<compile_context>
chip_gen: v7x
topology: tpu7x:2x2x1
jax: 0.10.0
libtpu: 0.0.40
codegen_flags: <defaults>
</compile_context>

<pallas_src>
import functools

import jax
import jax.numpy as jnp
from jax.experimental import pallas as pl
from jax.experimental.pallas import tpu as pltpu


def _round_up(x, m):
    return ((x + m - 1) // m) * m


# Modest scoped-VMEM budget: per-step footprints here are small, so this fits
# v7x's 64 MiB physical VMEM as well as v5e/v6e's 128 MiB.
_VMEM_LIMIT_BYTES = 48 * 1024 * 1024
_MAX_TILE = 512          # cap for the matmul K / N tiles


def _pad_dim_for_tile(d):
    """Pad d up so min(_MAX_TILE, round_up(d,128)) divides it exactly."""
    dp = _round_up(d, 128)
    if dp > _MAX_TILE:
        dp = _round_up(d, _MAX_TILE)
    return dp


# ---------------- tiled matmul + fused bias + ReLU (conv1 only) ----------------

def _matmul_bias_kernel(x_ref, w_ref, b_ref, o_ref, acc_ref, *, apply_relu):
    k = pl.program_id(2)

    @pl.when(k == 0)
    def _():
        acc_ref[...] = jnp.zeros_like(acc_ref)

    acc_ref[...] += jnp.dot(x_ref[...], w_ref[...],
                            preferred_element_type=jnp.float32)

    @pl.when(k == pl.num_programs(2) - 1)
    def _():
        out = acc_ref[...] + b_ref[...]          # (1, tn) broadcasts over rows
        if apply_relu:
            out = jnp.maximum(out, 0.0)
        o_ref[...] = out.astype(o_ref.dtype)


def matmul_bias(x, w, b, *, apply_relu=True, out_dtype=jnp.bfloat16):
    """y = relu?(x @ w + b).

    x: (M, Kp) bf16 (K pre-padded to match w), w: (Kp, Np) bf16 pre-padded,
    b: (1, Np) f32.  f32 MXU accumulation, bf16 lane-dense output tiles.
    M is left unpadded; the ragged last M tile is handled by Pallas.
    """
    M, Kp = x.shape
    Kp2, Np = w.shape
    assert Kp == Kp2 and b.shape == (1, Np)

    tk = min(_MAX_TILE, Kp)
    tn = min(_MAX_TILE, Np)
    assert Kp % tk == 0 and Np % tn == 0
    if M >= 512:
        tm = 512
    elif M > 256:
        tm = 256                                 # >=2 parallel M steps (v7x)
    else:
        tm = M                                   # full-dim block (always legal)

    grid = (pl.cdiv(M, tm), Np // tn, Kp // tk)
    return pl.pallas_call(
        functools.partial(_matmul_bias_kernel, apply_relu=apply_relu),
        out_shape=jax.ShapeDtypeStruct((M, Np), out_dtype),
        grid=grid,
        in_specs=[
            pl.BlockSpec((tm, tk), lambda i, j, k: (i, k)),
            pl.BlockSpec((tk, tn), lambda i, j, k: (k, j)),
            pl.BlockSpec((1, tn), lambda i, j, k: (0, j)),
        ],
        out_specs=pl.BlockSpec((tm, tn), lambda i, j, k: (i, j)),
        scratch_shapes=[pltpu.VMEM((tm, tn), jnp.float32)],
        compiler_params=pltpu.CompilerParams(
            dimension_semantics=("parallel", "parallel", "arbitrary"),
            vmem_limit_bytes=_VMEM_LIMIT_BYTES,
        ),
    )(x, w, b)


# ---------------- direct (no-im2col) stride-1 conv + bias + ReLU ----------------

def _conv_stride1_kernel(x_ref, w_ref, b_ref, o_ref, acc_ref, *, kw, wo, nb):
    # x_ref:  (N, Wp, Cin) bf16  -- one padded activation row (H index = oh + i)
    # w_ref:  (kw, Cin, Cout) bf16 -- kernel-row i of the weights
    # b_ref:  (1, Cout) f32
    # o_ref:  (N, Wo, Cout) bf16  -- output row oh (resident across the i axis)
    # acc_ref:(N, Wo, Cout) f32 scratch accumulator
    i = pl.program_id(1)

    @pl.when(i == 0)
    def _():
        acc_ref[...] = jnp.zeros_like(acc_ref)

    for n in range(nb):                          # static (small) batch loop
        row = x_ref[n]                           # (Wp, Cin)
        part = jnp.dot(row[0:wo, :], w_ref[0],
                       preferred_element_type=jnp.float32)
        for j in range(1, kw):                   # static kw-window loop
            part = part + jnp.dot(row[j:j + wo, :], w_ref[j],
                                  preferred_element_type=jnp.float32)
        acc_ref[n] += part

    @pl.when(i == pl.num_programs(1) - 1)
    def _():
        out = acc_ref[...] + b_ref[...]          # (1, Cout) broadcasts
        o_ref[...] = jnp.maximum(out, 0.0).astype(o_ref.dtype)


def conv2d_direct(x, w, b, *, pad):
    """Stride-1 conv + bias + ReLU streamed directly from the activation.

    x: (H, N, W, Cin) bf16; w: (kh, kw, Cin, Cout) bf16; b: (1, Cout) f32.
    Returns (Ho, N, Wo, Cout) bf16.
    """
    H, N, W, Cin = x.shape
    kh, kw, Cin2, Cout = w.shape
    assert Cin == Cin2
    xp = jnp.pad(x, ((pad, pad), (0, 0), (pad, pad), (0, 0)))
    Hp, Wp = H + 2 * pad, W + 2 * pad
    Ho, Wo = Hp - kh + 1, Wp - kw + 1

    return pl.pallas_call(
        functools.partial(_conv_stride1_kernel, kw=kw, wo=Wo, nb=N),
        out_shape=jax.ShapeDtypeStruct((Ho, N, Wo, Cout), jnp.bfloat16),
        grid=(Ho, kh),
        in_specs=[
            # One padded activation row per (oh, i): H block size 1, so the
            # block index IS the element row offset oh + i (in-kernel gather
            # of the kw window replaces the HBM im2col).
            pl.BlockSpec((None, N, Wp, Cin), lambda oh, i: (oh + i, 0, 0, 0)),
            pl.BlockSpec((None, kw, Cin, Cout), lambda oh, i: (i, 0, 0, 0)),
            pl.BlockSpec((1, Cout), lambda oh, i: (0, 0)),
        ],
        out_specs=pl.BlockSpec((None, N, Wo, Cout), lambda oh, i: (oh, 0, 0, 0)),
        scratch_shapes=[pltpu.VMEM((N, Wo, Cout), jnp.float32)],
        compiler_params=pltpu.CompilerParams(
            dimension_semantics=("parallel", "arbitrary"),
            vmem_limit_bytes=_VMEM_LIMIT_BYTES,
        ),
    )(xp, w, b)


# ---------------- maxpool: window rows via index_map, single-step reduction ----------------

def _maxpool_kernel(*refs, ws1):
    # refs[:-1]: k input rows (N, W, C); refs[-1]: output row (N, ws1, C).
    in_refs, o_ref = refs[:-1], refs[-1]
    m = in_refs[0][...]
    for r in in_refs[1:]:                        # max over the k window rows
        m = jnp.maximum(m, r[...])
    k = m.shape[1] - ws1 + 1
    acc = m[:, 0:ws1, :]
    for j in range(1, k):                        # max over the k-wide W window
        acc = jnp.maximum(acc, m[:, j:j + ws1, :])
    o_ref[...] = acc


def maxpool2d(x, *, k=3, stride=2):
    """MaxPool2d(k, stride).  x: (H, N, W, C) bf16 -> (Ho, N, Wo, C) bf16."""
    H, N, W, C = x.shape
    Ho = (H - k) // stride + 1
    Ws1 = W - k + 1                              # stride-1 window positions
    out = pl.pallas_call(
        functools.partial(_maxpool_kernel, ws1=Ws1),
        out_shape=jax.ShapeDtypeStruct((Ho, N, Ws1, C), x.dtype),
        grid=(Ho,),
        in_specs=[
            pl.BlockSpec((None, N, W, C),
                         lambda oh, i=i: (stride * oh + i, 0, 0, 0))
            for i in range(k)
        ],
        out_specs=pl.BlockSpec((None, N, Ws1, C), lambda oh: (oh, 0, 0, 0)),
        compiler_params=pltpu.CompilerParams(
            dimension_semantics=("parallel",),
            vmem_limit_bytes=_VMEM_LIMIT_BYTES,
        ),
    )(*([x] * k))
    # TODO(synk): stride-2 W subsample stays in XLA glue (tiny reduced tensor).
    return out[:, :, ::stride, :]


# ---------------- global average pool (AdaptiveAvgPool2d(1)) + ReLU ----------------

def _avgpool_relu_kernel(x_ref, o_ref, *, inv_hw):
    s = jnp.sum(x_ref[...].astype(jnp.float32), axis=0)    # (N, W, C)
    s = jnp.sum(s, axis=1) * inv_hw                        # (N, C)
    o_ref[...] = jnp.maximum(s, 0.0)


def global_avgpool_relu(x):
    """x: (H, N, W, C) bf16 -> (N, C) f32 = relu(mean over H, W)."""
    H, N, W, C = x.shape
    return pl.pallas_call(
        functools.partial(_avgpool_relu_kernel, inv_hw=1.0 / (H * W)),
        out_shape=jax.ShapeDtypeStruct((N, C), jnp.float32),
    )(x)


# ---------------- conv1 (stride 4): tiny im2col + tiled MXU matmul ----------------

def conv2d_im2col(x_nhwc, w_mat, b_row, *, cout, kh, kw, stride, pad):
    """Strided conv via XLA im2col feeding the tiled Pallas matmul (conv1 only;
    the 3-channel input keeps the patch matrix tiny).

    x_nhwc: (N, H, W, Cin) bf16; w_mat: (Kp, Np) bf16 pre-transformed/padded;
    b_row: (1, Np) f32.  Returns (Ho, N, Wo, cout) bf16 in internal layout.
    """
    N, H, W, Cin = x_nhwc.shape
    xp = jnp.pad(x_nhwc, ((0, 0), (pad, pad), (pad, pad), (0, 0)))
    Ho = (H + 2 * pad - kh) // stride + 1
    Wo = (W + 2 * pad - kw) // stride + 1
    cols = []
    for i in range(kh):
        for j in range(kw):
            cols.append(xp[:, i:i + stride * Ho:stride,
                           j:j + stride * Wo:stride, :])
    patches = jnp.stack(cols, axis=3)                  # (N, Ho, Wo, kh*kw, Cin)
    patches = jnp.transpose(patches, (1, 0, 2, 3, 4))  # (Ho, N, Wo, kh*kw, Cin)
    K = kh * kw * Cin
    patches = patches.reshape(Ho * N * Wo, K)
    patches = jnp.pad(patches, ((0, 0), (0, w_mat.shape[0] - K)))
    y = matmul_bias(patches, w_mat, b_row, apply_relu=True)   # (M, Np) bf16
    return y[:, :cout].reshape(Ho, N, Wo, cout)


# ---------------- params ----------------

def init_params(out_ch, key):
    """Deterministic params in PyTorch layout, matching torchvision
    AlexNet.features shapes (last conv replaced by Conv2d(256, out_ch, 3, 1, 1))."""
    shapes = [
        ((64, 3, 11, 11), (64,)),
        ((192, 64, 5, 5), (192,)),
        ((384, 192, 3, 3), (384,)),
        ((256, 384, 3, 3), (256,)),
        ((out_ch, 256, 3, 3), (out_ch,)),
    ]
    params = {}
    for idx, (ws, bs) in enumerate(shapes):
        key, kw_, kb_ = jax.random.split(key, 3)
        fan_in = ws[1] * ws[2] * ws[3]
        scale = 1.0 / jnp.sqrt(fan_in)
        params[f"w{idx}"] = jax.random.normal(kw_, ws, jnp.float32) * scale
        params[f"b{idx}"] = jax.random.normal(kb_, bs, jnp.float32) * scale
    return params


def prepare_params(params):
    """One-time weight pre-transform (no per-call transpose/cast/pad).

    conv1  -> padded bf16 (Kp, Np) matmul matrix + padded f32 (1, Np) bias.
    conv2+ -> bf16 (kh, kw, Cin, Cout) tensors + f32 (1, Cout) biases.
    """
    prepped = {}
    w0 = params["w0"]
    cout0, cin0, kh0, kw0 = w0.shape
    k0 = kh0 * kw0 * cin0
    kp0 = _pad_dim_for_tile(k0)
    np0 = _pad_dim_for_tile(cout0)
    w0m = jnp.transpose(w0, (2, 3, 1, 0)).reshape(k0, cout0)
    prepped["w0"] = jnp.pad(
        w0m, ((0, kp0 - k0), (0, np0 - cout0))).astype(jnp.bfloat16)
    prepped["b0"] = jnp.pad(
        params["b0"], (0, np0 - cout0)).reshape(1, np0).astype(jnp.float32)
    for idx in range(1, 5):
        w = params[f"w{idx}"]
        prepped[f"w{idx}"] = jnp.transpose(w, (2, 3, 1, 0)).astype(jnp.bfloat16)
        prepped[f"b{idx}"] = params[f"b{idx}"].reshape(1, -1).astype(jnp.float32)
    return prepped


# ---------------- forward ----------------

def alexnet_forward(x_nchw, prepped):
    """Equivalent of AlexNet(out_ch).forward.  NCHW input -> (N, out_ch, 1, 1)."""
    # NCHW -> NHWC; all inter-layer activations are bf16 from here on.
    x = jnp.transpose(x_nchw, (0, 2, 3, 1)).astype(jnp.bfloat16)
    # features[0..2]: Conv(3->64, 11x11, s4, p2) + ReLU, MaxPool(3, 2)
    x = conv2d_im2col(x, prepped["w0"], prepped["b0"],
                      cout=64, kh=11, kw=11, stride=4, pad=2)  # (H, N, W, 64)
    x = maxpool2d(x, k=3, stride=2)
    # features[3..5]: Conv(64->192, 5x5, p2) + ReLU, MaxPool(3, 2)
    x = conv2d_direct(x, prepped["w1"], prepped["b1"], pad=2)
    x = maxpool2d(x, k=3, stride=2)
    # features[6..9]: Conv(192->384, 3x3, p1) + ReLU, Conv(384->256, 3x3, p1) + ReLU
    x = conv2d_direct(x, prepped["w2"], prepped["b2"], pad=1)
    x = conv2d_direct(x, prepped["w3"], prepped["b3"], pad=1)
    # features[10..12]: Conv(256->out_ch, 3x3, p1) + ReLU, MaxPool(3, 2)
    x = conv2d_direct(x, prepped["w4"], prepped["b4"], pad=1)
    x = maxpool2d(x, k=3, stride=2)
    # AdaptiveAvgPool2d(1) + ReLU
    y = global_avgpool_relu(x)                                 # (N, out_ch) f32
    return y[:, :, None, None]                                 # (N, out_ch, 1, 1)


if __name__ == "__main__":
    out_ch = 16
    key = jax.random.PRNGKey(0)
    kx, kp = jax.random.split(key)
    # AlexNet needs 3 input channels; 64x64 spatial keeps every stride-4 conv /
    # stride-2 maxpool valid (final feature map 1x1).
    x = jax.random.normal(kx, (2, 3, 64, 64), jnp.float32)
    params = init_params(out_ch, kp)
    prepped = prepare_params(params)      # one-time weight pre-transform

    fwd = jax.jit(alexnet_forward)
    out = jax.block_until_ready(fwd(x, prepped))
    assert out.shape == (2, out_ch, 1, 1)
    assert bool(jnp.all(jnp.isfinite(out)))
    print("KERNEL_OK")
</pallas_src>

<mosaic_0001>
module attributes {stable_mosaic.version = 11 : i64} {
  func.func @_matmul_bias_kernel(%arg0: i32, %arg1: i32, %arg2: i32, %arg3: memref<256x384xbf16, #tpu.memory_space<vmem>>, %arg4: memref<384x128xbf16, #tpu.memory_space<vmem>>, %arg5: memref<1x128xf32, #tpu.memory_space<vmem>>, %arg6: memref<256x128xbf16, #tpu.memory_space<vmem>>, %arg7: memref<256x128xf32, #tpu.memory_space<vmem>>) attributes {dimension_semantics = [#tpu.dimension_semantics<parallel>, #tpu.dimension_semantics<parallel>, #tpu.dimension_semantics<arbitrary>], iteration_bounds = array<i64: 2, 1, 1>, scalar_prefetch = 0 : i64, scratch_operands = 1 : i64, tpu.core_type = #tpu.core_type<tc>, window_params = [{transform_indices = @transform_0, window_bounds = array<i64: 256, 384>}, {transform_indices = @transform_1, window_bounds = array<i64: 384, 128>}, {transform_indices = @transform_2, window_bounds = array<i64: 1, 128>}, {transform_indices = @transform_3, window_bounds = array<i64: 256, 128>}]} {
    %c0_i32 = arith.constant 0 : i32
    %0 = arith.cmpi eq, %arg2, %c0_i32 : i32
    %1 = arith.extui %0 : i1 to i32
    %c0_i32_0 = arith.constant 0 : i32
    %2 = arith.cmpi ne, %1, %c0_i32_0 : i32
    scf.if %2 {
      %cst_10 = arith.constant 0.000000e+00 : f32
      %12 = vector.broadcast %cst_10 : f32 to vector<256x128xf32>
      %c0_11 = arith.constant 0 : index
      %c0_12 = arith.constant 0 : index
      %13 = vector.load %arg7[%c0_11, %c0_12] : memref<256x128xf32, #tpu.memory_space<vmem>>, vector<256x128xf32>
      tpu.vector_store %arg7[%c0_11, %c0_12], %12 {strides = array<i32>} : memref<256x128xf32, #tpu.memory_space<vmem>>, vector<256x128xf32>,
    } else {
    }
    %c0 = arith.constant 0 : index
    %c0_1 = arith.constant 0 : index
    %3 = vector.load %arg7[%c0, %c0_1] : memref<256x128xf32, #tpu.memory_space<vmem>>, vector<256x128xf32>
    %c0_2 = arith.constant 0 : index
    %c0_3 = arith.constant 0 : index
    %4 = vector.load %arg3[%c0_2, %c0_3] : memref<256x384xbf16, #tpu.memory_space<vmem>>, vector<256x384xbf16>
    %c0_4 = arith.constant 0 : index
    %c0_5 = arith.constant 0 : index
    %5 = vector.load %arg4[%c0_4, %c0_5] : memref<384x128xbf16, #tpu.memory_space<vmem>>, vector<384x128xbf16>
    %cst = arith.constant dense<0.000000e+00> : vector<256x128xf32>
    %6 = tpu.matmul %4, %5, %cst {dimension_numbers = #tpu.dot_dimension_numbers<[1], [0], [0], [1], [0, 0, 1, 1], [], []>} : vector<256x384xbf16>, vector<384x128xbf16>, vector<256x128xf32> -> vector<256x128xf32>
    %7 = arith.addf %3, %6 : vector<256x128xf32>
    %c0_6 = arith.constant 0 : index
    %c0_7 = arith.constant 0 : index
    %8 = vector.load %arg7[%c0_6, %c0_7] : memref<256x128xf32, #tpu.memory_space<vmem>>, vector<256x128xf32>
    tpu.vector_store %arg7[%c0_6, %c0_7], %7 {strides = array<i32>} : memref<256x128xf32, #tpu.memory_space<vmem>>, vector<256x128xf32>,
    %c0_i32_8 = arith.constant 0 : i32
    %9 = arith.cmpi eq, %arg2, %c0_i32_8 : i32
    %10 = arith.extui %9 : i1 to i32
    %c0_i32_9 = arith.constant 0 : i32
    %11 = arith.cmpi ne, %10, %c0_i32_9 : i32
    scf.if %11 {
      %c0_10 = arith.constant 0 : index
      %c0_11 = arith.constant 0 : index
      %12 = vector.load %arg7[%c0_10, %c0_11] : memref<256x128xf32, #tpu.memory_space<vmem>>, vector<256x128xf32>
      %c0_12 = arith.constant 0 : index
      %c0_13 = arith.constant 0 : index
      %13 = vector.load %arg5[%c0_12, %c0_13] : memref<1x128xf32, #tpu.memory_space<vmem>>, vector<1x128xf32>
      %14 = vector.broadcast %13 : vector<1x128xf32> to vector<256x128xf32>
      %15 = arith.addf %12, %14 : vector<256x128xf32>
      %cst_14 = arith.constant 0.000000e+00 : f32
      %16 = vector.broadcast %cst_14 : f32 to vector<256x128xf32>
      %17 = arith.maximumf %15, %16 : vector<256x128xf32>
      %18 = arith.truncf %17 : vector<256x128xf32> to vector<256x128xbf16>
      %c0_15 = arith.constant 0 : index
      %c0_16 = arith.constant 0 : index
      %19 = vector.load %arg6[%c0_15, %c0_16] : memref<256x128xbf16, #tpu.memory_space<vmem>>, vector<256x128xbf16>
      tpu.vector_store %arg6[%c0_15, %c0_16], %18 {strides = array<i32>} : memref<256x128xbf16, #tpu.memory_space<vmem>>, vector<256x128xbf16>,
    } else {
    }
    return
  }
  func.func @transform_0(%arg0: i32, %arg1: i32, %arg2: i32) -> (i32, i32) {
    %c0_i32 = arith.constant 0 : i32
    return %arg0, %arg2 : i32, i32
  }
  func.func @transform_1(%arg0: i32, %arg1: i32, %arg2: i32) -> (i32, i32) {
    %c0_i32 = arith.constant 0 : i32
    return %arg2, %arg1 : i32, i32
  }
  func.func @transform_2(%arg0: i32, %arg1: i32, %arg2: i32) -> (i32, i32) {
    %c0_i32 = arith.constant 0 : i32
    %c0_i32_0 = arith.constant 0 : i32
    return %c0_i32, %arg1 : i32, i32
  }
  func.func @transform_3(%arg0: i32, %arg1: i32, %arg2: i32) -> (i32, i32) {
    %c0_i32 = arith.constant 0 : i32
    return %arg0, %arg1 : i32, i32
  }
}

module attributes {stable_mosaic.version = 11 : i64} {
  func.func @_maxpool_kernel(%arg0: i32, %arg1: memref<1x2x15x64xbf16, #tpu.memory_space<vmem>>, %arg2: memref<1x2x15x64xbf16, #tpu.memory_space<vmem>>, %arg3: memref<1x2x15x64xbf16, #tpu.memory_space<vmem>>, %arg4: memref<1x2x13x64xbf16, #tpu.memory_space<vmem>>) attributes {dimension_semantics = [#tpu.dimension_semantics<parallel>], iteration_bounds = array<i64: 7>, scalar_prefetch = 0 : i64, scratch_operands = 0 : i64, tpu.core_type = #tpu.core_type<tc>, window_params = [{transform_indices = @transform_0, window_bounds = array<i64: 1, 2, 15, 64>}, {transform_indices = @transform_1, window_bounds = array<i64: 1, 2, 15, 64>}, {transform_indices = @transform_2, window_bounds = array<i64: 1, 2, 15, 64>}, {transform_indices = @transform_3, window_bounds = array<i64: 1, 2, 13, 64>}]} {
    %c0 = arith.constant 0 : index
    %c0_0 = arith.constant 0 : index
    %c0_1 = arith.constant 0 : index
    %c0_2 = arith.constant 0 : index
    %0 = vector.load %arg1[%c0, %c0_0, %c0_1, %c0_2] : memref<1x2x15x64xbf16, #tpu.memory_space<vmem>>, vector<1x2x15x64xbf16>
    %1 = vector.shape_cast %0 : vector<1x2x15x64xbf16> to vector<2x15x64xbf16>
    %c0_3 = arith.constant 0 : index
    %c0_4 = arith.constant 0 : index
    %c0_5 = arith.constant 0 : index
    %c0_6 = arith.constant 0 : index
    %2 = vector.load %arg2[%c0_3, %c0_4, %c0_5, %c0_6] : memref<1x2x15x64xbf16, #tpu.memory_space<vmem>>, vector<1x2x15x64xbf16>
    %3 = vector.shape_cast %2 : vector<1x2x15x64xbf16> to vector<2x15x64xbf16>
    %4 = arith.maximumf %1, %3 : vector<2x15x64xbf16>
    %c0_7 = arith.constant 0 : index
    %c0_8 = arith.constant 0 : index
    %c0_9 = arith.constant 0 : index
    %c0_10 = arith.constant 0 : index
    %5 = vector.load %arg3[%c0_7, %c0_8, %c0_9, %c0_10] : memref<1x2x15x64xbf16, #tpu.memory_space<vmem>>, vector<1x2x15x64xbf16>
    %6 = vector.shape_cast %5 : vector<1x2x15x64xbf16> to vector<2x15x64xbf16>
    %7 = arith.maximumf %4, %6 : vector<2x15x64xbf16>
    %8 = vector.extract_strided_slice %7 {offsets = [0, 0, 0], sizes = [2, 13, 64], strides = [1, 1, 1]} : vector<2x15x64xbf16> to vector<2x13x64xbf16>
    %9 = vector.extract_strided_slice %7 {offsets = [0, 1, 0], sizes = [2, 13, 64], strides = [1, 1, 1]} : vector<2x15x64xbf16> to vector<2x13x64xbf16>
    %10 = arith.maximumf %8, %9 : vector<2x13x64xbf16>
    %11 = vector.extract_strided_slice %7 {offsets = [0, 2, 0], sizes = [2, 13, 64], strides = [1, 1, 1]} : vector<2x15x64xbf16> to vector<2x13x64xbf16>
    %12 = arith.maximumf %10, %11 : vector<2x13x64xbf16>
    %c0_11 = arith.constant 0 : index
    %c0_12 = arith.constant 0 : index
    %c0_13 = arith.constant 0 : index
    %c0_14 = arith.constant 0 : index
    %13 = vector.load %arg4[%c0_11, %c0_12, %c0_13, %c0_14] : memref<1x2x13x64xbf16, #tpu.memory_space<vmem>>, vector<1x2x13x64xbf16>
    %14 = vector.shape_cast %13 : vector<1x2x13x64xbf16> to vector<2x13x64xbf16>
    %15 = vector.shape_cast %12 : vector<2x13x64xbf16> to vector<1x2x13x64xbf16>
    tpu.vector_store %arg4[%c0_11, %c0_12, %c0_13, %c0_14], %15 {strides = array<i32>} : memref<1x2x13x64xbf16, #tpu.memory_space<vmem>>, vector<1x2x13x64xbf16>,
    return
  }
  func.func @transform_0(%arg0: i32) -> (i32, i32, i32, i32) {
    %c2_i32 = arith.constant 2 : i32
    %0 = arith.muli %c2_i32, %arg0 : i32
    %c0_i32 = arith.constant 0 : i32
    %1 = arith.addi %0, %c0_i32 : i32
    %c0_i32_0 = arith.constant 0 : i32
    %c0_i32_1 = arith.constant 0 : i32
    %c0_i32_2 = arith.constant 0 : i32
    %c0_i32_3 = arith.constant 0 : i32
    return %1, %c0_i32_0, %c0_i32_1, %c0_i32_2 : i32, i32, i32, i32
  }
  func.func @transform_1(%arg0: i32) -> (i32, i32, i32, i32) {
    %c2_i32 = arith.constant 2 : i32
    %0 = arith.muli %c2_i32, %arg0 : i32
    %c1_i32 = arith.constant 1 : i32
    %1 = arith.addi %0, %c1_i32 : i32
    %c0_i32 = arith.constant 0 : i32
    %c0_i32_0 = arith.constant 0 : i32
    %c0_i32_1 = arith.constant 0 : i32
    %c0_i32_2 = arith.constant 0 : i32
    return %1, %c0_i32, %c0_i32_0, %c0_i32_1 : i32, i32, i32, i32
  }
  func.func @transform_2(%arg0: i32) -> (i32, i32, i32, i32) {
    %c2_i32 = arith.constant 2 : i32
    %0 = arith.muli %c2_i32, %arg0 : i32
    %c2_i32_0 = arith.constant 2 : i32
    %1 = arith.addi %0, %c2_i32_0 : i32
    %c0_i32 = arith.constant 0 : i32
    %c0_i32_1 = arith.constant 0 : i32
    %c0_i32_2 = arith.constant 0 : i32
    %c0_i32_3 = arith.constant 0 : i32
    return %1, %c0_i32, %c0_i32_1, %c0_i32_2 : i32, i32, i32, i32
  }
  func.func @transform_3(%arg0: i32) -> (i32, i32, i32, i32) {
    %c0_i32 = arith.constant 0 : i32
    %c0_i32_0 = arith.constant 0 : i32
    %c0_i32_1 = arith.constant 0 : i32
    %c0_i32_2 = arith.constant 0 : i32
    return %arg0, %c0_i32, %c0_i32_0, %c0_i32_1 : i32, i32, i32, i32
  }
}

module attributes {stable_mosaic.version = 11 : i64} {
  func.func @_conv_stride1_kernel(%arg0: i32, %arg1: i32, %arg2: memref<1x2x11x64xbf16, #tpu.memory_space<vmem>>, %arg3: memref<1x5x64x192xbf16, #tpu.memory_space<vmem>>, %arg4: memref<1x192xf32, #tpu.memory_space<vmem>>, %arg5: memref<1x2x7x192xbf16, #tpu.memory_space<vmem>>, %arg6: memref<2x7x192xf32, #tpu.memory_space<vmem>>) attributes {dimension_semantics = [#tpu.dimension_semantics<parallel>, #tpu.dimension_semantics<arbitrary>], iteration_bounds = array<i64: 7, 5>, scalar_prefetch = 0 : i64, scratch_operands = 1 : i64, tpu.core_type = #tpu.core_type<tc>, window_params = [{transform_indices = @transform_0, window_bounds = array<i64: 1, 2, 11, 64>}, {transform_indices = @transform_1, window_bounds = array<i64: 1, 5, 64, 192>}, {pipeline_mode = #tpu.pipeline_mode<synchronous>, transform_indices = @transform_2, window_bounds = array<i64: 1, 192>}, {transform_indices = @transform_3, window_bounds = array<i64: 1, 2, 7, 192>}]} {
    %c0_i32 = arith.constant 0 : i32
    %0 = arith.cmpi eq, %arg1, %c0_i32 : i32
    %1 = arith.extui %0 : i1 to i32
    %c0_i32_0 = arith.constant 0 : i32
    %2 = arith.cmpi ne, %1, %c0_i32_0 : i32
    scf.if %2 {
      %cst_66 = arith.constant 0.000000e+00 : f32
      %70 = vector.broadcast %cst_66 : f32 to vector<2x7x192xf32>
      %c0_67 = arith.constant 0 : index
      %c0_68 = arith.constant 0 : index
      %c0_69 = arith.constant 0 : index
      %71 = vector.load %arg6[%c0_67, %c0_68, %c0_69] : memref<2x7x192xf32, #tpu.memory_space<vmem>>, vector<2x7x192xf32>
      tpu.vector_store %arg6[%c0_67, %c0_68, %c0_69], %70 {strides = array<i32>} : memref<2x7x192xf32, #tpu.memory_space<vmem>>, vector<2x7x192xf32>,
    } else {
    }
    %c0 = arith.constant 0 : index
    %c0_1 = arith.constant 0 : index
    %c0_2 = arith.constant 0 : index
    %c0_3 = arith.constant 0 : index
    %3 = vector.load %arg2[%c0, %c0_1, %c0_2, %c0_3] : memref<1x2x11x64xbf16, #tpu.memory_space<vmem>>, vector<1x1x11x64xbf16>
    %4 = vector.shape_cast %3 : vector<1x1x11x64xbf16> to vector<11x64xbf16>
    %5 = vector.extract_strided_slice %4 {offsets = [0, 0], sizes = [7, 64], strides = [1, 1]} : vector<11x64xbf16> to vector<7x64xbf16>
    %c0_4 = arith.constant 0 : index
    %c0_5 = arith.constant 0 : index
    %c0_6 = arith.constant 0 : index
    %c0_7 = arith.constant 0 : index
    %6 = vector.load %arg3[%c0_4, %c0_5, %c0_6, %c0_7] : memref<1x5x64x192xbf16, #tpu.memory_space<vmem>>, vector<1x1x64x192xbf16>
    %7 = vector.shape_cast %6 : vector<1x1x64x192xbf16> to vector<64x192xbf16>
    %cst = arith.constant dense<0.000000e+00> : vector<7x192xf32>
    %8 = tpu.matmul %5, %7, %cst {dimension_numbers = #tpu.dot_dimension_numbers<[1], [0], [0], [1], [0, 0, 1, 1], [], []>} : vector<7x64xbf16>, vector<64x192xbf16>, vector<7x192xf32> -> vector<7x192xf32>
    %9 = vector.extract_strided_slice %4 {offsets = [1, 0], sizes = [7, 64], strides = [1, 1]} : vector<11x64xbf16> to vector<7x64xbf16>
    %c0_8 = arith.constant 0 : index
    %c1 = arith.constant 1 : index
    %c0_9 = arith.constant 0 : index
    %c0_10 = arith.constant 0 : index
    %10 = vector.load %arg3[%c0_8, %c1, %c0_9, %c0_10] : memref<1x5x64x192xbf16, #tpu.memory_space<vmem>>, vector<1x1x64x192xbf16>
    %11 = vector.shape_cast %10 : vector<1x1x64x192xbf16> to vector<64x192xbf16>
    %cst_11 = arith.constant dense<0.000000e+00> : vector<7x192xf32>
    %12 = tpu.matmul %9, %11, %cst_11 {dimension_numbers = #tpu.dot_dimension_numbers<[1], [0], [0], [1], [0, 0, 1, 1], [], []>} : vector<7x64xbf16>, vector<64x192xbf16>, vector<7x192xf32> -> vector<7x192xf32>
    %13 = arith.addf %8, %12 : vector<7x192xf32>
    %14 = vector.extract_strided_slice %4 {offsets = [2, 0], sizes = [7, 64], strides = [1, 1]} : vector<11x64xbf16> to vector<7x64xbf16>
    %c0_12 = arith.constant 0 : index
    %c2 = arith.constant 2 : index
    %c0_13 = arith.constant 0 : index
    %c0_14 = arith.constant 0 : index
    %15 = vector.load %arg3[%c0_12, %c2, %c0_13, %c0_14] : memref<1x5x64x192xbf16, #tpu.memory_space<vmem>>, vector<1x1x64x192xbf16>
    %16 = vector.shape_cast %15 : vector<1x1x64x192xbf16> to vector<64x192xbf16>
    %cst_15 = arith.constant dense<0.000000e+00> : vector<7x192xf32>
    %17 = tpu.matmul %14, %16, %cst_15 {dimension_numbers = #tpu.dot_dimension_numbers<[1], [0], [0], [1], [0, 0, 1, 1], [], []>} : vector<7x64xbf16>, vector<64x192xbf16>, vector<7x192xf32> -> vector<7x192xf32>
    %18 = arith.addf %13, %17 : vector<7x192xf32>
    %19 = vector.extract_strided_slice %4 {offsets = [3, 0], sizes = [7, 64], strides = [1, 1]} : vector<11x64xbf16> to vector<7x64xbf16>
    %c0_16 = arith.constant 0 : index
    %c3 = arith.constant 3 : index
    %c0_17 = arith.constant 0 : index
    %c0_18 = arith.constant 0 : index
    %20 = vector.load %arg3[%c0_16, %c3, %c0_17, %c0_18] : memref<1x5x64x192xbf16, #tpu.memory_space<vmem>>, vector<1x1x64x192xbf16>
    %21 = vector.shape_cast %20 : vector<1x1x64x192xbf16> to vector<64x192xbf16>
    %cst_19 = arith.constant dense<0.000000e+00> : vector<7x192xf32>
    %22 = tpu.matmul %19, %21, %cst_19 {dimension_numbers = #tpu.dot_dimension_numbers<[1], [0], [0], [1], [0, 0, 1, 1], [], []>} : vector<7x64xbf16>, vector<64x192xbf16>, vector<7x192xf32> -> vector<7x192xf32>
    %23 = arith.addf %18, %22 : vector<7x192xf32>
    %24 = vector.extract_strided_slice %4 {offsets = [4, 0], sizes = [7, 64], strides = [1, 1]} : vector<11x64xbf16> to vector<7x64xbf16>
    %c0_20 = arith.constant 0 : index
    %c4 = arith.constant 4 : index
    %c0_21 = arith.constant 0 : index
    %c0_22 = arith.constant 0 : index
    %25 = vector.load %arg3[%c0_20, %c4, %c0_21, %c0_22] : memref<1x5x64x192xbf16, #tpu.memory_space<vmem>>, vector<1x1x64x192xbf16>
    %26 = vector.shape_cast %25 : vector<1x1x64x192xbf16> to vector<64x192xbf16>
    %cst_23 = arith.constant dense<0.000000e+00> : vector<7x192xf32>
    %27 = tpu.matmul %24, %26, %cst_23 {dimension_numbers = #tpu.dot_dimension_numbers<[1], [0], [0], [1], [0, 0, 1, 1], [], []>} : vector<7x64xbf16>, vector<64x192xbf16>, vector<7x192xf32> -> vector<7x192xf32>
    %28 = arith.addf %23, %27 : vector<7x192xf32>
    %c0_24 = arith.constant 0 : index
    %c0_25 = arith.constant 0 : index
    %c0_26 = arith.constant 0 : index
    %29 = vector.load %arg6[%c0_24, %c0_25, %c0_26] : memref<2x7x192xf32, #tpu.memory_space<vmem>>, vector<1x7x192xf32>
    %30 = vector.shape_cast %29 : vector<1x7x192xf32> to vector<7x192xf32>
    %31 = arith.addf %30, %28 : vector<7x192xf32>
    %c0_27 = arith.constant 0 : index
    %c0_28 = arith.constant 0 : index
    %c0_29 = arith.constant 0 : index
    %32 = vector.load %arg6[%c0_27, %c0_28, %c0_29] : memref<2x7x192xf32, #tpu.memory_space<vmem>>, vector<1x7x192xf32>
    %33 = vector.shape_cast %32 : vector<1x7x192xf32> to vector<7x192xf32>
    %34 = vector.shape_cast %31 : vector<7x192xf32> to vector<1x7x192xf32>
    tpu.vector_store %arg6[%c0_27, %c0_28, %c0_29], %34 {strides = array<i32>} : memref<2x7x192xf32, #tpu.memory_space<vmem>>, vector<1x7x192xf32>,
    %c0_30 = arith.constant 0 : index
    %c1_31 = arith.constant 1 : index
    %c0_32 = arith.constant 0 : index
    %c0_33 = arith.constant 0 : index
    %35 = vector.load %arg2[%c0_30, %c1_31, %c0_32, %c0_33] : memref<1x2x11x64xbf16, #tpu.memory_space<vmem>>, vector<1x1x11x64xbf16>
    %36 = vector.shape_cast %35 : vector<1x1x11x64xbf16> to vector<11x64xbf16>
    %37 = vector.extract_strided_slice %36 {offsets = [0, 0], sizes = [7, 64], strides = [1, 1]} : vector<11x64xbf16> to vector<7x64xbf16>
    %c0_34 = arith.constant 0 : index
    %c0_35 = arith.constant 0 : index
    %c0_36 = arith.constant 0 : index
    %c0_37 = arith.constant 0 : index
    %38 = vector.load %arg3[%c0_34, %c0_35, %c0_36, %c0_37] : memref<1x5x64x192xbf16, #tpu.memory_space<vmem>>, vector<1x1x64x192xbf16>
    %39 = vector.shape_cast %38 : vector<1x1x64x192xbf16> to vector<64x192xbf16>
    %cst_38 = arith.constant dense<0.000000e+00> : vector<7x192xf32>
    %40 = tpu.matmul %37, %39, %cst_38 {dimension_numbers = #tpu.dot_dimension_numbers<[1], [0], [0], [1], [0, 0, 1, 1], [], []>} : vector<7x64xbf16>, vector<64x192xbf16>, vector<7x192xf32> -> vector<7x192xf32>
    %41 = vector.extract_strided_slice %36 {offsets = [1, 0], sizes = [7, 64], strides = [1, 1]} : vector<11x64xbf16> to vector<7x64xbf16>
    %c0_39 = arith.constant 0 : index
    %c1_40 = arith.constant 1 : index
    %c0_41 = arith.constant 0 : index
    %c0_42 = arith.constant 0 : index
    %42 = vector.load %arg3[%c0_39, %c1_40, %c0_41, %c0_42] : memref<1x5x64x192xbf16, #tpu.memory_space<vmem>>, vector<1x1x64x192xbf16>
    %43 = vector.shape_cast %42 : vector<1x1x64x192xbf16> to vector<64x192xbf16>
    %cst_43 = arith.constant dense<0.000000e+00> : vector<7x192xf32>
    %44 = tpu.matmul %41, %43, %cst_43 {dimension_numbers = #tpu.dot_dimension_numbers<[1], [0], [0], [1], [0, 0, 1, 1], [], []>} : vector<7x64xbf16>, vector<64x192xbf16>, vector<7x192xf32> -> vector<7x192xf32>
    %45 = arith.addf %40, %44 : vector<7x192xf32>
    %46 = vector.extract_strided_slice %36 {offsets = [2, 0], sizes = [7, 64], strides = [1, 1]} : vector<11x64xbf16> to vector<7x64xbf16>
    %c0_44 = arith.constant 0 : index
    %c2_45 = arith.constant 2 : index
    %c0_46 = arith.constant 0 : index
    %c0_47 = arith.constant 0 : index
    %47 = vector.load %arg3[%c0_44, %c2_45, %c0_46, %c0_47] : memref<1x5x64x192xbf16, #tpu.memory_space<vmem>>, vector<1x1x64x192xbf16>
    %48 = vector.shape_cast %47 : vector<1x1x64x192xbf16> to vector<64x192xbf16>
    %cst_48 = arith.constant dense<0.000000e+00> : vector<7x192xf32>
    %49 = tpu.matmul %46, %48, %cst_48 {dimension_numbers = #tpu.dot_dimension_numbers<[1], [0], [0], [1], [0, 0, 1, 1], [], []>} : vector<7x64xbf16>, vector<64x192xbf16>, vector<7x192xf32> -> vector<7x192xf32>
    %50 = arith.addf %45, %49 : vector<7x192xf32>
    %51 = vector.extract_strided_slice %36 {offsets = [3, 0], sizes = [7, 64], strides = [1, 1]} : vector<11x64xbf16> to vector<7x64xbf16>
    %c0_49 = arith.constant 0 : index
    %c3_50 = arith.constant 3 : index
    %c0_51 = arith.constant 0 : index
    %c0_52 = arith.constant 0 : index
    %52 = vector.load %arg3[%c0_49, %c3_50, %c0_51, %c0_52] : memref<1x5x64x192xbf16, #tpu.memory_space<vmem>>, vector<1x1x64x192xbf16>
    %53 = vector.shape_cast %52 : vector<1x1x64x192xbf16> to vector<64x192xbf16>
    %cst_53 = arith.constant dense<0.000000e+00> : vector<7x192xf32>
    %54 = tpu.matmul %51, %53, %cst_53 {dimension_numbers = #tpu.dot_dimension_numbers<[1], [0], [0], [1], [0, 0, 1, 1], [], []>} : vector<7x64xbf16>, vector<64x192xbf16>, vector<7x192xf32> -> vector<7x192xf32>
    %55 = arith.addf %50, %54 : vector<7x192xf32>
    %56 = vector.extract_strided_slice %36 {offsets = [4, 0], sizes = [7, 64], strides = [1, 1]} : vector<11x64xbf16> to vector<7x64xbf16>
    %c0_54 = arith.constant 0 : index
    %c4_55 = arith.constant 4 : index
    %c0_56 = arith.constant 0 : index
    %c0_57 = arith.constant 0 : index
    %57 = vector.load %arg3[%c0_54, %c4_55, %c0_56, %c0_57] : memref<1x5x64x192xbf16, #tpu.memory_space<vmem>>, vector<1x1x64x192xbf16>
    %58 = vector.shape_cast %57 : vector<1x1x64x192xbf16> to vector<64x192xbf16>
    %cst_58 = arith.constant dense<0.000000e+00> : vector<7x192xf32>
    %59 = tpu.matmul %56, %58, %cst_58 {dimension_numbers = #tpu.dot_dimension_numbers<[1], [0], [0], [1], [0, 0, 1, 1], [], []>} : vector<7x64xbf16>, vector<64x192xbf16>, vector<7x192xf32> -> vector<7x192xf32>
    %60 = arith.addf %55, %59 : vector<7x192xf32>
    %c1_59 = arith.constant 1 : index
    %c0_60 = arith.constant 0 : index
    %c0_61 = arith.constant 0 : index
    %61 = vector.load %arg6[%c1_59, %c0_60, %c0_61] : memref<2x7x192xf32, #tpu.memory_space<vmem>>, vector<1x7x192xf32>
    %62 = vector.shape_cast %61 : vector<1x7x192xf32> to vector<7x192xf32>
    %63 = arith.addf %62, %60 : vector<7x192xf32>
    %c1_62 = arith.constant 1 : index
    %c0_63 = arith.constant 0 : index
    %c0_64 = arith.constant 0 : index
    %64 = vector.load %arg6[%c1_62, %c0_63, %c0_64] : memref<2x7x192xf32, #tpu.memory_space<vmem>>, vector<1x7x192xf32>
    %65 = vector.shape_cast %64 : vector<1x7x192xf32> to vector<7x192xf32>
    %66 = vector.shape_cast %63 : vector<7x192xf32> to vector<1x7x192xf32>
    tpu.vector_store %arg6[%c1_62, %c0_63, %c0_64], %66 {strides = array<i32>} : memref<2x7x192xf32, #tpu.memory_space<vmem>>, vector<1x7x192xf32>,
    %c4_i32 = arith.constant 4 : i32
    %67 = arith.cmpi eq, %arg1, %c4_i32 : i32
    %68 = arith.extui %67 : i1 to i32
    %c0_i32_65 = arith.constant 0 : i32
    %69 = arith.cmpi ne, %68, %c0_i32_65 : i32
    scf.if %69 {
      %c0_66 = arith.constant 0 : index
      %c0_67 = arith.constant 0 : index
      %c0_68 = arith.constant 0 : index
      %70 = vector.load %arg6[%c0_66, %c0_67, %c0_68] : memref<2x7x192xf32, #tpu.memory_space<vmem>>, vector<2x7x192xf32>
      %c0_69 = arith.constant 0 : index
      %c0_70 = arith.constant 0 : index
      %71 = vector.load %arg4[%c0_69, %c0_70] : memref<1x192xf32, #tpu.memory_space<vmem>>, vector<1x192xf32>
      %72 = vector.shape_cast %71 : vector<1x192xf32> to vector<1x1x192xf32>
      %73 = vector.broadcast %72 : vector<1x1x192xf32> to vector<2x7x192xf32>
      %74 = arith.addf %70, %73 : vector<2x7x192xf32>
      %cst_71 = arith.constant 0.000000e+00 : f32
      %75 = vector.broadcast %cst_71 : f32 to vector<2x7x192xf32>
      %76 = arith.maximumf %74, %75 : vector<2x7x192xf32>
      %77 = arith.truncf %76 : vector<2x7x192xf32> to vector<2x7x192xbf16>
      %c0_72 = arith.constant 0 : index
      %c0_73 = arith.constant 0 : index
      %c0_74 = arith.constant 0 : index
      %c0_75 = arith.constant 0 : index
      %78 = vector.load %arg5[%c0_72, %c0_73, %c0_74, %c0_75] : memref<1x2x7x192xbf16, #tpu.memory_space<vmem>>, vector<1x2x7x192xbf16>
      %79 = vector.shape_cast %78 : vector<1x2x7x192xbf16> to vector<2x7x192xbf16>
      %80 = vector.shape_cast %77 : vector<2x7x192xbf16> to vector<1x2x7x192xbf16>
      tpu.vector_store %arg5[%c0_72, %c0_73, %c0_74, %c0_75], %80 {strides = array<i32>} : memref<1x2x7x192xbf16, #tpu.memory_space<vmem>>, vector<1x2x7x192xbf16>,
    } else {
    }
    return
  }
  func.func @transform_0(%arg0: i32, %arg1: i32) -> (i32, i32, i32, i32) {
    %0 = arith.addi %arg0, %arg1 : i32
    %c0_i32 = arith.constant 0 : i32
    %c0_i32_0 = arith.constant 0 : i32
    %c0_i32_1 = arith.constant 0 : i32
    %c0_i32_2 = arith.constant 0 : i32
    return %0, %c0_i32, %c0_i32_0, %c0_i32_1 : i32, i32, i32, i32
  }
  func.func @transform_1(%arg0: i32, %arg1: i32) -> (i32, i32, i32, i32) {
    %c0_i32 = arith.constant 0 : i32
    %c0_i32_0 = arith.constant 0 : i32
    %c0_i32_1 = arith.constant 0 : i32
    %c0_i32_2 = arith.constant 0 : i32
    return %arg1, %c0_i32, %c0_i32_0, %c0_i32_1 : i32, i32, i32, i32
  }
  func.func @transform_2(%arg0: i32, %arg1: i32) -> (i32, i32) {
    %c0_i32 = arith.constant 0 : i32
    %c0_i32_0 = arith.constant 0 : i32
    %c0_i32_1 = arith.constant 0 : i32
    return %c0_i32, %c0_i32_0 : i32, i32
  }
  func.func @transform_3(%arg0: i32, %arg1: i32) -> (i32, i32, i32, i32) {
    %c0_i32 = arith.constant 0 : i32
    %c0_i32_0 = arith.constant 0 : i32
    %c0_i32_1 = arith.constant 0 : i32
    %c0_i32_2 = arith.constant 0 : i32
    return %arg0, %c0_i32, %c0_i32_0, %c0_i32_1 : i32, i32, i32, i32
  }
}

module attributes {stable_mosaic.version = 11 : i64} {
  func.func @_maxpool_kernel(%arg0: i32, %arg1: memref<1x2x7x192xbf16, #tpu.memory_space<vmem>>, %arg2: memref<1x2x7x192xbf16, #tpu.memory_space<vmem>>, %arg3: memref<1x2x7x192xbf16, #tpu.memory_space<vmem>>, %arg4: memref<1x2x5x192xbf16, #tpu.memory_space<vmem>>) attributes {dimension_semantics = [#tpu.dimension_semantics<parallel>], iteration_bounds = array<i64: 3>, scalar_prefetch = 0 : i64, scratch_operands = 0 : i64, tpu.core_type = #tpu.core_type<tc>, window_params = [{transform_indices = @transform_0, window_bounds = array<i64: 1, 2, 7, 192>}, {transform_indices = @transform_1, window_bounds = array<i64: 1, 2, 7, 192>}, {transform_indices = @transform_2, window_bounds = array<i64: 1, 2, 7, 192>}, {transform_indices = @transform_3, window_bounds = array<i64: 1, 2, 5, 192>}]} {
    %c0 = arith.constant 0 : index
    %c0_0 = arith.constant 0 : index
    %c0_1 = arith.constant 0 : index
    %c0_2 = arith.constant 0 : index
    %0 = vector.load %arg1[%c0, %c0_0, %c0_1, %c0_2] : memref<1x2x7x192xbf16, #tpu.memory_space<vmem>>, vector<1x2x7x192xbf16>
    %1 = vector.shape_cast %0 : vector<1x2x7x192xbf16> to vector<2x7x192xbf16>
    %c0_3 = arith.constant 0 : index
    %c0_4 = arith.constant 0 : index
    %c0_5 = arith.constant 0 : index
    %c0_6 = arith.constant 0 : index
    %2 = vector.load %arg2[%c0_3, %c0_4, %c0_5, %c0_6] : memref<1x2x7x192xbf16, #tpu.memory_space<vmem>>, vector<1x2x7x192xbf16>
    %3 = vector.shape_cast %2 : vector<1x2x7x192xbf16> to vector<2x7x192xbf16>
    %4 = arith.maximumf %1, %3 : vector<2x7x192xbf16>
    %c0_7 = arith.constant 0 : index
    %c0_8 = arith.constant 0 : index
    %c0_9 = arith.constant 0 : index
    %c0_10 = arith.constant 0 : index
    %5 = vector.load %arg3[%c0_7, %c0_8, %c0_9, %c0_10] : memref<1x2x7x192xbf16, #tpu.memory_space<vmem>>, vector<1x2x7x192xbf16>
    %6 = vector.shape_cast %5 : vector<1x2x7x192xbf16> to vector<2x7x192xbf16>
    %7 = arith.maximumf %4, %6 : vector<2x7x192xbf16>
    %8 = vector.extract_strided_slice %7 {offsets = [0, 0, 0], sizes = [2, 5, 192], strides = [1, 1, 1]} : vector<2x7x192xbf16> to vector<2x5x192xbf16>
    %9 = vector.extract_strided_slice %7 {offsets = [0, 1, 0], sizes = [2, 5, 192], strides = [1, 1, 1]} : vector<2x7x192xbf16> to vector<2x5x192xbf16>
    %10 = arith.maximumf %8, %9 : vector<2x5x192xbf16>
    %11 = vector.extract_strided_slice %7 {offsets = [0, 2, 0], sizes = [2, 5, 192], strides = [1, 1, 1]} : vector<2x7x192xbf16> to vector<2x5x192xbf16>
    %12 = arith.maximumf %10, %11 : vector<2x5x192xbf16>
    %c0_11 = arith.constant 0 : index
    %c0_12 = arith.constant 0 : index
    %c0_13 = arith.constant 0 : index
    %c0_14 = arith.constant 0 : index
    %13 = vector.load %arg4[%c0_11, %c0_12, %c0_13, %c0_14] : memref<1x2x5x192xbf16, #tpu.memory_space<vmem>>, vector<1x2x5x192xbf16>
    %14 = vector.shape_cast %13 : vector<1x2x5x192xbf16> to vector<2x5x192xbf16>
    %15 = vector.shape_cast %12 : vector<2x5x192xbf16> to vector<1x2x5x192xbf16>
    tpu.vector_store %arg4[%c0_11, %c0_12, %c0_13, %c0_14], %15 {strides = array<i32>} : memref<1x2x5x192xbf16, #tpu.memory_space<vmem>>, vector<1x2x5x192xbf16>,
    return
  }
  func.func @transform_0(%arg0: i32) -> (i32, i32, i32, i32) {
    %c2_i32 = arith.constant 2 : i32
    %0 = arith.muli %c2_i32, %arg0 : i32
    %c0_i32 = arith.constant 0 : i32
    %1 = arith.addi %0, %c0_i32 : i32
    %c0_i32_0 = arith.constant 0 : i32
    %c0_i32_1 = arith.constant 0 : i32
    %c0_i32_2 = arith.constant 0 : i32
    %c0_i32_3 = arith.constant 0 : i32
    return %1, %c0_i32_0, %c0_i32_1, %c0_i32_2 : i32, i32, i32, i32
  }
  func.func @transform_1(%arg0: i32) -> (i32, i32, i32, i32) {
    %c2_i32 = arith.constant 2 : i32
    %0 = arith.muli %c2_i32, %arg0 : i32
    %c1_i32 = arith.constant 1 : i32
    %1 = arith.addi %0, %c1_i32 : i32
    %c0_i32 = arith.constant 0 : i32
    %c0_i32_0 = arith.constant 0 : i32
    %c0_i32_1 = arith.constant 0 : i32
    %c0_i32_2 = arith.constant 0 : i32
    return %1, %c0_i32, %c0_i32_0, %c0_i32_1 : i32, i32, i32, i32
  }
  func.func @transform_2(%arg0: i32) -> (i32, i32, i32, i32) {
    %c2_i32 = arith.constant 2 : i32
    %0 = arith.muli %c2_i32, %arg0 : i32
    %c2_i32_0 = arith.constant 2 : i32
    %1 = arith.addi %0, %c2_i32_0 : i32
    %c0_i32 = arith.constant 0 : i32
    %c0_i32_1 = arith.constant 0 : i32
    %c0_i32_2 = arith.constant 0 : i32
    %c0_i32_3 = arith.constant 0 : i32
    return %1, %c0_i32, %c0_i32_1, %c0_i32_2 : i32, i32, i32, i32
  }
  func.func @transform_3(%arg0: i32) -> (i32, i32, i32, i32) {
    %c0_i32 = arith.constant 0 : i32
    %c0_i32_0 = arith.constant 0 : i32
    %c0_i32_1 = arith.constant 0 : i32
    %c0_i32_2 = arith.constant 0 : i32
    return %arg0, %c0_i32, %c0_i32_0, %c0_i32_1 : i32, i32, i32, i32
  }
}

module attributes {stable_mosaic.version = 11 : i64} {
  func.func @_conv_stride1_kernel(%arg0: i32, %arg1: i32, %arg2: memref<1x2x5x192xbf16, #tpu.memory_space<vmem>>, %arg3: memref<1x3x192x384xbf16, #tpu.memory_space<vmem>>, %arg4: memref<1x384xf32, #tpu.memory_space<vmem>>, %arg5: memref<1x2x3x384xbf16, #tpu.memory_space<vmem>>, %arg6: memref<2x3x384xf32, #tpu.memory_space<vmem>>) attributes {dimension_semantics = [#tpu.dimension_semantics<parallel>, #tpu.dimension_semantics<arbitrary>], iteration_bounds = array<i64: 3, 3>, scalar_prefetch = 0 : i64, scratch_operands = 1 : i64, tpu.core_type = #tpu.core_type<tc>, window_params = [{transform_indices = @transform_0, window_bounds = array<i64: 1, 2, 5, 192>}, {transform_indices = @transform_1, window_bounds = array<i64: 1, 3, 192, 384>}, {pipeline_mode = #tpu.pipeline_mode<synchronous>, transform_indices = @transform_2, window_bounds = array<i64: 1, 384>}, {transform_indices = @transform_3, window_bounds = array<i64: 1, 2, 3, 384>}]} {
    %c0_i32 = arith.constant 0 : i32
    %0 = arith.cmpi eq, %arg1, %c0_i32 : i32
    %1 = arith.extui %0 : i1 to i32
    %c0_i32_0 = arith.constant 0 : i32
    %2 = arith.cmpi ne, %1, %c0_i32_0 : i32
    scf.if %2 {
      %cst_48 = arith.constant 0.000000e+00 : f32
      %50 = vector.broadcast %cst_48 : f32 to vector<2x3x384xf32>
      %c0_49 = arith.constant 0 : index
      %c0_50 = arith.constant 0 : index
      %c0_51 = arith.constant 0 : index
      %51 = vector.load %arg6[%c0_49, %c0_50, %c0_51] : memref<2x3x384xf32, #tpu.memory_space<vmem>>, vector<2x3x384xf32>
      tpu.vector_store %arg6[%c0_49, %c0_50, %c0_51], %50 {strides = array<i32>} : memref<2x3x384xf32, #tpu.memory_space<vmem>>, vector<2x3x384xf32>,
    } else {
    }
    %c0 = arith.constant 0 : index
    %c0_1 = arith.constant 0 : index
    %c0_2 = arith.constant 0 : index
    %c0_3 = arith.constant 0 : index
    %3 = vector.load %arg2[%c0, %c0_1, %c0_2, %c0_3] : memref<1x2x5x192xbf16, #tpu.memory_space<vmem>>, vector<1x1x5x192xbf16>
    %4 = vector.shape_cast %3 : vector<1x1x5x192xbf16> to vector<5x192xbf16>
    %5 = vector.extract_strided_slice %4 {offsets = [0, 0], sizes = [3, 192], strides = [1, 1]} : vector<5x192xbf16> to vector<3x192xbf16>
    %c0_4 = arith.constant 0 : index
    %c0_5 = arith.constant 0 : index
    %c0_6 = arith.constant 0 : index
    %c0_7 = arith.constant 0 : index
    %6 = vector.load %arg3[%c0_4, %c0_5, %c0_6, %c0_7] : memref<1x3x192x384xbf16, #tpu.memory_space<vmem>>, vector<1x1x192x384xbf16>
    %7 = vector.shape_cast %6 : vector<1x1x192x384xbf16> to vector<192x384xbf16>
    %cst = arith.constant dense<0.000000e+00> : vector<3x384xf32>
    %8 = tpu.matmul %5, %7, %cst {dimension_numbers = #tpu.dot_dimension_numbers<[1], [0], [0], [1], [0, 0, 1, 1], [], []>} : vector<3x192xbf16>, vector<192x384xbf16>, vector<3x384xf32> -> vector<3x384xf32>
    %9 = vector.extract_strided_slice %4 {offsets = [1, 0], sizes = [3, 192], strides = [1, 1]} : vector<5x192xbf16> to vector<3x192xbf16>
    %c0_8 = arith.constant 0 : index
    %c1 = arith.constant 1 : index
    %c0_9 = arith.constant 0 : index
    %c0_10 = arith.constant 0 : index
    %10 = vector.load %arg3[%c0_8, %c1, %c0_9, %c0_10] : memref<1x3x192x384xbf16, #tpu.memory_space<vmem>>, vector<1x1x192x384xbf16>
    %11 = vector.shape_cast %10 : vector<1x1x192x384xbf16> to vector<192x384xbf16>
    %cst_11 = arith.constant dense<0.000000e+00> : vector<3x384xf32>
    %12 = tpu.matmul %9, %11, %cst_11 {dimension_numbers = #tpu.dot_dimension_numbers<[1], [0], [0], [1], [0, 0, 1, 1], [], []>} : vector<3x192xbf16>, vector<192x384xbf16>, vector<3x384xf32> -> vector<3x384xf32>
    %13 = arith.addf %8, %12 : vector<3x384xf32>
    %14 = vector.extract_strided_slice %4 {offsets = [2, 0], sizes = [3, 192], strides = [1, 1]} : vector<5x192xbf16> to vector<3x192xbf16>
    %c0_12 = arith.constant 0 : index
    %c2 = arith.constant 2 : index
    %c0_13 = arith.constant 0 : index
    %c0_14 = arith.constant 0 : index
    %15 = vector.load %arg3[%c0_12, %c2, %c0_13, %c0_14] : memref<1x3x192x384xbf16, #tpu.memory_space<vmem>>, vector<1x1x192x384xbf16>
    %16 = vector.shape_cast %15 : vector<1x1x192x384xbf16> to vector<192x384xbf16>
    %cst_15 = arith.constant dense<0.000000e+00> : vector<3x384xf32>
    %17 = tpu.matmul %14, %16, %cst_15 {dimension_numbers = #tpu.dot_dimension_numbers<[1], [0], [0], [1], [0, 0, 1, 1], [], []>} : vector<3x192xbf16>, vector<192x384xbf16>, vector<3x384xf32> -> vector<3x384xf32>
    %18 = arith.addf %13, %17 : vector<3x384xf32>
    %c0_16 = arith.constant 0 : index
    %c0_17 = arith.constant 0 : index
    %c0_18 = arith.constant 0 : index
    %19 = vector.load %arg6[%c0_16, %c0_17, %c0_18] : memref<2x3x384xf32, #tpu.memory_space<vmem>>, vector<1x3x384xf32>
    %20 = vector.shape_cast %19 : vector<1x3x384xf32> to vector<3x384xf32>
    %21 = arith.addf %20, %18 : vector<3x384xf32>
    %c0_19 = arith.constant 0 : index
    %c0_20 = arith.constant 0 : index
    %c0_21 = arith.constant 0 : index
    %22 = vector.load %arg6[%c0_19, %c0_20, %c0_21] : memref<2x3x384xf32, #tpu.memory_space<vmem>>, vector<1x3x384xf32>
    %23 = vector.shape_cast %22 : vector<1x3x384xf32> to vector<3x384xf32>
    %24 = vector.shape_cast %21 : vector<3x384xf32> to vector<1x3x384xf32>
    tpu.vector_store %arg6[%c0_19, %c0_20, %c0_21], %24 {strides = array<i32>} : memref<2x3x384xf32, #tpu.memory_space<vmem>>, vector<1x3x384xf32>,
    %c0_22 = arith.constant 0 : index
    %c1_23 = arith.constant 1 : index
    %c0_24 = arith.constant 0 : index
    %c0_25 = arith.constant 0 : index
    %25 = vector.load %arg2[%c0_22, %c1_23, %c0_24, %c0_25] : memref<1x2x5x192xbf16, #tpu.memory_space<vmem>>, vector<1x1x5x192xbf16>
    %26 = vector.shape_cast %25 : vector<1x1x5x192xbf16> to vector<5x192xbf16>
    %27 = vector.extract_strided_slice %26 {offsets = [0, 0], sizes = [3, 192], strides = [1, 1]} : vector<5x192xbf16> to vector<3x192xbf16>
    %c0_26 = arith.constant 0 : index
    %c0_27 = arith.constant 0 : index
    %c0_28 = arith.constant 0 : index
    %c0_29 = arith.constant 0 : index
    %28 = vector.load %arg3[%c0_26, %c0_27, %c0_28, %c0_29] : memref<1x3x192x384xbf16, #tpu.memory_space<vmem>>, vector<1x1x192x384xbf16>
    %29 = vector.shape_cast %28 : vector<1x1x192x384xbf16> to vector<192x384xbf16>
    %cst_30 = arith.constant dense<0.000000e+00> : vector<3x384xf32>
    %30 = tpu.matmul %27, %29, %cst_30 {dimension_numbers = #tpu.dot_dimension_numbers<[1], [0], [0], [1], [0, 0, 1, 1], [], []>} : vector<3x192xbf16>, vector<192x384xbf16>, vector<3x384xf32> -> vector<3x384xf32>
    %31 = vector.extract_strided_slice %26 {offsets = [1, 0], sizes = [3, 192], strides = [1, 1]} : vector<5x192xbf16> to vector<3x192xbf16>
    %c0_31 = arith.constant 0 : index
    %c1_32 = arith.constant 1 : index
    %c0_33 = arith.constant 0 : index
    %c0_34 = arith.constant 0 : index
    %32 = vector.load %arg3[%c0_31, %c1_32, %c0_33, %c0_34] : memref<1x3x192x384xbf16, #tpu.memory_space<vmem>>, vector<1x1x192x384xbf16>
    %33 = vector.shape_cast %32 : vector<1x1x192x384xbf16> to vector<192x384xbf16>
    %cst_35 = arith.constant dense<0.000000e+00> : vector<3x384xf32>
    %34 = tpu.matmul %31, %33, %cst_35 {dimension_numbers = #tpu.dot_dimension_numbers<[1], [0], [0], [1], [0, 0, 1, 1], [], []>} : vector<3x192xbf16>, vector<192x384xbf16>, vector<3x384xf32> -> vector<3x384xf32>
    %35 = arith.addf %30, %34 : vector<3x384xf32>
    %36 = vector.extract_strided_slice %26 {offsets = [2, 0], sizes = [3, 192], strides = [1, 1]} : vector<5x192xbf16> to vector<3x192xbf16>
    %c0_36 = arith.constant 0 : index
    %c2_37 = arith.constant 2 : index
    %c0_38 = arith.constant 0 : index
    %c0_39 = arith.constant 0 : index
    %37 = vector.load %arg3[%c0_36, %c2_37, %c0_38, %c0_39] : memref<1x3x192x384xbf16, #tpu.memory_space<vmem>>, vector<1x1x192x384xbf16>
    %38 = vector.shape_cast %37 : vector<1x1x192x384xbf16> to vector<192x384xbf16>
    %cst_40 = arith.constant dense<0.000000e+00> : vector<3x384xf32>
    %39 = tpu.matmul %36, %38, %cst_40 {dimension_numbers = #tpu.dot_dimension_numbers<[1], [0], [0], [1], [0, 0, 1, 1], [], []>} : vector<3x192xbf16>, vector<192x384xbf16>, vector<3x384xf32> -> vector<3x384xf32>
    %40 = arith.addf %35, %39 : vector<3x384xf32>
    %c1_41 = arith.constant 1 : index
    %c0_42 = arith.constant 0 : index
    %c0_43 = arith.constant 0 : index
    %41 = vector.load %arg6[%c1_41, %c0_42, %c0_43] : memref<2x3x384xf32, #tpu.memory_space<vmem>>, vector<1x3x384xf32>
    %42 = vector.shape_cast %41 : vector<1x3x384xf32> to vector<3x384xf32>
    %43 = arith.addf %42, %40 : vector<3x384xf32>
    %c1_44 = arith.constant 1 : index
    %c0_45 = arith.constant 0 : index
    %c0_46 = arith.constant 0 : index
    %44 = vector.load %arg6[%c1_44, %c0_45, %c0_46] : memref<2x3x384xf32, #tpu.memory_space<vmem>>, vector<1x3x384xf32>
    %45 = vector.shape_cast %44 : vector<1x3x384xf32> to vector<3x384xf32>
    %46 = vector.shape_cast %43 : vector<3x384xf32> to vector<1x3x384xf32>
    tpu.vector_store %arg6[%c1_44, %c0_45, %c0_46], %46 {strides = array<i32>} : memref<2x3x384xf32, #tpu.memory_space<vmem>>, vector<1x3x384xf32>,
    %c2_i32 = arith.constant 2 : i32
    %47 = arith.cmpi eq, %arg1, %c2_i32 : i32
    %48 = arith.extui %47 : i1 to i32
    %c0_i32_47 = arith.constant 0 : i32
    %49 = arith.cmpi ne, %48, %c0_i32_47 : i32
    scf.if %49 {
      %c0_48 = arith.constant 0 : index
      %c0_49 = arith.constant 0 : index
      %c0_50 = arith.constant 0 : index
      %50 = vector.load %arg6[%c0_48, %c0_49, %c0_50] : memref<2x3x384xf32, #tpu.memory_space<vmem>>, vector<2x3x384xf32>
      %c0_51 = arith.constant 0 : index
      %c0_52 = arith.constant 0 : index
      %51 = vector.load %arg4[%c0_51, %c0_52] : memref<1x384xf32, #tpu.memory_space<vmem>>, vector<1x384xf32>
      %52 = vector.shape_cast %51 : vector<1x384xf32> to vector<1x1x384xf32>
      %53 = vector.broadcast %52 : vector<1x1x384xf32> to vector<2x3x384xf32>
      %54 = arith.addf %50, %53 : vector<2x3x384xf32>
      %cst_53 = arith.constant 0.000000e+00 : f32
      %55 = vector.broadcast %cst_53 : f32 to vector<2x3x384xf32>
      %56 = arith.maximumf %54, %55 : vector<2x3x384xf32>
      %57 = arith.truncf %56 : vector<2x3x384xf32> to vector<2x3x384xbf16>
      %c0_54 = arith.constant 0 : index
      %c0_55 = arith.constant 0 : index
      %c0_56 = arith.constant 0 : index
      %c0_57 = arith.constant 0 : index
      %58 = vector.load %arg5[%c0_54, %c0_55, %c0_56, %c0_57] : memref<1x2x3x384xbf16, #tpu.memory_space<vmem>>, vector<1x2x3x384xbf16>
      %59 = vector.shape_cast %58 : vector<1x2x3x384xbf16> to vector<2x3x384xbf16>
      %60 = vector.shape_cast %57 : vector<2x3x384xbf16> to vector<1x2x3x384xbf16>
      tpu.vector_store %arg5[%c0_54, %c0_55, %c0_56, %c0_57], %60 {strides = array<i32>} : memref<1x2x3x384xbf16, #tpu.memory_space<vmem>>, vector<1x2x3x384xbf16>,
    } else {
    }
    return
  }
  func.func @transform_0(%arg0: i32, %arg1: i32) -> (i32, i32, i32, i32) {
    %0 = arith.addi %arg0, %arg1 : i32
    %c0_i32 = arith.constant 0 : i32
    %c0_i32_0 = arith.constant 0 : i32
    %c0_i32_1 = arith.constant 0 : i32
    %c0_i32_2 = arith.constant 0 : i32
    return %0, %c0_i32, %c0_i32_0, %c0_i32_1 : i32, i32, i32, i32
  }
  func.func @transform_1(%arg0: i32, %arg1: i32) -> (i32, i32, i32, i32) {
    %c0_i32 = arith.constant 0 : i32
    %c0_i32_0 = arith.constant 0 : i32
    %c0_i32_1 = arith.constant 0 : i32
    %c0_i32_2 = arith.constant 0 : i32
    return %arg1, %c0_i32, %c0_i32_0, %c0_i32_1 : i32, i32, i32, i32
  }
  func.func @transform_2(%arg0: i32, %arg1: i32) -> (i32, i32) {
    %c0_i32 = arith.constant 0 : i32
    %c0_i32_0 = arith.constant 0 : i32
    %c0_i32_1 = arith.constant 0 : i32
    return %c0_i32, %c0_i32_0 : i32, i32
  }
  func.func @transform_3(%arg0: i32, %arg1: i32) -> (i32, i32, i32, i32) {
    %c0_i32 = arith.constant 0 : i32
    %c0_i32_0 = arith.constant 0 : i32
    %c0_i32_1 = arith.constant 0 : i32
    %c0_i32_2 = arith.constant 0 : i32
    return %arg0, %c0_i32, %c0_i32_0, %c0_i32_1 : i32, i32, i32, i32
  }
}

module attributes {stable_mosaic.version = 11 : i64} {
  func.func @_conv_stride1_kernel(%arg0: i32, %arg1: i32, %arg2: memref<1x2x5x384xbf16, #tpu.memory_space<vmem>>, %arg3: memref<1x3x384x256xbf16, #tpu.memory_space<vmem>>, %arg4: memref<1x256xf32, #tpu.memory_space<vmem>>, %arg5: memref<1x2x3x256xbf16, #tpu.memory_space<vmem>>, %arg6: memref<2x3x256xf32, #tpu.memory_space<vmem>>) attributes {dimension_semantics = [#tpu.dimension_semantics<parallel>, #tpu.dimension_semantics<arbitrary>], iteration_bounds = array<i64: 3, 3>, scalar_prefetch = 0 : i64, scratch_operands = 1 : i64, tpu.core_type = #tpu.core_type<tc>, window_params = [{transform_indices = @transform_0, window_bounds = array<i64: 1, 2, 5, 384>}, {transform_indices = @transform_1, window_bounds = array<i64: 1, 3, 384, 256>}, {pipeline_mode = #tpu.pipeline_mode<synchronous>, transform_indices = @transform_2, window_bounds = array<i64: 1, 256>}, {transform_indices = @transform_3, window_bounds = array<i64: 1, 2, 3, 256>}]} {
    %c0_i32 = arith.constant 0 : i32
    %0 = arith.cmpi eq, %arg1, %c0_i32 : i32
    %1 = arith.extui %0 : i1 to i32
    %c0_i32_0 = arith.constant 0 : i32
    %2 = arith.cmpi ne, %1, %c0_i32_0 : i32
    scf.if %2 {
      %cst_48 = arith.constant 0.000000e+00 : f32
      %50 = vector.broadcast %cst_48 : f32 to vector<2x3x256xf32>
      %c0_49 = arith.constant 0 : index
      %c0_50 = arith.constant 0 : index
      %c0_51 = arith.constant 0 : index
      %51 = vector.load %arg6[%c0_49, %c0_50, %c0_51] : memref<2x3x256xf32, #tpu.memory_space<vmem>>, vector<2x3x256xf32>
      tpu.vector_store %arg6[%c0_49, %c0_50, %c0_51], %50 {strides = array<i32>} : memref<2x3x256xf32, #tpu.memory_space<vmem>>, vector<2x3x256xf32>,
    } else {
    }
    %c0 = arith.constant 0 : index
    %c0_1 = arith.constant 0 : index
    %c0_2 = arith.constant 0 : index
    %c0_3 = arith.constant 0 : index
    %3 = vector.load %arg2[%c0, %c0_1, %c0_2, %c0_3] : memref<1x2x5x384xbf16, #tpu.memory_space<vmem>>, vector<1x1x5x384xbf16>
    %4 = vector.shape_cast %3 : vector<1x1x5x384xbf16> to vector<5x384xbf16>
    %5 = vector.extract_strided_slice %4 {offsets = [0, 0], sizes = [3, 384], strides = [1, 1]} : vector<5x384xbf16> to vector<3x384xbf16>
    %c0_4 = arith.constant 0 : index
    %c0_5 = arith.constant 0 : index
    %c0_6 = arith.constant 0 : index
    %c0_7 = arith.constant 0 : index
    %6 = vector.load %arg3[%c0_4, %c0_5, %c0_6, %c0_7] : memref<1x3x384x256xbf16, #tpu.memory_space<vmem>>, vector<1x1x384x256xbf16>
    %7 = vector.shape_cast %6 : vector<1x1x384x256xbf16> to vector<384x256xbf16>
    %cst = arith.constant dense<0.000000e+00> : vector<3x256xf32>
    %8 = tpu.matmul %5, %7, %cst {dimension_numbers = #tpu.dot_dimension_numbers<[1], [0], [0], [1], [0, 0, 1, 1], [], []>} : vector<3x384xbf16>, vector<384x256xbf16>, vector<3x256xf32> -> vector<3x256xf32>
    %9 = vector.extract_strided_slice %4 {offsets = [1, 0], sizes = [3, 384], strides = [1, 1]} : vector<5x384xbf16> to vector<3x384xbf16>
    %c0_8 = arith.constant 0 : index
    %c1 = arith.constant 1 : index
    %c0_9 = arith.constant 0 : index
    %c0_10 = arith.constant 0 : index
    %10 = vector.load %arg3[%c0_8, %c1, %c0_9, %c0_10] : memref<1x3x384x256xbf16, #tpu.memory_space<vmem>>, vector<1x1x384x256xbf16>
    %11 = vector.shape_cast %10 : vector<1x1x384x256xbf16> to vector<384x256xbf16>
    %cst_11 = arith.constant dense<0.000000e+00> : vector<3x256xf32>
    %12 = tpu.matmul %9, %11, %cst_11 {dimension_numbers = #tpu.dot_dimension_numbers<[1], [0], [0], [1], [0, 0, 1, 1], [], []>} : vector<3x384xbf16>, vector<384x256xbf16>, vector<3x256xf32> -> vector<3x256xf32>
    %13 = arith.addf %8, %12 : vector<3x256xf32>
    %14 = vector.extract_strided_slice %4 {offsets = [2, 0], sizes = [3, 384], strides = [1, 1]} : vector<5x384xbf16> to vector<3x384xbf16>
    %c0_12 = arith.constant 0 : index
    %c2 = arith.constant 2 : index
    %c0_13 = arith.constant 0 : index
    %c0_14 = arith.constant 0 : index
    %15 = vector.load %arg3[%c0_12, %c2, %c0_13, %c0_14] : memref<1x3x384x256xbf16, #tpu.memory_space<vmem>>, vector<1x1x384x256xbf16>
    %16 = vector.shape_cast %15 : vector<1x1x384x256xbf16> to vector<384x256xbf16>
    %cst_15 = arith.constant dense<0.000000e+00> : vector<3x256xf32>
    %17 = tpu.matmul %14, %16, %cst_15 {dimension_numbers = #tpu.dot_dimension_numbers<[1], [0], [0], [1], [0, 0, 1, 1], [], []>} : vector<3x384xbf16>, vector<384x256xbf16>, vector<3x256xf32> -> vector<3x256xf32>
    %18 = arith.addf %13, %17 : vector<3x256xf32>
    %c0_16 = arith.constant 0 : index
    %c0_17 = arith.constant 0 : index
    %c0_18 = arith.constant 0 : index
    %19 = vector.load %arg6[%c0_16, %c0_17, %c0_18] : memref<2x3x256xf32, #tpu.memory_space<vmem>>, vector<1x3x256xf32>
    %20 = vector.shape_cast %19 : vector<1x3x256xf32> to vector<3x256xf32>
    %21 = arith.addf %20, %18 : vector<3x256xf32>
    %c0_19 = arith.constant 0 : index
    %c0_20 = arith.constant 0 : index
    %c0_21 = arith.constant 0 : index
    %22 = vector.load %arg6[%c0_19, %c0_20, %c0_21] : memref<2x3x256xf32, #tpu.memory_space<vmem>>, vector<1x3x256xf32>
    %23 = vector.shape_cast %22 : vector<1x3x256xf32> to vector<3x256xf32>
    %24 = vector.shape_cast %21 : vector<3x256xf32> to vector<1x3x256xf32>
    tpu.vector_store %arg6[%c0_19, %c0_20, %c0_21], %24 {strides = array<i32>} : memref<2x3x256xf32, #tpu.memory_space<vmem>>, vector<1x3x256xf32>,
    %c0_22 = arith.constant 0 : index
    %c1_23 = arith.constant 1 : index
    %c0_24 = arith.constant 0 : index
    %c0_25 = arith.constant 0 : index
    %25 = vector.load %arg2[%c0_22, %c1_23, %c0_24, %c0_25] : memref<1x2x5x384xbf16, #tpu.memory_space<vmem>>, vector<1x1x5x384xbf16>
    %26 = vector.shape_cast %25 : vector<1x1x5x384xbf16> to vector<5x384xbf16>
    %27 = vector.extract_strided_slice %26 {offsets = [0, 0], sizes = [3, 384], strides = [1, 1]} : vector<5x384xbf16> to vector<3x384xbf16>
    %c0_26 = arith.constant 0 : index
    %c0_27 = arith.constant 0 : index
    %c0_28 = arith.constant 0 : index
    %c0_29 = arith.constant 0 : index
    %28 = vector.load %arg3[%c0_26, %c0_27, %c0_28, %c0_29] : memref<1x3x384x256xbf16, #tpu.memory_space<vmem>>, vector<1x1x384x256xbf16>
    %29 = vector.shape_cast %28 : vector<1x1x384x256xbf16> to vector<384x256xbf16>
    %cst_30 = arith.constant dense<0.000000e+00> : vector<3x256xf32>
    %30 = tpu.matmul %27, %29, %cst_30 {dimension_numbers = #tpu.dot_dimension_numbers<[1], [0], [0], [1], [0, 0, 1, 1], [], []>} : vector<3x384xbf16>, vector<384x256xbf16>, vector<3x256xf32> -> vector<3x256xf32>
    %31 = vector.extract_strided_slice %26 {offsets = [1, 0], sizes = [3, 384], strides = [1, 1]} : vector<5x384xbf16> to vector<3x384xbf16>
    %c0_31 = arith.constant 0 : index
    %c1_32 = arith.constant 1 : index
    %c0_33 = arith.constant 0 : index
    %c0_34 = arith.constant 0 : index
    %32 = vector.load %arg3[%c0_31, %c1_32, %c0_33, %c0_34] : memref<1x3x384x256xbf16, #tpu.memory_space<vmem>>, vector<1x1x384x256xbf16>
    %33 = vector.shape_cast %32 : vector<1x1x384x256xbf16> to vector<384x256xbf16>
    %cst_35 = arith.constant dense<0.000000e+00> : vector<3x256xf32>
    %34 = tpu.matmul %31, %33, %cst_35 {dimension_numbers = #tpu.dot_dimension_numbers<[1], [0], [0], [1], [0, 0, 1, 1], [], []>} : vector<3x384xbf16>, vector<384x256xbf16>, vector<3x256xf32> -> vector<3x256xf32>
    %35 = arith.addf %30, %34 : vector<3x256xf32>
    %36 = vector.extract_strided_slice %26 {offsets = [2, 0], sizes = [3, 384], strides = [1, 1]} : vector<5x384xbf16> to vector<3x384xbf16>
    %c0_36 = arith.constant 0 : index
    %c2_37 = arith.constant 2 : index
    %c0_38 = arith.constant 0 : index
    %c0_39 = arith.constant 0 : index
    %37 = vector.load %arg3[%c0_36, %c2_37, %c0_38, %c0_39] : memref<1x3x384x256xbf16, #tpu.memory_space<vmem>>, vector<1x1x384x256xbf16>
    %38 = vector.shape_cast %37 : vector<1x1x384x256xbf16> to vector<384x256xbf16>
    %cst_40 = arith.constant dense<0.000000e+00> : vector<3x256xf32>
    %39 = tpu.matmul %36, %38, %cst_40 {dimension_numbers = #tpu.dot_dimension_numbers<[1], [0], [0], [1], [0, 0, 1, 1], [], []>} : vector<3x384xbf16>, vector<384x256xbf16>, vector<3x256xf32> -> vector<3x256xf32>
    %40 = arith.addf %35, %39 : vector<3x256xf32>
    %c1_41 = arith.constant 1 : index
    %c0_42 = arith.constant 0 : index
    %c0_43 = arith.constant 0 : index
    %41 = vector.load %arg6[%c1_41, %c0_42, %c0_43] : memref<2x3x256xf32, #tpu.memory_space<vmem>>, vector<1x3x256xf32>
    %42 = vector.shape_cast %41 : vector<1x3x256xf32> to vector<3x256xf32>
    %43 = arith.addf %42, %40 : vector<3x256xf32>
    %c1_44 = arith.constant 1 : index
    %c0_45 = arith.constant 0 : index
    %c0_46 = arith.constant 0 : index
    %44 = vector.load %arg6[%c1_44, %c0_45, %c0_46] : memref<2x3x256xf32, #tpu.memory_space<vmem>>, vector<1x3x256xf32>
    %45 = vector.shape_cast %44 : vector<1x3x256xf32> to vector<3x256xf32>
    %46 = vector.shape_cast %43 : vector<3x256xf32> to vector<1x3x256xf32>
    tpu.vector_store %arg6[%c1_44, %c0_45, %c0_46], %46 {strides = array<i32>} : memref<2x3x256xf32, #tpu.memory_space<vmem>>, vector<1x3x256xf32>,
    %c2_i32 = arith.constant 2 : i32
    %47 = arith.cmpi eq, %arg1, %c2_i32 : i32
    %48 = arith.extui %47 : i1 to i32
    %c0_i32_47 = arith.constant 0 : i32
    %49 = arith.cmpi ne, %48, %c0_i32_47 : i32
    scf.if %49 {
      %c0_48 = arith.constant 0 : index
      %c0_49 = arith.constant 0 : index
      %c0_50 = arith.constant 0 : index
      %50 = vector.load %arg6[%c0_48, %c0_49, %c0_50] : memref<2x3x256xf32, #tpu.memory_space<vmem>>, vector<2x3x256xf32>
      %c0_51 = arith.constant 0 : index
      %c0_52 = arith.constant 0 : index
      %51 = vector.load %arg4[%c0_51, %c0_52] : memref<1x256xf32, #tpu.memory_space<vmem>>, vector<1x256xf32>
      %52 = vector.shape_cast %51 : vector<1x256xf32> to vector<1x1x256xf32>
      %53 = vector.broadcast %52 : vector<1x1x256xf32> to vector<2x3x256xf32>
      %54 = arith.addf %50, %53 : vector<2x3x256xf32>
      %cst_53 = arith.constant 0.000000e+00 : f32
      %55 = vector.broadcast %cst_53 : f32 to vector<2x3x256xf32>
      %56 = arith.maximumf %54, %55 : vector<2x3x256xf32>
      %57 = arith.truncf %56 : vector<2x3x256xf32> to vector<2x3x256xbf16>
      %c0_54 = arith.constant 0 : index
      %c0_55 = arith.constant 0 : index
      %c0_56 = arith.constant 0 : index
      %c0_57 = arith.constant 0 : index
      %58 = vector.load %arg5[%c0_54, %c0_55, %c0_56, %c0_57] : memref<1x2x3x256xbf16, #tpu.memory_space<vmem>>, vector<1x2x3x256xbf16>
      %59 = vector.shape_cast %58 : vector<1x2x3x256xbf16> to vector<2x3x256xbf16>
      %60 = vector.shape_cast %57 : vector<2x3x256xbf16> to vector<1x2x3x256xbf16>
      tpu.vector_store %arg5[%c0_54, %c0_55, %c0_56, %c0_57], %60 {strides = array<i32>} : memref<1x2x3x256xbf16, #tpu.memory_space<vmem>>, vector<1x2x3x256xbf16>,
    } else {
    }
    return
  }
  func.func @transform_0(%arg0: i32, %arg1: i32) -> (i32, i32, i32, i32) {
    %0 = arith.addi %arg0, %arg1 : i32
    %c0_i32 = arith.constant 0 : i32
    %c0_i32_0 = arith.constant 0 : i32
    %c0_i32_1 = arith.constant 0 : i32
    %c0_i32_2 = arith.constant 0 : i32
    return %0, %c0_i32, %c0_i32_0, %c0_i32_1 : i32, i32, i32, i32
  }
  func.func @transform_1(%arg0: i32, %arg1: i32) -> (i32, i32, i32, i32) {
    %c0_i32 = arith.constant 0 : i32
    %c0_i32_0 = arith.constant 0 : i32
    %c0_i32_1 = arith.constant 0 : i32
    %c0_i32_2 = arith.constant 0 : i32
    return %arg1, %c0_i32, %c0_i32_0, %c0_i32_1 : i32, i32, i32, i32
  }
  func.func @transform_2(%arg0: i32, %arg1: i32) -> (i32, i32) {
    %c0_i32 = arith.constant 0 : i32
    %c0_i32_0 = arith.constant 0 : i32
    %c0_i32_1 = arith.constant 0 : i32
    return %c0_i32, %c0_i32_0 : i32, i32
  }
  func.func @transform_3(%arg0: i32, %arg1: i32) -> (i32, i32, i32, i32) {
    %c0_i32 = arith.constant 0 : i32
    %c0_i32_0 = arith.constant 0 : i32
    %c0_i32_1 = arith.constant 0 : i32
    %c0_i32_2 = arith.constant 0 : i32
    return %arg0, %c0_i32, %c0_i32_0, %c0_i32_1 : i32, i32, i32, i32
  }
}

module attributes {stable_mosaic.version = 11 : i64} {
  func.func @_conv_stride1_kernel(%arg0: i32, %arg1: i32, %arg2: memref<1x2x5x256xbf16, #tpu.memory_space<vmem>>, %arg3: memref<1x3x256x16xbf16, #tpu.memory_space<vmem>>, %arg4: memref<1x16xf32, #tpu.memory_space<vmem>>, %arg5: memref<1x2x3x16xbf16, #tpu.memory_space<vmem>>, %arg6: memref<2x3x16xf32, #tpu.memory_space<vmem>>) attributes {dimension_semantics = [#tpu.dimension_semantics<parallel>, #tpu.dimension_semantics<arbitrary>], iteration_bounds = array<i64: 3, 3>, scalar_prefetch = 0 : i64, scratch_operands = 1 : i64, tpu.core_type = #tpu.core_type<tc>, window_params = [{transform_indices = @transform_0, window_bounds = array<i64: 1, 2, 5, 256>}, {transform_indices = @transform_1, window_bounds = array<i64: 1, 3, 256, 16>}, {pipeline_mode = #tpu.pipeline_mode<synchronous>, transform_indices = @transform_2, window_bounds = array<i64: 1, 16>}, {transform_indices = @transform_3, window_bounds = array<i64: 1, 2, 3, 16>}]} {
    %c0_i32 = arith.constant 0 : i32
    %0 = arith.cmpi eq, %arg1, %c0_i32 : i32
    %1 = arith.extui %0 : i1 to i32
    %c0_i32_0 = arith.constant 0 : i32
    %2 = arith.cmpi ne, %1, %c0_i32_0 : i32
    scf.if %2 {
      %cst_48 = arith.constant 0.000000e+00 : f32
      %50 = vector.broadcast %cst_48 : f32 to vector<2x3x16xf32>
      %c0_49 = arith.constant 0 : index
      %c0_50 = arith.constant 0 : index
      %c0_51 = arith.constant 0 : index
      %51 = vector.load %arg6[%c0_49, %c0_50, %c0_51] : memref<2x3x16xf32, #tpu.memory_space<vmem>>, vector<2x3x16xf32>
      tpu.vector_store %arg6[%c0_49, %c0_50, %c0_51], %50 {strides = array<i32>} : memref<2x3x16xf32, #tpu.memory_space<vmem>>, vector<2x3x16xf32>,
    } else {
    }
    %c0 = arith.constant 0 : index
    %c0_1 = arith.constant 0 : index
    %c0_2 = arith.constant 0 : index
    %c0_3 = arith.constant 0 : index
    %3 = vector.load %arg2[%c0, %c0_1, %c0_2, %c0_3] : memref<1x2x5x256xbf16, #tpu.memory_space<vmem>>, vector<1x1x5x256xbf16>
    %4 = vector.shape_cast %3 : vector<1x1x5x256xbf16> to vector<5x256xbf16>
    %5 = vector.extract_strided_slice %4 {offsets = [0, 0], sizes = [3, 256], strides = [1, 1]} : vector<5x256xbf16> to vector<3x256xbf16>
    %c0_4 = arith.constant 0 : index
    %c0_5 = arith.constant 0 : index
    %c0_6 = arith.constant 0 : index
    %c0_7 = arith.constant 0 : index
    %6 = vector.load %arg3[%c0_4, %c0_5, %c0_6, %c0_7] : memref<1x3x256x16xbf16, #tpu.memory_space<vmem>>, vector<1x1x256x16xbf16>
    %7 = vector.shape_cast %6 : vector<1x1x256x16xbf16> to vector<256x16xbf16>
    %cst = arith.constant dense<0.000000e+00> : vector<3x16xf32>
    %8 = tpu.matmul %5, %7, %cst {dimension_numbers = #tpu.dot_dimension_numbers<[1], [0], [0], [1], [0, 0, 1, 1], [], []>} : vector<3x256xbf16>, vector<256x16xbf16>, vector<3x16xf32> -> vector<3x16xf32>
    %9 = vector.extract_strided_slice %4 {offsets = [1, 0], sizes = [3, 256], strides = [1, 1]} : vector<5x256xbf16> to vector<3x256xbf16>
    %c0_8 = arith.constant 0 : index
    %c1 = arith.constant 1 : index
    %c0_9 = arith.constant 0 : index
    %c0_10 = arith.constant 0 : index
    %10 = vector.load %arg3[%c0_8, %c1, %c0_9, %c0_10] : memref<1x3x256x16xbf16, #tpu.memory_space<vmem>>, vector<1x1x256x16xbf16>
    %11 = vector.shape_cast %10 : vector<1x1x256x16xbf16> to vector<256x16xbf16>
    %cst_11 = arith.constant dense<0.000000e+00> : vector<3x16xf32>
    %12 = tpu.matmul %9, %11, %cst_11 {dimension_numbers = #tpu.dot_dimension_numbers<[1], [0], [0], [1], [0, 0, 1, 1], [], []>} : vector<3x256xbf16>, vector<256x16xbf16>, vector<3x16xf32> -> vector<3x16xf32>
    %13 = arith.addf %8, %12 : vector<3x16xf32>
    %14 = vector.extract_strided_slice %4 {offsets = [2, 0], sizes = [3, 256], strides = [1, 1]} : vector<5x256xbf16> to vector<3x256xbf16>
    %c0_12 = arith.constant 0 : index
    %c2 = arith.constant 2 : index
    %c0_13 = arith.constant 0 : index
    %c0_14 = arith.constant 0 : index
    %15 = vector.load %arg3[%c0_12, %c2, %c0_13, %c0_14] : memref<1x3x256x16xbf16, #tpu.memory_space<vmem>>, vector<1x1x256x16xbf16>
    %16 = vector.shape_cast %15 : vector<1x1x256x16xbf16> to vector<256x16xbf16>
    %cst_15 = arith.constant dense<0.000000e+00> : vector<3x16xf32>
    %17 = tpu.matmul %14, %16, %cst_15 {dimension_numbers = #tpu.dot_dimension_numbers<[1], [0], [0], [1], [0, 0, 1, 1], [], []>} : vector<3x256xbf16>, vector<256x16xbf16>, vector<3x16xf32> -> vector<3x16xf32>
    %18 = arith.addf %13, %17 : vector<3x16xf32>
    %c0_16 = arith.constant 0 : index
    %c0_17 = arith.constant 0 : index
    %c0_18 = arith.constant 0 : index
    %19 = vector.load %arg6[%c0_16, %c0_17, %c0_18] : memref<2x3x16xf32, #tpu.memory_space<vmem>>, vector<1x3x16xf32>
    %20 = vector.shape_cast %19 : vector<1x3x16xf32> to vector<3x16xf32>
    %21 = arith.addf %20, %18 : vector<3x16xf32>
    %c0_19 = arith.constant 0 : index
    %c0_20 = arith.constant 0 : index
    %c0_21 = arith.constant 0 : index
    %22 = vector.load %arg6[%c0_19, %c0_20, %c0_21] : memref<2x3x16xf32, #tpu.memory_space<vmem>>, vector<1x3x16xf32>
    %23 = vector.shape_cast %22 : vector<1x3x16xf32> to vector<3x16xf32>
    %24 = vector.shape_cast %21 : vector<3x16xf32> to vector<1x3x16xf32>
    tpu.vector_store %arg6[%c0_19, %c0_20, %c0_21], %24 {strides = array<i32>} : memref<2x3x16xf32, #tpu.memory_space<vmem>>, vector<1x3x16xf32>,
    %c0_22 = arith.constant 0 : index
    %c1_23 = arith.constant 1 : index
    %c0_24 = arith.constant 0 : index
    %c0_25 = arith.constant 0 : index
    %25 = vector.load %arg2[%c0_22, %c1_23, %c0_24, %c0_25] : memref<1x2x5x256xbf16, #tpu.memory_space<vmem>>, vector<1x1x5x256xbf16>
    %26 = vector.shape_cast %25 : vector<1x1x5x256xbf16> to vector<5x256xbf16>
    %27 = vector.extract_strided_slice %26 {offsets = [0, 0], sizes = [3, 256], strides = [1, 1]} : vector<5x256xbf16> to vector<3x256xbf16>
    %c0_26 = arith.constant 0 : index
    %c0_27 = arith.constant 0 : index
    %c0_28 = arith.constant 0 : index
    %c0_29 = arith.constant 0 : index
    %28 = vector.load %arg3[%c0_26, %c0_27, %c0_28, %c0_29] : memref<1x3x256x16xbf16, #tpu.memory_space<vmem>>, vector<1x1x256x16xbf16>
    %29 = vector.shape_cast %28 : vector<1x1x256x16xbf16> to vector<256x16xbf16>
    %cst_30 = arith.constant dense<0.000000e+00> : vector<3x16xf32>
    %30 = tpu.matmul %27, %29, %cst_30 {dimension_numbers = #tpu.dot_dimension_numbers<[1], [0], [0], [1], [0, 0, 1, 1], [], []>} : vector<3x256xbf16>, vector<256x16xbf16>, vector<3x16xf32> -> vector<3x16xf32>
    %31 = vector.extract_strided_slice %26 {offsets = [1, 0], sizes = [3, 256], strides = [1, 1]} : vector<5x256xbf16> to vector<3x256xbf16>
    %c0_31 = arith.constant 0 : index
    %c1_32 = arith.constant 1 : index
    %c0_33 = arith.constant 0 : index
    %c0_34 = arith.constant 0 : index
    %32 = vector.load %arg3[%c0_31, %c1_32, %c0_33, %c0_34] : memref<1x3x256x16xbf16, #tpu.memory_space<vmem>>, vector<1x1x256x16xbf16>
    %33 = vector.shape_cast %32 : vector<1x1x256x16xbf16> to vector<256x16xbf16>
    %cst_35 = arith.constant dense<0.000000e+00> : vector<3x16xf32>
    %34 = tpu.matmul %31, %33, %cst_35 {dimension_numbers = #tpu.dot_dimension_numbers<[1], [0], [0], [1], [0, 0, 1, 1], [], []>} : vector<3x256xbf16>, vector<256x16xbf16>, vector<3x16xf32> -> vector<3x16xf32>
    %35 = arith.addf %30, %34 : vector<3x16xf32>
    %36 = vector.extract_strided_slice %26 {offsets = [2, 0], sizes = [3, 256], strides = [1, 1]} : vector<5x256xbf16> to vector<3x256xbf16>
    %c0_36 = arith.constant 0 : index
    %c2_37 = arith.constant 2 : index
    %c0_38 = arith.constant 0 : index
    %c0_39 = arith.constant 0 : index
    %37 = vector.load %arg3[%c0_36, %c2_37, %c0_38, %c0_39] : memref<1x3x256x16xbf16, #tpu.memory_space<vmem>>, vector<1x1x256x16xbf16>
    %38 = vector.shape_cast %37 : vector<1x1x256x16xbf16> to vector<256x16xbf16>
    %cst_40 = arith.constant dense<0.000000e+00> : vector<3x16xf32>
    %39 = tpu.matmul %36, %38, %cst_40 {dimension_numbers = #tpu.dot_dimension_numbers<[1], [0], [0], [1], [0, 0, 1, 1], [], []>} : vector<3x256xbf16>, vector<256x16xbf16>, vector<3x16xf32> -> vector<3x16xf32>
    %40 = arith.addf %35, %39 : vector<3x16xf32>
    %c1_41 = arith.constant 1 : index
    %c0_42 = arith.constant 0 : index
    %c0_43 = arith.constant 0 : index
    %41 = vector.load %arg6[%c1_41, %c0_42, %c0_43] : memref<2x3x16xf32, #tpu.memory_space<vmem>>, vector<1x3x16xf32>
    %42 = vector.shape_cast %41 : vector<1x3x16xf32> to vector<3x16xf32>
    %43 = arith.addf %42, %40 : vector<3x16xf32>
    %c1_44 = arith.constant 1 : index
    %c0_45 = arith.constant 0 : index
    %c0_46 = arith.constant 0 : index
    %44 = vector.load %arg6[%c1_44, %c0_45, %c0_46] : memref<2x3x16xf32, #tpu.memory_space<vmem>>, vector<1x3x16xf32>
    %45 = vector.shape_cast %44 : vector<1x3x16xf32> to vector<3x16xf32>
    %46 = vector.shape_cast %43 : vector<3x16xf32> to vector<1x3x16xf32>
    tpu.vector_store %arg6[%c1_44, %c0_45, %c0_46], %46 {strides = array<i32>} : memref<2x3x16xf32, #tpu.memory_space<vmem>>, vector<1x3x16xf32>,
    %c2_i32 = arith.constant 2 : i32
    %47 = arith.cmpi eq, %arg1, %c2_i32 : i32
    %48 = arith.extui %47 : i1 to i32
    %c0_i32_47 = arith.constant 0 : i32
    %49 = arith.cmpi ne, %48, %c0_i32_47 : i32
    scf.if %49 {
      %c0_48 = arith.constant 0 : index
      %c0_49 = arith.constant 0 : index
      %c0_50 = arith.constant 0 : index
      %50 = vector.load %arg6[%c0_48, %c0_49, %c0_50] : memref<2x3x16xf32, #tpu.memory_space<vmem>>, vector<2x3x16xf32>
      %c0_51 = arith.constant 0 : index
      %c0_52 = arith.constant 0 : index
      %51 = vector.load %arg4[%c0_51, %c0_52] : memref<1x16xf32, #tpu.memory_space<vmem>>, vector<1x16xf32>
      %52 = vector.shape_cast %51 : vector<1x16xf32> to vector<1x1x16xf32>
      %53 = vector.broadcast %52 : vector<1x1x16xf32> to vector<2x3x16xf32>
      %54 = arith.addf %50, %53 : vector<2x3x16xf32>
      %cst_53 = arith.constant 0.000000e+00 : f32
      %55 = vector.broadcast %cst_53 : f32 to vector<2x3x16xf32>
      %56 = arith.maximumf %54, %55 : vector<2x3x16xf32>
      %57 = arith.truncf %56 : vector<2x3x16xf32> to vector<2x3x16xbf16>
      %c0_54 = arith.constant 0 : index
      %c0_55 = arith.constant 0 : index
      %c0_56 = arith.constant 0 : index
      %c0_57 = arith.constant 0 : index
      %58 = vector.load %arg5[%c0_54, %c0_55, %c0_56, %c0_57] : memref<1x2x3x16xbf16, #tpu.memory_space<vmem>>, vector<1x2x3x16xbf16>
      %59 = vector.shape_cast %58 : vector<1x2x3x16xbf16> to vector<2x3x16xbf16>
      %60 = vector.shape_cast %57 : vector<2x3x16xbf16> to vector<1x2x3x16xbf16>
      tpu.vector_store %arg5[%c0_54, %c0_55, %c0_56, %c0_57], %60 {strides = array<i32>} : memref<1x2x3x16xbf16, #tpu.memory_space<vmem>>, vector<1x2x3x16xbf16>,
    } else {
    }
    return
  }
  func.func @transform_0(%arg0: i32, %arg1: i32) -> (i32, i32, i32, i32) {
    %0 = arith.addi %arg0, %arg1 : i32
    %c0_i32 = arith.constant 0 : i32
    %c0_i32_0 = arith.constant 0 : i32
    %c0_i32_1 = arith.constant 0 : i32
    %c0_i32_2 = arith.constant 0 : i32
    return %0, %c0_i32, %c0_i32_0, %c0_i32_1 : i32, i32, i32, i32
  }
  func.func @transform_1(%arg0: i32, %arg1: i32) -> (i32, i32, i32, i32) {
    %c0_i32 = arith.constant 0 : i32
    %c0_i32_0 = arith.constant 0 : i32
    %c0_i32_1 = arith.constant 0 : i32
    %c0_i32_2 = arith.constant 0 : i32
    return %arg1, %c0_i32, %c0_i32_0, %c0_i32_1 : i32, i32, i32, i32
  }
  func.func @transform_2(%arg0: i32, %arg1: i32) -> (i32, i32) {
    %c0_i32 = arith.constant 0 : i32
    %c0_i32_0 = arith.constant 0 : i32
    %c0_i32_1 = arith.constant 0 : i32
    return %c0_i32, %c0_i32_0 : i32, i32
  }
  func.func @transform_3(%arg0: i32, %arg1: i32) -> (i32, i32, i32, i32) {
    %c0_i32 = arith.constant 0 : i32
    %c0_i32_0 = arith.constant 0 : i32
    %c0_i32_1 = arith.constant 0 : i32
    %c0_i32_2 = arith.constant 0 : i32
    return %arg0, %c0_i32, %c0_i32_0, %c0_i32_1 : i32, i32, i32, i32
  }
}

module attributes {stable_mosaic.version = 11 : i64} {
  func.func @_maxpool_kernel(%arg0: i32, %arg1: memref<1x2x3x16xbf16, #tpu.memory_space<vmem>>, %arg2: memref<1x2x3x16xbf16, #tpu.memory_space<vmem>>, %arg3: memref<1x2x3x16xbf16, #tpu.memory_space<vmem>>, %arg4: memref<1x2x1x16xbf16, #tpu.memory_space<vmem>>) attributes {dimension_semantics = [#tpu.dimension_semantics<parallel>], iteration_bounds = array<i64: 1>, scalar_prefetch = 0 : i64, scratch_operands = 0 : i64, tpu.core_type = #tpu.core_type<tc>, window_params = [{transform_indices = @transform_0, window_bounds = array<i64: 1, 2, 3, 16>}, {transform_indices = @transform_1, window_bounds = array<i64: 1, 2, 3, 16>}, {transform_indices = @transform_2, window_bounds = array<i64: 1, 2, 3, 16>}, {transform_indices = @transform_3, window_bounds = array<i64: 1, 2, 1, 16>}]} {
    %c0 = arith.constant 0 : index
    %c0_0 = arith.constant 0 : index
    %c0_1 = arith.constant 0 : index
    %c0_2 = arith.constant 0 : index
    %0 = vector.load %arg1[%c0, %c0_0, %c0_1, %c0_2] : memref<1x2x3x16xbf16, #tpu.memory_space<vmem>>, vector<1x2x3x16xbf16>
    %1 = vector.shape_cast %0 : vector<1x2x3x16xbf16> to vector<2x3x16xbf16>
    %c0_3 = arith.constant 0 : index
    %c0_4 = arith.constant 0 : index
    %c0_5 = arith.constant 0 : index
    %c0_6 = arith.constant 0 : index
    %2 = vector.load %arg2[%c0_3, %c0_4, %c0_5, %c0_6] : memref<1x2x3x16xbf16, #tpu.memory_space<vmem>>, vector<1x2x3x16xbf16>
    %3 = vector.shape_cast %2 : vector<1x2x3x16xbf16> to vector<2x3x16xbf16>
    %4 = arith.maximumf %1, %3 : vector<2x3x16xbf16>
    %c0_7 = arith.constant 0 : index
    %c0_8 = arith.constant 0 : index
    %c0_9 = arith.constant 0 : index
    %c0_10 = arith.constant 0 : index
    %5 = vector.load %arg3[%c0_7, %c0_8, %c0_9, %c0_10] : memref<1x2x3x16xbf16, #tpu.memory_space<vmem>>, vector<1x2x3x16xbf16>
    %6 = vector.shape_cast %5 : vector<1x2x3x16xbf16> to vector<2x3x16xbf16>
    %7 = arith.maximumf %4, %6 : vector<2x3x16xbf16>
    %8 = vector.extract_strided_slice %7 {offsets = [0, 0, 0], sizes = [2, 1, 16], strides = [1, 1, 1]} : vector<2x3x16xbf16> to vector<2x1x16xbf16>
    %9 = vector.extract_strided_slice %7 {offsets = [0, 1, 0], sizes = [2, 1, 16], strides = [1, 1, 1]} : vector<2x3x16xbf16> to vector<2x1x16xbf16>
    %10 = arith.maximumf %8, %9 : vector<2x1x16xbf16>
    %11 = vector.extract_strided_slice %7 {offsets = [0, 2, 0], sizes = [2, 1, 16], strides = [1, 1, 1]} : vector<2x3x16xbf16> to vector<2x1x16xbf16>
    %12 = arith.maximumf %10, %11 : vector<2x1x16xbf16>
    %c0_11 = arith.constant 0 : index
    %c0_12 = arith.constant 0 : index
    %c0_13 = arith.constant 0 : index
    %c0_14 = arith.constant 0 : index
    %13 = vector.load %arg4[%c0_11, %c0_12, %c0_13, %c0_14] : memref<1x2x1x16xbf16, #tpu.memory_space<vmem>>, vector<1x2x1x16xbf16>
    %14 = vector.shape_cast %13 : vector<1x2x1x16xbf16> to vector<2x1x16xbf16>
    %15 = vector.shape_cast %12 : vector<2x1x16xbf16> to vector<1x2x1x16xbf16>
    tpu.vector_store %arg4[%c0_11, %c0_12, %c0_13, %c0_14], %15 {strides = array<i32>} : memref<1x2x1x16xbf16, #tpu.memory_space<vmem>>, vector<1x2x1x16xbf16>,
    return
  }
  func.func @transform_0(%arg0: i32) -> (i32, i32, i32, i32) {
    %c2_i32 = arith.constant 2 : i32
    %0 = arith.muli %c2_i32, %arg0 : i32
    %c0_i32 = arith.constant 0 : i32
    %1 = arith.addi %0, %c0_i32 : i32
    %c0_i32_0 = arith.constant 0 : i32
    %c0_i32_1 = arith.constant 0 : i32
    %c0_i32_2 = arith.constant 0 : i32
    %c0_i32_3 = arith.constant 0 : i32
    return %1, %c0_i32_0, %c0_i32_1, %c0_i32_2 : i32, i32, i32, i32
  }
  func.func @transform_1(%arg0: i32) -> (i32, i32, i32, i32) {
    %c2_i32 = arith.constant 2 : i32
    %0 = arith.muli %c2_i32, %arg0 : i32
    %c1_i32 = arith.constant 1 : i32
    %1 = arith.addi %0, %c1_i32 : i32
    %c0_i32 = arith.constant 0 : i32
    %c0_i32_0 = arith.constant 0 : i32
    %c0_i32_1 = arith.constant 0 : i32
    %c0_i32_2 = arith.constant 0 : i32
    return %1, %c0_i32, %c0_i32_0, %c0_i32_1 : i32, i32, i32, i32
  }
  func.func @transform_2(%arg0: i32) -> (i32, i32, i32, i32) {
    %c2_i32 = arith.constant 2 : i32
    %0 = arith.muli %c2_i32, %arg0 : i32
    %c2_i32_0 = arith.constant 2 : i32
    %1 = arith.addi %0, %c2_i32_0 : i32
    %c0_i32 = arith.constant 0 : i32
    %c0_i32_1 = arith.constant 0 : i32
    %c0_i32_2 = arith.constant 0 : i32
    %c0_i32_3 = arith.constant 0 : i32
    return %1, %c0_i32, %c0_i32_1, %c0_i32_2 : i32, i32, i32, i32
  }
  func.func @transform_3(%arg0: i32) -> (i32, i32, i32, i32) {
    %c0_i32 = arith.constant 0 : i32
    %c0_i32_0 = arith.constant 0 : i32
    %c0_i32_1 = arith.constant 0 : i32
    %c0_i32_2 = arith.constant 0 : i32
    return %arg0, %c0_i32, %c0_i32_0, %c0_i32_1 : i32, i32, i32, i32
  }
}

module attributes {stable_mosaic.version = 11 : i64} {
  func.func @_avgpool_relu_kernel(%arg0: memref<1x2x1x16xbf16, #tpu.memory_space<vmem>>, %arg1: memref<2x16xf32, #tpu.memory_space<vmem>>) attributes {dimension_semantics = [], scalar_prefetch = 0 : i64, scratch_operands = 0 : i64, tpu.core_type = #tpu.core_type<tc>} {
    %c0 = arith.constant 0 : index
    %c0_0 = arith.constant 0 : index
    %c0_1 = arith.constant 0 : index
    %c0_2 = arith.constant 0 : index
    %0 = vector.load %arg0[%c0, %c0_0, %c0_1, %c0_2] : memref<1x2x1x16xbf16, #tpu.memory_space<vmem>>, vector<1x2x1x16xbf16>
    %1 = arith.extf %0 : vector<1x2x1x16xbf16> to vector<1x2x1x16xf32>
    %cst = arith.constant dense<0.000000e+00> : vector<2x1x16xf32>
    %2 = vector.multi_reduction <add>, %1, %cst [0] : vector<1x2x1x16xf32> to vector<2x1x16xf32>
    %cst_3 = arith.constant dense<0.000000e+00> : vector<2x16xf32>
    %3 = vector.multi_reduction <add>, %2, %cst_3 [1] : vector<2x1x16xf32> to vector<2x16xf32>
    %cst_4 = arith.constant 1.000000e+00 : f32
    %4 = vector.broadcast %cst_4 : f32 to vector<2x16xf32>
    %5 = arith.mulf %3, %4 : vector<2x16xf32>
    %cst_5 = arith.constant 0.000000e+00 : f32
    %6 = vector.broadcast %cst_5 : f32 to vector<2x16xf32>
    %7 = arith.maximumf %5, %6 : vector<2x16xf32>
    %c0_6 = arith.constant 0 : index
    %c0_7 = arith.constant 0 : index
    %8 = vector.load %arg1[%c0_6, %c0_7] : memref<2x16xf32, #tpu.memory_space<vmem>>, vector<2x16xf32>
    tpu.vector_store %arg1[%c0_6, %c0_7], %7 {strides = array<i32>} : memref<2x16xf32, #tpu.memory_space<vmem>>, vector<2x16xf32>,
    return
  }
}

</mosaic_0001>

<llo_original>
// kernel: alexnet_forward.10
$region0: #{alexnet_forward.10}
  #allocation0 [shape = 'u32[]', space=smem, size = 0x4, offset = 0x4, fixed_abs, tag = 'smem constant byte address 0x4 - core index']
  #allocation1 [shape = 'u32[144,128]{1,0:T(1,128)}', space=vmem, size = 0x12000, scoped, tag = 'internal scratch']
  %s0 = inlined_call_operand.vmem [shape: bf16[15,2,15,64], index: 0, kind: input, shape index: {}, may-alias: {0,1,2}]
  %s1 = inlined_call_operand.vmem [shape: bf16[15,2,15,64], index: 1, kind: input, shape index: {}, may-alias: {0,1,2}]
  %s2 = inlined_call_operand.vmem [shape: bf16[15,2,15,64], index: 2, kind: input, shape index: {}, may-alias: {0,1,2}]
  %s3 = inlined_call_operand.vmem [shape: bf16[7,2,13,64], index: 3, kind: output, shape index: {}]
  %s4 = sld [smem:[#allocation0]]
  $region45: #{alexnet_forward.10} parent=0
    _
  %s6 = ssub.s32 1, %s4
  %s7 = scalar_select 0, %s6, %s4
  loop: start=0, step=1, limit=9
  $region2: #{alexnet_forward.10} parent=0 // loop_pre_header
    _
  $region3: #{alexnet_forward.10} parent=0 // loop_header
    %s9 = sphi 0, %s13
    %p10 = scmp.ge.s32.totalorder %s9, 9
    %s21 = sphi 0, %s23
    %s24 = sphi 0, %s21
    %s25 = sphi 0, %s24
    %s41 = sphi 0, %s25
    %s51 = sphi 0, %s53
    %s54 = sphi 0, %s51
    %s55 = sphi 0, %s54
    %s71 = sphi 0, %s55
    %s81 = sphi 0, %s83
    %s84 = sphi 0, %s81
    %s85 = sphi 0, %s84
    %s101 = sphi 0, %s85
    %s107 = sphi 0, %s109
    %s110 = sphi 0, %s107
    %s111 = sphi 0, %s110
    %s127 = sphi 0, %s111
  $region4: #{alexnet_forward.10} parent=0 // loop_header_branch
    %12 = sbr.rel (%p10) target = $region8
  $region5: #{alexnet_forward.10} parent=0 // loop_body
    %s14 = ssub.s32 %s9, 1
    %s15 = ssub.s32 %s9, 2
    %s16 = sadd.s32 %s9, 1
    %s17 = smul.u32 %s9, 2
    %s18 = smul.u32 %s16, 2
    %s19 = ssub.s32 %s17, %s18
    %p20 = scmp.eq.s32.totalorder %s19, 0
    %s22 = sadd.s32 %s21, 1
    %s23 = scalar_select %p20, %s21, %s22
    %p26 = pneg %p20
    %p27 = scmp.eq.s32.totalorder %s9, 6
    %p28 = por %p26, %p27
    %p29 = scmp.ne.s32.totalorder %s21, %s24
    %p30 = scmp.eq.s32.totalorder %s9, 0
    %p31 = por %p29, %p30
    %p32 = scmp.ne.s32.totalorder %s21, %s24
    %p33 = scmp.eq.s32.totalorder %s14, 6
    %p34 = por %p32, %p33
    %p35 = scmp.ne.s32.totalorder %s24, %s25
    %p36 = scmp.eq.s32.totalorder %s14, 0
    %p37 = por %p35, %p36
    %p38 = scmp.ne.s32.totalorder %s24, %s25
    %p39 = scmp.eq.s32.totalorder %s15, 6
    %p40 = por %p38, %p39
    %p42 = scmp.ne.s32.totalorder %s25, %s41
    %p43 = scmp.eq.s32.totalorder %s15, 0
    %p44 = por %p42, %p43
    %s45 = smul.u32 %s9, 2
    %s46 = sadd.s32 %s45, 1
    %s47 = smul.u32 %s16, 2
    %s48 = sadd.s32 %s47, 1
    %s49 = ssub.s32 %s46, %s48
    %p50 = scmp.eq.s32.totalorder %s49, 0
    %s52 = sadd.s32 %s51, 1
    %s53 = scalar_select %p50, %s51, %s52
    %p56 = pneg %p50
    %p57 = scmp.eq.s32.totalorder %s9, 6
    %p58 = por %p56, %p57
    %p59 = scmp.ne.s32.totalorder %s51, %s54
    %p60 = scmp.eq.s32.totalorder %s9, 0
    %p61 = por %p59, %p60
    %p62 = scmp.ne.s32.totalorder %s51, %s54
    %p63 = scmp.eq.s32.totalorder %s14, 6
    %p64 = por %p62, %p63
    %p65 = scmp.ne.s32.totalorder %s54, %s55
    %p66 = scmp.eq.s32.totalorder %s14, 0
    %p67 = por %p65, %p66
    %p68 = scmp.ne.s32.totalorder %s54, %s55
    %p69 = scmp.eq.s32.totalorder %s15, 6
    %p70 = por %p68, %p69
    %p72 = scmp.ne.s32.totalorder %s55, %s71
    %p73 = scmp.eq.s32.totalorder %s15, 0
    %p74 = por %p72, %p73
    %s75 = smul.u32 %s9, 2
    %s76 = sadd.s32 %s75, 2
    %s77 = smul.u32 %s16, 2
    %s78 = sadd.s32 %s77, 2
    %s79 = ssub.s32 %s76, %s78
    %p80 = scmp.eq.s32.totalorder %s79, 0
    %s82 = sadd.s32 %s81, 1
    %s83 = scalar_select %p80, %s81, %s82
    %p86 = pneg %p80
    %p87 = scmp.eq.s32.totalorder %s9, 6
    %p88 = por %p86, %p87
    %p89 = scmp.ne.s32.totalorder %s81, %s84
    %p90 = scmp.eq.s32.totalorder %s9, 0
    %p91 = por %p89, %p90
    %p92 = scmp.ne.s32.totalorder %s81, %s84
    %p93 = scmp.eq.s32.totalorder %s14, 6
    %p94 = por %p92, %p93
    %p95 = scmp.ne.s32.totalorder %s84, %s85
    %p96 = scmp.eq.s32.totalorder %s14, 0
    %p97 = por %p95, %p96
    %p98 = scmp.ne.s32.totalorder %s84, %s85
    %p99 = scmp.eq.s32.totalorder %s15, 6
    %p100 = por %p98, %p99
    %p102 = scmp.ne.s32.totalorder %s85, %s101
    %p103 = scmp.eq.s32.totalorder %s15, 0
    %p104 = por %p102, %p103
    %s105 = ssub.s32 %s9, %s16
    %p106 = scmp.eq.s32.totalorder %s105, 0
    %s108 = sadd.s32 %s107, 1
    %s109 = scalar_select %p106, %s107, %s108
    %p112 = pneg %p106
    %p113 = scmp.eq.s32.totalorder %s9, 6
    %p114 = por %p112, %p113
    %p115 = scmp.ne.s32.totalorder %s107, %s110
    %p116 = scmp.eq.s32.totalorder %s9, 0
    %p117 = por %p115, %p116
    %p118 = scmp.ne.s32.totalorder %s107, %s110
    %p119 = scmp.eq.s32.totalorder %s14, 6
    %p120 = por %p118, %p119
    %p121 = scmp.ne.s32.totalorder %s110, %s111
    %p122 = scmp.eq.s32.totalorder %s14, 0
    %p123 = por %p121, %p122
    %p124 = scmp.ne.s32.totalorder %s110, %s111
    %p125 = scmp.eq.s32.totalorder %s15, 6
    %p126 = por %p124, %p125
    %p128 = scmp.ne.s32.totalorder %s111, %s127
    %p129 = scmp.eq.s32.totalorder %s15, 0
    %p130 = por %p128, %p129
    %p131 = scmp.le.s32.totalorder 1, %s9
    %p132 = scmp.lt.s32.totalorder %s9, 8
    %p133 = pnand %p131, %p132
    %p134 = pneg %p133
    // Predicated region
    $region9: #{alexnet_forward.10} parent=5 // pred_check
      _
    $region10: #{alexnet_forward.10} parent=5 // pred_check_branch
      %136 = sbr.rel (%p133) target = $region12
    $region11: #{alexnet_forward.10} parent=5 // pred_region
      %s137 = ssub.s32 %s9, 1
    $region12: #{alexnet_forward.10} parent=5 // pred_fallthru
      _
    %p138 = scmp.lt.s32.totalorder %s9, 7
    // Predicated region
    $region13: #{alexnet_forward.10} parent=5 // pred_check
      %p139 = pneg %p138
    $region14: #{alexnet_forward.10} parent=5 // pred_check_branch
      %141 = sbr.rel (%p139) target = $region16
    $region15: #{alexnet_forward.10} parent=5 // pred_region
      // Predicated region
      $region17: #{alexnet_forward.10} parent=15 // pred_check
        %p142 = pneg %p31
      $region18: #{alexnet_forward.10} parent=15 // pred_check_branch
        %144 = sbr.rel (%p142) target = $region20
      $region19: #{alexnet_forward.10} parent=15 // pred_region
        %s145 = smul.u32 %s9, 2
        %p146 = scmp.lt.s32.totalorder %s145, 14
        %s147 = scalar_select %p146, %s145, 14
        %s148 = smul.addr %s147, 4
        %s149 = smul.addr %s148, 4
        %s150 = scalar_lea.vmem %s0, %s149
        %s151 = smul.u32 %s9, 2
      $region20: #{alexnet_forward.10} parent=15 // pred_fallthru
        _
      // Predicated region
      $region21: #{alexnet_forward.10} parent=15 // pred_check
        %p152 = pneg %p61
      $region22: #{alexnet_forward.10} parent=15 // pred_check_branch
        %154 = sbr.rel (%p152) target = $region24
      $region23: #{alexnet_forward.10} parent=15 // pred_region
        %s155 = smul.u32 %s9, 2
        %s156 = sadd.s32 %s155, 1
        %p157 = scmp.lt.s32.totalorder %s156, 14
        %s158 = scalar_select %p157, %s156, 14
        %s159 = smul.addr %s158, 4
        %s160 = smul.addr %s159, 4
        %s161 = scalar_lea.vmem %s1, %s160
        %s162 = smul.u32 %s9, 2
        %s163 = sadd.s32 %s162, 1
      $region24: #{alexnet_forward.10} parent=15 // pred_fallthru
        _
      // Predicated region
      $region25: #{alexnet_forward.10} parent=15 // pred_check
        %p164 = pneg %p91
      $region26: #{alexnet_forward.10} parent=15 // pred_check_branch
        %166 = sbr.rel (%p164) target = $region28
      $region27: #{alexnet_forward.10} parent=15 // pred_region
        %s167 = smul.u32 %s9, 2
        %s168 = sadd.s32 %s167, 2
        %p169 = scmp.lt.s32.totalorder %s168, 14
        %s170 = scalar_select %p169, %s168, 14
        %s171 = smul.addr %s170, 4
        %s172 = smul.addr %s171, 4
        %s173 = scalar_lea.vmem %s2, %s172
        %s174 = smul.u32 %s9, 2
        %s175 = sadd.s32 %s174, 2
      $region28: #{alexnet_forward.10} parent=15 // pred_fallthru
        _
    $region16: #{alexnet_forward.10} parent=5 // pred_fallthru
      _
    %p176 = scmp.le.s32.totalorder 1, %s9
    %p177 = scmp.lt.s32.totalorder %s9, 8
    %p178 = pnand %p176, %p177
    %p179 = pneg %p178
    // Predicated region
    $region29: #{alexnet_forward.10} parent=5 // pred_check
      _
    $region30: #{alexnet_forward.10} parent=5 // pred_check_branch
      %181 = sbr.rel (%p178) target = $region32
    $region31: #{alexnet_forward.10} parent=5 // pred_region
      %s182 = ssub.s32 %s9, 1
      %s183 = smul.u32 %s14, 2
      %p184 = scmp.lt.s32.totalorder %s183, 14
      %s185 = scalar_select %p184, %s183, 14
      %s186 = smul.addr %s185, 4
      %s187 = smul.addr %s186, 4
      %s188 = scalar_lea.vmem %s0, %s187
      %p189 = pneg %p37
      %p190 = pneg %p34
      %s191 = smul.u32 %s14, 2
      %s192 = sadd.s32 %s191, 1
      %p193 = scmp.lt.s32.totalorder %s192, 14
      %s194 = scalar_select %p193, %s192, 14
      %s195 = smul.addr %s194, 4
      %s196 = smul.addr %s195, 4
      %s197 = scalar_lea.vmem %s1, %s196
      %p198 = pneg %p67
      %p199 = pneg %p64
      %s200 = smul.u32 %s14, 2
      %s201 = sadd.s32 %s200, 2
      %p202 = scmp.lt.s32.totalorder %s201, 14
      %s203 = scalar_select %p202, %s201, 14
      %s204 = smul.addr %s203, 4
      %s205 = smul.addr %s204, 4
      %s206 = scalar_lea.vmem %s2, %s205
      %p207 = pneg %p97
      %p208 = pneg %p94
      %p209 = pneg %p123
      %p210 = pneg %p120
      %p211 = scmp.lt.s32.totalorder %s14, 6
      %s212 = scalar_select %p211, %s14, 6
      %s213 = smul.addr %s212, 4
      %s214 = smul.addr %s213, 4
      %s215 = scalar_lea.vmem %s3, %s214
      %s216 = smul.u32 %s14, 2
      %p217 = scmp.lt.s32.totalorder %s216, 14
      %s218 = scalar_select %p217, %s216, 14
      %s219 = smul.addr %s218, 4
      %s220 = smul.addr %s219, 4
      %s221 = scalar_lea.vmem %s0, %s220
      %s222 = smul.u32 %s14, 2
      %s223 = smul.u32 %s14, 2
      %s224 = sadd.s32 %s223, 1
      %p225 = scmp.lt.s32.totalorder %s224, 14
      %s226 = scalar_select %p225, %s224, 14
      %s227 = smul.addr %s226, 4
      %s228 = smul.addr %s227, 4
      %s229 = scalar_lea.vmem %s1, %s228
      %s230 = smul.u32 %s14, 2
      %s231 = sadd.s32 %s230, 1
      %s232 = smul.u32 %s14, 2
      %s233 = sadd.s32 %s232, 2
      %p234 = scmp.lt.s32.totalorder %s233, 14
      %s235 = scalar_select %p234, %s233, 14
      %s236 = smul.addr %s235, 4
      %s237 = smul.addr %s236, 4
      %s238 = scalar_lea.vmem %s2, %s237
      %s239 = smul.u32 %s14, 2
      %s240 = sadd.s32 %s239, 2
      %p241 = scmp.lt.s32.totalorder %s14, 6
      %s242 = scalar_select %p241, %s14, 6
      %s243 = smul.addr %s242, 4
      %s244 = smul.addr %s243, 4
      %s245 = scalar_lea.vmem %s3, %s244
      %v246 = vld [vmem:[%s221] sm:$0xf]
      %v247 = vld [vmem:[%s221 + $0x4] sm:$0xf]
      %v248 = vld [vmem:[%s221 + $0x8] sm:$0xf]
      %v249 = vld [vmem:[%s221 + $0xc] sm:$0xf]
      %v250 = vld [vmem:[%s229] sm:$0xf]
      %v251 = vld [vmem:[%s229 + $0x4] sm:$0xf]
      %v252 = vld [vmem:[%s229 + $0x8] sm:$0xf]
      %v253 = vld [vmem:[%s229 + $0xc] sm:$0xf]
      %v254 = vmax.bf16 %v246, %v250
      %v255 = vmax.bf16 %v247, %v251
      %v256 = vmax.bf16 %v248, %v252
      %v257 = vmax.bf16 %v249, %v253
      %v258 = vld [vmem:[%s238] sm:$0xf]
      %v259 = vld [vmem:[%s238 + $0x4] sm:$0xf]
      %v260 = vld [vmem:[%s238 + $0x8] sm:$0xf]
      %v261 = vld [vmem:[%s238 + $0xc] sm:$0xf]
      %v262 = vmax.bf16 %v254, %v258
      %v263 = vmax.bf16 %v255, %v259
      %v264 = vmax.bf16 %v256, %v260
      %v265 = vmax.bf16 %v257, %v261
      %vm266 = vsmask.f32 3328
      %vm267 = vsmask.f32 7440
      %vm268 = vmor %vm266, %vm267
      %v270 = vshrl.u32 %v262, 16
      %v272 = vrot.slane %v270, 4
      %v273 = vshll.u32 %v262, 16
      %v275 = vrot.slane %v273, 5
      %v276 = vor.u32 %v272, %v275
      %v277 = vrot.slane %v276, 4
      %v279 = vshll.u32 %v263, 16
      %v281 = vrot.slane %v279, 5
      %v282 = vsel %vm268, %v277, %v281
      %v283 = vshrl.u32 %v263, 16
      %v285 = vrot.slane %v283, 4
      %v286 = vor.u32 %v285, %v281
      %v287 = vrot.slane %v286, 4
      %v289 = vshrl.u32 %v264, 16
      %v291 = vrot.slane %v289, 4
      %v292 = vshll.u32 %v264, 16
      %v294 = vrot.slane %v292, 5
      %v295 = vor.u32 %v291, %v294
      %v296 = vrot.slane %v295, 4
      %v298 = vshll.u32 %v265, 16
      %v300 = vrot.slane %v298, 5
      %v301 = vsel %vm268, %v296, %v300
      %v302 = vshrl.u32 %v265, 16
      %v304 = vrot.slane %v302, 4
      %v305 = vor.u32 %v304, %v300
      %v306 = vrot.slane %v305, 4
      %v311 = vmax.bf16 %v262, %v282
      %v312 = vmax.bf16 %v263, %v287
      %v313 = vmax.bf16 %v264, %v301
      %v314 = vmax.bf16 %v265, %v306
      %vm319 = vcmask 1042432
      %vm320 = vcmask 1046532
      %vm321 = vmor %vm319, %vm320
      %v322 = vrot.slane %v262, 5
      %v323 = vrot.slane %v322, 4
      %v324 = vrot.slane %v263, 5
      %v325 = vsel %vm321, %v323, %v324
      %v326 = vrot.slane %v324, 4
      %v327 = vrot.slane %v264, 5
      %v328 = vrot.slane %v327, 4
      %v329 = vrot.slane %v265, 5
      %v330 = vsel %vm321, %v328, %v329
      %v331 = vrot.slane %v329, 4
      %v336 = vmax.bf16 %v311, %v325
      %v337 = vmax.bf16 %v312, %v326
      %v338 = vmax.bf16 %v313, %v330
      %v339 = vmax.bf16 %v314, %v331
      %vm340 = vcmask 519168
      %341 = vst.msk [vmem:[%s245] sm:$0xf] %vm340, %v336
      %vm342 = vcmask 518144
      %vm343 = vsmask.f32 2304
      %vm344 = vmand %vm342, %vm343
      %v345 = vld [vmem:[%s245 + $0x4] sm:$0x7]
      %v346 = vsel %vm344, %v337, %v345
      %347 = vst [vmem:[%s245 + $0x4] sm:$0x7] %v346
      %348 = vst.msk [vmem:[%s245 + $0x8] sm:$0xf] %vm340, %v338
      %v349 = vld [vmem:[%s245 + $0xc] sm:$0x7]
      %v350 = vsel %vm344, %v339, %v349
      %351 = vst [vmem:[%s245 + $0xc] sm:$0x7] %v350
      %p352 = scmp.lt.s32.totalorder %s14, 6
      %s353 = scalar_select %p352, %s14, 6
      %s354 = smul.addr %s353, 4
      %s355 = smul.addr %s354, 4
      %s356 = scalar_lea.vmem %s3, %s355
      // Predicated region
      $region33: #{alexnet_forward.10} parent=31 // pred_check
        %p357 = pneg %p120
      $region34: #{alexnet_forward.10} parent=31 // pred_check_branch
        %359 = sbr.rel (%p357) target = $region36
      $region35: #{alexnet_forward.10} parent=31 // pred_region
        _
      $region36: #{alexnet_forward.10} parent=31 // pred_fallthru
        _
    $region32: #{alexnet_forward.10} parent=5 // pred_fallthru
      _
    %p360 = scmp.le.s32.totalorder 2, %s9
    // Predicated region
    $region37: #{alexnet_forward.10} parent=5 // pred_check
      %p361 = pneg %p360
    $region38: #{alexnet_forward.10} parent=5 // pred_check_branch
      %363 = sbr.rel (%p361) target = $region40
    $region39: #{alexnet_forward.10} parent=5 // pred_region
      %s364 = ssub.s32 %s9, 2
      // Predicated region
      $region41: #{alexnet_forward.10} parent=39 // pred_check
        %p365 = pneg %p126
      $region42: #{alexnet_forward.10} parent=39 // pred_check_branch
        %367 = sbr.rel (%p365) target = $region44
      $region43: #{alexnet_forward.10} parent=39 // pred_region
        %p368 = scmp.lt.s32.totalorder %s15, 6
        %s369 = scalar_select %p368, %s15, 6
        %s370 = smul.addr %s369, 4
        %s371 = smul.addr %s370, 4
        %s372 = scalar_lea.vmem %s3, %s371
      $region44: #{alexnet_forward.10} parent=39 // pred_fallthru
        _
    $region40: #{alexnet_forward.10} parent=5 // pred_fallthru
      _
  $region6: #{alexnet_forward.10} parent=0 // loop_footer
    %s13 = sadd.s32 1, %s9
  $region7: #{alexnet_forward.10} parent=0 // loop_footer_branch
    %8 = sbr.rel target = $region3
  $region8: #{alexnet_forward.10} parent=0 // loop_exit
    _

// kernel: alexnet_forward.9
$region0: #{alexnet_forward.9}
  #allocation0 [shape = 'u32[]', space=smem, size = 0x4, offset = 0x4, fixed_abs, tag = 'smem constant byte address 0x4 - core index']
  #allocation1 [shape = 'u32[144,128]{1,0:T(1,128)}', space=vmem, size = 0x12000, scoped, tag = 'internal scratch']
  #allocation2 [shape = 'f32[256,128]{1,0:T(8,128)}', space=vmem, size = 0x20000, scoped, tag = 'scratch operand']
  %s0 = inlined_call_operand.vmem [shape: bf16[450,384], index: 0, kind: input, shape index: {}]
  %s1 = inlined_call_operand.vmem [shape: bf16[384,128], index: 1, kind: input, shape index: {}]
  %s2 = inlined_call_operand.vmem [shape: f32[1,128], index: 2, kind: input, shape index: {}]
  %s3 = inlined_call_operand.vmem [shape: bf16[450,128], index: 3, kind: output, shape index: {}]
  %s4 = sld [smem:[#allocation0]]
  $region97: #{alexnet_forward.9} parent=0
    _
  %s6 = ssub.s32 1, %s4
  %s7 = scalar_select 0, %s6, %s4
  $region1: #{alexnet_forward.9} parent=0
    #allocation3 [shape = 'u8[131072]{0}', space=vmem, size = 0x20000, scoped, tag = 'output window, operand 0']
    loop: start=0, step=1, limit=4
    $region2: #{alexnet_forward.9} parent=1 // loop_pre_header
      _
    $region3: #{alexnet_forward.9} parent=1 // loop_header
      %s9 = sphi 0, %s13
      %p10 = scmp.ge.s32.totalorder %s9, 4
      %s16 = sphi 0, %s35
      %s17 = sphi 0, %s31
      %s18 = sphi 0, %s27
      %s19 = sphi 0, %s16
      %s20 = sphi 0, %s17
      %s21 = sphi 0, %s18
      %s22 = sphi 0, %s19
      %s23 = sphi 0, %s20
      %s24 = sphi 0, %s21
      %s40 = sphi 0, %s42
      %s43 = sphi 0, %s40
      %s44 = sphi 0, %s43
      %s60 = sphi 0, %s44
      %s68 = sphi 0, %s70
      %s71 = sphi 0, %s68
      %s72 = sphi 0, %s71
      %s88 = sphi 0, %s72
      %s94 = sphi 0, %s96
      %s97 = sphi 0, %s94
      %s98 = sphi 0, %s97
      %s114 = sphi 0, %s98
      %s122 = sphi 0, %s124
      %s125 = sphi 0, %s122
      %s126 = sphi 0, %s125
      %s142 = sphi 0, %s126
    $region4: #{alexnet_forward.9} parent=1 // loop_header_branch
      %12 = sbr.rel (%p10) target = $region8
    $region5: #{alexnet_forward.9} parent=1 // loop_body
      %s14 = ssub.s32 %s9, 1
      %s15 = ssub.s32 %s9, 2
      %s25 = sadd.s32 1, %s18
      %p26 = scmp.ge.s32.totalorder %s25, 1
      %s27 = scalar_select %p26, 0, %s25
      %s28 = sadd.s32 1, %s17
      %s29 = scalar_select %p26, %s28, %s17
      %p30 = scmp.ge.s32.totalorder %s29, 1
      %s31 = scalar_select %p30, 0, %s29
      %s32 = sadd.s32 1, %s16
      %s33 = scalar_select %p30, %s32, %s16
      %p34 = scmp.ge.s32.totalorder %s33, 2
      %s35 = scalar_select %p34, 0, %s33
      %s36 = ssub.s32 %s16, %s35
      %s37 = ssub.s32 %s18, %s27
      %s38 = sor.u32 %s36, %s37
      %p39 = scmp.eq.s32.totalorder %s38, 0
      %s41 = sadd.s32 %s40, 1
      %s42 = scalar_select %p39, %s40, %s41
      %p45 = pneg %p39
      %p46 = scmp.eq.s32.totalorder %s9, 1
      %p47 = por %p45, %p46
      %p48 = scmp.ne.s32.totalorder %s40, %s43
      %p49 = scmp.eq.s32.totalorder %s9, 0
      %p50 = por %p48, %p49
      %p51 = scmp.ne.s32.totalorder %s40, %s43
      %p52 = scmp.eq.s32.totalorder %s14, 1
      %p53 = por %p51, %p52
      %p54 = scmp.ne.s32.totalorder %s43, %s44
      %p55 = scmp.eq.s32.totalorder %s14, 0
      %p56 = por %p54, %p55
      %p57 = scmp.ne.s32.totalorder %s43, %s44
      %p58 = scmp.eq.s32.totalorder %s15, 1
      %p59 = por %p57, %p58
      %p61 = scmp.ne.s32.totalorder %s44, %s60
      %p62 = scmp.eq.s32.totalorder %s15, 0
      %p63 = por %p61, %p62
      %s64 = ssub.s32 %s18, %s27
      %s65 = ssub.s32 %s17, %s31
      %s66 = sor.u32 %s64, %s65
      %p67 = scmp.eq.s32.totalorder %s66, 0
      %s69 = sadd.s32 %s68, 1
      %s70 = scalar_select %p67, %s68, %s69
      %p73 = pneg %p67
      %p74 = scmp.eq.s32.totalorder %s9, 1
      %p75 = por %p73, %p74
      %p76 = scmp.ne.s32.totalorder %s68, %s71
      %p77 = scmp.eq.s32.totalorder %s9, 0
      %p78 = por %p76, %p77
      %p79 = scmp.ne.s32.totalorder %s68, %s71
      %p80 = scmp.eq.s32.totalorder %s14, 1
      %p81 = por %p79, %p80
      %p82 = scmp.ne.s32.totalorder %s71, %s72
      %p83 = scmp.eq.s32.totalorder %s14, 0
      %p84 = por %p82, %p83
      %p85 = scmp.ne.s32.totalorder %s71, %s72
      %p86 = scmp.eq.s32.totalorder %s15, 1
      %p87 = por %p85, %p86
      %p89 = scmp.ne.s32.totalorder %s72, %s88
      %p90 = scmp.eq.s32.totalorder %s15, 0
      %p91 = por %p89, %p90
      %s92 = ssub.s32 %s17, %s31
      %p93 = scmp.eq.s32.totalorder %s92, 0
      %s95 = sadd.s32 %s94, 1
      %s96 = scalar_select %p93, %s94, %s95
      %p99 = pneg %p93
      %p100 = scmp.eq.s32.totalorder %s9, 1
      %p101 = por %p99, %p100
      %p102 = scmp.ne.s32.totalorder %s94, %s97
      %p103 = scmp.eq.s32.totalorder %s9, 0
      %p104 = por %p102, %p103
      %p105 = scmp.ne.s32.totalorder %s94, %s97
      %p106 = scmp.eq.s32.totalorder %s14, 1
      %p107 = por %p105, %p106
      %p108 = scmp.ne.s32.totalorder %s97, %s98
      %p109 = scmp.eq.s32.totalorder %s14, 0
      %p110 = por %p108, %p109
      %p111 = scmp.ne.s32.totalorder %s97, %s98
      %p112 = scmp.eq.s32.totalorder %s15, 1
      %p113 = por %p111, %p112
      %p115 = scmp.ne.s32.totalorder %s98, %s114
      %p116 = scmp.eq.s32.totalorder %s15, 0
      %p117 = por %p115, %p116
      %s118 = ssub.s32 %s16, %s35
      %s119 = ssub.s32 %s17, %s31
      %s120 = sor.u32 %s118, %s119
      %p121 = scmp.eq.s32.totalorder %s120, 0
      %s123 = sadd.s32 %s122, 1
      %s124 = scalar_select %p121, %s122, %s123
      %p127 = pneg %p121
      %p128 = scmp.eq.s32.totalorder %s9, 1
      %p129 = por %p127, %p128
      %p130 = scmp.ne.s32.totalorder %s122, %s125
      %p131 = scmp.eq.s32.totalorder %s9, 0
      %p132 = por %p130, %p131
      %p133 = scmp.ne.s32.totalorder %s122, %s125
      %p134 = scmp.eq.s32.totalorder %s14, 1
      %p135 = por %p133, %p134
      %p136 = scmp.ne.s32.totalorder %s125, %s126
      %p137 = scmp.eq.s32.totalorder %s14, 0
      %p138 = por %p136, %p137
      %p139 = scmp.ne.s32.totalorder %s125, %s126
      %p140 = scmp.eq.s32.totalorder %s15, 1
      %p141 = por %p139, %p140
      %p143 = scmp.ne.s32.totalorder %s126, %s142
      %p144 = scmp.eq.s32.totalorder %s15, 0
      %p145 = por %p143, %p144
      %p146 = scmp.le.s32.totalorder 1, %s9
      %p147 = scmp.lt.s32.totalorder %s9, 3
      %p148 = pnand %p146, %p147
      %p149 = pneg %p148
      // Predicated region
      $region9: #{alexnet_forward.9} parent=5 // pred_check
        _
      $region10: #{alexnet_forward.9} parent=5 // pred_check_branch
        %151 = sbr.rel (%p148) target = $region12
      $region11: #{alexnet_forward.9} parent=5 // pred_region
        %s152 = ssub.s32 %s9, 1
        // Predicated region
        $region13: #{alexnet_forward.9} parent=11 // pred_check
          %p153 = pneg %p84
        $region14: #{alexnet_forward.9} parent=11 // pred_check_branch
          %155 = sbr.rel (%p153) target = $region16
        $region15: #{alexnet_forward.9} parent=11 // pred_region
          %s156 = smul.u32 48, %s21
          %p157 = scmp.lt.s32.totalorder %s156, 47
          %s158 = scalar_select %p157, %s156, 47
          %p159 = scmp.lt.s32.totalorder %s20, 0
          %s160 = scalar_select %p159, %s20, 0
          %s161 = sadd.s32 %s160, %s158
          %s162 = smul.addr %s161, 4
          %s163 = scalar_lea.vmem %s1, %s162
          %s164 = smul.u32 48, %s21
        $region16: #{alexnet_forward.9} parent=11 // pred_fallthru
          _
        // Predicated region
        $region17: #{alexnet_forward.9} parent=11 // pred_check
          %p165 = pneg %p110
        $region18: #{alexnet_forward.9} parent=11 // pred_check_branch
          %167 = sbr.rel (%p165) target = $region20
        $region19: #{alexnet_forward.9} parent=11 // pred_region
          %p168 = scmp.lt.s32.totalorder %s20, 0
          %s169 = scalar_select %p168, %s20, 0
          %s170 = scalar_lea.vmem %s2, %s169
        $region20: #{alexnet_forward.9} parent=11 // pred_fallthru
          _
      $region12: #{alexnet_forward.9} parent=5 // pred_fallthru
        _
      %p171 = scmp.lt.s32.totalorder %s9, 2
      // Predicated region
      $region21: #{alexnet_forward.9} parent=5 // pred_check
        %p172 = pneg %p171
      $region22: #{alexnet_forward.9} parent=5 // pred_check_branch
        %174 = sbr.rel (%p172) target = $region24
      $region23: #{alexnet_forward.9} parent=5 // pred_region
        // Predicated region
        $region25: #{alexnet_forward.9} parent=23 // pred_check
          %p175 = pneg %p50
        $region26: #{alexnet_forward.9} parent=23 // pred_check_branch
          %177 = sbr.rel (%p175) target = $region28
        $region27: #{alexnet_forward.9} parent=23 // pred_region
          %s178 = smul.u32 32, %s16
          %s179 = smul.u32 3, %s18
          %s180 = ssub.s32 57, %s178
          %p181 = scmp.lt.s32.totalorder %s180, 32
          %s182 = scalar_select %p181, %s180, 32
          %s183 = smul.u32 64, %s182
          %s184 = smul.u32 %s183, 3
          %p185 = scmp.lt.s32.totalorder %s178, 56
          %s186 = scalar_select %p185, %s178, 56
          %p187 = scmp.lt.s32.totalorder %s179, 2
          %s188 = scalar_select %p187, %s179, 2
          %s189 = smul.addr %s186, 3
          %s190 = sadd.s32 %s188, %s189
          %s191 = smul.addr %s190, 4
          %s192 = scalar_lea.vmem %s0, %s191
          %s193 = smul.u32 32, %s16
          %s194 = smul.u32 3, %s18
          %s195 = ssub.s32 57, %s193
          %p196 = scmp.lt.s32.totalorder %s195, 32
          %s197 = scalar_select %p196, %s195, 32
          %s198 = smul.u32 64, %s197
          %s199 = smul.u32 %s198, 3
        $region28: #{alexnet_forward.9} parent=23 // pred_fallthru
          _
      $region24: #{alexnet_forward.9} parent=5 // pred_fallthru
        _
      %p200 = scmp.le.s32.totalorder 1, %s9
      %p201 = scmp.lt.s32.totalorder %s9, 3
      %p202 = pnand %p200, %p201
      %p203 = pneg %p202
      // Predicated region
      $region29: #{alexnet_forward.9} parent=5 // pred_check
        _
      $region30: #{alexnet_forward.9} parent=5 // pred_check_branch
        %205 = sbr.rel (%p202) target = $region32
      $region31: #{alexnet_forward.9} parent=5 // pred_region
        %s206 = ssub.s32 %s9, 1
        %s207 = smul.u32 32, %s19
        %s208 = smul.u32 3, %s21
        %s209 = ssub.s32 57, %s207
        %p210 = scmp.lt.s32.totalorder %s209, 32
        %s211 = scalar_select %p210, %s209, 32
        %s212 = smul.u32 64, %s211
        %s213 = smul.u32 %s212, 3
        %p214 = scmp.lt.s32.totalorder %s207, 56
        %s215 = scalar_select %p214, %s207, 56
        %p216 = scmp.lt.s32.totalorder %s208, 2
        %s217 = scalar_select %p216, %s208, 2
        %s218 = smul.addr %s215, 3
        %s219 = sadd.s32 %s217, %s218
        %s220 = smul.addr %s219, 4
        %s221 = scalar_lea.vmem %s0, %s220
        %p222 = pneg %p56
        %p223 = pneg %p53
        %s224 = smul.u32 48, %s21
        %p225 = scmp.lt.s32.totalorder %s224, 47
        %s226 = scalar_select %p225, %s224, 47
        %p227 = scmp.lt.s32.totalorder %s20, 0
        %s228 = scalar_select %p227, %s20, 0
        %s229 = sadd.s32 %s228, %s226
        %s230 = smul.addr %s229, 4
        %s231 = scalar_lea.vmem %s1, %s230
        %p232 = pneg %p84
        %p233 = pneg %p81
        %p234 = scmp.lt.s32.totalorder %s20, 0
        %s235 = scalar_select %p234, %s20, 0
        %s236 = scalar_lea.vmem %s2, %s235
        %p237 = pneg %p110
        %p238 = pneg %p107
        %p239 = pneg %p138
        %p240 = pneg %p135
        %s241 = sand.u32 %s125, 1
        %s242 = sand.u32 %s125, 1
        %s243 = smul.addr %s242, 128
        %s244 = scalar_lea.vmem [#allocation3], %s243
        %s245 = smul.u32 32, %s19
        %s246 = smul.u32 3, %s21
        %s247 = ssub.s32 57, %s245
        %p248 = scmp.lt.s32.totalorder %s247, 32
        %s249 = scalar_select %p248, %s247, 32
        %s250 = smul.u32 64, %s249
        %s251 = smul.u32 %s250, 3
        %p252 = scmp.lt.s32.totalorder %s245, 56
        %s253 = scalar_select %p252, %s245, 56
        %p254 = scmp.lt.s32.totalorder %s246, 2
        %s255 = scalar_select %p254, %s246, 2
        %s256 = smul.addr %s253, 3
        %s257 = sadd.s32 %s255, %s256
        %s258 = smul.addr %s257, 4
        %s259 = scalar_lea.vmem %s0, %s258
        %s260 = smul.u32 32, %s19
        %s261 = smul.u32 3, %s21
        %s262 = ssub.s32 57, %s260
        %p263 = scmp.lt.s32.totalorder %s262, 32
        %s264 = scalar_select %p263, %s262, 32
        %s265 = smul.u32 64, %s264
        %s266 = smul.u32 %s265, 3
        %s267 = smul.u32 48, %s21
        %p268 = scmp.lt.s32.totalorder %s267, 47
        %s269 = scalar_select %p268, %s267, 47
        %p270 = scmp.lt.s32.totalorder %s20, 0
        %s271 = scalar_select %p270, %s20, 0
        %s272 = sadd.s32 %s271, %s269
        %s273 = smul.addr %s272, 4
        %s274 = scalar_lea.vmem %s1, %s273
        %s275 = smul.u32 48, %s21
        %p276 = scmp.lt.s32.totalorder %s20, 0
        %s277 = scalar_select %p276, %s20, 0
        %s278 = scalar_lea.vmem %s2, %s277
        %s279 = smul.u32 32, %s19
        %s280 = ssub.s32 57, %s279
        %p281 = scmp.lt.s32.totalorder %s280, 32
        %s282 = scalar_select %p281, %s280, 32
        %s283 = smul.u32 64, %s282
        %p285 = scmp.eq.s32.totalorder %s21, 0
        // Predicated region
        $region33: #{alexnet_forward.9} parent=31 // pred_check
          %p286 = pneg %p285
        $region34: #{alexnet_forward.9} parent=31 // pred_check_branch
          %288 = sbr.rel (%p286) target = $region36
        $region35: #{alexnet_forward.9} parent=31 // pred_region
          %289 = vst [vmem:[#allocation2] sm:$0xff] 0.0
          %290 = vst [vmem:[#allocation2 + $0x8] sm:$0xff] 0.0
          %291 = vst [vmem:[#allocation2 + $0x10] sm:$0xff] 0.0
          %292 = vst [vmem:[#allocation2 + $0x18] sm:$0xff] 0.0
          %293 = vst [vmem:[#allocation2 + $0x20] sm:$0xff] 0.0
          %294 = vst [vmem:[#allocation2 + $0x28] sm:$0xff] 0.0
          %295 = vst [vmem:[#allocation2 + $0x30] sm:$0xff] 0.0
          %296 = vst [vmem:[#allocation2 + $0x38] sm:$0xff] 0.0
          %297 = vst [vmem:[#allocation2 + $0x40] sm:$0xff] 0.0
          %298 = vst [vmem:[#allocation2 + $0x48] sm:$0xff] 0.0
          %299 = vst [vmem:[#allocation2 + $0x50] sm:$0xff] 0.0
          %300 = vst [vmem:[#allocation2 + $0x58] sm:$0xff] 0.0
          %301 = vst [vmem:[#allocation2 + $0x60] sm:$0xff] 0.0
          %302 = vst [vmem:[#allocation2 + $0x68] sm:$0xff] 0.0
          %303 = vst [vmem:[#allocation2 + $0x70] sm:$0xff] 0.0
          %304 = vst [vmem:[#allocation2 + $0x78] sm:$0xff] 0.0
          %305 = vst [vmem:[#allocation2 + $0x80] sm:$0xff] 0.0
          %306 = vst [vmem:[#allocation2 + $0x88] sm:$0xff] 0.0
          %307 = vst [vmem:[#allocation2 + $0x90] sm:$0xff] 0.0
          %308 = vst [vmem:[#allocation2 + $0x98] sm:$0xff] 0.0
          %309 = vst [vmem:[#allocation2 + $0xa0] sm:$0xff] 0.0
          %310 = vst [vmem:[#allocation2 + $0xa8] sm:$0xff] 0.0
          %311 = vst [vmem:[#allocation2 + $0xb0] sm:$0xff] 0.0
          %312 = vst [vmem:[#allocation2 + $0xb8] sm:$0xff] 0.0
          %313 = vst [vmem:[#allocation2 + $0xc0] sm:$0xff] 0.0
          %314 = vst [vmem:[#allocation2 + $0xc8] sm:$0xff] 0.0
          %315 = vst [vmem:[#allocation2 + $0xd0] sm:$0xff] 0.0
          %316 = vst [vmem:[#allocation2 + $0xd8] sm:$0xff] 0.0
          %317 = vst [vmem:[#allocation2 + $0xe0] sm:$0xff] 0.0
          %318 = vst [vmem:[#allocation2 + $0xe8] sm:$0xff] 0.0
          %319 = vst [vmem:[#allocation2 + $0xf0] sm:$0xff] 0.0
          %320 = vst [vmem:[#allocation2 + $0xf8] sm:$0xff] 0.0
        $region36: #{alexnet_forward.9} parent=31 // pred_fallthru
          _
        %v321 = vld [vmem:[#allocation2] sm:$0xff]
        %v322 = vld [vmem:[#allocation2 + $0x8] sm:$0xff]
        %v323 = vld [vmem:[#allocation2 + $0x10] sm:$0xff]
        %v324 = vld [vmem:[#allocation2 + $0x18] sm:$0xff]
        %v325 = vld [vmem:[#allocation2 + $0x20] sm:$0xff]
        %v326 = vld [vmem:[#allocation2 + $0x28] sm:$0xff]
        %v327 = vld [vmem:[#allocation2 + $0x30] sm:$0xff]
        %v328 = vld [vmem:[#allocation2 + $0x38] sm:$0xff]
        %v329 = vld [vmem:[#allocation2 + $0x40] sm:$0xff]
        %v330 = vld [vmem:[#allocation2 + $0x48] sm:$0xff]
        %v331 = vld [vmem:[#allocation2 + $0x50] sm:$0xff]
        %v332 = vld [vmem:[#allocation2 + $0x58] sm:$0xff]
        %v333 = vld [vmem:[#allocation2 + $0x60] sm:$0xff]
        %v334 = vld [vmem:[#allocation2 + $0x68] sm:$0xff]
        %v335 = vld [vmem:[#allocation2 + $0x70] sm:$0xff]
        %v336 = vld [vmem:[#allocation2 + $0x78] sm:$0xff]
        %v337 = vld [vmem:[#allocation2 + $0x80] sm:$0xff]
        %v338 = vld [vmem:[#allocation2 + $0x88] sm:$0xff]
        %v339 = vld [vmem:[#allocation2 + $0x90] sm:$0xff]
        %v340 = vld [vmem:[#allocation2 + $0x98] sm:$0xff]
        %v341 = vld [vmem:[#allocation2 + $0xa0] sm:$0xff]
        %v342 = vld [vmem:[#allocation2 + $0xa8] sm:$0xff]
        %v343 = vld [vmem:[#allocation2 + $0xb0] sm:$0xff]
        %v344 = vld [vmem:[#allocation2 + $0xb8] sm:$0xff]
        %v345 = vld [vmem:[#allocation2 + $0xc0] sm:$0xff]
        %v346 = vld [vmem:[#allocation2 + $0xc8] sm:$0xff]
        %v347 = vld [vmem:[#allocation2 + $0xd0] sm:$0xff]
        %v348 = vld [vmem:[#allocation2 + $0xd8] sm:$0xff]
        %v349 = vld [vmem:[#allocation2 + $0xe0] sm:$0xff]
        %v350 = vld [vmem:[#allocation2 + $0xe8] sm:$0xff]
        %v351 = vld [vmem:[#allocation2 + $0xf0] sm:$0xff]
        %v352 = vld [vmem:[#allocation2 + $0xf8] sm:$0xff]
        %v353 = vld [vmem:[%s259] sm:$0xff]
        %v354 = vld [vmem:[%s259 + $0x8] sm:$0xf]
        %v355 = vld [vmem:[%s259 + $0xc] sm:$0xff]
        %v356 = vld [vmem:[%s259 + $0x14] sm:$0xf]
        %v357 = vld [vmem:[%s259 + $0x18] sm:$0xff]
        %v358 = vld [vmem:[%s259 + $0x20] sm:$0xf]
        %v359 = vld [vmem:[%s259 + $0x24] sm:$0xff]
        %v360 = vld [vmem:[%s259 + $0x2c] sm:$0xf]
        %v361 = vld [vmem:[%s259 + $0x30] sm:$0xff]
        %v362 = vld [vmem:[%s259 + $0x38] sm:$0xf]
        %v363 = vld [vmem:[%s259 + $0x3c] sm:$0xff]
        %v364 = vld [vmem:[%s259 + $0x44] sm:$0xf]
        %v365 = vld [vmem:[%s259 + $0x48] sm:$0xff]
        %v366 = vld [vmem:[%s259 + $0x50] sm:$0xf]
        %v367 = vld [vmem:[%s259 + $0x54] sm:$0xff]
        %v368 = vld [vmem:[%s259 + $0x5c] sm:$0xf]
        %v369 = vld [vmem:[%s259 + $0x60] sm:$0xff]
        %v370 = vld [vmem:[%s259 + $0x68] sm:$0xf]
        %v371 = vld [vmem:[%s259 + $0x6c] sm:$0xff]
        %v372 = vld [vmem:[%s259 + $0x74] sm:$0xf]
        %v373 = vld [vmem:[%s259 + $0x78] sm:$0xff]
        %v374 = vld [vmem:[%s259 + $0x80] sm:$0xf]
        %v375 = vld [vmem:[%s259 + $0x84] sm:$0xff]
        %v376 = vld [vmem:[%s259 + $0x8c] sm:$0xf]
        %v377 = vld [vmem:[%s259 + $0x90] sm:$0xff]
        %v378 = vld [vmem:[%s259 + $0x98] sm:$0xf]
        %v379 = vld [vmem:[%s259 + $0x9c] sm:$0xff]
        %v380 = vld [vmem:[%s259 + $0xa4] sm:$0xf]
        %v381 = vld [vmem:[%s259 + $0xa8] sm:$0xff]
        %v382 = vld [vmem:[%s259 + $0xb0] sm:$0xf]
        %v383 = vld [vmem:[%s259 + $0xb4] sm:$0xff]
        %v384 = vld [vmem:[%s259 + $0xbc] sm:$0xf]
        %v385 = vld [vmem:[%s259 + $0xc0] sm:$0xff]
        %v386 = vld [vmem:[%s259 + $0xc8] sm:$0xf]
        %v387 = vld [vmem:[%s259 + $0xcc] sm:$0xff]
        %v388 = vld [vmem:[%s259 + $0xd4] sm:$0xf]
        %v389 = vld [vmem:[%s259 + $0xd8] sm:$0xff]
        %v390 = vld [vmem:[%s259 + $0xe0] sm:$0xf]
        %v391 = vld [vmem:[%s259 + $0xe4] sm:$0xff]
        %v392 = vld [vmem:[%s259 + $0xec] sm:$0xf]
        %v393 = vld [vmem:[%s259 + $0xf0] sm:$0xff]
        %v394 = vld [vmem:[%s259 + $0xf8] sm:$0xf]
        %v395 = vld [vmem:[%s259 + $0xfc] sm:$0xff]
        %v396 = vld [vmem:[%s259 + $0x104] sm:$0xf]
        %v397 = vld [vmem:[%s259 + $0x108] sm:$0xff]
        %v398 = vld [vmem:[%s259 + $0x110] sm:$0xf]
        %v399 = vld [vmem:[%s259 + $0x114] sm:$0xff]
        %v400 = vld [vmem:[%s259 + $0x11c] sm:$0xf]
        %v401 = vld [vmem:[%s259 + $0x120] sm:$0xff]
        %v402 = vld [vmem:[%s259 + $0x128] sm:$0xf]
        %v403 = vld [vmem:[%s259 + $0x12c] sm:$0xff]
        %v404 = vld [vmem:[%s259 + $0x134] sm:$0xf]
        %v405 = vld [vmem:[%s259 + $0x138] sm:$0xff]
        %v406 = vld [vmem:[%s259 + $0x140] sm:$0xf]
        %v407 = vld [vmem:[%s259 + $0x144] sm:$0xff]
        %v408 = vld [vmem:[%s259 + $0x14c] sm:$0xf]
        %v409 = vld [vmem:[%s259 + $0x150] sm:$0xff]
        %v410 = vld [vmem:[%s259 + $0x158] sm:$0xf]
        %v411 = vld [vmem:[%s259 + $0x15c] sm:$0xff]
        %v412 = vld [vmem:[%s259 + $0x164] sm:$0xf]
        %v413 = vld [vmem:[%s259 + $0x168] sm:$0xff]
        %v414 = vld [vmem:[%s259 + $0x170] sm:$0xf]
        %v415 = vld [vmem:[%s259 + $0x174] sm:$0xff]
        %v416 = vld [vmem:[%s259 + $0x17c] sm:$0xf]
        %v417 = vld [vmem:[%s274] sm:$0xf]
        %v418 = vld [vmem:[%s274 + $0x4] sm:$0xf]
        %v419 = vld [vmem:[%s274 + $0x8] sm:$0xf]
        %v420 = vld [vmem:[%s274 + $0xc] sm:$0xf]
        %v421 = vld [vmem:[%s274 + $0x10] sm:$0xf]
        %v422 = vld [vmem:[%s274 + $0x14] sm:$0xf]
        %v423 = vld [vmem:[%s274 + $0x18] sm:$0xf]
        %v424 = vld [vmem:[%s274 + $0x1c] sm:$0xf]
        %v425 = vld [vmem:[%s274 + $0x20] sm:$0xf]
        %v426 = vld [vmem:[%s274 + $0x24] sm:$0xf]
        %v427 = vld [vmem:[%s274 + $0x28] sm:$0xf]
        %v428 = vld [vmem:[%s274 + $0x2c] sm:$0xf]
        %v429 = vld [vmem:[%s274 + $0x30] sm:$0xf]
        %v430 = vld [vmem:[%s274 + $0x34] sm:$0xf]
        %v431 = vld [vmem:[%s274 + $0x38] sm:$0xf]
        %v432 = vld [vmem:[%s274 + $0x3c] sm:$0xf]
        %v433 = vld [vmem:[%s274 + $0x40] sm:$0xf]
        %v434 = vld [vmem:[%s274 + $0x44] sm:$0xf]
        %v435 = vld [vmem:[%s274 + $0x48] sm:$0xf]
        %v436 = vld [vmem:[%s274 + $0x4c] sm:$0xf]
        %v437 = vld [vmem:[%s274 + $0x50] sm:$0xf]
        %v438 = vld [vmem:[%s274 + $0x54] sm:$0xf]
        %v439 = vld [vmem:[%s274 + $0x58] sm:$0xf]
        %v440 = vld [vmem:[%s274 + $0x5c] sm:$0xf]
        %v441 = vld [vmem:[%s274 + $0x60] sm:$0xf]
        %v442 = vld [vmem:[%s274 + $0x64] sm:$0xf]
        %v443 = vld [vmem:[%s274 + $0x68] sm:$0xf]
        %v444 = vld [vmem:[%s274 + $0x6c] sm:$0xf]
        %v445 = vld [vmem:[%s274 + $0x70] sm:$0xf]
        %v446 = vld [vmem:[%s274 + $0x74] sm:$0xf]
        %v447 = vld [vmem:[%s274 + $0x78] sm:$0xf]
        %v448 = vld [vmem:[%s274 + $0x7c] sm:$0xf]
        %v449 = vld [vmem:[%s274 + $0x80] sm:$0xf]
        %v450 = vld [vmem:[%s274 + $0x84] sm:$0xf]
        %v451 = vld [vmem:[%s274 + $0x88] sm:$0xf]
        %v452 = vld [vmem:[%s274 + $0x8c] sm:$0xf]
        %v453 = vld [vmem:[%s274 + $0x90] sm:$0xf]
        %v454 = vld [vmem:[%s274 + $0x94] sm:$0xf]
        %v455 = vld [vmem:[%s274 + $0x98] sm:$0xf]
        %v456 = vld [vmem:[%s274 + $0x9c] sm:$0xf]
        %v457 = vld [vmem:[%s274 + $0xa0] sm:$0xf]
        %v458 = vld [vmem:[%s274 + $0xa4] sm:$0xf]
        %v459 = vld [vmem:[%s274 + $0xa8] sm:$0xf]
        %v460 = vld [vmem:[%s274 + $0xac] sm:$0xf]
        %v461 = vld [vmem:[%s274 + $0xb0] sm:$0xf]
        %v462 = vld [vmem:[%s274 + $0xb4] sm:$0xf]
        %v463 = vld [vmem:[%s274 + $0xb8] sm:$0xf]
        %v464 = vld [vmem:[%s274 + $0xbc] sm:$0xf]
        %v529 = vunpack.c.l.b16 %v353
        %v530 = vunpack.c.h.b16 %v353
        %v531 = vunpack.c.l.b16 %v354
        %v532 = vunpack.c.l.b16 %v355
        %v533 = vunpack.c.h.b16 %v355
        %v534 = vunpack.c.l.b16 %v356
        %v535 = vunpack.c.l.b16 %v357
        %v536 = vunpack.c.h.b16 %v357
        %v537 = vunpack.c.l.b16 %v358
        %v538 = vunpack.c.l.b16 %v359
        %v539 = vunpack.c.h.b16 %v359
        %v540 = vunpack.c.l.b16 %v360
        %v541 = vunpack.c.l.b16 %v361
        %v542 = vunpack.c.h.b16 %v361
        %v543 = vunpack.c.l.b16 %v362
        %v544 = vunpack.c.l.b16 %v363
        %v545 = vunpack.c.h.b16 %v363
        %v546 = vunpack.c.l.b16 %v364
        %v547 = vunpack.c.l.b16 %v365
        %v548 = vunpack.c.h.b16 %v365
        %v549 = vunpack.c.l.b16 %v366
        %v550 = vunpack.c.l.b16 %v367
        %v551 = vunpack.c.h.b16 %v367
        %v552 = vunpack.c.l.b16 %v368
        %v553 = vunpack.c.l.b16 %v369
        %v554 = vunpack.c.h.b16 %v369
        %v555 = vunpack.c.l.b16 %v370
        %v556 = vunpack.c.l.b16 %v371
        %v557 = vunpack.c.h.b16 %v371
        %v558 = vunpack.c.l.b16 %v372
        %v559 = vunpack.c.l.b16 %v373
        %v560 = vunpack.c.h.b16 %v373
        %v561 = vunpack.c.l.b16 %v374
        %v562 = vunpack.c.l.b16 %v375
        %v563 = vunpack.c.h.b16 %v375
        %v564 = vunpack.c.l.b16 %v376
        %v565 = vunpack.c.l.b16 %v377
        %v566 = vunpack.c.h.b16 %v377
        %v567 = vunpack.c.l.b16 %v378
        %v568 = vunpack.c.l.b16 %v379
        %v569 = vunpack.c.h.b16 %v379
        %v570 = vunpack.c.l.b16 %v380
        %v571 = vunpack.c.l.b16 %v381
        %v572 = vunpack.c.h.b16 %v381
        %v573 = vunpack.c.l.b16 %v382
        %v574 = vunpack.c.l.b16 %v383
        %v575 = vunpack.c.h.b16 %v383
        %v576 = vunpack.c.l.b16 %v384
        %v577 = vunpack.c.l.b16 %v385
        %v578 = vunpack.c.h.b16 %v385
        %v579 = vunpack.c.l.b16 %v386
        %v580 = vunpack.c.l.b16 %v387
        %v581 = vunpack.c.h.b16 %v387
        %v582 = vunpack.c.l.b16 %v388
        %v583 = vunpack.c.l.b16 %v389
        %v584 = vunpack.c.h.b16 %v389
        %v585 = vunpack.c.l.b16 %v390
        %v586 = vunpack.c.l.b16 %v391
        %v587 = vunpack.c.h.b16 %v391
        %v588 = vunpack.c.l.b16 %v392
        %v589 = vunpack.c.l.b16 %v393
        %v590 = vunpack.c.h.b16 %v393
        %v591 = vunpack.c.l.b16 %v394
        %v592 = vunpack.c.l.b16 %v395
        %v593 = vunpack.c.h.b16 %v395
        %v594 = vunpack.c.l.b16 %v396
        %v595 = vunpack.c.l.b16 %v397
        %v596 = vunpack.c.h.b16 %v397
        %v597 = vunpack.c.l.b16 %v398
        %v598 = vunpack.c.l.b16 %v399
        %v599 = vunpack.c.h.b16 %v399
        %v600 = vunpack.c.l.b16 %v400
        %v601 = vunpack.c.l.b16 %v401
        %v602 = vunpack.c.h.b16 %v401
        %v603 = vunpack.c.l.b16 %v402
        %v604 = vunpack.c.l.b16 %v403
        %v605 = vunpack.c.h.b16 %v403
        %v606 = vunpack.c.l.b16 %v404
        %v607 = vunpack.c.l.b16 %v405
        %v608 = vunpack.c.h.b16 %v405
        %v609 = vunpack.c.l.b16 %v406
        %v610 = vunpack.c.l.b16 %v407
        %v611 = vunpack.c.h.b16 %v407
        %v612 = vunpack.c.l.b16 %v408
        %v613 = vunpack.c.l.b16 %v409
        %v614 = vunpack.c.h.b16 %v409
        %v615 = vunpack.c.l.b16 %v410
        %v616 = vunpack.c.l.b16 %v411
        %v617 = vunpack.c.h.b16 %v411
        %v618 = vunpack.c.l.b16 %v412
        %v619 = vunpack.c.l.b16 %v413
        %v620 = vunpack.c.h.b16 %v413
        %v621 = vunpack.c.l.b16 %v414
        %v622 = vunpack.c.l.b16 %v415
        %v623 = vunpack.c.h.b16 %v415
        %v624 = vunpack.c.l.b16 %v416
        %v625 = vpack.c.b16 %v532, %v529
        %v626 = vpack.c.b16 %v533, %v530
        %v627 = vpack.c.b16 %v534, %v531
        %v628 = vpack.c.b16 %v538, %v535
        %v629 = vpack.c.b16 %v539, %v536
        %v630 = vpack.c.b16 %v540, %v537
        %v631 = vpack.c.b16 %v544, %v541
        %v632 = vpack.c.b16 %v545, %v542
        %v633 = vpack.c.b16 %v546, %v543
        %v634 = vpack.c.b16 %v550, %v547
        %v635 = vpack.c.b16 %v551, %v548
        %v636 = vpack.c.b16 %v552, %v549
        %v637 = vpack.c.b16 %v556, %v553
        %v638 = vpack.c.b16 %v557, %v554
        %v639 = vpack.c.b16 %v558, %v555
        %v640 = vpack.c.b16 %v562, %v559
        %v641 = vpack.c.b16 %v563, %v560
        %v642 = vpack.c.b16 %v564, %v561
        %v643 = vpack.c.b16 %v568, %v565
        %v644 = vpack.c.b16 %v569, %v566
        %v645 = vpack.c.b16 %v570, %v567
        %v646 = vpack.c.b16 %v574, %v571
        %v647 = vpack.c.b16 %v575, %v572
        %v648 = vpack.c.b16 %v576, %v573
        %v649 = vpack.c.b16 %v580, %v577
        %v650 = vpack.c.b16 %v581, %v578
        %v651 = vpack.c.b16 %v582, %v579
        %v652 = vpack.c.b16 %v586, %v583
        %v653 = vpack.c.b16 %v587, %v584
        %v654 = vpack.c.b16 %v588, %v585
        %v655 = vpack.c.b16 %v592, %v589
        %v656 = vpack.c.b16 %v593, %v590
        %v657 = vpack.c.b16 %v594, %v591
        %v658 = vpack.c.b16 %v598, %v595
        %v659 = vpack.c.b16 %v599, %v596
        %v660 = vpack.c.b16 %v600, %v597
        %v661 = vpack.c.b16 %v604, %v601
        %v662 = vpack.c.b16 %v605, %v602
        %v663 = vpack.c.b16 %v606, %v603
        %v664 = vpack.c.b16 %v610, %v607
        %v665 = vpack.c.b16 %v611, %v608
        %v666 = vpack.c.b16 %v612, %v609
        %v667 = vpack.c.b16 %v616, %v613
        %v668 = vpack.c.b16 %v617, %v614
        %v669 = vpack.c.b16 %v618, %v615
        %v670 = vpack.c.b16 %v622, %v619
        %v671 = vpack.c.b16 %v623, %v620
        %v672 = vpack.c.b16 %v624, %v621
        %v769 = vunpack.c.l.b16 %v417
        %v770 = vunpack.c.l.b16 %v418
        %v771 = vunpack.c.l.b16 %v419
        %v772 = vunpack.c.l.b16 %v420
        %v773 = vunpack.c.l.b16 %v421
        %v774 = vunpack.c.l.b16 %v422
        %v775 = vunpack.c.l.b16 %v423
        %v776 = vunpack.c.l.b16 %v424
        %v777 = vunpack.c.l.b16 %v425
        %v778 = vunpack.c.l.b16 %v426
        %v779 = vunpack.c.l.b16 %v427
        %v780 = vunpack.c.l.b16 %v428
        %v781 = vunpack.c.l.b16 %v429
        %v782 = vunpack.c.l.b16 %v430
        %v783 = vunpack.c.l.b16 %v431
        %v784 = vunpack.c.l.b16 %v432
        %v785 = vunpack.c.l.b16 %v433
        %v786 = vunpack.c.l.b16 %v434
        %v787 = vunpack.c.l.b16 %v435
        %v788 = vunpack.c.l.b16 %v436
        %v789 = vunpack.c.l.b16 %v437
        %v790 = vunpack.c.l.b16 %v438
        %v791 = vunpack.c.l.b16 %v439
        %v792 = vunpack.c.l.b16 %v440
        %v793 = vunpack.c.l.b16 %v441
        %v794 = vunpack.c.l.b16 %v442
        %v795 = vunpack.c.l.b16 %v443
        %v796 = vunpack.c.l.b16 %v444
        %v797 = vunpack.c.l.b16 %v445
        %v798 = vunpack.c.l.b16 %v446
        %v799 = vunpack.c.l.b16 %v447
        %v800 = vunpack.c.l.b16 %v448
        %v801 = vunpack.c.l.b16 %v449
        %v802 = vunpack.c.l.b16 %v450
        %v803 = vunpack.c.l.b16 %v451
        %v804 = vunpack.c.l.b16 %v452
        %v805 = vunpack.c.l.b16 %v453
        %v806 = vunpack.c.l.b16 %v454
        %v807 = vunpack.c.l.b16 %v455
        %v808 = vunpack.c.l.b16 %v456
        %v809 = vunpack.c.l.b16 %v457
        %v810 = vunpack.c.l.b16 %v458
        %v811 = vunpack.c.l.b16 %v459
        %v812 = vunpack.c.l.b16 %v460
        %v813 = vunpack.c.l.b16 %v461
        %v814 = vunpack.c.l.b16 %v462
        %v815 = vunpack.c.l.b16 %v463
        %v816 = vunpack.c.l.b16 %v464
        %v817 = vpack.c.b16 %v770, %v769
        %v818 = vpack.c.b16 %v772, %v771
        %v819 = vpack.c.b16 %v774, %v773
        %v820 = vpack.c.b16 %v776, %v775
        %v821 = vpack.c.b16 %v778, %v777
        %v822 = vpack.c.b16 %v780, %v779
        %v823 = vpack.c.b16 %v782, %v781
        %v824 = vpack.c.b16 %v784, %v783
        %v825 = vpack.c.b16 %v786, %v785
        %v826 = vpack.c.b16 %v788, %v787
        %v827 = vpack.c.b16 %v790, %v789
        %v828 = vpack.c.b16 %v792, %v791
        %v829 = vpack.c.b16 %v794, %v793
        %v830 = vpack.c.b16 %v796, %v795
        %v831 = vpack.c.b16 %v798, %v797
        %v832 = vpack.c.b16 %v800, %v799
        %v833 = vpack.c.b16 %v802, %v801
        %v834 = vpack.c.b16 %v804, %v803
        %v835 = vpack.c.b16 %v806, %v805
        %v836 = vpack.c.b16 %v808, %v807
        %v837 = vpack.c.b16 %v810, %v809
        %v838 = vpack.c.b16 %v812, %v811
        %v839 = vpack.c.b16 %v814, %v813
        %v840 = vpack.c.b16 %v816, %v815
        %865 = vmatprep.subr.bf16.mxu0 0
        %866 = vmatpush1.bf16.msra.mxu0 %v817
        %867 = vmatprep.subr.bf16.mxu0 0
        %868 = vmatpush1.bf16.msra.mxu0 %v818
        %869 = vmatprep.subr.bf16.mxu0 0
        %870 = vmatpush1.bf16.msra.mxu0 %v819
        %871 = vmatprep.subr.bf16.mxu0 0
        %872 = vmatpush1.bf16.msra.mxu0 %v820
        %873 = vmatprep.subr.bf16.mxu0 0
        %874 = vmatpush1.bf16.msra.mxu0 %v821
        %875 = vmatprep.subr.bf16.mxu0 0
        %876 = vmatpush1.bf16.msra.mxu0 %v822
        %877 = vmatprep.subr.bf16.mxu0 0
        %878 = vmatpush1.bf16.msra.mxu0 %v823
        %879 = vmatprep.subr.bf16.mxu0 0
        %880 = vmatpush1.bf16.msra.mxu0 %v824
        %881 = vmatprep.subr.bf16.mxu0 0
        %882 = vmatpush1.bf16.msra.mxu0 %v825
        %883 = vmatprep.subr.bf16.mxu0 0
        %884 = vmatpush1.bf16.msra.mxu0 %v826
        %885 = vmatprep.subr.bf16.mxu0 0
        %886 = vmatpush1.bf16.msra.mxu0 %v827
        %887 = vmatprep.subr.bf16.mxu0 0
        %888 = vmatpush1.bf16.msra.mxu0 %v828
        %889 = vmatprep.subr.bf16.mxu0 0
        %890 = vmatpush1.bf16.msra.mxu0 %v829
        %891 = vmatprep.subr.bf16.mxu0 0
        %892 = vmatpush1.bf16.msra.mxu0 %v830
        %893 = vmatprep.subr.bf16.mxu0 0
        %894 = vmatpush1.bf16.msra.mxu0 %v831
        %895 = vmatprep.subr.bf16.mxu0 0
        %896 = vmatpush1.bf16.msra.mxu0 %v832
        %897 = vmatprep.mubr.bf16.mxu0 %v626
        %898 = vmatmul.mubr.bf16.gmra.mrb[0].mxu0 %v625
        %v899 = vpop.f32.mrb[0].mxu0
        %v900 = vadd.f32 0.0, %v899
        %v901 = vpop.f32.mrb[0].mxu0
        %v902 = vpop.f32.mrb[0].mxu0
        %v903 = vadd.f32 0.0, %v902
        %v904 = vpop.f32.mrb[0].mxu0
        %905 = vmatprep.mubr.bf16.mxu0 %v629
        %906 = vmatmul.mubr.bf16.gmra.mrb[0].mxu0 %v628
        %v907 = vpop.f32.mrb[0].mxu0
        %v908 = vadd.f32 0.0, %v907
        %v909 = vpop.f32.mrb[0].mxu0
        %v910 = vpop.f32.mrb[0].mxu0
        %v911 = vadd.f32 0.0, %v910
        %v912 = vpop.f32.mrb[0].mxu0
        %913 = vmatprep.mubr.bf16.mxu0 %v632
        %914 = vmatmul.mubr.bf16.gmra.mrb[0].mxu0 %v631
        %v915 = vpop.f32.mrb[0].mxu0
        %v916 = vadd.f32 0.0, %v915
        %v917 = vpop.f32.mrb[0].mxu0
        %v918 = vpop.f32.mrb[0].mxu0
        %v919 = vadd.f32 0.0, %v918
        %v920 = vpop.f32.mrb[0].mxu0
        %921 = vmatprep.mubr.bf16.mxu0 %v635
        %922 = vmatmul.mubr.bf16.gmra.mrb[0].mxu0 %v634
        %v923 = vpop.f32.mrb[0].mxu0
        %v924 = vadd.f32 0.0, %v923
        %v925 = vpop.f32.mrb[0].mxu0
        %v926 = vpop.f32.mrb[0].mxu0
        %v927 = vadd.f32 0.0, %v926
        %v928 = vpop.f32.mrb[0].mxu0
        %929 = vmatprep.mubr.bf16.mxu0 %v638
        %930 = vmatmul.mubr.bf16.gmra.mrb[0].mxu0 %v637
        %v931 = vpop.f32.mrb[0].mxu0
        %v932 = vadd.f32 0.0, %v931
        %v933 = vpop.f32.mrb[0].mxu0
        %v934 = vpop.f32.mrb[0].mxu0
        %v935 = vadd.f32 0.0, %v934
        %v936 = vpop.f32.mrb[0].mxu0
        %937 = vmatprep.mubr.bf16.mxu0 %v641
        %938 = vmatmul.mubr.bf16.gmra.mrb[0].mxu0 %v640
        %v939 = vpop.f32.mrb[0].mxu0
        %v940 = vadd.f32 0.0, %v939
        %v941 = vpop.f32.mrb[0].mxu0
        %v942 = vpop.f32.mrb[0].mxu0
        %v943 = vadd.f32 0.0, %v942
        %v944 = vpop.f32.mrb[0].mxu0
        %945 = vmatprep.mubr.bf16.mxu0 %v644
        %946 = vmatmul.mubr.bf16.gmra.mrb[0].mxu0 %v643
        %v947 = vpop.f32.mrb[0].mxu0
        %v948 = vadd.f32 0.0, %v947
        %v949 = vpop.f32.mrb[0].mxu0
        %v950 = vpop.f32.mrb[0].mxu0
        %v951 = vadd.f32 0.0, %v950
        %v952 = vpop.f32.mrb[0].mxu0
        %953 = vmatprep.mubr.bf16.mxu0 %v647
        %954 = vmatmul.mubr.bf16.gmra.mrb[0].mxu0 %v646
        %v955 = vpop.f32.mrb[0].mxu0
        %v956 = vadd.f32 0.0, %v955
        %v957 = vpop.f32.mrb[0].mxu0
        %v958 = vpop.f32.mrb[0].mxu0
        %v959 = vadd.f32 0.0, %v958
        %v960 = vpop.f32.mrb[0].mxu0
        %961 = vmatprep.mubr.bf16.mxu0 %v650
        %962 = vmatmul.mubr.bf16.gmra.mrb[0].mxu0 %v649
        %v963 = vpop.f32.mrb[0].mxu0
        %v964 = vadd.f32 0.0, %v963
        %v965 = vpop.f32.mrb[0].mxu0
        %v966 = vpop.f32.mrb[0].mxu0
        %v967 = vadd.f32 0.0, %v966
        %v968 = vpop.f32.mrb[0].mxu0
        %969 = vmatprep.mubr.bf16.mxu0 %v653
        %970 = vmatmul.mubr.bf16.gmra.mrb[0].mxu0 %v652
        %v971 = vpop.f32.mrb[0].mxu0
        %v972 = vadd.f32 0.0, %v971
        %v973 = vpop.f32.mrb[0].mxu0
        %v974 = vpop.f32.mrb[0].mxu0
        %v975 = vadd.f32 0.0, %v974
        %v976 = vpop.f32.mrb[0].mxu0
        %977 = vmatprep.mubr.bf16.mxu0 %v656
        %978 = vmatmul.mubr.bf16.gmra.mrb[0].mxu0 %v655
        %v979 = vpop.f32.mrb[0].mxu0
        %v980 = vadd.f32 0.0, %v979
        %v981 = vpop.f32.mrb[0].mxu0
        %v982 = vpop.f32.mrb[0].mxu0
        %v983 = vadd.f32 0.0, %v982
        %v984 = vpop.f32.mrb[0].mxu0
        %985 = vmatprep.mubr.bf16.mxu0 %v659
        %986 = vmatmul.mubr.bf16.gmra.mrb[0].mxu0 %v658
        %v987 = vpop.f32.mrb[0].mxu0
        %v988 = vadd.f32 0.0, %v987
        %v989 = vpop.f32.mrb[0].mxu0
        %v990 = vpop.f32.mrb[0].mxu0
        %v991 = vadd.f32 0.0, %v990
        %v992 = vpop.f32.mrb[0].mxu0
        %993 = vmatprep.mubr.bf16.mxu0 %v662
        %994 = vmatmul.mubr.bf16.gmra.mrb[0].mxu0 %v661
        %v995 = vpop.f32.mrb[0].mxu0
        %v996 = vadd.f32 0.0, %v995
        %v997 = vpop.f32.mrb[0].mxu0
        %v998 = vpop.f32.mrb[0].mxu0
        %v999 = vadd.f32 0.0, %v998
        %v1000 = vpop.f32.mrb[0].mxu0
        %1001 = vmatprep.mubr.bf16.mxu0 %v665
        %1002 = vmatmul.mubr.bf16.gmra.mrb[0].mxu0 %v664
        %v1003 = vpop.f32.mrb[0].mxu0
        %v1004 = vadd.f32 0.0, %v1003
        %v1005 = vpop.f32.mrb[0].mxu0
        %v1006 = vpop.f32.mrb[0].mxu0
        %v1007 = vadd.f32 0.0, %v1006
        %v1008 = vpop.f32.mrb[0].mxu0
        %1009 = vmatprep.mubr.bf16.mxu0 %v668
        %1010 = vmatmul.mubr.bf16.gmra.mrb[0].mxu0 %v667
        %v1011 = vpop.f32.mrb[0].mxu0
        %v1012 = vadd.f32 0.0, %v1011
        %v1013 = vpop.f32.mrb[0].mxu0
        %v1014 = vpop.f32.mrb[0].mxu0
        %v1015 = vadd.f32 0.0, %v1014
        %v1016 = vpop.f32.mrb[0].mxu0
        %1017 = vmatprep.mubr.bf16.mxu0 %v671
        %1018 = vmatmul.mubr.bf16.gmra.mrb[0].mxu0 %v670
        %v1019 = vpop.f32.mrb[0].mxu0
        %v1020 = vadd.f32 0.0, %v1019
        %v1021 = vpop.f32.mrb[0].mxu0
        %v1022 = vpop.f32.mrb[0].mxu0
        %v1023 = vadd.f32 0.0, %v1022
        %v1024 = vpop.f32.mrb[0].mxu0
        %1025 = vdwg.mxu0
        %1026 = vmatprep.subr.bf16.mxu0 0
        %1027 = vmatpush1.bf16.msra.mxu0 %v833
        %1028 = vmatprep.subr.bf16.mxu0 0
        %1029 = vmatpush1.bf16.msra.mxu0 %v834
        %1030 = vmatprep.subr.bf16.mxu0 0
        %1031 = vmatpush1.bf16.msra.mxu0 %v835
        %1032 = vmatprep.subr.bf16.mxu0 0
        %1033 = vmatpush1.bf16.msra.mxu0 %v836
        %1034 = vmatprep.subr.bf16.mxu0 0
        %1035 = vmatpush1.bf16.msra.mxu0 %v837
        %1036 = vmatprep.subr.bf16.mxu0 0
        %1037 = vmatpush1.bf16.msra.mxu0 %v838
        %1038 = vmatprep.subr.bf16.mxu0 0
        %1039 = vmatpush1.bf16.msra.mxu0 %v839
        %1040 = vmatprep.subr.bf16.mxu0 0
        %1041 = vmatpush1.bf16.msra.mxu0 %v840
        %1042 = vmatprep.subr.bf16.mxu0 0
        %1043 = vmatpush1.bf16.msra.mxu0 0
        %1044 = vmatprep.subr.bf16.mxu0 0
        %1045 = vmatpush1.bf16.msra.mxu0 0
        %1046 = vmatprep.subr.bf16.mxu0 0
        %1047 = vmatpush1.bf16.msra.mxu0 0
        %1048 = vmatprep.subr.bf16.mxu0 0
        %1049 = vmatpush1.bf16.msra.mxu0 0
        %1050 = vmatprep.subr.bf16.mxu0 0
        %1051 = vmatpush1.bf16.msra.mxu0 0
        %1052 = vmatprep.subr.bf16.mxu0 0
        %1053 = vmatpush1.bf16.msra.mxu0 0
        %1054 = vmatprep.subr.bf16.mxu0 0
        %1055 = vmatpush1.bf16.msra.mxu0 0
        %1056 = vmatprep.subr.bf16.mxu0 0
        %1057 = vmatpush1.bf16.msra.mxu0 0
        %1058 = vmatprep.mubr.bf16.mxu0 0
        %1059 = vmatmul.mubr.bf16.gmra.mrb[0].mxu0 %v627
        %v1060 = vpop.f32.mrb[0].mxu0
        %v1061 = vadd.f32 %v900, %v1060
        %v1062 = vpop.f32.mrb[0].mxu0
        %v1063 = vpop.f32.mrb[0].mxu0
        %v1064 = vadd.f32 %v903, %v1063
        %v1065 = vpop.f32.mrb[0].mxu0
        %1066 = vmatprep.mubr.bf16.mxu0 0
        %1067 = vmatmul.mubr.bf16.gmra.mrb[0].mxu0 %v630
        %v1068 = vpop.f32.mrb[0].mxu0
        %v1069 = vadd.f32 %v908, %v1068
        %v1070 = vpop.f32.mrb[0].mxu0
        %v1071 = vpop.f32.mrb[0].mxu0
        %v1072 = vadd.f32 %v911, %v1071
        %v1073 = vpop.f32.mrb[0].mxu0
        %1074 = vmatprep.mubr.bf16.mxu0 0
        %1075 = vmatmul.mubr.bf16.gmra.mrb[0].mxu0 %v633
        %v1076 = vpop.f32.mrb[0].mxu0
        %v1077 = vadd.f32 %v916, %v1076
        %v1078 = vpop.f32.mrb[0].mxu0
        %v1079 = vpop.f32.mrb[0].mxu0
        %v1080 = vadd.f32 %v919, %v1079
        %v1081 = vpop.f32.mrb[0].mxu0
        %1082 = vmatprep.mubr.bf16.mxu0 0
        %1083 = vmatmul.mubr.bf16.gmra.mrb[0].mxu0 %v636
        %v1084 = vpop.f32.mrb[0].mxu0
        %v1085 = vadd.f32 %v924, %v1084
        %v1086 = vpop.f32.mrb[0].mxu0
        %v1087 = vpop.f32.mrb[0].mxu0
        %v1088 = vadd.f32 %v927, %v1087
        %v1089 = vpop.f32.mrb[0].mxu0
        %1090 = vmatprep.mubr.bf16.mxu0 0
        %1091 = vmatmul.mubr.bf16.gmra.mrb[0].mxu0 %v639
        %v1092 = vpop.f32.mrb[0].mxu0
        %v1093 = vadd.f32 %v932, %v1092
        %v1094 = vpop.f32.mrb[0].mxu0
        %v1095 = vpop.f32.mrb[0].mxu0
        %v1096 = vadd.f32 %v935, %v1095
        %v1097 = vpop.f32.mrb[0].mxu0
        %1098 = vmatprep.mubr.bf16.mxu0 0
        %1099 = vmatmul.mubr.bf16.gmra.mrb[0].mxu0 %v642
        %v1100 = vpop.f32.mrb[0].mxu0
        %v1101 = vadd.f32 %v940, %v1100
        %v1102 = vpop.f32.mrb[0].mxu0
        %v1103 = vpop.f32.mrb[0].mxu0
        %v1104 = vadd.f32 %v943, %v1103
        %v1105 = vpop.f32.mrb[0].mxu0
        %1106 = vmatprep.mubr.bf16.mxu0 0
        %1107 = vmatmul.mubr.bf16.gmra.mrb[0].mxu0 %v645
        %v1108 = vpop.f32.mrb[0].mxu0
        %v1109 = vadd.f32 %v948, %v1108
        %v1110 = vpop.f32.mrb[0].mxu0
        %v1111 = vpop.f32.mrb[0].mxu0
        %v1112 = vadd.f32 %v951, %v1111
        %v1113 = vpop.f32.mrb[0].mxu0
        %1114 = vmatprep.mubr.bf16.mxu0 0
        %1115 = vmatmul.mubr.bf16.gmra.mrb[0].mxu0 %v648
        %v1116 = vpop.f32.mrb[0].mxu0
        %v1117 = vadd.f32 %v956, %v1116
        %v1118 = vpop.f32.mrb[0].mxu0
        %v1119 = vpop.f32.mrb[0].mxu0
        %v1120 = vadd.f32 %v959, %v1119
        %v1121 = vpop.f32.mrb[0].mxu0
        %1122 = vmatprep.mubr.bf16.mxu0 0
        %1123 = vmatmul.mubr.bf16.gmra.mrb[0].mxu0 %v651
        %v1124 = vpop.f32.mrb[0].mxu0
        %v1125 = vadd.f32 %v964, %v1124
        %v1126 = vpop.f32.mrb[0].mxu0
        %v1127 = vpop.f32.mrb[0].mxu0
        %v1128 = vadd.f32 %v967, %v1127
        %v1129 = vpop.f32.mrb[0].mxu0
        %1130 = vmatprep.mubr.bf16.mxu0 0
        %1131 = vmatmul.mubr.bf16.gmra.mrb[0].mxu0 %v654
        %v1132 = vpop.f32.mrb[0].mxu0
        %v1133 = vadd.f32 %v972, %v1132
        %v1134 = vpop.f32.mrb[0].mxu0
        %v1135 = vpop.f32.mrb[0].mxu0
        %v1136 = vadd.f32 %v975, %v1135
        %v1137 = vpop.f32.mrb[0].mxu0
        %1138 = vmatprep.mubr.bf16.mxu0 0
        %1139 = vmatmul.mubr.bf16.gmra.mrb[0].mxu0 %v657
        %v1140 = vpop.f32.mrb[0].mxu0
        %v1141 = vadd.f32 %v980, %v1140
        %v1142 = vpop.f32.mrb[0].mxu0
        %v1143 = vpop.f32.mrb[0].mxu0
        %v1144 = vadd.f32 %v983, %v1143
        %v1145 = vpop.f32.mrb[0].mxu0
        %1146 = vmatprep.mubr.bf16.mxu0 0
        %1147 = vmatmul.mubr.bf16.gmra.mrb[0].mxu0 %v660
        %v1148 = vpop.f32.mrb[0].mxu0
        %v1149 = vadd.f32 %v988, %v1148
        %v1150 = vpop.f32.mrb[0].mxu0
        %v1151 = vpop.f32.mrb[0].mxu0
        %v1152 = vadd.f32 %v991, %v1151
        %v1153 = vpop.f32.mrb[0].mxu0
        %1154 = vmatprep.mubr.bf16.mxu0 0
        %1155 = vmatmul.mubr.bf16.gmra.mrb[0].mxu0 %v663
        %v1156 = vpop.f32.mrb[0].mxu0
        %v1157 = vadd.f32 %v996, %v1156
        %v1158 = vpop.f32.mrb[0].mxu0
        %v1159 = vpop.f32.mrb[0].mxu0
        %v1160 = vadd.f32 %v999, %v1159
        %v1161 = vpop.f32.mrb[0].mxu0
        %1162 = vmatprep.mubr.bf16.mxu0 0
        %1163 = vmatmul.mubr.bf16.gmra.mrb[0].mxu0 %v666
        %v1164 = vpop.f32.mrb[0].mxu0
        %v1165 = vadd.f32 %v1004, %v1164
        %v1166 = vpop.f32.mrb[0].mxu0
        %v1167 = vpop.f32.mrb[0].mxu0
        %v1168 = vadd.f32 %v1007, %v1167
        %v1169 = vpop.f32.mrb[0].mxu0
        %1170 = vmatprep.mubr.bf16.mxu0 0
        %1171 = vmatmul.mubr.bf16.gmra.mrb[0].mxu0 %v669
        %v1172 = vpop.f32.mrb[0].mxu0
        %v1173 = vadd.f32 %v1012, %v1172
        %v1174 = vpop.f32.mrb[0].mxu0
        %v1175 = vpop.f32.mrb[0].mxu0
        %v1176 = vadd.f32 %v1015, %v1175
        %v1177 = vpop.f32.mrb[0].mxu0
        %1178 = vmatprep.mubr.bf16.mxu0 0
        %1179 = vmatmul.mubr.bf16.gmra.mrb[0].mxu0 %v672
        %v1180 = vpop.f32.mrb[0].mxu0
        %v1181 = vadd.f32 %v1020, %v1180
        %v1182 = vpop.f32.mrb[0].mxu0
        %v1183 = vpop.f32.mrb[0].mxu0
        %v1184 = vadd.f32 %v1023, %v1183
        %v1185 = vpop.f32.mrb[0].mxu0
        %1186 = vdwg.mxu0
        %v1187 = vadd.f32 %v321, %v1061
        %v1188 = vadd.f32 %v322, %v1064
        %v1189 = vadd.f32 %v323, %v1069
        %v1190 = vadd.f32 %v324, %v1072
        %v1191 = vadd.f32 %v325, %v1077
        %v1192 = vadd.f32 %v326, %v1080
        %v1193 = vadd.f32 %v327, %v1085
        %v1194 = vadd.f32 %v328, %v1088
        %v1195 = vadd.f32 %v329, %v1093
        %v1196 = vadd.f32 %v330, %v1096
        %v1197 = vadd.f32 %v331, %v1101
        %v1198 = vadd.f32 %v332, %v1104
        %v1199 = vadd.f32 %v333, %v1109
        %v1200 = vadd.f32 %v334, %v1112
        %v1201 = vadd.f32 %v335, %v1117
        %v1202 = vadd.f32 %v336, %v1120
        %v1203 = vadd.f32 %v337, %v1125
        %v1204 = vadd.f32 %v338, %v1128
        %v1205 = vadd.f32 %v339, %v1133
        %v1206 = vadd.f32 %v340, %v1136
        %v1207 = vadd.f32 %v341, %v1141
        %v1208 = vadd.f32 %v342, %v1144
        %v1209 = vadd.f32 %v343, %v1149
        %v1210 = vadd.f32 %v344, %v1152
        %v1211 = vadd.f32 %v345, %v1157
        %v1212 = vadd.f32 %v346, %v1160
        %v1213 = vadd.f32 %v347, %v1165
        %v1214 = vadd.f32 %v348, %v1168
        %v1215 = vadd.f32 %v349, %v1173
        %v1216 = vadd.f32 %v350, %v1176
        %v1217 = vadd.f32 %v351, %v1181
        %v1218 = vadd.f32 %v352, %v1184
        %1219 = vst [vmem:[#allocation2] sm:$0xff] %v1187
        %1220 = vst [vmem:[#allocation2 + $0x8] sm:$0xff] %v1188
        %1221 = vst [vmem:[#allocation2 + $0x10] sm:$0xff] %v1189
        %1222 = vst [vmem:[#allocation2 + $0x18] sm:$0xff] %v1190
        %1223 = vst [vmem:[#allocation2 + $0x20] sm:$0xff] %v1191
        %1224 = vst [vmem:[#allocation2 + $0x28] sm:$0xff] %v1192
        %1225 = vst [vmem:[#allocation2 + $0x30] sm:$0xff] %v1193
        %1226 = vst [vmem:[#allocation2 + $0x38] sm:$0xff] %v1194
        %1227 = vst [vmem:[#allocation2 + $0x40] sm:$0xff] %v1195
        %1228 = vst [vmem:[#allocation2 + $0x48] sm:$0xff] %v1196
        %1229 = vst [vmem:[#allocation2 + $0x50] sm:$0xff] %v1197
        %1230 = vst [vmem:[#allocation2 + $0x58] sm:$0xff] %v1198
        %1231 = vst [vmem:[#allocation2 + $0x60] sm:$0xff] %v1199
        %1232 = vst [vmem:[#allocation2 + $0x68] sm:$0xff] %v1200
        %1233 = vst [vmem:[#allocation2 + $0x70] sm:$0xff] %v1201
        %1234 = vst [vmem:[#allocation2 + $0x78] sm:$0xff] %v1202
        %1235 = vst [vmem:[#allocation2 + $0x80] sm:$0xff] %v1203
        %1236 = vst [vmem:[#allocation2 + $0x88] sm:$0xff] %v1204
        %1237 = vst [vmem:[#allocation2 + $0x90] sm:$0xff] %v1205
        %1238 = vst [vmem:[#allocation2 + $0x98] sm:$0xff] %v1206
        %1239 = vst [vmem:[#allocation2 + $0xa0] sm:$0xff] %v1207
        %1240 = vst [vmem:[#allocation2 + $0xa8] sm:$0xff] %v1208
        %1241 = vst [vmem:[#allocation2 + $0xb0] sm:$0xff] %v1209
        %1242 = vst [vmem:[#allocation2 + $0xb8] sm:$0xff] %v1210
        %1243 = vst [vmem:[#allocation2 + $0xc0] sm:$0xff] %v1211
        %1244 = vst [vmem:[#allocation2 + $0xc8] sm:$0xff] %v1212
        %1245 = vst [vmem:[#allocation2 + $0xd0] sm:$0xff] %v1213
        %1246 = vst [vmem:[#allocation2 + $0xd8] sm:$0xff] %v1214
        %1247 = vst [vmem:[#allocation2 + $0xe0] sm:$0xff] %v1215
        %1248 = vst [vmem:[#allocation2 + $0xe8] sm:$0xff] %v1216
        %1249 = vst [vmem:[#allocation2 + $0xf0] sm:$0xff] %v1217
        %1250 = vst [vmem:[#allocation2 + $0xf8] sm:$0xff] %v1218
        // Predicated region
        $region37: #{alexnet_forward.9} parent=31 // pred_check
          %p1251 = pneg %p285
        $region38: #{alexnet_forward.9} parent=31 // pred_check_branch
          %1253 = sbr.rel (%p1251) target = $region40
        $region39: #{alexnet_forward.9} parent=31 // pred_region
          %v1254 = vld [vmem:[#allocation2] sm:$0xff]
          %v1255 = vld [vmem:[#allocation2 + $0x8] sm:$0xff]
          %v1256 = vld [vmem:[#allocation2 + $0x10] sm:$0xff]
          %v1257 = vld [vmem:[#allocation2 + $0x18] sm:$0xff]
          %v1258 = vld [vmem:[#allocation2 + $0x20] sm:$0xff]
          %v1259 = vld [vmem:[#allocation2 + $0x28] sm:$0xff]
          %v1260 = vld [vmem:[#allocation2 + $0x30] sm:$0xff]
          %v1261 = vld [vmem:[#allocation2 + $0x38] sm:$0xff]
          %v1262 = vld [vmem:[#allocation2 + $0x40] sm:$0xff]
          %v1263 = vld [vmem:[#allocation2 + $0x48] sm:$0xff]
          %v1264 = vld [vmem:[#allocation2 + $0x50] sm:$0xff]
          %v1265 = vld [vmem:[#allocation2 + $0x58] sm:$0xff]
          %v1266 = vld [vmem:[#allocation2 + $0x60] sm:$0xff]
          %v1267 = vld [vmem:[#allocation2 + $0x68] sm:$0xff]
          %v1268 = vld [vmem:[#allocation2 + $0x70] sm:$0xff]
          %v1269 = vld [vmem:[#allocation2 + $0x78] sm:$0xff]
          %v1270 = vld [vmem:[#allocation2 + $0x80] sm:$0xff]
          %v1271 = vld [vmem:[#allocation2 + $0x88] sm:$0xff]
          %v1272 = vld [vmem:[#allocation2 + $0x90] sm:$0xff]
          %v1273 = vld [vmem:[#allocation2 + $0x98] sm:$0xff]
          %v1274 = vld [vmem:[#allocation2 + $0xa0] sm:$0xff]
          %v1275 = vld [vmem:[#allocation2 + $0xa8] sm:$0xff]
          %v1276 = vld [vmem:[#allocation2 + $0xb0] sm:$0xff]
          %v1277 = vld [vmem:[#allocation2 + $0xb8] sm:$0xff]
          %v1278 = vld [vmem:[#allocation2 + $0xc0] sm:$0xff]
          %v1279 = vld [vmem:[#allocation2 + $0xc8] sm:$0xff]
          %v1280 = vld [vmem:[#allocation2 + $0xd0] sm:$0xff]
          %v1281 = vld [vmem:[#allocation2 + $0xd8] sm:$0xff]
          %v1282 = vld [vmem:[#allocation2 + $0xe0] sm:$0xff]
          %v1283 = vld [vmem:[#allocation2 + $0xe8] sm:$0xff]
          %v1284 = vld [vmem:[#allocation2 + $0xf0] sm:$0xff]
          %v1285 = vld [vmem:[#allocation2 + $0xf8] sm:$0xff]
          %v1286 = vld [vmem:[%s278] sm:$0x1]
          %v1288 = vlaneseq
          %v1289 = vshrl.u32 %v1288, 7
          %v1290 = vsub.s32 0, %v1289
          %v1291 = vrot.slane %v1286, %v1290
          %v1293 = vadd.f32 %v1254, %v1291
          %v1294 = vadd.f32 %v1255, %v1291
          %v1295 = vadd.f32 %v1256, %v1291
          %v1296 = vadd.f32 %v1257, %v1291
          %v1297 = vadd.f32 %v1258, %v1291
          %v1298 = vadd.f32 %v1259, %v1291
          %v1299 = vadd.f32 %v1260, %v1291
          %v1300 = vadd.f32 %v1261, %v1291
          %v1301 = vadd.f32 %v1262, %v1291
          %v1302 = vadd.f32 %v1263, %v1291
          %v1303 = vadd.f32 %v1264, %v1291
          %v1304 = vadd.f32 %v1265, %v1291
          %v1305 = vadd.f32 %v1266, %v1291
          %v1306 = vadd.f32 %v1267, %v1291
          %v1307 = vadd.f32 %v1268, %v1291
          %v1308 = vadd.f32 %v1269, %v1291
          %v1309 = vadd.f32 %v1270, %v1291
          %v1310 = vadd.f32 %v1271, %v1291
          %v1311 = vadd.f32 %v1272, %v1291
          %v1312 = vadd.f32 %v1273, %v1291
          %v1313 = vadd.f32 %v1274, %v1291
          %v1314 = vadd.f32 %v1275, %v1291
          %v1315 = vadd.f32 %v1276, %v1291
          %v1316 = vadd.f32 %v1277, %v1291
          %v1317 = vadd.f32 %v1278, %v1291
          %v1318 = vadd.f32 %v1279, %v1291
          %v1319 = vadd.f32 %v1280, %v1291
          %v1320 = vadd.f32 %v1281, %v1291
          %v1321 = vadd.f32 %v1282, %v1291
          %v1322 = vadd.f32 %v1283, %v1291
          %v1323 = vadd.f32 %v1284, %v1291
          %v1324 = vadd.f32 %v1285, %v1291
          %v1325 = vmax.f32 %v1293, 0.0
          %v1326 = vmax.f32 %v1294, 0.0
          %v1327 = vmax.f32 %v1295, 0.0
          %v1328 = vmax.f32 %v1296, 0.0
          %v1329 = vmax.f32 %v1297, 0.0
          %v1330 = vmax.f32 %v1298, 0.0
          %v1331 = vmax.f32 %v1299, 0.0
          %v1332 = vmax.f32 %v1300, 0.0
          %v1333 = vmax.f32 %v1301, 0.0
          %v1334 = vmax.f32 %v1302, 0.0
          %v1335 = vmax.f32 %v1303, 0.0
          %v1336 = vmax.f32 %v1304, 0.0
          %v1337 = vmax.f32 %v1305, 0.0
          %v1338 = vmax.f32 %v1306, 0.0
          %v1339 = vmax.f32 %v1307, 0.0
          %v1340 = vmax.f32 %v1308, 0.0
          %v1341 = vmax.f32 %v1309, 0.0
          %v1342 = vmax.f32 %v1310, 0.0
          %v1343 = vmax.f32 %v1311, 0.0
          %v1344 = vmax.f32 %v1312, 0.0
          %v1345 = vmax.f32 %v1313, 0.0
          %v1346 = vmax.f32 %v1314, 0.0
          %v1347 = vmax.f32 %v1315, 0.0
          %v1348 = vmax.f32 %v1316, 0.0
          %v1349 = vmax.f32 %v1317, 0.0
          %v1350 = vmax.f32 %v1318, 0.0
          %v1351 = vmax.f32 %v1319, 0.0
          %v1352 = vmax.f32 %v1320, 0.0
          %v1353 = vmax.f32 %v1321, 0.0
          %v1354 = vmax.f32 %v1322, 0.0
          %v1355 = vmax.f32 %v1323, 0.0
          %v1356 = vmax.f32 %v1324, 0.0
          %v1357 = vpack.c.bf16 %v1326, %v1325
          %v1358 = vpack.c.bf16 %v1328, %v1327
          %v1359 = vpack.c.bf16 %v1330, %v1329
          %v1360 = vpack.c.bf16 %v1332, %v1331
          %v1361 = vpack.c.bf16 %v1334, %v1333
          %v1362 = vpack.c.bf16 %v1336, %v1335
          %v1363 = vpack.c.bf16 %v1338, %v1337
          %v1364 = vpack.c.bf16 %v1340, %v1339
          %v1365 = vpack.c.bf16 %v1342, %v1341
          %v1366 = vpack.c.bf16 %v1344, %v1343
          %v1367 = vpack.c.bf16 %v1346, %v1345
          %v1368 = vpack.c.bf16 %v1348, %v1347
          %v1369 = vpack.c.bf16 %v1350, %v1349
          %v1370 = vpack.c.bf16 %v1352, %v1351
          %v1371 = vpack.c.bf16 %v1354, %v1353
          %v1372 = vpack.c.bf16 %v1356, %v1355
          %v1389 = vunpack.c.l.b16 %v1357
          %v1390 = vunpack.c.h.b16 %v1357
          %v1391 = vunpack.c.l.b16 %v1358
          %v1392 = vunpack.c.h.b16 %v1358
          %v1393 = vunpack.c.l.b16 %v1359
          %v1394 = vunpack.c.h.b16 %v1359
          %v1395 = vunpack.c.l.b16 %v1360
          %v1396 = vunpack.c.h.b16 %v1360
          %v1397 = vunpack.c.l.b16 %v1361
          %v1398 = vunpack.c.h.b16 %v1361
          %v1399 = vunpack.c.l.b16 %v1362
          %v1400 = vunpack.c.h.b16 %v1362
          %v1401 = vunpack.c.l.b16 %v1363
          %v1402 = vunpack.c.h.b16 %v1363
          %v1403 = vunpack.c.l.b16 %v1364
          %v1404 = vunpack.c.h.b16 %v1364
          %v1405 = vunpack.c.l.b16 %v1365
          %v1406 = vunpack.c.h.b16 %v1365
          %v1407 = vunpack.c.l.b16 %v1366
          %v1408 = vunpack.c.h.b16 %v1366
          %v1409 = vunpack.c.l.b16 %v1367
          %v1410 = vunpack.c.h.b16 %v1367
          %v1411 = vunpack.c.l.b16 %v1368
          %v1412 = vunpack.c.h.b16 %v1368
          %v1413 = vunpack.c.l.b16 %v1369
          %v1414 = vunpack.c.h.b16 %v1369
          %v1415 = vunpack.c.l.b16 %v1370
          %v1416 = vunpack.c.h.b16 %v1370
          %v1417 = vunpack.c.l.b16 %v1371
          %v1418 = vunpack.c.h.b16 %v1371
          %v1419 = vunpack.c.l.b16 %v1372
          %v1420 = vunpack.c.h.b16 %v1372
          %v1421 = vpack.c.b16 %v1389, %v1389
          %v1422 = vpack.c.b16 %v1390, %v1390
          %v1423 = vpack.c.b16 %v1391, %v1391
          %v1424 = vpack.c.b16 %v1392, %v1392
          %v1425 = vpack.c.b16 %v1393, %v1393
          %v1426 = vpack.c.b16 %v1394, %v1394
          %v1427 = vpack.c.b16 %v1395, %v1395
          %v1428 = vpack.c.b16 %v1396, %v1396
          %v1429 = vpack.c.b16 %v1397, %v1397
          %v1430 = vpack.c.b16 %v1398, %v1398
          %v1431 = vpack.c.b16 %v1399, %v1399
          %v1432 = vpack.c.b16 %v1400, %v1400
          %v1433 = vpack.c.b16 %v1401, %v1401
          %v1434 = vpack.c.b16 %v1402, %v1402
          %v1435 = vpack.c.b16 %v1403, %v1403
          %v1436 = vpack.c.b16 %v1404, %v1404
          %v1437 = vpack.c.b16 %v1405, %v1405
          %v1438 = vpack.c.b16 %v1406, %v1406
          %v1439 = vpack.c.b16 %v1407, %v1407
          %v1440 = vpack.c.b16 %v1408, %v1408
          %v1441 = vpack.c.b16 %v1409, %v1409
          %v1442 = vpack.c.b16 %v1410, %v1410
          %v1443 = vpack.c.b16 %v1411, %v1411
          %v1444 = vpack.c.b16 %v1412, %v1412
          %v1445 = vpack.c.b16 %v1413, %v1413
          %v1446 = vpack.c.b16 %v1414, %v1414
          %v1447 = vpack.c.b16 %v1415, %v1415
          %v1448 = vpack.c.b16 %v1416, %v1416
          %v1449 = vpack.c.b16 %v1417, %v1417
          %v1450 = vpack.c.b16 %v1418, %v1418
          %v1451 = vpack.c.b16 %v1419, %v1419
          %v1452 = vpack.c.b16 %v1420, %v1420
          %1485 = vst [vmem:[%s244] sm:$0xf] %v1421
          %1486 = vst [vmem:[%s244 + $0x4] sm:$0xf] %v1422
          %1487 = vst [vmem:[%s244 + $0x8] sm:$0xf] %v1423
          %1488 = vst [vmem:[%s244 + $0xc] sm:$0xf] %v1424
          %1489 = vst [vmem:[%s244 + $0x10] sm:$0xf] %v1425
          %1490 = vst [vmem:[%s244 + $0x14] sm:$0xf] %v1426
          %1491 = vst [vmem:[%s244 + $0x18] sm:$0xf] %v1427
          %1492 = vst [vmem:[%s244 + $0x1c] sm:$0xf] %v1428
          %1493 = vst [vmem:[%s244 + $0x20] sm:$0xf] %v1429
          %1494 = vst [vmem:[%s244 + $0x24] sm:$0xf] %v1430
          %1495 = vst [vmem:[%s244 + $0x28] sm:$0xf] %v1431
          %1496 = vst [vmem:[%s244 + $0x2c] sm:$0xf] %v1432
          %1497 = vst [vmem:[%s244 + $0x30] sm:$0xf] %v1433
          %1498 = vst [vmem:[%s244 + $0x34] sm:$0xf] %v1434
          %1499 = vst [vmem:[%s244 + $0x38] sm:$0xf] %v1435
          %1500 = vst [vmem:[%s244 + $0x3c] sm:$0xf] %v1436
          %1501 = vst [vmem:[%s244 + $0x40] sm:$0xf] %v1437
          %1502 = vst [vmem:[%s244 + $0x44] sm:$0xf] %v1438
          %1503 = vst [vmem:[%s244 + $0x48] sm:$0xf] %v1439
          %1504 = vst [vmem:[%s244 + $0x4c] sm:$0xf] %v1440
          %1505 = vst [vmem:[%s244 + $0x50] sm:$0xf] %v1441
          %1506 = vst [vmem:[%s244 + $0x54] sm:$0xf] %v1442
          %1507 = vst [vmem:[%s244 + $0x58] sm:$0xf] %v1443
          %1508 = vst [vmem:[%s244 + $0x5c] sm:$0xf] %v1444
          %1509 = vst [vmem:[%s244 + $0x60] sm:$0xf] %v1445
          %1510 = vst [vmem:[%s244 + $0x64] sm:$0xf] %v1446
          %1511 = vst [vmem:[%s244 + $0x68] sm:$0xf] %v1447
          %1512 = vst [vmem:[%s244 + $0x6c] sm:$0xf] %v1448
          %1513 = vst [vmem:[%s244 + $0x70] sm:$0xf] %v1449
          %1514 = vst [vmem:[%s244 + $0x74] sm:$0xf] %v1450
          %1515 = vst [vmem:[%s244 + $0x78] sm:$0xf] %v1451
          %1516 = vst [vmem:[%s244 + $0x7c] sm:$0xf] %v1452
        $region40: #{alexnet_forward.9} parent=31 // pred_fallthru
          _
        %s1517 = sand.u32 %s125, 1
        %s1518 = sand.u32 %s125, 1
        %s1519 = smul.addr %s1518, 128
        %s1520 = scalar_lea.vmem [#allocation3], %s1519
        // Predicated region
        $region41: #{alexnet_forward.9} parent=31 // pred_check
          %p1521 = pneg %p135
        $region42: #{alexnet_forward.9} parent=31 // pred_check_branch
          %1523 = sbr.rel (%p1521) target = $region44
        $region43: #{alexnet_forward.9} parent=31 // pred_region
          %s1524 = smul.u32 32, %s19
          %s1525 = ssub.s32 57, %s1524
          %p1526 = scmp.lt.s32.totalorder %s1525, 32
          %s1527 = scalar_select %p1526, %s1525, 32
          %s1528 = smul.u32 64, %s1527
          %p1529 = scmp.ne.s32.totalorder 0, %s1528
          %s1530 = sadd.s32 %s20, %s1524
          %s1531 = smul.addr %s1530, 4
          %s1532 = scalar_lea.vmem %s3, %s1531
          // Predicated region
          $region45: #{alexnet_forward.9} parent=43 // pred_check
            %p1533 = pneg %p1529
          $region46: #{alexnet_forward.9} parent=43 // pred_check_branch
            %1535 = sbr.rel (%p1533) target = $region48
          $region47: #{alexnet_forward.9} parent=43 // pred_region
            // Predicated region
            $region49: #{alexnet_forward.9} parent=47 // pred_check
              _
            $region50: #{alexnet_forward.9} parent=47 // pred_check_branch
              %1537 = sbr.rel target = $region52
            $region51: #{alexnet_forward.9} parent=47 // pred_region
              // Predicated region
              $region71: #{alexnet_forward.9} parent=51 // pred_check
                _
              $region72: #{alexnet_forward.9} parent=51 // pred_check_branch
                %1648 = sbr.rel (0) target = $region74
              $region73: #{alexnet_forward.9} parent=51 // pred_region
                %s1650 = sshrl.u32 %s1527, 5
                // While loop
                $region75: #{alexnet_forward.9} parent=73 // loop_pre_header
                  _
                $region76: #{alexnet_forward.9} parent=73 // loop_header
                  %s1652 = sphi 0, %s1654
                  %p1653 = scmp.ge.s32.totalorder %s1652, %s1650
                  %s1657 = sphi 0, %s1726
                  %s1658 = sphi %s1520, %s1729
                  %s1659 = sphi %s1532, %s1730
                $region77: #{alexnet_forward.9} parent=73 // loop_header_branch
                  %1656 = sbr.rel (%p1653) target = $region81
                $region78: #{alexnet_forward.9} parent=73 // loop_body
                  %v1660 = vld [vmem:[%s1658] sm:$0xf]
                  %1661 = vst [vmem:[%s1659] sm:$0xf] %v1660
                  %v1662 = vld [vmem:[%s1658 + $0x4] sm:$0xf]
                  %1663 = vst [vmem:[%s1659 + $0x4] sm:$0xf] %v1662
                  %v1664 = vld [vmem:[%s1658 + $0x8] sm:$0xf]
                  %1665 = vst [vmem:[%s1659 + $0x8] sm:$0xf] %v1664
                  %v1666 = vld [vmem:[%s1658 + $0xc] sm:$0xf]
                  %1667 = vst [vmem:[%s1659 + $0xc] sm:$0xf] %v1666
                  %v1668 = vld [vmem:[%s1658 + $0x10] sm:$0xf]
                  %1669 = vst [vmem:[%s1659 + $0x10] sm:$0xf] %v1668
                  %v1670 = vld [vmem:[%s1658 + $0x14] sm:$0xf]
                  %1671 = vst [vmem:[%s1659 + $0x14] sm:$0xf] %v1670
                  %v1672 = vld [vmem:[%s1658 + $0x18] sm:$0xf]
                  %1673 = vst [vmem:[%s1659 + $0x18] sm:$0xf] %v1672
                  %v1674 = vld [vmem:[%s1658 + $0x1c] sm:$0xf]
                  %1675 = vst [vmem:[%s1659 + $0x1c] sm:$0xf] %v1674
                  %v1676 = vld [vmem:[%s1658 + $0x20] sm:$0xf]
                  %1677 = vst [vmem:[%s1659 + $0x20] sm:$0xf] %v1676
                  %v1678 = vld [vmem:[%s1658 + $0x24] sm:$0xf]
                  %1679 = vst [vmem:[%s1659 + $0x24] sm:$0xf] %v1678
                  %v1680 = vld [vmem:[%s1658 + $0x28] sm:$0xf]
                  %1681 = vst [vmem:[%s1659 + $0x28] sm:$0xf] %v1680
                  %v1682 = vld [vmem:[%s1658 + $0x2c] sm:$0xf]
                  %1683 = vst [vmem:[%s1659 + $0x2c] sm:$0xf] %v1682
                  %v1684 = vld [vmem:[%s1658 + $0x30] sm:$0xf]
                  %1685 = vst [vmem:[%s1659 + $0x30] sm:$0xf] %v1684
                  %v1686 = vld [vmem:[%s1658 + $0x34] sm:$0xf]
                  %1687 = vst [vmem:[%s1659 + $0x34] sm:$0xf] %v1686
                  %v1688 = vld [vmem:[%s1658 + $0x38] sm:$0xf]
                  %1689 = vst [vmem:[%s1659 + $0x38] sm:$0xf] %v1688
                  %v1690 = vld [vmem:[%s1658 + $0x3c] sm:$0xf]
                  %1691 = vst [vmem:[%s1659 + $0x3c] sm:$0xf] %v1690
                  %v1692 = vld [vmem:[%s1658 + $0x40] sm:$0xf]
                  %1693 = vst [vmem:[%s1659 + $0x40] sm:$0xf] %v1692
                  %v1694 = vld [vmem:[%s1658 + $0x44] sm:$0xf]
                  %1695 = vst [vmem:[%s1659 + $0x44] sm:$0xf] %v1694
                  %v1696 = vld [vmem:[%s1658 + $0x48] sm:$0xf]
                  %1697 = vst [vmem:[%s1659 + $0x48] sm:$0xf] %v1696
                  %v1698 = vld [vmem:[%s1658 + $0x4c] sm:$0xf]
                  %1699 = vst [vmem:[%s1659 + $0x4c] sm:$0xf] %v1698
                  %v1700 = vld [vmem:[%s1658 + $0x50] sm:$0xf]
                  %1701 = vst [vmem:[%s1659 + $0x50] sm:$0xf] %v1700
                  %v1702 = vld [vmem:[%s1658 + $0x54] sm:$0xf]
                  %1703 = vst [vmem:[%s1659 + $0x54] sm:$0xf] %v1702
                  %v1704 = vld [vmem:[%s1658 + $0x58] sm:$0xf]
                  %1705 = vst [vmem:[%s1659 + $0x58] sm:$0xf] %v1704
                  %v1706 = vld [vmem:[%s1658 + $0x5c] sm:$0xf]
                  %1707 = vst [vmem:[%s1659 + $0x5c] sm:$0xf] %v1706
                  %v1708 = vld [vmem:[%s1658 + $0x60] sm:$0xf]
                  %1709 = vst [vmem:[%s1659 + $0x60] sm:$0xf] %v1708
                  %v1710 = vld [vmem:[%s1658 + $0x64] sm:$0xf]
                  %1711 = vst [vmem:[%s1659 + $0x64] sm:$0xf] %v1710
                  %v1712 = vld [vmem:[%s1658 + $0x68] sm:$0xf]
                  %1713 = vst [vmem:[%s1659 + $0x68] sm:$0xf] %v1712
                  %v1714 = vld [vmem:[%s1658 + $0x6c] sm:$0xf]
                  %1715 = vst [vmem:[%s1659 + $0x6c] sm:$0xf] %v1714
                  %v1716 = vld [vmem:[%s1658 + $0x70] sm:$0xf]
                  %1717 = vst [vmem:[%s1659 + $0x70] sm:$0xf] %v1716
                  %v1718 = vld [vmem:[%s1658 + $0x74] sm:$0xf]
                  %1719 = vst [vmem:[%s1659 + $0x74] sm:$0xf] %v1718
                  %v1720 = vld [vmem:[%s1658 + $0x78] sm:$0xf]
                  %1721 = vst [vmem:[%s1659 + $0x78] sm:$0xf] %v1720
                  %v1722 = vld [vmem:[%s1658 + $0x7c] sm:$0xf]
                  %1723 = vst [vmem:[%s1659 + $0x7c] sm:$0xf] %v1722
                  %s1724 = sadd.s32 1, %s1657
                  %p1725 = scmp.ge.s32.totalorder %s1724, %s1650
                  %s1726 = scalar_select %p1725, 0, %s1724
                  %s1727 = smul.u32 %s1726, 128
                  %s1728 = smul.u32 %s1726, 128
                  %s1729 = scalar_lea.vmem %s1520, %s1727 [#allocation3]
                  %s1730 = scalar_lea.vmem %s1532, %s1728
                $region79: #{alexnet_forward.9} parent=73 // loop_footer
                  %s1654 = sadd.s32 %s1652, 1
                $region80: #{alexnet_forward.9} parent=73 // loop_footer_branch
                  %1651 = sbr.rel target = $region76
                $region81: #{alexnet_forward.9} parent=73 // loop_exit
                  _
                %s1731 = sshrl.u32 %s1527, 5
                %s1732 = sand.u32 %s1527, 31
                %s1733 = smul.u32 %s1731, 32
                %s1734 = smul.u32 4, %s1733
                %s1735 = scalar_lea.vmem %s1520, %s1734 [#allocation3]
                %s1736 = smul.u32 4, %s1733
                %s1737 = scalar_lea.vmem %s1532, %s1736
                // While loop
                $region82: #{alexnet_forward.9} parent=73 // loop_pre_header
                  _
                $region83: #{alexnet_forward.9} parent=73 // loop_header
                  %s1739 = sphi 0, %s1741
                  %p1740 = scmp.ge.s32.totalorder %s1739, %s1732
                  %s1744 = sphi 0, %s1751
                  %s1745 = sphi %s1735, %s1754
                  %s1746 = sphi %s1737, %s1755
                $region84: #{alexnet_forward.9} parent=73 // loop_header_branch
                  %1743 = sbr.rel (%p1740) target = $region88
                $region85: #{alexnet_forward.9} parent=73 // loop_body
                  %v1747 = vld [vmem:[%s1745] sm:$0xf]
                  %1748 = vst [vmem:[%s1746] sm:$0xf] %v1747
                  %s1749 = sadd.s32 1, %s1744
                  %p1750 = scmp.ge.s32.totalorder %s1749, %s1732
                  %s1751 = scalar_select %p1750, 0, %s1749
                  %s1752 = smul.u32 %s1751, 4
                  %s1753 = smul.u32 %s1751, 4
                  %s1754 = scalar_lea.vmem %s1735, %s1752 [#allocation3]
                  %s1755 = scalar_lea.vmem %s1737, %s1753
                $region86: #{alexnet_forward.9} parent=73 // loop_footer
                  %s1741 = sadd.s32 %s1739, 1
                $region87: #{alexnet_forward.9} parent=73 // loop_footer_branch
                  %1738 = sbr.rel target = $region83
                $region88: #{alexnet_forward.9} parent=73 // loop_exit
                  _
              $region74: #{alexnet_forward.9} parent=51 // pred_fallthru
                _
            $region52: #{alexnet_forward.9} parent=47 // pred_fallthru
              _
            // Predicated region
            $region53: #{alexnet_forward.9} parent=47 // pred_check
              _
            $region54: #{alexnet_forward.9} parent=47 // pred_check_branch
              %1539 = sbr.rel (0) target = $region56
            $region55: #{alexnet_forward.9} parent=47 // pred_region
              %s1541 = sshrl.u32 %s1527, 5
              // While loop
              $region57: #{alexnet_forward.9} parent=55 // loop_pre_header
                _
              $region58: #{alexnet_forward.9} parent=55 // loop_header
                %s1543 = sphi 0, %s1545
                %p1544 = scmp.ge.s32.totalorder %s1543, %s1541
                %s1548 = sphi 0, %s1617
                %s1549 = sphi %s1520, %s1620
                %s1550 = sphi %s1532, %s1621
              $region59: #{alexnet_forward.9} parent=55 // loop_header_branch
                %1547 = sbr.rel (%p1544) target = $region63
              $region60: #{alexnet_forward.9} parent=55 // loop_body
                %v1551 = vld [vmem:[%s1549] sm:$0xf]
                %1552 = vst [vmem:[%s1550] sm:$0xf] %v1551
                %v1553 = vld [vmem:[%s1549 + $0x4] sm:$0xf]
                %1554 = vst [vmem:[%s1550 + $0x4] sm:$0xf] %v1553
                %v1555 = vld [vmem:[%s1549 + $0x8] sm:$0xf]
                %1556 = vst [vmem:[%s1550 + $0x8] sm:$0xf] %v1555
                %v1557 = vld [vmem:[%s1549 + $0xc] sm:$0xf]
                %1558 = vst [vmem:[%s1550 + $0xc] sm:$0xf] %v1557
                %v1559 = vld [vmem:[%s1549 + $0x10] sm:$0xf]
                %1560 = vst [vmem:[%s1550 + $0x10] sm:$0xf] %v1559
                %v1561 = vld [vmem:[%s1549 + $0x14] sm:$0xf]
                %1562 = vst [vmem:[%s1550 + $0x14] sm:$0xf] %v1561
                %v1563 = vld [vmem:[%s1549 + $0x18] sm:$0xf]
                %1564 = vst [vmem:[%s1550 + $0x18] sm:$0xf] %v1563
                %v1565 = vld [vmem:[%s1549 + $0x1c] sm:$0xf]
                %1566 = vst [vmem:[%s1550 + $0x1c] sm:$0xf] %v1565
                %v1567 = vld [vmem:[%s1549 + $0x20] sm:$0xf]
                %1568 = vst [vmem:[%s1550 + $0x20] sm:$0xf] %v1567
                %v1569 = vld [vmem:[%s1549 + $0x24] sm:$0xf]
                %1570 = vst [vmem:[%s1550 + $0x24] sm:$0xf] %v1569
                %v1571 = vld [vmem:[%s1549 + $0x28] sm:$0xf]
                %1572 = vst [vmem:[%s1550 + $0x28] sm:$0xf] %v1571
                %v1573 = vld [vmem:[%s1549 + $0x2c] sm:$0xf]
                %1574 = vst [vmem:[%s1550 + $0x2c] sm:$0xf] %v1573
                %v1575 = vld [vmem:[%s1549 + $0x30] sm:$0xf]
                %1576 = vst [vmem:[%s1550 + $0x30] sm:$0xf] %v1575
                %v1577 = vld [vmem:[%s1549 + $0x34] sm:$0xf]
                %1578 = vst [vmem:[%s1550 + $0x34] sm:$0xf] %v1577
                %v1579 = vld [vmem:[%s1549 + $0x38] sm:$0xf]
                %1580 = vst [vmem:[%s1550 + $0x38] sm:$0xf] %v1579
                %v1581 = vld [vmem:[%s1549 + $0x3c] sm:$0xf]
                %1582 = vst [vmem:[%s1550 + $0x3c] sm:$0xf] %v1581
                %v1583 = vld [vmem:[%s1549 + $0x40] sm:$0xf]
                %1584 = vst [vmem:[%s1550 + $0x40] sm:$0xf] %v1583
                %v1585 = vld [vmem:[%s1549 + $0x44] sm:$0xf]
                %1586 = vst [vmem:[%s1550 + $0x44] sm:$0xf] %v1585
                %v1587 = vld [vmem:[%s1549 + $0x48] sm:$0xf]
                %1588 = vst [vmem:[%s1550 + $0x48] sm:$0xf] %v1587
                %v1589 = vld [vmem:[%s1549 + $0x4c] sm:$0xf]
                %1590 = vst [vmem:[%s1550 + $0x4c] sm:$0xf] %v1589
                %v1591 = vld [vmem:[%s1549 + $0x50] sm:$0xf]
                %1592 = vst [vmem:[%s1550 + $0x50] sm:$0xf] %v1591
                %v1593 = vld [vmem:[%s1549 + $0x54] sm:$0xf]
                %1594 = vst [vmem:[%s1550 + $0x54] sm:$0xf] %v1593
                %v1595 = vld [vmem:[%s1549 + $0x58] sm:$0xf]
                %1596 = vst [vmem:[%s1550 + $0x58] sm:$0xf] %v1595
                %v1597 = vld [vmem:[%s1549 + $0x5c] sm:$0xf]
                %1598 = vst [vmem:[%s1550 + $0x5c] sm:$0xf] %v1597
                %v1599 = vld [vmem:[%s1549 + $0x60] sm:$0xf]
                %1600 = vst [vmem:[%s1550 + $0x60] sm:$0xf] %v1599
                %v1601 = vld [vmem:[%s1549 + $0x64] sm:$0xf]
                %1602 = vst [vmem:[%s1550 + $0x64] sm:$0xf] %v1601
                %v1603 = vld [vmem:[%s1549 + $0x68] sm:$0xf]
                %1604 = vst [vmem:[%s1550 + $0x68] sm:$0xf] %v1603
                %v1605 = vld [vmem:[%s1549 + $0x6c] sm:$0xf]
                %1606 = vst [vmem:[%s1550 + $0x6c] sm:$0xf] %v1605
                %v1607 = vld [vmem:[%s1549 + $0x70] sm:$0xf]
                %1608 = vst [vmem:[%s1550 + $0x70] sm:$0xf] %v1607
                %v1609 = vld [vmem:[%s1549 + $0x74] sm:$0xf]
                %1610 = vst [vmem:[%s1550 + $0x74] sm:$0xf] %v1609
                %v1611 = vld [vmem:[%s1549 + $0x78] sm:$0xf]
                %1612 = vst [vmem:[%s1550 + $0x78] sm:$0xf] %v1611
                %v1613 = vld [vmem:[%s1549 + $0x7c] sm:$0xf]
                %1614 = vst [vmem:[%s1550 + $0x7c] sm:$0xf] %v1613
                %s1615 = sadd.s32 1, %s1548
                %p1616 = scmp.ge.s32.totalorder %s1615, %s1541
                %s1617 = scalar_select %p1616, 0, %s1615
                %s1618 = smul.u32 %s1617, 128
                %s1619 = smul.u32 %s1617, 128
                %s1620 = scalar_lea.vmem %s1520, %s1618 [#allocation3]
                %s1621 = scalar_lea.vmem %s1532, %s1619
              $region61: #{alexnet_forward.9} parent=55 // loop_footer
                %s1545 = sadd.s32 %s1543, 1
              $region62: #{alexnet_forward.9} parent=55 // loop_footer_branch
                %1542 = sbr.rel target = $region58
              $region63: #{alexnet_forward.9} parent=55 // loop_exit
                _
              %s1622 = sshrl.u32 %s1527, 5
              %s1623 = sand.u32 %s1527, 31
              %s1624 = smul.u32 %s1622, 32
              %s1625 = smul.u32 4, %s1624
              %s1626 = scalar_lea.vmem %s1520, %s1625 [#allocation3]
              %s1627 = smul.u32 4, %s1624
              %s1628 = scalar_lea.vmem %s1532, %s1627
              // While loop
              $region64: #{alexnet_forward.9} parent=55 // loop_pre_header
                _
              $region65: #{alexnet_forward.9} parent=55 // loop_header
                %s1630 = sphi 0, %s1632
                %p1631 = scmp.ge.s32.totalorder %s1630, %s1623
                %s1635 = sphi 0, %s1642
                %s1636 = sphi %s1626, %s1645
                %s1637 = sphi %s1628, %s1646
              $region66: #{alexnet_forward.9} parent=55 // loop_header_branch
                %1634 = sbr.rel (%p1631) target = $region70
              $region67: #{alexnet_forward.9} parent=55 // loop_body
                %v1638 = vld [vmem:[%s1636] sm:$0xf]
                %1639 = vst [vmem:[%s1637] sm:$0xf] %v1638
                %s1640 = sadd.s32 1, %s1635
                %p1641 = scmp.ge.s32.totalorder %s1640, %s1623
                %s1642 = scalar_select %p1641, 0, %s1640
                %s1643 = smul.u32 %s1642, 4
                %s1644 = smul.u32 %s1642, 4
                %s1645 = scalar_lea.vmem %s1626, %s1643 [#allocation3]
                %s1646 = scalar_lea.vmem %s1628, %s1644
              $region68: #{alexnet_forward.9} parent=55 // loop_footer
                %s1632 = sadd.s32 %s1630, 1
              $region69: #{alexnet_forward.9} parent=55 // loop_footer_branch
                %1629 = sbr.rel target = $region65
              $region70: #{alexnet_forward.9} parent=55 // loop_exit
                _
            $region56: #{alexnet_forward.9} parent=47 // pred_fallthru
              _
          $region48: #{alexnet_forward.9} parent=43 // pred_fallthru
            _
          %1756 = vnop
        $region44: #{alexnet_forward.9} parent=31 // pred_fallthru
          _
      $region32: #{alexnet_forward.9} parent=5 // pred_fallthru
        _
      %p1757 = scmp.le.s32.totalorder 2, %s9
      // Predicated region
      $region89: #{alexnet_forward.9} parent=5 // pred_check
        %p1758 = pneg %p1757
      $region90: #{alexnet_forward.9} parent=5 // pred_check_branch
        %1760 = sbr.rel (%p1758) target = $region92
      $region91: #{alexnet_forward.9} parent=5 // pred_region
        %s1761 = ssub.s32 %s9, 2
        // Predicated region
        $region93: #{alexnet_forward.9} parent=91 // pred_check
          %p1762 = pneg %p141
        $region94: #{alexnet_forward.9} parent=91 // pred_check_branch
          %1764 = sbr.rel (%p1762) target = $region96
        $region95: #{alexnet_forward.9} parent=91 // pred_region
          %s1765 = sand.u32 %s126, 1
          %s1766 = sand.u32 %s126, 1
          %s1767 = smul.addr %s1766, 128
          %s1768 = scalar_lea.vmem [#allocation3], %s1767
        $region96: #{alexnet_forward.9} parent=91 // pred_fallthru
          _
      $region92: #{alexnet_forward.9} parent=5 // pred_fallthru
        _
    $region6: #{alexnet_forward.9} parent=1 // loop_footer
      %s13 = sadd.s32 1, %s9
    $region7: #{alexnet_forward.9} parent=1 // loop_footer_branch
      %8 = sbr.rel target = $region3
    $region8: #{alexnet_forward.9} parent=1 // loop_exit
      _

// kernel: alexnet_forward.12
$region0: #{alexnet_forward.12}
  #allocation0 [shape = 'u32[]', space=smem, size = 0x4, offset = 0x4, fixed_abs, tag = 'smem constant byte address 0x4 - core index']
  #allocation1 [shape = 'u32[144,128]{1,0:T(1,128)}', space=vmem, size = 0x12000, scoped, tag = 'internal scratch']
  %s0 = inlined_call_operand.vmem [shape: bf16[7,2,7,192], index: 0, kind: input, shape index: {}, may-alias: {0,1,2}]
  %s1 = inlined_call_operand.vmem [shape: bf16[7,2,7,192], index: 1, kind: input, shape index: {}, may-alias: {0,1,2}]
  %s2 = inlined_call_operand.vmem [shape: bf16[7,2,7,192], index: 2, kind: input, shape index: {}, may-alias: {0,1,2}]
  %s3 = inlined_call_operand.vmem [shape: bf16[3,2,5,192], index: 3, kind: output, shape index: {}]
  %s4 = sld [smem:[#allocation0]]
  $region45: #{alexnet_forward.12} parent=0
    _
  %s6 = ssub.s32 1, %s4
  %s7 = scalar_select 0, %s6, %s4
  loop: start=0, step=1, limit=5
  $region2: #{alexnet_forward.12} parent=0 // loop_pre_header
    _
  $region3: #{alexnet_forward.12} parent=0 // loop_header
    %s9 = sphi 0, %s13
    %p10 = scmp.ge.s32.totalorder %s9, 5
    %s21 = sphi 0, %s23
    %s24 = sphi 0, %s21
    %s25 = sphi 0, %s24
    %s41 = sphi 0, %s25
    %s51 = sphi 0, %s53
    %s54 = sphi 0, %s51
    %s55 = sphi 0, %s54
    %s71 = sphi 0, %s55
    %s81 = sphi 0, %s83
    %s84 = sphi 0, %s81
    %s85 = sphi 0, %s84
    %s101 = sphi 0, %s85
    %s107 = sphi 0, %s109
    %s110 = sphi 0, %s107
    %s111 = sphi 0, %s110
    %s127 = sphi 0, %s111
  $region4: #{alexnet_forward.12} parent=0 // loop_header_branch
    %12 = sbr.rel (%p10) target = $region8
  $region5: #{alexnet_forward.12} parent=0 // loop_body
    %s14 = ssub.s32 %s9, 1
    %s15 = ssub.s32 %s9, 2
    %s16 = sadd.s32 %s9, 1
    %s17 = smul.u32 %s9, 2
    %s18 = smul.u32 %s16, 2
    %s19 = ssub.s32 %s17, %s18
    %p20 = scmp.eq.s32.totalorder %s19, 0
    %s22 = sadd.s32 %s21, 1
    %s23 = scalar_select %p20, %s21, %s22
    %p26 = pneg %p20
    %p27 = scmp.eq.s32.totalorder %s9, 2
    %p28 = por %p26, %p27
    %p29 = scmp.ne.s32.totalorder %s21, %s24
    %p30 = scmp.eq.s32.totalorder %s9, 0
    %p31 = por %p29, %p30
    %p32 = scmp.ne.s32.totalorder %s21, %s24
    %p33 = scmp.eq.s32.totalorder %s14, 2
    %p34 = por %p32, %p33
    %p35 = scmp.ne.s32.totalorder %s24, %s25
    %p36 = scmp.eq.s32.totalorder %s14, 0
    %p37 = por %p35, %p36
    %p38 = scmp.ne.s32.totalorder %s24, %s25
    %p39 = scmp.eq.s32.totalorder %s15, 2
    %p40 = por %p38, %p39
    %p42 = scmp.ne.s32.totalorder %s25, %s41
    %p43 = scmp.eq.s32.totalorder %s15, 0
    %p44 = por %p42, %p43
    %s45 = smul.u32 %s9, 2
    %s46 = sadd.s32 %s45, 1
    %s47 = smul.u32 %s16, 2
    %s48 = sadd.s32 %s47, 1
    %s49 = ssub.s32 %s46, %s48
    %p50 = scmp.eq.s32.totalorder %s49, 0
    %s52 = sadd.s32 %s51, 1
    %s53 = scalar_select %p50, %s51, %s52
    %p56 = pneg %p50
    %p57 = scmp.eq.s32.totalorder %s9, 2
    %p58 = por %p56, %p57
    %p59 = scmp.ne.s32.totalorder %s51, %s54
    %p60 = scmp.eq.s32.totalorder %s9, 0
    %p61 = por %p59, %p60
    %p62 = scmp.ne.s32.totalorder %s51, %s54
    %p63 = scmp.eq.s32.totalorder %s14, 2
    %p64 = por %p62, %p63
    %p65 = scmp.ne.s32.totalorder %s54, %s55
    %p66 = scmp.eq.s32.totalorder %s14, 0
    %p67 = por %p65, %p66
    %p68 = scmp.ne.s32.totalorder %s54, %s55
    %p69 = scmp.eq.s32.totalorder %s15, 2
    %p70 = por %p68, %p69
    %p72 = scmp.ne.s32.totalorder %s55, %s71
    %p73 = scmp.eq.s32.totalorder %s15, 0
    %p74 = por %p72, %p73
    %s75 = smul.u32 %s9, 2
    %s76 = sadd.s32 %s75, 2
    %s77 = smul.u32 %s16, 2
    %s78 = sadd.s32 %s77, 2
    %s79 = ssub.s32 %s76, %s78
    %p80 = scmp.eq.s32.totalorder %s79, 0
    %s82 = sadd.s32 %s81, 1
    %s83 = scalar_select %p80, %s81, %s82
    %p86 = pneg %p80
    %p87 = scmp.eq.s32.totalorder %s9, 2
    %p88 = por %p86, %p87
    %p89 = scmp.ne.s32.totalorder %s81, %s84
    %p90 = scmp.eq.s32.totalorder %s9, 0
    %p91 = por %p89, %p90
    %p92 = scmp.ne.s32.totalorder %s81, %s84
    %p93 = scmp.eq.s32.totalorder %s14, 2
    %p94 = por %p92, %p93
    %p95 = scmp.ne.s32.totalorder %s84, %s85
    %p96 = scmp.eq.s32.totalorder %s14, 0
    %p97 = por %p95, %p96
    %p98 = scmp.ne.s32.totalorder %s84, %s85
    %p99 = scmp.eq.s32.totalorder %s15, 2
    %p100 = por %p98, %p99
    %p102 = scmp.ne.s32.totalorder %s85, %s101
    %p103 = scmp.eq.s32.totalorder %s15, 0
    %p104 = por %p102, %p103
    %s105 = ssub.s32 %s9, %s16
    %p106 = scmp.eq.s32.totalorder %s105, 0
    %s108 = sadd.s32 %s107, 1
    %s109 = scalar_select %p106, %s107, %s108
    %p112 = pneg %p106
    %p113 = scmp.eq.s32.totalorder %s9, 2
    %p114 = por %p112, %p113
    %p115 = scmp.ne.s32.totalorder %s107, %s110
    %p116 = scmp.eq.s32.totalorder %s9, 0
    %p117 = por %p115, %p116
    %p118 = scmp.ne.s32.totalorder %s107, %s110
    %p119 = scmp.eq.s32.totalorder %s14, 2
    %p120 = por %p118, %p119
    %p121 = scmp.ne.s32.totalorder %s110, %s111
    %p122 = scmp.eq.s32.totalorder %s14, 0
    %p123 = por %p121, %p122
    %p124 = scmp.ne.s32.totalorder %s110, %s111
    %p125 = scmp.eq.s32.totalorder %s15, 2
    %p126 = por %p124, %p125
    %p128 = scmp.ne.s32.totalorder %s111, %s127
    %p129 = scmp.eq.s32.totalorder %s15, 0
    %p130 = por %p128, %p129
    %p131 = scmp.le.s32.totalorder 1, %s9
    %p132 = scmp.lt.s32.totalorder %s9, 4
    %p133 = pnand %p131, %p132
    %p134 = pneg %p133
    // Predicated region
    $region9: #{alexnet_forward.12} parent=5 // pred_check
      _
    $region10: #{alexnet_forward.12} parent=5 // pred_check_branch
      %136 = sbr.rel (%p133) target = $region12
    $region11: #{alexnet_forward.12} parent=5 // pred_region
      %s137 = ssub.s32 %s9, 1
    $region12: #{alexnet_forward.12} parent=5 // pred_fallthru
      _
    %p138 = scmp.lt.s32.totalorder %s9, 3
    // Predicated region
    $region13: #{alexnet_forward.12} parent=5 // pred_check
      %p139 = pneg %p138
    $region14: #{alexnet_forward.12} parent=5 // pred_check_branch
      %141 = sbr.rel (%p139) target = $region16
    $region15: #{alexnet_forward.12} parent=5 // pred_region
      // Predicated region
      $region17: #{alexnet_forward.12} parent=15 // pred_check
        %p142 = pneg %p31
      $region18: #{alexnet_forward.12} parent=15 // pred_check_branch
        %144 = sbr.rel (%p142) target = $region20
      $region19: #{alexnet_forward.12} parent=15 // pred_region
        %s145 = smul.u32 %s9, 2
        %p146 = scmp.lt.s32.totalorder %s145, 6
        %s147 = scalar_select %p146, %s145, 6
        %s148 = smul.addr %s147, 4
        %s149 = smul.addr %s148, 4
        %s150 = scalar_lea.vmem %s0, %s149
        %s151 = smul.u32 %s9, 2
      $region20: #{alexnet_forward.12} parent=15 // pred_fallthru
        _
      // Predicated region
      $region21: #{alexnet_forward.12} parent=15 // pred_check
        %p152 = pneg %p61
      $region22: #{alexnet_forward.12} parent=15 // pred_check_branch
        %154 = sbr.rel (%p152) target = $region24
      $region23: #{alexnet_forward.12} parent=15 // pred_region
        %s155 = smul.u32 %s9, 2
        %s156 = sadd.s32 %s155, 1
        %p157 = scmp.lt.s32.totalorder %s156, 6
        %s158 = scalar_select %p157, %s156, 6
        %s159 = smul.addr %s158, 4
        %s160 = smul.addr %s159, 4
        %s161 = scalar_lea.vmem %s1, %s160
        %s162 = smul.u32 %s9, 2
        %s163 = sadd.s32 %s162, 1
      $region24: #{alexnet_forward.12} parent=15 // pred_fallthru
        _
      // Predicated region
      $region25: #{alexnet_forward.12} parent=15 // pred_check
        %p164 = pneg %p91
      $region26: #{alexnet_forward.12} parent=15 // pred_check_branch
        %166 = sbr.rel (%p164) target = $region28
      $region27: #{alexnet_forward.12} parent=15 // pred_region
        %s167 = smul.u32 %s9, 2
        %s168 = sadd.s32 %s167, 2
        %p169 = scmp.lt.s32.totalorder %s168, 6
        %s170 = scalar_select %p169, %s168, 6
        %s171 = smul.addr %s170, 4
        %s172 = smul.addr %s171, 4
        %s173 = scalar_lea.vmem %s2, %s172
        %s174 = smul.u32 %s9, 2
        %s175 = sadd.s32 %s174, 2
      $region28: #{alexnet_forward.12} parent=15 // pred_fallthru
        _
    $region16: #{alexnet_forward.12} parent=5 // pred_fallthru
      _
    %p176 = scmp.le.s32.totalorder 1, %s9
    %p177 = scmp.lt.s32.totalorder %s9, 4
    %p178 = pnand %p176, %p177
    %p179 = pneg %p178
    // Predicated region
    $region29: #{alexnet_forward.12} parent=5 // pred_check
      _
    $region30: #{alexnet_forward.12} parent=5 // pred_check_branch
      %181 = sbr.rel (%p178) target = $region32
    $region31: #{alexnet_forward.12} parent=5 // pred_region
      %s182 = ssub.s32 %s9, 1
      %s183 = smul.u32 %s14, 2
      %p184 = scmp.lt.s32.totalorder %s183, 6
      %s185 = scalar_select %p184, %s183, 6
      %s186 = smul.addr %s185, 4
      %s187 = smul.addr %s186, 4
      %s188 = scalar_lea.vmem %s0, %s187
      %p189 = pneg %p37
      %p190 = pneg %p34
      %s191 = smul.u32 %s14, 2
      %s192 = sadd.s32 %s191, 1
      %p193 = scmp.lt.s32.totalorder %s192, 6
      %s194 = scalar_select %p193, %s192, 6
      %s195 = smul.addr %s194, 4
      %s196 = smul.addr %s195, 4
      %s197 = scalar_lea.vmem %s1, %s196
      %p198 = pneg %p67
      %p199 = pneg %p64
      %s200 = smul.u32 %s14, 2
      %s201 = sadd.s32 %s200, 2
      %p202 = scmp.lt.s32.totalorder %s201, 6
      %s203 = scalar_select %p202, %s201, 6
      %s204 = smul.addr %s203, 4
      %s205 = smul.addr %s204, 4
      %s206 = scalar_lea.vmem %s2, %s205
      %p207 = pneg %p97
      %p208 = pneg %p94
      %p209 = pneg %p123
      %p210 = pneg %p120
      %p211 = scmp.lt.s32.totalorder %s14, 2
      %s212 = scalar_select %p211, %s14, 2
      %s213 = smul.addr %s212, 4
      %s214 = smul.addr %s213, 4
      %s215 = scalar_lea.vmem %s3, %s214
      %s216 = smul.u32 %s14, 2
      %p217 = scmp.lt.s32.totalorder %s216, 6
      %s218 = scalar_select %p217, %s216, 6
      %s219 = smul.addr %s218, 4
      %s220 = smul.addr %s219, 4
      %s221 = scalar_lea.vmem %s0, %s220
      %s222 = smul.u32 %s14, 2
      %s223 = smul.u32 %s14, 2
      %s224 = sadd.s32 %s223, 1
      %p225 = scmp.lt.s32.totalorder %s224, 6
      %s226 = scalar_select %p225, %s224, 6
      %s227 = smul.addr %s226, 4
      %s228 = smul.addr %s227, 4
      %s229 = scalar_lea.vmem %s1, %s228
      %s230 = smul.u32 %s14, 2
      %s231 = sadd.s32 %s230, 1
      %s232 = smul.u32 %s14, 2
      %s233 = sadd.s32 %s232, 2
      %p234 = scmp.lt.s32.totalorder %s233, 6
      %s235 = scalar_select %p234, %s233, 6
      %s236 = smul.addr %s235, 4
      %s237 = smul.addr %s236, 4
      %s238 = scalar_lea.vmem %s2, %s237
      %s239 = smul.u32 %s14, 2
      %s240 = sadd.s32 %s239, 2
      %p241 = scmp.lt.s32.totalorder %s14, 2
      %s242 = scalar_select %p241, %s14, 2
      %s243 = smul.addr %s242, 4
      %s244 = smul.addr %s243, 4
      %s245 = scalar_lea.vmem %s3, %s244
      %v246 = vld [vmem:[%s221] sm:$0xff]
      %v247 = vld [vmem:[%s221 + $0x8] sm:$0xff]
      %v248 = vld [vmem:[%s229] sm:$0xff]
      %v249 = vld [vmem:[%s229 + $0x8] sm:$0xff]
      %v250 = vmax.bf16 %v246, %v248
      %v251 = vmax.bf16 %v247, %v249
      %v252 = vld [vmem:[%s238] sm:$0xff]
      %v253 = vld [vmem:[%s238 + $0x8] sm:$0xff]
      %v254 = vmax.bf16 %v250, %v252
      %v255 = vmax.bf16 %v251, %v253
      %v257 = vshrl.u32 %v254, 16
      %v259 = vrot.slane %v257, 4
      %v260 = vshll.u32 %v254, 16
      %v262 = vrot.slane %v260, 5
      %v263 = vor.u32 %v259, %v262
      %v264 = vrot.slane %v263, 4
      %v266 = vshrl.u32 %v255, 16
      %v268 = vrot.slane %v266, 4
      %v269 = vshll.u32 %v255, 16
      %v271 = vrot.slane %v269, 5
      %v272 = vor.u32 %v268, %v271
      %v273 = vrot.slane %v272, 4
      %v276 = vmax.bf16 %v254, %v264
      %v277 = vmax.bf16 %v255, %v273
      %v280 = vrot.slane %v254, 5
      %v281 = vrot.slane %v280, 4
      %v282 = vrot.slane %v255, 5
      %v283 = vrot.slane %v282, 4
      %v286 = vmax.bf16 %v276, %v281
      %v287 = vmax.bf16 %v277, %v283
      %vm288 = vcmask 1042432
      %vm289 = vsmask.f32 2304
      %vm290 = vmand %vm288, %vm289
      %vm291 = vcmask 522244
      %vm292 = vsmask.f32 6400
      %vm293 = vmand %vm291, %vm292
      %vm294 = vmor %vm293, %vm290
      %v295 = vld [vmem:[%s245] sm:$0x77]
      %v296 = vsel %vm294, %v286, %v295
      %297 = vst [vmem:[%s245] sm:$0x77] %v296
      %v298 = vld [vmem:[%s245 + $0x8] sm:$0x77]
      %v299 = vsel %vm294, %v287, %v298
      %300 = vst [vmem:[%s245 + $0x8] sm:$0x77] %v299
      %p301 = scmp.lt.s32.totalorder %s14, 2
      %s302 = scalar_select %p301, %s14, 2
      %s303 = smul.addr %s302, 4
      %s304 = smul.addr %s303, 4
      %s305 = scalar_lea.vmem %s3, %s304
      // Predicated region
      $region33: #{alexnet_forward.12} parent=31 // pred_check
        %p306 = pneg %p120
      $region34: #{alexnet_forward.12} parent=31 // pred_check_branch
        %308 = sbr.rel (%p306) target = $region36
      $region35: #{alexnet_forward.12} parent=31 // pred_region
        _
      $region36: #{alexnet_forward.12} parent=31 // pred_fallthru
        _
    $region32: #{alexnet_forward.12} parent=5 // pred_fallthru
      _
    %p309 = scmp.le.s32.totalorder 2, %s9
    // Predicated region
    $region37: #{alexnet_forward.12} parent=5 // pred_check
      %p310 = pneg %p309
    $region38: #{alexnet_forward.12} parent=5 // pred_check_branch
      %312 = sbr.rel (%p310) target = $region40
    $region39: #{alexnet_forward.12} parent=5 // pred_region
      %s313 = ssub.s32 %s9, 2
      // Predicated region
      $region41: #{alexnet_forward.12} parent=39 // pred_check
        %p314 = pneg %p126
      $region42: #{alexnet_forward.12} parent=39 // pred_check_branch
        %316 = sbr.rel (%p314) target = $region44
      $region43: #{alexnet_forward.12} parent=39 // pred_region
        %p317 = scmp.lt.s32.totalorder %s15, 2
        %s318 = scalar_select %p317, %s15, 2
        %s319 = smul.addr %s318, 4
        %s320 = smul.addr %s319, 4
        %s321 = scalar_lea.vmem %s3, %s320
      $region44: #{alexnet_forward.12} parent=39 // pred_fallthru
        _
    $region40: #{alexnet_forward.12} parent=5 // pred_fallthru
      _
  $region6: #{alexnet_forward.12} parent=0 // loop_footer
    %s13 = sadd.s32 1, %s9
  $region7: #{alexnet_forward.12} parent=0 // loop_footer_branch
    %8 = sbr.rel target = $region3
  $region8: #{alexnet_forward.12} parent=0 // loop_exit
    _

// kernel: alexnet_forward.11
$region0: #{alexnet_forward.11}
  #allocation0 [shape = 'u32[]', space=smem, size = 0x4, offset = 0x4, fixed_abs, tag = 'smem constant byte address 0x4 - core index']
  #allocation1 [shape = 'u32[144,128]{1,0:T(1,128)}', space=vmem, size = 0x12000, scoped, tag = 'internal scratch']
  #allocation2 [shape = 'f32[2,7,192]{2,1,0:T(8,128)}', space=vmem, size = 0x4000, scoped, tag = 'scratch operand']
  %s0 = inlined_call_operand.vmem [shape: bf16[11,2,11,64], index: 0, kind: input, shape index: {}]
  %s1 = inlined_call_operand.vmem [shape: bf16[5,5,64,192], index: 1, kind: input, shape index: {}]
  %s2 = inlined_call_operand.vmem [shape: f32[1,192], index: 2, kind: input, shape index: {}]
  %s3 = inlined_call_operand.vmem [shape: bf16[7,2,7,192], index: 3, kind: output, shape index: {}]
  %s4 = sld [smem:[#allocation0]]
  $region53: #{alexnet_forward.11} parent=0
    _
  %s6 = ssub.s32 1, %s4
  %s7 = scalar_select 0, %s6, %s4
  loop: start=0, step=1, limit=37
  $region2: #{alexnet_forward.11} parent=0 // loop_pre_header
    _
  $region3: #{alexnet_forward.11} parent=0 // loop_header
    %s9 = sphi 0, %s13
    %p10 = scmp.ge.s32.totalorder %s9, 37
    %s16 = sphi 0, %s28
    %s17 = sphi 0, %s24
    %s18 = sphi 0, %s16
    %s19 = sphi 0, %s17
    %s20 = sphi 0, %s18
    %s21 = sphi 0, %s19
    %s33 = sphi 0, %s35
    %s36 = sphi 0, %s33
    %s37 = sphi 0, %s36
    %s53 = sphi 0, %s37
    %s59 = sphi 0, %s61
    %s62 = sphi 0, %s59
    %s63 = sphi 0, %s62
    %s79 = sphi 0, %s63
    %s83 = sphi 0, %s83
    %s85 = sphi 0, %s83
    %s86 = sphi 0, %s85
    %s100 = sphi 0, %s86
    %s106 = sphi 0, %s108
    %s109 = sphi 0, %s106
    %s110 = sphi 0, %s109
    %s126 = sphi 0, %s110
  $region4: #{alexnet_forward.11} parent=0 // loop_header_branch
    %12 = sbr.rel (%p10) target = $region8
  $region5: #{alexnet_forward.11} parent=0 // loop_body
    %s14 = ssub.s32 %s9, 1
    %s15 = ssub.s32 %s9, 2
    %s22 = sadd.s32 1, %s17
    %p23 = scmp.ge.s32.totalorder %s22, 5
    %s24 = scalar_select %p23, 0, %s22
    %s25 = sadd.s32 1, %s16
    %s26 = scalar_select %p23, %s25, %s16
    %p27 = scmp.ge.s32.totalorder %s26, 7
    %s28 = scalar_select %p27, 0, %s26
    %s29 = sadd.s32 %s16, %s17
    %s30 = sadd.s32 %s28, %s24
    %s31 = ssub.s32 %s29, %s30
    %p32 = scmp.eq.s32.totalorder %s31, 0
    %s34 = sadd.s32 %s33, 1
    %s35 = scalar_select %p32, %s33, %s34
    %p38 = pneg %p32
    %p39 = scmp.eq.s32.totalorder %s9, 34
    %p40 = por %p38, %p39
    %p41 = scmp.ne.s32.totalorder %s33, %s36
    %p42 = scmp.eq.s32.totalorder %s9, 0
    %p43 = por %p41, %p42
    %p44 = scmp.ne.s32.totalorder %s33, %s36
    %p45 = scmp.eq.s32.totalorder %s14, 34
    %p46 = por %p44, %p45
    %p47 = scmp.ne.s32.totalorder %s36, %s37
    %p48 = scmp.eq.s32.totalorder %s14, 0
    %p49 = por %p47, %p48
    %p50 = scmp.ne.s32.totalorder %s36, %s37
    %p51 = scmp.eq.s32.totalorder %s15, 34
    %p52 = por %p50, %p51
    %p54 = scmp.ne.s32.totalorder %s37, %s53
    %p55 = scmp.eq.s32.totalorder %s15, 0
    %p56 = por %p54, %p55
    %s57 = ssub.s32 %s17, %s24
    %p58 = scmp.eq.s32.totalorder %s57, 0
    %s60 = sadd.s32 %s59, 1
    %s61 = scalar_select %p58, %s59, %s60
    %p64 = pneg %p58
    %p65 = scmp.eq.s32.totalorder %s9, 34
    %p66 = por %p64, %p65
    %p67 = scmp.ne.s32.totalorder %s59, %s62
    %p68 = scmp.eq.s32.totalorder %s9, 0
    %p69 = por %p67, %p68
    %p70 = scmp.ne.s32.totalorder %s59, %s62
    %p71 = scmp.eq.s32.totalorder %s14, 34
    %p72 = por %p70, %p71
    %p73 = scmp.ne.s32.totalorder %s62, %s63
    %p74 = scmp.eq.s32.totalorder %s14, 0
    %p75 = por %p73, %p74
    %p76 = scmp.ne.s32.totalorder %s62, %s63
    %p77 = scmp.eq.s32.totalorder %s15, 34
    %p78 = por %p76, %p77
    %p80 = scmp.ne.s32.totalorder %s63, %s79
    %p81 = scmp.eq.s32.totalorder %s15, 0
    %p82 = por %p80, %p81
    %s84 = sadd.s32 %s83, 1
    %p87 = scmp.eq.s32.totalorder %s9, 34
    %p88 = scmp.ne.s32.totalorder %s83, %s85
    %p89 = scmp.eq.s32.totalorder %s9, 0
    %p90 = por %p88, %p89
    %p91 = scmp.ne.s32.totalorder %s83, %s85
    %p92 = scmp.eq.s32.totalorder %s14, 34
    %p93 = por %p91, %p92
    %p94 = scmp.ne.s32.totalorder %s85, %s86
    %p95 = scmp.eq.s32.totalorder %s14, 0
    %p96 = por %p94, %p95
    %p97 = scmp.ne.s32.totalorder %s85, %s86
    %p98 = scmp.eq.s32.totalorder %s15, 34
    %p99 = por %p97, %p98
    %p101 = scmp.ne.s32.totalorder %s86, %s100
    %p102 = scmp.eq.s32.totalorder %s15, 0
    %p103 = por %p101, %p102
    %s104 = ssub.s32 %s16, %s28
    %p105 = scmp.eq.s32.totalorder %s104, 0
    %s107 = sadd.s32 %s106, 1
    %s108 = scalar_select %p105, %s106, %s107
    %p111 = pneg %p105
    %p112 = scmp.eq.s32.totalorder %s9, 34
    %p113 = por %p111, %p112
    %p114 = scmp.ne.s32.totalorder %s106, %s109
    %p115 = scmp.eq.s32.totalorder %s9, 0
    %p116 = por %p114, %p115
    %p117 = scmp.ne.s32.totalorder %s106, %s109
    %p118 = scmp.eq.s32.totalorder %s14, 34
    %p119 = por %p117, %p118
    %p120 = scmp.ne.s32.totalorder %s109, %s110
    %p121 = scmp.eq.s32.totalorder %s14, 0
    %p122 = por %p120, %p121
    %p123 = scmp.ne.s32.totalorder %s109, %s110
    %p124 = scmp.eq.s32.totalorder %s15, 34
    %p125 = por %p123, %p124
    %p127 = scmp.ne.s32.totalorder %s110, %s126
    %p128 = scmp.eq.s32.totalorder %s15, 0
    %p129 = por %p127, %p128
    %p130 = scmp.le.s32.totalorder 1, %s9
    %p131 = scmp.lt.s32.totalorder %s9, 36
    %p132 = pnand %p130, %p131
    %p133 = pneg %p132
    // Predicated region
    $region9: #{alexnet_forward.11} parent=5 // pred_check
      _
    $region10: #{alexnet_forward.11} parent=5 // pred_check_branch
      %135 = sbr.rel (%p132) target = $region12
    $region11: #{alexnet_forward.11} parent=5 // pred_region
      %s136 = ssub.s32 %s9, 1
      // Predicated region
      $region13: #{alexnet_forward.11} parent=11 // pred_check
        %p137 = pneg %p96
      $region14: #{alexnet_forward.11} parent=11 // pred_check_branch
        %139 = sbr.rel (%p137) target = $region16
      $region15: #{alexnet_forward.11} parent=11 // pred_region
        _
      $region16: #{alexnet_forward.11} parent=11 // pred_fallthru
        _
    $region12: #{alexnet_forward.11} parent=5 // pred_fallthru
      _
    %p140 = scmp.lt.s32.totalorder %s9, 35
    // Predicated region
    $region17: #{alexnet_forward.11} parent=5 // pred_check
      %p141 = pneg %p140
    $region18: #{alexnet_forward.11} parent=5 // pred_check_branch
      %143 = sbr.rel (%p141) target = $region20
    $region19: #{alexnet_forward.11} parent=5 // pred_region
      // Predicated region
      $region21: #{alexnet_forward.11} parent=19 // pred_check
        %p144 = pneg %p43
      $region22: #{alexnet_forward.11} parent=19 // pred_check_branch
        %146 = sbr.rel (%p144) target = $region24
      $region23: #{alexnet_forward.11} parent=19 // pred_region
        %s147 = sadd.s32 %s16, %s17
        %p148 = scmp.lt.s32.totalorder %s147, 10
        %s149 = scalar_select %p148, %s147, 10
        %s150 = smul.addr %s149, 4
        %s151 = smul.addr %s150, 4
        %s152 = scalar_lea.vmem %s0, %s151
        %s153 = sadd.s32 %s16, %s17
      $region24: #{alexnet_forward.11} parent=19 // pred_fallthru
        _
      // Predicated region
      $region25: #{alexnet_forward.11} parent=19 // pred_check
        %p154 = pneg %p69
      $region26: #{alexnet_forward.11} parent=19 // pred_check_branch
        %156 = sbr.rel (%p154) target = $region28
      $region27: #{alexnet_forward.11} parent=19 // pred_region
        %p157 = scmp.lt.s32.totalorder %s17, 4
        %s158 = scalar_select %p157, %s17, 4
        %s159 = smul.addr %s158, 80
        %s160 = smul.addr %s159, 4
        %s161 = scalar_lea.vmem %s1, %s160
      $region28: #{alexnet_forward.11} parent=19 // pred_fallthru
        _
    $region20: #{alexnet_forward.11} parent=5 // pred_fallthru
      _
    %p162 = scmp.le.s32.totalorder 1, %s9
    %p163 = scmp.lt.s32.totalorder %s9, 36
    %p164 = pnand %p162, %p163
    %p165 = pneg %p164
    // Predicated region
    $region29: #{alexnet_forward.11} parent=5 // pred_check
      _
    $region30: #{alexnet_forward.11} parent=5 // pred_check_branch
      %167 = sbr.rel (%p164) target = $region32
    $region31: #{alexnet_forward.11} parent=5 // pred_region
      %s168 = ssub.s32 %s9, 1
      %s169 = sadd.s32 %s18, %s19
      %p170 = scmp.lt.s32.totalorder %s169, 10
      %s171 = scalar_select %p170, %s169, 10
      %s172 = smul.addr %s171, 4
      %s173 = smul.addr %s172, 4
      %s174 = scalar_lea.vmem %s0, %s173
      %p175 = pneg %p49
      %p176 = pneg %p46
      %p177 = scmp.lt.s32.totalorder %s19, 4
      %s178 = scalar_select %p177, %s19, 4
      %s179 = smul.addr %s178, 80
      %s180 = smul.addr %s179, 4
      %s181 = scalar_lea.vmem %s1, %s180
      %p182 = pneg %p75
      %p183 = pneg %p72
      %p184 = pneg %p96
      %p185 = pneg %p93
      %p186 = pneg %p122
      %p187 = pneg %p119
      %p188 = scmp.lt.s32.totalorder %s18, 6
      %s189 = scalar_select %p188, %s18, 6
      %s190 = smul.addr %s189, 4
      %s191 = smul.addr %s190, 4
      %s192 = scalar_lea.vmem %s3, %s191
      %s193 = sadd.s32 %s18, %s19
      %p194 = scmp.lt.s32.totalorder %s193, 10
      %s195 = scalar_select %p194, %s193, 10
      %s196 = smul.addr %s195, 4
      %s197 = smul.addr %s196, 4
      %s198 = scalar_lea.vmem %s0, %s197
      %s199 = sadd.s32 %s18, %s19
      %p200 = scmp.lt.s32.totalorder %s19, 4
      %s201 = scalar_select %p200, %s19, 4
      %s202 = smul.addr %s201, 80
      %s203 = smul.addr %s202, 4
      %s204 = scalar_lea.vmem %s1, %s203
      %p205 = scmp.lt.s32.totalorder %s18, 6
      %s206 = scalar_select %p205, %s18, 6
      %s207 = smul.addr %s206, 4
      %s208 = smul.addr %s207, 4
      %s209 = scalar_lea.vmem %s3, %s208
      %p211 = scmp.eq.s32.totalorder %s19, 0
      // Predicated region
      $region33: #{alexnet_forward.11} parent=31 // pred_check
        %p212 = pneg %p211
      $region34: #{alexnet_forward.11} parent=31 // pred_check_branch
        %214 = sbr.rel (%p212) target = $region36
      $region35: #{alexnet_forward.11} parent=31 // pred_region
        %215 = vst [vmem:[#allocation2] sm:$0x7f] 0.0
        %vm216 = vcmask 522240
        %217 = vst.msk [vmem:[#allocation2 + $0x8] sm:$0x7f] %vm216, 0.0
        %218 = vst [vmem:[#allocation2 + $0x10] sm:$0x7f] 0.0
        %219 = vst.msk [vmem:[#allocation2 + $0x18] sm:$0x7f] %vm216, 0.0
      $region36: #{alexnet_forward.11} parent=31 // pred_fallthru
        _
      %v220 = vld [vmem:[%s198] sm:$0xf]
      %v221 = vld [vmem:[%s198 + $0x4] sm:$0x3]
      %v222 = vld [vmem:[%s204] sm:$0xff]
      %v223 = vld [vmem:[%s204 + $0x8] sm:$0xff]
      %v224 = vld [vmem:[%s204 + $0x10] sm:$0xff]
      %v225 = vld [vmem:[%s204 + $0x18] sm:$0xff]
      %v226 = vld [vmem:[%s204 + $0x20] sm:$0xff]
      %v227 = vld [vmem:[%s204 + $0x28] sm:$0xff]
      %v228 = vld [vmem:[%s204 + $0x30] sm:$0xff]
      %v229 = vld [vmem:[%s204 + $0x38] sm:$0xff]
      %s230 = scalar_lea.vmem %s204, 64
      %v231 = vld [vmem:[%s230] sm:$0xff]
      %v232 = vld [vmem:[%s230 + $0x8] sm:$0xff]
      %v233 = vld [vmem:[%s230 + $0x10] sm:$0xff]
      %v234 = vld [vmem:[%s230 + $0x18] sm:$0xff]
      %v235 = vld [vmem:[%s230 + $0x20] sm:$0xff]
      %v236 = vld [vmem:[%s230 + $0x28] sm:$0xff]
      %v237 = vld [vmem:[%s230 + $0x30] sm:$0xff]
      %v238 = vld [vmem:[%s230 + $0x38] sm:$0xff]
      %v240 = vunpack.c.l.b16 %v220
      %v241 = vpack.c.b16 %v240, %v240
      %v243 = vshrl.u32 %v241, 16
      %v245 = vshll.u32 %v241, 16
      %v247 = vrot.slane %v245, 1
      %v248 = vor.u32 %v243, %v247
      %v257 = vunpack.c.l.b16 %v231
      %v258 = vunpack.c.h.b16 %v231
      %v259 = vunpack.c.l.b16 %v232
      %v260 = vunpack.c.h.b16 %v232
      %v261 = vunpack.c.l.b16 %v233
      %v262 = vunpack.c.h.b16 %v233
      %v263 = vunpack.c.l.b16 %v234
      %v264 = vunpack.c.h.b16 %v234
      %v265 = vunpack.c.l.b16 %v235
      %v266 = vunpack.c.h.b16 %v235
      %v267 = vunpack.c.l.b16 %v236
      %v268 = vunpack.c.h.b16 %v236
      %v269 = vunpack.c.l.b16 %v237
      %v270 = vunpack.c.h.b16 %v237
      %v271 = vunpack.c.l.b16 %v238
      %v272 = vunpack.c.h.b16 %v238
      %v273 = vpack.c.b16 %v259, %v257
      %v274 = vpack.c.b16 %v260, %v258
      %v275 = vpack.c.b16 %v263, %v261
      %v276 = vpack.c.b16 %v264, %v262
      %v277 = vpack.c.b16 %v267, %v265
      %v278 = vpack.c.b16 %v268, %v266
      %v279 = vpack.c.b16 %v271, %v269
      %v280 = vpack.c.b16 %v272, %v270
      %vm289 = vcmask 523264
      %v291 = vsel %vm289, %v248, 0
      %293 = vmatprep.subr.bf16.mxu0 %v274
      %294 = vmatpush1.bf16.msra.mxu0 %v273
      %295 = vmatprep.subr.bf16.mxu0 %v276
      %296 = vmatpush1.bf16.msra.mxu0 %v275
      %297 = vmatprep.subr.bf16.mxu0 %v278
      %298 = vmatpush1.bf16.msra.mxu0 %v277
      %299 = vmatprep.subr.bf16.mxu0 %v280
      %300 = vmatpush1.bf16.msra.mxu0 %v279
      %301 = vmatprep.subr.bf16.mxu0 0
      %302 = vmatpush1.bf16.msra.mxu0 0
      %303 = vmatprep.subr.bf16.mxu0 0
      %304 = vmatpush1.bf16.msra.mxu0 0
      %305 = vmatprep.subr.bf16.mxu0 0
      %306 = vmatpush1.bf16.msra.mxu0 0
      %307 = vmatprep.subr.bf16.mxu0 0
      %308 = vmatpush1.bf16.msra.mxu0 0
      %309 = vmatprep.subr.bf16.mxu0 0
      %310 = vmatpush1.bf16.msra.mxu0 0
      %311 = vmatprep.subr.bf16.mxu0 0
      %312 = vmatpush1.bf16.msra.mxu0 0
      %313 = vmatprep.subr.bf16.mxu0 0
      %314 = vmatpush1.bf16.msra.mxu0 0
      %315 = vmatprep.subr.bf16.mxu0 0
      %316 = vmatpush1.bf16.msra.mxu0 0
      %317 = vmatprep.subr.bf16.mxu0 0
      %318 = vmatpush1.bf16.msra.mxu0 0
      %319 = vmatprep.subr.bf16.mxu0 0
      %320 = vmatpush1.bf16.msra.mxu0 0
      %321 = vmatprep.subr.bf16.mxu0 0
      %322 = vmatpush1.bf16.msra.mxu0 0
      %323 = vmatprep.subr.bf16.mxu0 0
      %324 = vmatpush1.bf16.msra.mxu0 0
      %325 = vmatprep.mubr.bf16.mxu0 0
      %326 = vmatmul.mubr.bf16.gmra.mrb[0].mxu0 %v291
      %v327 = vpop.f32.mrb[0].mxu0
      %v328 = vadd.f32 0.0, %v327
      %v329 = vpop.f32.mrb[0].mxu0
      %v330 = vadd.f32 0.0, %v329
      %v331 = vpop.f32.mrb[0].mxu0
      %v332 = vpop.f32.mrb[0].mxu0
      %333 = vdwg.mxu0
      %v342 = vunpack.c.l.b16 %v222
      %v343 = vunpack.c.h.b16 %v222
      %v344 = vunpack.c.l.b16 %v223
      %v345 = vunpack.c.h.b16 %v223
      %v346 = vunpack.c.l.b16 %v224
      %v347 = vunpack.c.h.b16 %v224
      %v348 = vunpack.c.l.b16 %v225
      %v349 = vunpack.c.h.b16 %v225
      %v350 = vunpack.c.l.b16 %v226
      %v351 = vunpack.c.h.b16 %v226
      %v352 = vunpack.c.l.b16 %v227
      %v353 = vunpack.c.h.b16 %v227
      %v354 = vunpack.c.l.b16 %v228
      %v355 = vunpack.c.h.b16 %v228
      %v356 = vunpack.c.l.b16 %v229
      %v357 = vunpack.c.h.b16 %v229
      %v358 = vpack.c.b16 %v344, %v342
      %v359 = vpack.c.b16 %v345, %v343
      %v360 = vpack.c.b16 %v348, %v346
      %v361 = vpack.c.b16 %v349, %v347
      %v362 = vpack.c.b16 %v352, %v350
      %v363 = vpack.c.b16 %v353, %v351
      %v364 = vpack.c.b16 %v356, %v354
      %v365 = vpack.c.b16 %v357, %v355
      %v375 = vsel %vm289, %v220, 0
      %377 = vmatprep.subr.bf16.mxu0 %v359
      %378 = vmatpush1.bf16.msra.mxu0 %v358
      %379 = vmatprep.subr.bf16.mxu0 %v361
      %380 = vmatpush1.bf16.msra.mxu0 %v360
      %381 = vmatprep.subr.bf16.mxu0 %v363
      %382 = vmatpush1.bf16.msra.mxu0 %v362
      %383 = vmatprep.subr.bf16.mxu0 %v365
      %384 = vmatpush1.bf16.msra.mxu0 %v364
      %385 = vmatprep.subr.bf16.mxu0 0
      %386 = vmatpush1.bf16.msra.mxu0 0
      %387 = vmatprep.subr.bf16.mxu0 0
      %388 = vmatpush1.bf16.msra.mxu0 0
      %389 = vmatprep.subr.bf16.mxu0 0
      %390 = vmatpush1.bf16.msra.mxu0 0
      %391 = vmatprep.subr.bf16.mxu0 0
      %392 = vmatpush1.bf16.msra.mxu0 0
      %393 = vmatprep.subr.bf16.mxu0 0
      %394 = vmatpush1.bf16.msra.mxu0 0
      %395 = vmatprep.subr.bf16.mxu0 0
      %396 = vmatpush1.bf16.msra.mxu0 0
      %397 = vmatprep.subr.bf16.mxu0 0
      %398 = vmatpush1.bf16.msra.mxu0 0
      %399 = vmatprep.subr.bf16.mxu0 0
      %400 = vmatpush1.bf16.msra.mxu0 0
      %401 = vmatprep.subr.bf16.mxu0 0
      %402 = vmatpush1.bf16.msra.mxu0 0
      %403 = vmatprep.subr.bf16.mxu0 0
      %404 = vmatpush1.bf16.msra.mxu0 0
      %405 = vmatprep.subr.bf16.mxu0 0
      %406 = vmatpush1.bf16.msra.mxu0 0
      %407 = vmatprep.subr.bf16.mxu0 0
      %408 = vmatpush1.bf16.msra.mxu0 0
      %409 = vmatprep.mubr.bf16.mxu0 0
      %410 = vmatmul.mubr.bf16.gmra.mrb[0].mxu0 %v375
      %v411 = vpop.f32.mrb[0].mxu0
      %v412 = vadd.f32 %v328, %v411
      %v413 = vpop.f32.mrb[0].mxu0
      %v414 = vadd.f32 %v330, %v413
      %v415 = vpop.f32.mrb[0].mxu0
      %v416 = vpop.f32.mrb[0].mxu0
      %417 = vdwg.mxu0
      %s418 = scalar_lea.vmem %s204, 128
      %v419 = vld [vmem:[%s418] sm:$0xff]
      %v420 = vld [vmem:[%s418 + $0x8] sm:$0xff]
      %v421 = vld [vmem:[%s418 + $0x10] sm:$0xff]
      %v422 = vld [vmem:[%s418 + $0x18] sm:$0xff]
      %v423 = vld [vmem:[%s418 + $0x20] sm:$0xff]
      %v424 = vld [vmem:[%s418 + $0x28] sm:$0xff]
      %v425 = vld [vmem:[%s418 + $0x30] sm:$0xff]
      %v426 = vld [vmem:[%s418 + $0x38] sm:$0xff]
      %v428 = vunpack.c.l.b16 %v221
      %v429 = vpack.c.b16 %v428, %v240
      %v430 = vrot.slane %v429, 1
      %v439 = vunpack.c.l.b16 %v419
      %v440 = vunpack.c.h.b16 %v419
      %v441 = vunpack.c.l.b16 %v420
      %v442 = vunpack.c.h.b16 %v420
      %v443 = vunpack.c.l.b16 %v421
      %v444 = vunpack.c.h.b16 %v421
      %v445 = vunpack.c.l.b16 %v422
      %v446 = vunpack.c.h.b16 %v422
      %v447 = vunpack.c.l.b16 %v423
      %v448 = vunpack.c.h.b16 %v423
      %v449 = vunpack.c.l.b16 %v424
      %v450 = vunpack.c.h.b16 %v424
      %v451 = vunpack.c.l.b16 %v425
      %v452 = vunpack.c.h.b16 %v425
      %v453 = vunpack.c.l.b16 %v426
      %v454 = vunpack.c.h.b16 %v426
      %v455 = vpack.c.b16 %v441, %v439
      %v456 = vpack.c.b16 %v442, %v440
      %v457 = vpack.c.b16 %v445, %v443
      %v458 = vpack.c.b16 %v446, %v444
      %v459 = vpack.c.b16 %v449, %v447
      %v460 = vpack.c.b16 %v450, %v448
      %v461 = vpack.c.b16 %v453, %v451
      %v462 = vpack.c.b16 %v454, %v452
      %v472 = vsel %vm289, %v430, 0
      %474 = vmatprep.subr.bf16.mxu0 %v456
      %475 = vmatpush1.bf16.msra.mxu0 %v455
      %476 = vmatprep.subr.bf16.mxu0 %v458
      %477 = vmatpush1.bf16.msra.mxu0 %v457
      %478 = vmatprep.subr.bf16.mxu0 %v460
      %479 = vmatpush1.bf16.msra.mxu0 %v459
      %480 = vmatprep.subr.bf16.mxu0 %v462
      %481 = vmatpush1.bf16.msra.mxu0 %v461
      %482 = vmatprep.subr.bf16.mxu0 0
      %483 = vmatpush1.bf16.msra.mxu0 0
      %484 = vmatprep.subr.bf16.mxu0 0
      %485 = vmatpush1.bf16.msra.mxu0 0
      %486 = vmatprep.subr.bf16.mxu0 0
      %487 = vmatpush1.bf16.msra.mxu0 0
      %488 = vmatprep.subr.bf16.mxu0 0
      %489 = vmatpush1.bf16.msra.mxu0 0
      %490 = vmatprep.subr.bf16.mxu0 0
      %491 = vmatpush1.bf16.msra.mxu0 0
      %492 = vmatprep.subr.bf16.mxu0 0
      %493 = vmatpush1.bf16.msra.mxu0 0
      %494 = vmatprep.subr.bf16.mxu0 0
      %495 = vmatpush1.bf16.msra.mxu0 0
      %496 = vmatprep.subr.bf16.mxu0 0
      %497 = vmatpush1.bf16.msra.mxu0 0
      %498 = vmatprep.subr.bf16.mxu0 0
      %499 = vmatpush1.bf16.msra.mxu0 0
      %500 = vmatprep.subr.bf16.mxu0 0
      %501 = vmatpush1.bf16.msra.mxu0 0
      %502 = vmatprep.subr.bf16.mxu0 0
      %503 = vmatpush1.bf16.msra.mxu0 0
      %504 = vmatprep.subr.bf16.mxu0 0
      %505 = vmatpush1.bf16.msra.mxu0 0
      %506 = vmatprep.mubr.bf16.mxu0 0
      %507 = vmatmul.mubr.bf16.gmra.mrb[0].mxu0 %v472
      %v508 = vpop.f32.mrb[0].mxu0
      %v509 = vadd.f32 0.0, %v508
      %v510 = vpop.f32.mrb[0].mxu0
      %v511 = vadd.f32 0.0, %v510
      %v512 = vpop.f32.mrb[0].mxu0
      %v513 = vpop.f32.mrb[0].mxu0
      %514 = vdwg.mxu0
      %v515 = vadd.f32 %v412, %v509
      %v516 = vadd.f32 %v414, %v511
      %s517 = scalar_lea.vmem %s204, 192
      %v518 = vld [vmem:[%s517] sm:$0xff]
      %v519 = vld [vmem:[%s517 + $0x8] sm:$0xff]
      %v520 = vld [vmem:[%s517 + $0x10] sm:$0xff]
      %v521 = vld [vmem:[%s517 + $0x18] sm:$0xff]
      %v522 = vld [vmem:[%s517 + $0x20] sm:$0xff]
      %v523 = vld [vmem:[%s517 + $0x28] sm:$0xff]
      %v524 = vld [vmem:[%s517 + $0x30] sm:$0xff]
      %v525 = vld [vmem:[%s517 + $0x38] sm:$0xff]
      %v527 = vshrl.u32 %v429, 16
      %v529 = vrot.slane %v527, 1
      %v530 = vshll.u32 %v429, 16
      %v532 = vrot.slane %v530, 2
      %v533 = vor.u32 %v529, %v532
      %v542 = vunpack.c.l.b16 %v518
      %v543 = vunpack.c.h.b16 %v518
      %v544 = vunpack.c.l.b16 %v519
      %v545 = vunpack.c.h.b16 %v519
      %v546 = vunpack.c.l.b16 %v520
      %v547 = vunpack.c.h.b16 %v520
      %v548 = vunpack.c.l.b16 %v521
      %v549 = vunpack.c.h.b16 %v521
      %v550 = vunpack.c.l.b16 %v522
      %v551 = vunpack.c.h.b16 %v522
      %v552 = vunpack.c.l.b16 %v523
      %v553 = vunpack.c.h.b16 %v523
      %v554 = vunpack.c.l.b16 %v524
      %v555 = vunpack.c.h.b16 %v524
      %v556 = vunpack.c.l.b16 %v525
      %v557 = vunpack.c.h.b16 %v525
      %v558 = vpack.c.b16 %v544, %v542
      %v559 = vpack.c.b16 %v545, %v543
      %v560 = vpack.c.b16 %v548, %v546
      %v561 = vpack.c.b16 %v549, %v547
      %v562 = vpack.c.b16 %v552, %v550
      %v563 = vpack.c.b16 %v553, %v551
      %v564 = vpack.c.b16 %v556, %v554
      %v565 = vpack.c.b16 %v557, %v555
      %v575 = vsel %vm289, %v533, 0
      %577 = vmatprep.subr.bf16.mxu0 %v559
      %578 = vmatpush1.bf16.msra.mxu0 %v558
      %579 = vmatprep.subr.bf16.mxu0 %v561
      %580 = vmatpush1.bf16.msra.mxu0 %v560
      %581 = vmatprep.subr.bf16.mxu0 %v563
      %582 = vmatpush1.bf16.msra.mxu0 %v562
      %583 = vmatprep.subr.bf16.mxu0 %v565
      %584 = vmatpush1.bf16.msra.mxu0 %v564
      %585 = vmatprep.subr.bf16.mxu0 0
      %586 = vmatpush1.bf16.msra.mxu0 0
      %587 = vmatprep.subr.bf16.mxu0 0
      %588 = vmatpush1.bf16.msra.mxu0 0
      %589 = vmatprep.subr.bf16.mxu0 0
      %590 = vmatpush1.bf16.msra.mxu0 0
      %591 = vmatprep.subr.bf16.mxu0 0
      %592 = vmatpush1.bf16.msra.mxu0 0
      %593 = vmatprep.subr.bf16.mxu0 0
      %594 = vmatpush1.bf16.msra.mxu0 0
      %595 = vmatprep.subr.bf16.mxu0 0
      %596 = vmatpush1.bf16.msra.mxu0 0
      %597 = vmatprep.subr.bf16.mxu0 0
      %598 = vmatpush1.bf16.msra.mxu0 0
      %599 = vmatprep.subr.bf16.mxu0 0
      %600 = vmatpush1.bf16.msra.mxu0 0
      %601 = vmatprep.subr.bf16.mxu0 0
      %602 = vmatpush1.bf16.msra.mxu0 0
      %603 = vmatprep.subr.bf16.mxu0 0
      %604 = vmatpush1.bf16.msra.mxu0 0
      %605 = vmatprep.subr.bf16.mxu0 0
      %606 = vmatpush1.bf16.msra.mxu0 0
      %607 = vmatprep.subr.bf16.mxu0 0
      %608 = vmatpush1.bf16.msra.mxu0 0
      %609 = vmatprep.mubr.bf16.mxu0 0
      %610 = vmatmul.mubr.bf16.gmra.mrb[0].mxu0 %v575
      %v611 = vpop.f32.mrb[0].mxu0
      %v612 = vadd.f32 0.0, %v611
      %v613 = vpop.f32.mrb[0].mxu0
      %v614 = vadd.f32 0.0, %v613
      %v615 = vpop.f32.mrb[0].mxu0
      %v616 = vpop.f32.mrb[0].mxu0
      %617 = vdwg.mxu0
      %v618 = vadd.f32 %v515, %v612
      %v619 = vadd.f32 %v516, %v614
      %s620 = scalar_lea.vmem %s204, 256
      %v621 = vld [vmem:[%s620] sm:$0xff]
      %v622 = vld [vmem:[%s620 + $0x8] sm:$0xff]
      %v623 = vld [vmem:[%s620 + $0x10] sm:$0xff]
      %v624 = vld [vmem:[%s620 + $0x18] sm:$0xff]
      %v625 = vld [vmem:[%s620 + $0x20] sm:$0xff]
      %v626 = vld [vmem:[%s620 + $0x28] sm:$0xff]
      %v627 = vld [vmem:[%s620 + $0x30] sm:$0xff]
      %v628 = vld [vmem:[%s620 + $0x38] sm:$0xff]
      %v629 = vrot.slane %v429, 2
      %v638 = vunpack.c.l.b16 %v621
      %v639 = vunpack.c.h.b16 %v621
      %v640 = vunpack.c.l.b16 %v622
      %v641 = vunpack.c.h.b16 %v622
      %v642 = vunpack.c.l.b16 %v623
      %v643 = vunpack.c.h.b16 %v623
      %v644 = vunpack.c.l.b16 %v624
      %v645 = vunpack.c.h.b16 %v624
      %v646 = vunpack.c.l.b16 %v625
      %v647 = vunpack.c.h.b16 %v625
      %v648 = vunpack.c.l.b16 %v626
      %v649 = vunpack.c.h.b16 %v626
      %v650 = vunpack.c.l.b16 %v627
      %v651 = vunpack.c.h.b16 %v627
      %v652 = vunpack.c.l.b16 %v628
      %v653 = vunpack.c.h.b16 %v628
      %v654 = vpack.c.b16 %v640, %v638
      %v655 = vpack.c.b16 %v641, %v639
      %v656 = vpack.c.b16 %v644, %v642
      %v657 = vpack.c.b16 %v645, %v643
      %v658 = vpack.c.b16 %v648, %v646
      %v659 = vpack.c.b16 %v649, %v647
      %v660 = vpack.c.b16 %v652, %v650
      %v661 = vpack.c.b16 %v653, %v651
      %v671 = vsel %vm289, %v629, 0
      %673 = vmatprep.subr.bf16.mxu0 %v655
      %674 = vmatpush1.bf16.msra.mxu0 %v654
      %675 = vmatprep.subr.bf16.mxu0 %v657
      %676 = vmatpush1.bf16.msra.mxu0 %v656
      %677 = vmatprep.subr.bf16.mxu0 %v659
      %678 = vmatpush1.bf16.msra.mxu0 %v658
      %679 = vmatprep.subr.bf16.mxu0 %v661
      %680 = vmatpush1.bf16.msra.mxu0 %v660
      %681 = vmatprep.subr.bf16.mxu0 0
      %682 = vmatpush1.bf16.msra.mxu0 0
      %683 = vmatprep.subr.bf16.mxu0 0
      %684 = vmatpush1.bf16.msra.mxu0 0
      %685 = vmatprep.subr.bf16.mxu0 0
      %686 = vmatpush1.bf16.msra.mxu0 0
      %687 = vmatprep.subr.bf16.mxu0 0
      %688 = vmatpush1.bf16.msra.mxu0 0
      %689 = vmatprep.subr.bf16.mxu0 0
      %690 = vmatpush1.bf16.msra.mxu0 0
      %691 = vmatprep.subr.bf16.mxu0 0
      %692 = vmatpush1.bf16.msra.mxu0 0
      %693 = vmatprep.subr.bf16.mxu0 0
      %694 = vmatpush1.bf16.msra.mxu0 0
      %695 = vmatprep.subr.bf16.mxu0 0
      %696 = vmatpush1.bf16.msra.mxu0 0
      %697 = vmatprep.subr.bf16.mxu0 0
      %698 = vmatpush1.bf16.msra.mxu0 0
      %699 = vmatprep.subr.bf16.mxu0 0
      %700 = vmatpush1.bf16.msra.mxu0 0
      %701 = vmatprep.subr.bf16.mxu0 0
      %702 = vmatpush1.bf16.msra.mxu0 0
      %703 = vmatprep.subr.bf16.mxu0 0
      %704 = vmatpush1.bf16.msra.mxu0 0
      %705 = vmatprep.mubr.bf16.mxu0 0
      %706 = vmatmul.mubr.bf16.gmra.mrb[0].mxu0 %v671
      %v707 = vpop.f32.mrb[0].mxu0
      %v708 = vadd.f32 0.0, %v707
      %v709 = vpop.f32.mrb[0].mxu0
      %v710 = vadd.f32 0.0, %v709
      %v711 = vpop.f32.mrb[0].mxu0
      %v712 = vpop.f32.mrb[0].mxu0
      %713 = vdwg.mxu0
      %v714 = vadd.f32 %v618, %v708
      %v715 = vadd.f32 %v619, %v710
      %v716 = vld [vmem:[#allocation2] sm:$0x7f]
      %v717 = vld [vmem:[#allocation2 + $0x8] sm:$0x7f]
      %v718 = vadd.f32 %v716, %v714
      %v719 = vadd.f32 %v717, %v715
      %720 = vst [vmem:[#allocation2] sm:$0x7f] %v718
      %vm721 = vcmask 522240
      %722 = vst.msk [vmem:[#allocation2 + $0x8] sm:$0x7f] %vm721, %v719
      %s723 = scalar_lea.vmem %s198, 8
      %v724 = vld [vmem:[%s723] sm:$0xf]
      %v725 = vld [vmem:[%s723 + $0x4] sm:$0x3]
      %v726 = vld [vmem:[%s204] sm:$0xff]
      %v727 = vld [vmem:[%s204 + $0x8] sm:$0xff]
      %v728 = vld [vmem:[%s204 + $0x10] sm:$0xff]
      %v729 = vld [vmem:[%s204 + $0x18] sm:$0xff]
      %v730 = vld [vmem:[%s204 + $0x20] sm:$0xff]
      %v731 = vld [vmem:[%s204 + $0x28] sm:$0xff]
      %v732 = vld [vmem:[%s204 + $0x30] sm:$0xff]
      %v733 = vld [vmem:[%s204 + $0x38] sm:$0xff]
      %v734 = vld [vmem:[%s230] sm:$0xff]
      %v735 = vld [vmem:[%s230 + $0x8] sm:$0xff]
      %v736 = vld [vmem:[%s230 + $0x10] sm:$0xff]
      %v737 = vld [vmem:[%s230 + $0x18] sm:$0xff]
      %v738 = vld [vmem:[%s230 + $0x20] sm:$0xff]
      %v739 = vld [vmem:[%s230 + $0x28] sm:$0xff]
      %v740 = vld [vmem:[%s230 + $0x30] sm:$0xff]
      %v741 = vld [vmem:[%s230 + $0x38] sm:$0xff]
      %v743 = vunpack.c.l.b16 %v724
      %v744 = vpack.c.b16 %v743, %v743
      %v746 = vshrl.u32 %v744, 16
      %v748 = vshll.u32 %v744, 16
      %v750 = vrot.slane %v748, 1
      %v751 = vor.u32 %v746, %v750
      %v760 = vunpack.c.l.b16 %v734
      %v761 = vunpack.c.h.b16 %v734
      %v762 = vunpack.c.l.b16 %v735
      %v763 = vunpack.c.h.b16 %v735
      %v764 = vunpack.c.l.b16 %v736
      %v765 = vunpack.c.h.b16 %v736
      %v766 = vunpack.c.l.b16 %v737
      %v767 = vunpack.c.h.b16 %v737
      %v768 = vunpack.c.l.b16 %v738
      %v769 = vunpack.c.h.b16 %v738
      %v770 = vunpack.c.l.b16 %v739
      %v771 = vunpack.c.h.b16 %v739
      %v772 = vunpack.c.l.b16 %v740
      %v773 = vunpack.c.h.b16 %v740
      %v774 = vunpack.c.l.b16 %v741
      %v775 = vunpack.c.h.b16 %v741
      %v776 = vpack.c.b16 %v762, %v760
      %v777 = vpack.c.b16 %v763, %v761
      %v778 = vpack.c.b16 %v766, %v764
      %v779 = vpack.c.b16 %v767, %v765
      %v780 = vpack.c.b16 %v770, %v768
      %v781 = vpack.c.b16 %v771, %v769
      %v782 = vpack.c.b16 %v774, %v772
      %v783 = vpack.c.b16 %v775, %v773
      %v793 = vsel %vm289, %v751, 0
      %795 = vmatprep.subr.bf16.mxu0 %v777
      %796 = vmatpush1.bf16.msra.mxu0 %v776
      %797 = vmatprep.subr.bf16.mxu0 %v779
      %798 = vmatpush1.bf16.msra.mxu0 %v778
      %799 = vmatprep.subr.bf16.mxu0 %v781
      %800 = vmatpush1.bf16.msra.mxu0 %v780
      %801 = vmatprep.subr.bf16.mxu0 %v783
      %802 = vmatpush1.bf16.msra.mxu0 %v782
      %803 = vmatprep.subr.bf16.mxu0 0
      %804 = vmatpush1.bf16.msra.mxu0 0
      %805 = vmatprep.subr.bf16.mxu0 0
      %806 = vmatpush1.bf16.msra.mxu0 0
      %807 = vmatprep.subr.bf16.mxu0 0
      %808 = vmatpush1.bf16.msra.mxu0 0
      %809 = vmatprep.subr.bf16.mxu0 0
      %810 = vmatpush1.bf16.msra.mxu0 0
      %811 = vmatprep.subr.bf16.mxu0 0
      %812 = vmatpush1.bf16.msra.mxu0 0
      %813 = vmatprep.subr.bf16.mxu0 0
      %814 = vmatpush1.bf16.msra.mxu0 0
      %815 = vmatprep.subr.bf16.mxu0 0
      %816 = vmatpush1.bf16.msra.mxu0 0
      %817 = vmatprep.subr.bf16.mxu0 0
      %818 = vmatpush1.bf16.msra.mxu0 0
      %819 = vmatprep.subr.bf16.mxu0 0
      %820 = vmatpush1.bf16.msra.mxu0 0
      %821 = vmatprep.subr.bf16.mxu0 0
      %822 = vmatpush1.bf16.msra.mxu0 0
      %823 = vmatprep.subr.bf16.mxu0 0
      %824 = vmatpush1.bf16.msra.mxu0 0
      %825 = vmatprep.subr.bf16.mxu0 0
      %826 = vmatpush1.bf16.msra.mxu0 0
      %827 = vmatprep.mubr.bf16.mxu0 0
      %828 = vmatmul.mubr.bf16.gmra.mrb[0].mxu0 %v793
      %v829 = vpop.f32.mrb[0].mxu0
      %v830 = vadd.f32 0.0, %v829
      %v831 = vpop.f32.mrb[0].mxu0
      %v832 = vadd.f32 0.0, %v831
      %v833 = vpop.f32.mrb[0].mxu0
      %v834 = vpop.f32.mrb[0].mxu0
      %835 = vdwg.mxu0
      %v844 = vunpack.c.l.b16 %v726
      %v845 = vunpack.c.h.b16 %v726
      %v846 = vunpack.c.l.b16 %v727
      %v847 = vunpack.c.h.b16 %v727
      %v848 = vunpack.c.l.b16 %v728
      %v849 = vunpack.c.h.b16 %v728
      %v850 = vunpack.c.l.b16 %v729
      %v851 = vunpack.c.h.b16 %v729
      %v852 = vunpack.c.l.b16 %v730
      %v853 = vunpack.c.h.b16 %v730
      %v854 = vunpack.c.l.b16 %v731
      %v855 = vunpack.c.h.b16 %v731
      %v856 = vunpack.c.l.b16 %v732
      %v857 = vunpack.c.h.b16 %v732
      %v858 = vunpack.c.l.b16 %v733
      %v859 = vunpack.c.h.b16 %v733
      %v860 = vpack.c.b16 %v846, %v844
      %v861 = vpack.c.b16 %v847, %v845
      %v862 = vpack.c.b16 %v850, %v848
      %v863 = vpack.c.b16 %v851, %v849
      %v864 = vpack.c.b16 %v854, %v852
      %v865 = vpack.c.b16 %v855, %v853
      %v866 = vpack.c.b16 %v858, %v856
      %v867 = vpack.c.b16 %v859, %v857
      %v877 = vsel %vm289, %v724, 0
      %879 = vmatprep.subr.bf16.mxu0 %v861
      %880 = vmatpush1.bf16.msra.mxu0 %v860
      %881 = vmatprep.subr.bf16.mxu0 %v863
      %882 = vmatpush1.bf16.msra.mxu0 %v862
      %883 = vmatprep.subr.bf16.mxu0 %v865
      %884 = vmatpush1.bf16.msra.mxu0 %v864
      %885 = vmatprep.subr.bf16.mxu0 %v867
      %886 = vmatpush1.bf16.msra.mxu0 %v866
      %887 = vmatprep.subr.bf16.mxu0 0
      %888 = vmatpush1.bf16.msra.mxu0 0
      %889 = vmatprep.subr.bf16.mxu0 0
      %890 = vmatpush1.bf16.msra.mxu0 0
      %891 = vmatprep.subr.bf16.mxu0 0
      %892 = vmatpush1.bf16.msra.mxu0 0
      %893 = vmatprep.subr.bf16.mxu0 0
      %894 = vmatpush1.bf16.msra.mxu0 0
      %895 = vmatprep.subr.bf16.mxu0 0
      %896 = vmatpush1.bf16.msra.mxu0 0
      %897 = vmatprep.subr.bf16.mxu0 0
      %898 = vmatpush1.bf16.msra.mxu0 0
      %899 = vmatprep.subr.bf16.mxu0 0
      %900 = vmatpush1.bf16.msra.mxu0 0
      %901 = vmatprep.subr.bf16.mxu0 0
      %902 = vmatpush1.bf16.msra.mxu0 0
      %903 = vmatprep.subr.bf16.mxu0 0
      %904 = vmatpush1.bf16.msra.mxu0 0
      %905 = vmatprep.subr.bf16.mxu0 0
      %906 = vmatpush1.bf16.msra.mxu0 0
      %907 = vmatprep.subr.bf16.mxu0 0
      %908 = vmatpush1.bf16.msra.mxu0 0
      %909 = vmatprep.subr.bf16.mxu0 0
      %910 = vmatpush1.bf16.msra.mxu0 0
      %911 = vmatprep.mubr.bf16.mxu0 0
      %912 = vmatmul.mubr.bf16.gmra.mrb[0].mxu0 %v877
      %v913 = vpop.f32.mrb[0].mxu0
      %v914 = vadd.f32 %v830, %v913
      %v915 = vpop.f32.mrb[0].mxu0
      %v916 = vadd.f32 %v832, %v915
      %v917 = vpop.f32.mrb[0].mxu0
      %v918 = vpop.f32.mrb[0].mxu0
      %919 = vdwg.mxu0
      %v920 = vld [vmem:[%s418] sm:$0xff]
      %v921 = vld [vmem:[%s418 + $0x8] sm:$0xff]
      %v922 = vld [vmem:[%s418 + $0x10] sm:$0xff]
      %v923 = vld [vmem:[%s418 + $0x18] sm:$0xff]
      %v924 = vld [vmem:[%s418 + $0x20] sm:$0xff]
      %v925 = vld [vmem:[%s418 + $0x28] sm:$0xff]
      %v926 = vld [vmem:[%s418 + $0x30] sm:$0xff]
      %v927 = vld [vmem:[%s418 + $0x38] sm:$0xff]
      %v929 = vunpack.c.l.b16 %v725
      %v930 = vpack.c.b16 %v929, %v743
      %v931 = vrot.slane %v930, 1
      %v940 = vunpack.c.l.b16 %v920
      %v941 = vunpack.c.h.b16 %v920
      %v942 = vunpack.c.l.b16 %v921
      %v943 = vunpack.c.h.b16 %v921
      %v944 = vunpack.c.l.b16 %v922
      %v945 = vunpack.c.h.b16 %v922
      %v946 = vunpack.c.l.b16 %v923
      %v947 = vunpack.c.h.b16 %v923
      %v948 = vunpack.c.l.b16 %v924
      %v949 = vunpack.c.h.b16 %v924
      %v950 = vunpack.c.l.b16 %v925
      %v951 = vunpack.c.h.b16 %v925
      %v952 = vunpack.c.l.b16 %v926
      %v953 = vunpack.c.h.b16 %v926
      %v954 = vunpack.c.l.b16 %v927
      %v955 = vunpack.c.h.b16 %v927
      %v956 = vpack.c.b16 %v942, %v940
      %v957 = vpack.c.b16 %v943, %v941
      %v958 = vpack.c.b16 %v946, %v944
      %v959 = vpack.c.b16 %v947, %v945
      %v960 = vpack.c.b16 %v950, %v948
      %v961 = vpack.c.b16 %v951, %v949
      %v962 = vpack.c.b16 %v954, %v952
      %v963 = vpack.c.b16 %v955, %v953
      %v973 = vsel %vm289, %v931, 0
      %975 = vmatprep.subr.bf16.mxu0 %v957
      %976 = vmatpush1.bf16.msra.mxu0 %v956
      %977 = vmatprep.subr.bf16.mxu0 %v959
      %978 = vmatpush1.bf16.msra.mxu0 %v958
      %979 = vmatprep.subr.bf16.mxu0 %v961
      %980 = vmatpush1.bf16.msra.mxu0 %v960
      %981 = vmatprep.subr.bf16.mxu0 %v963
      %982 = vmatpush1.bf16.msra.mxu0 %v962
      %983 = vmatprep.subr.bf16.mxu0 0
      %984 = vmatpush1.bf16.msra.mxu0 0
      %985 = vmatprep.subr.bf16.mxu0 0
      %986 = vmatpush1.bf16.msra.mxu0 0
      %987 = vmatprep.subr.bf16.mxu0 0
      %988 = vmatpush1.bf16.msra.mxu0 0
      %989 = vmatprep.subr.bf16.mxu0 0
      %990 = vmatpush1.bf16.msra.mxu0 0
      %991 = vmatprep.subr.bf16.mxu0 0
      %992 = vmatpush1.bf16.msra.mxu0 0
      %993 = vmatprep.subr.bf16.mxu0 0
      %994 = vmatpush1.bf16.msra.mxu0 0
      %995 = vmatprep.subr.bf16.mxu0 0
      %996 = vmatpush1.bf16.msra.mxu0 0
      %997 = vmatprep.subr.bf16.mxu0 0
      %998 = vmatpush1.bf16.msra.mxu0 0
      %999 = vmatprep.subr.bf16.mxu0 0
      %1000 = vmatpush1.bf16.msra.mxu0 0
      %1001 = vmatprep.subr.bf16.mxu0 0
      %1002 = vmatpush1.bf16.msra.mxu0 0
      %1003 = vmatprep.subr.bf16.mxu0 0
      %1004 = vmatpush1.bf16.msra.mxu0 0
      %1005 = vmatprep.subr.bf16.mxu0 0
      %1006 = vmatpush1.bf16.msra.mxu0 0
      %1007 = vmatprep.mubr.bf16.mxu0 0
      %1008 = vmatmul.mubr.bf16.gmra.mrb[0].mxu0 %v973
      %v1009 = vpop.f32.mrb[0].mxu0
      %v1010 = vadd.f32 0.0, %v1009
      %v1011 = vpop.f32.mrb[0].mxu0
      %v1012 = vadd.f32 0.0, %v1011
      %v1013 = vpop.f32.mrb[0].mxu0
      %v1014 = vpop.f32.mrb[0].mxu0
      %1015 = vdwg.mxu0
      %v1016 = vadd.f32 %v914, %v1010
      %v1017 = vadd.f32 %v916, %v1012
      %v1018 = vld [vmem:[%s517] sm:$0xff]
      %v1019 = vld [vmem:[%s517 + $0x8] sm:$0xff]
      %v1020 = vld [vmem:[%s517 + $0x10] sm:$0xff]
      %v1021 = vld [vmem:[%s517 + $0x18] sm:$0xff]
      %v1022 = vld [vmem:[%s517 + $0x20] sm:$0xff]
      %v1023 = vld [vmem:[%s517 + $0x28] sm:$0xff]
      %v1024 = vld [vmem:[%s517 + $0x30] sm:$0xff]
      %v1025 = vld [vmem:[%s517 + $0x38] sm:$0xff]
      %v1027 = vshrl.u32 %v930, 16
      %v1029 = vrot.slane %v1027, 1
      %v1030 = vshll.u32 %v930, 16
      %v1032 = vrot.slane %v1030, 2
      %v1033 = vor.u32 %v1029, %v1032
      %v1042 = vunpack.c.l.b16 %v1018
      %v1043 = vunpack.c.h.b16 %v1018
      %v1044 = vunpack.c.l.b16 %v1019
      %v1045 = vunpack.c.h.b16 %v1019
      %v1046 = vunpack.c.l.b16 %v1020
      %v1047 = vunpack.c.h.b16 %v1020
      %v1048 = vunpack.c.l.b16 %v1021
      %v1049 = vunpack.c.h.b16 %v1021
      %v1050 = vunpack.c.l.b16 %v1022
      %v1051 = vunpack.c.h.b16 %v1022
      %v1052 = vunpack.c.l.b16 %v1023
      %v1053 = vunpack.c.h.b16 %v1023
      %v1054 = vunpack.c.l.b16 %v1024
      %v1055 = vunpack.c.h.b16 %v1024
      %v1056 = vunpack.c.l.b16 %v1025
      %v1057 = vunpack.c.h.b16 %v1025
      %v1058 = vpack.c.b16 %v1044, %v1042
      %v1059 = vpack.c.b16 %v1045, %v1043
      %v1060 = vpack.c.b16 %v1048, %v1046
      %v1061 = vpack.c.b16 %v1049, %v1047
      %v1062 = vpack.c.b16 %v1052, %v1050
      %v1063 = vpack.c.b16 %v1053, %v1051
      %v1064 = vpack.c.b16 %v1056, %v1054
      %v1065 = vpack.c.b16 %v1057, %v1055
      %v1075 = vsel %vm289, %v1033, 0
      %1077 = vmatprep.subr.bf16.mxu0 %v1059
      %1078 = vmatpush1.bf16.msra.mxu0 %v1058
      %1079 = vmatprep.subr.bf16.mxu0 %v1061
      %1080 = vmatpush1.bf16.msra.mxu0 %v1060
      %1081 = vmatprep.subr.bf16.mxu0 %v1063
      %1082 = vmatpush1.bf16.msra.mxu0 %v1062
      %1083 = vmatprep.subr.bf16.mxu0 %v1065
      %1084 = vmatpush1.bf16.msra.mxu0 %v1064
      %1085 = vmatprep.subr.bf16.mxu0 0
      %1086 = vmatpush1.bf16.msra.mxu0 0
      %1087 = vmatprep.subr.bf16.mxu0 0
      %1088 = vmatpush1.bf16.msra.mxu0 0
      %1089 = vmatprep.subr.bf16.mxu0 0
      %1090 = vmatpush1.bf16.msra.mxu0 0
      %1091 = vmatprep.subr.bf16.mxu0 0
      %1092 = vmatpush1.bf16.msra.mxu0 0
      %1093 = vmatprep.subr.bf16.mxu0 0
      %1094 = vmatpush1.bf16.msra.mxu0 0
      %1095 = vmatprep.subr.bf16.mxu0 0
      %1096 = vmatpush1.bf16.msra.mxu0 0
      %1097 = vmatprep.subr.bf16.mxu0 0
      %1098 = vmatpush1.bf16.msra.mxu0 0
      %1099 = vmatprep.subr.bf16.mxu0 0
      %1100 = vmatpush1.bf16.msra.mxu0 0
      %1101 = vmatprep.subr.bf16.mxu0 0
      %1102 = vmatpush1.bf16.msra.mxu0 0
      %1103 = vmatprep.subr.bf16.mxu0 0
      %1104 = vmatpush1.bf16.msra.mxu0 0
      %1105 = vmatprep.subr.bf16.mxu0 0
      %1106 = vmatpush1.bf16.msra.mxu0 0
      %1107 = vmatprep.subr.bf16.mxu0 0
      %1108 = vmatpush1.bf16.msra.mxu0 0
      %1109 = vmatprep.mubr.bf16.mxu0 0
      %1110 = vmatmul.mubr.bf16.gmra.mrb[0].mxu0 %v1075
      %v1111 = vpop.f32.mrb[0].mxu0
      %v1112 = vadd.f32 0.0, %v1111
      %v1113 = vpop.f32.mrb[0].mxu0
      %v1114 = vadd.f32 0.0, %v1113
      %v1115 = vpop.f32.mrb[0].mxu0
      %v1116 = vpop.f32.mrb[0].mxu0
      %1117 = vdwg.mxu0
      %v1118 = vadd.f32 %v1016, %v1112
      %v1119 = vadd.f32 %v1017, %v1114
      %v1120 = vld [vmem:[%s620] sm:$0xff]
      %v1121 = vld [vmem:[%s620 + $0x8] sm:$0xff]
      %v1122 = vld [vmem:[%s620 + $0x10] sm:$0xff]
      %v1123 = vld [vmem:[%s620 + $0x18] sm:$0xff]
      %v1124 = vld [vmem:[%s620 + $0x20] sm:$0xff]
      %v1125 = vld [vmem:[%s620 + $0x28] sm:$0xff]
      %v1126 = vld [vmem:[%s620 + $0x30] sm:$0xff]
      %v1127 = vld [vmem:[%s620 + $0x38] sm:$0xff]
      %v1128 = vrot.slane %v930, 2
      %v1137 = vunpack.c.l.b16 %v1120
      %v1138 = vunpack.c.h.b16 %v1120
      %v1139 = vunpack.c.l.b16 %v1121
      %v1140 = vunpack.c.h.b16 %v1121
      %v1141 = vunpack.c.l.b16 %v1122
      %v1142 = vunpack.c.h.b16 %v1122
      %v1143 = vunpack.c.l.b16 %v1123
      %v1144 = vunpack.c.h.b16 %v1123
      %v1145 = vunpack.c.l.b16 %v1124
      %v1146 = vunpack.c.h.b16 %v1124
      %v1147 = vunpack.c.l.b16 %v1125
      %v1148 = vunpack.c.h.b16 %v1125
      %v1149 = vunpack.c.l.b16 %v1126
      %v1150 = vunpack.c.h.b16 %v1126
      %v1151 = vunpack.c.l.b16 %v1127
      %v1152 = vunpack.c.h.b16 %v1127
      %v1153 = vpack.c.b16 %v1139, %v1137
      %v1154 = vpack.c.b16 %v1140, %v1138
      %v1155 = vpack.c.b16 %v1143, %v1141
      %v1156 = vpack.c.b16 %v1144, %v1142
      %v1157 = vpack.c.b16 %v1147, %v1145
      %v1158 = vpack.c.b16 %v1148, %v1146
      %v1159 = vpack.c.b16 %v1151, %v1149
      %v1160 = vpack.c.b16 %v1152, %v1150
      %v1170 = vsel %vm289, %v1128, 0
      %1172 = vmatprep.subr.bf16.mxu0 %v1154
      %1173 = vmatpush1.bf16.msra.mxu0 %v1153
      %1174 = vmatprep.subr.bf16.mxu0 %v1156
      %1175 = vmatpush1.bf16.msra.mxu0 %v1155
      %1176 = vmatprep.subr.bf16.mxu0 %v1158
      %1177 = vmatpush1.bf16.msra.mxu0 %v1157
      %1178 = vmatprep.subr.bf16.mxu0 %v1160
      %1179 = vmatpush1.bf16.msra.mxu0 %v1159
      %1180 = vmatprep.subr.bf16.mxu0 0
      %1181 = vmatpush1.bf16.msra.mxu0 0
      %1182 = vmatprep.subr.bf16.mxu0 0
      %1183 = vmatpush1.bf16.msra.mxu0 0
      %1184 = vmatprep.subr.bf16.mxu0 0
      %1185 = vmatpush1.bf16.msra.mxu0 0
      %1186 = vmatprep.subr.bf16.mxu0 0
      %1187 = vmatpush1.bf16.msra.mxu0 0
      %1188 = vmatprep.subr.bf16.mxu0 0
      %1189 = vmatpush1.bf16.msra.mxu0 0
      %1190 = vmatprep.subr.bf16.mxu0 0
      %1191 = vmatpush1.bf16.msra.mxu0 0
      %1192 = vmatprep.subr.bf16.mxu0 0
      %1193 = vmatpush1.bf16.msra.mxu0 0
      %1194 = vmatprep.subr.bf16.mxu0 0
      %1195 = vmatpush1.bf16.msra.mxu0 0
      %1196 = vmatprep.subr.bf16.mxu0 0
      %1197 = vmatpush1.bf16.msra.mxu0 0
      %1198 = vmatprep.subr.bf16.mxu0 0
      %1199 = vmatpush1.bf16.msra.mxu0 0
      %1200 = vmatprep.subr.bf16.mxu0 0
      %1201 = vmatpush1.bf16.msra.mxu0 0
      %1202 = vmatprep.subr.bf16.mxu0 0
      %1203 = vmatpush1.bf16.msra.mxu0 0
      %1204 = vmatprep.mubr.bf16.mxu0 0
      %1205 = vmatmul.mubr.bf16.gmra.mrb[0].mxu0 %v1170
      %v1206 = vpop.f32.mrb[0].mxu0
      %v1207 = vadd.f32 0.0, %v1206
      %v1208 = vpop.f32.mrb[0].mxu0
      %v1209 = vadd.f32 0.0, %v1208
      %v1210 = vpop.f32.mrb[0].mxu0
      %v1211 = vpop.f32.mrb[0].mxu0
      %1212 = vdwg.mxu0
      %v1213 = vadd.f32 %v1118, %v1207
      %v1214 = vadd.f32 %v1119, %v1209
      %s1215 = scalar_lea.vmem [#allocation2], 16
      %v1216 = vld [vmem:[%s1215] sm:$0x7f]
      %v1217 = vld [vmem:[%s1215 + $0x8] sm:$0x7f]
      %v1218 = vadd.f32 %v1216, %v1213
      %v1219 = vadd.f32 %v1217, %v1214
      %1220 = vst [vmem:[%s1215] sm:$0x7f] %v1218
      %1221 = vst.msk [vmem:[%s1215 + $0x8] sm:$0x7f] %vm721, %v1219
      %p1222 = scmp.eq.s32.totalorder %s19, 4
      // Predicated region
      $region37: #{alexnet_forward.11} parent=31 // pred_check
        %p1223 = pneg %p1222
      $region38: #{alexnet_forward.11} parent=31 // pred_check_branch
        %1225 = sbr.rel (%p1223) target = $region40
      $region39: #{alexnet_forward.11} parent=31 // pred_region
        %v1226 = vld [vmem:[#allocation2] sm:$0x7f]
        %v1227 = vld [vmem:[#allocation2 + $0x8] sm:$0x7f]
        %v1228 = vld [vmem:[#allocation2 + $0x10] sm:$0x7f]
        %v1229 = vld [vmem:[#allocation2 + $0x18] sm:$0x7f]
        %v1230 = vld [vmem:[%s2] sm:$0x3]
        %v1232 = vlaneseq
        %v1233 = vshrl.u32 %v1232, 7
        %v1234 = vsub.s32 0, %v1233
        %v1235 = vrot.slane %v1230, %v1234
        %v1236 = vlaneseq
        %v1237 = vshrl.u32 %v1236, 7
        %v1238 = vsub.s32 1, %v1237
        %v1239 = vrot.slane %v1230, %v1238
        %v1242 = vadd.f32 %v1226, %v1235
        %v1243 = vadd.f32 %v1227, %v1239
        %v1244 = vadd.f32 %v1228, %v1235
        %v1245 = vadd.f32 %v1229, %v1239
        %v1246 = vmax.f32 %v1242, 0.0
        %v1247 = vmax.f32 %v1243, 0.0
        %v1248 = vmax.f32 %v1244, 0.0
        %v1249 = vmax.f32 %v1245, 0.0
        %v1250 = vpack.c.bf16 %v1246, %v1246
        %v1251 = vpack.c.bf16 %v1247, %v1247
        %v1252 = vpack.c.bf16 %v1248, %v1248
        %v1253 = vpack.c.bf16 %v1249, %v1249
        %v1258 = vunpack.c.l.b16 %v1250
        %v1259 = vunpack.c.l.b16 %v1251
        %v1260 = vunpack.c.l.b16 %v1252
        %v1261 = vunpack.c.l.b16 %v1253
        %v1262 = vpack.c.b16 %v1259, %v1258
        %v1263 = vpack.c.b16 %v1261, %v1260
        %vm1266 = vcmask 1043456
        %vm1267 = vsmask.f32 3328
        %vm1268 = vmand %vm1266, %vm1267
        %vm1269 = vcmask 523268
        %vm1270 = vsmask.f32 7424
        %vm1271 = vmand %vm1269, %vm1270
        %vm1272 = vmor %vm1271, %vm1268
        %v1273 = vld [vmem:[%s209] sm:$0xff]
        %v1274 = vsel %vm1272, %v1262, %v1273
        %1275 = vst [vmem:[%s209] sm:$0xff] %v1274
        %v1276 = vld [vmem:[%s209 + $0x8] sm:$0xff]
        %v1277 = vsel %vm1272, %v1263, %v1276
        %1278 = vst [vmem:[%s209 + $0x8] sm:$0xff] %v1277
      $region40: #{alexnet_forward.11} parent=31 // pred_fallthru
        _
      %p1279 = scmp.lt.s32.totalorder %s18, 6
      %s1280 = scalar_select %p1279, %s18, 6
      %s1281 = smul.addr %s1280, 4
      %s1282 = smul.addr %s1281, 4
      %s1283 = scalar_lea.vmem %s3, %s1282
      // Predicated region
      $region41: #{alexnet_forward.11} parent=31 // pred_check
        %p1284 = pneg %p119
      $region42: #{alexnet_forward.11} parent=31 // pred_check_branch
        %1286 = sbr.rel (%p1284) target = $region44
      $region43: #{alexnet_forward.11} parent=31 // pred_region
        _
      $region44: #{alexnet_forward.11} parent=31 // pred_fallthru
        _
    $region32: #{alexnet_forward.11} parent=5 // pred_fallthru
      _
    %p1287 = scmp.le.s32.totalorder 2, %s9
    // Predicated region
    $region45: #{alexnet_forward.11} parent=5 // pred_check
      %p1288 = pneg %p1287
    $region46: #{alexnet_forward.11} parent=5 // pred_check_branch
      %1290 = sbr.rel (%p1288) target = $region48
    $region47: #{alexnet_forward.11} parent=5 // pred_region
      %s1291 = ssub.s32 %s9, 2
      // Predicated region
      $region49: #{alexnet_forward.11} parent=47 // pred_check
        %p1292 = pneg %p125
      $region50: #{alexnet_forward.11} parent=47 // pred_check_branch
        %1294 = sbr.rel (%p1292) target = $region52
      $region51: #{alexnet_forward.11} parent=47 // pred_region
        %p1295 = scmp.lt.s32.totalorder %s20, 6
        %s1296 = scalar_select %p1295, %s20, 6
        %s1297 = smul.addr %s1296, 4
        %s1298 = smul.addr %s1297, 4
        %s1299 = scalar_lea.vmem %s3, %s1298
      $region52: #{alexnet_forward.11} parent=47 // pred_fallthru
        _
    $region48: #{alexnet_forward.11} parent=5 // pred_fallthru
      _
  $region6: #{alexnet_forward.11} parent=0 // loop_footer
    %s13 = sadd.s32 1, %s9
  $region7: #{alexnet_forward.11} parent=0 // loop_footer_branch
    %8 = sbr.rel target = $region3
  $region8: #{alexnet_forward.11} parent=0 // loop_exit
    _

// kernel: alexnet_forward.15
$region0: #{alexnet_forward.15}
  #allocation0 [shape = 'u32[]', space=smem, size = 0x4, offset = 0x4, fixed_abs, tag = 'smem constant byte address 0x4 - core index']
  #allocation1 [shape = 'u32[144,128]{1,0:T(1,128)}', space=vmem, size = 0x12000, scoped, tag = 'internal scratch']
  #allocation2 [shape = 'f32[2,3,16]{2,1,0:T(4,128)}', space=vmem, size = 0x1000, scoped, tag = 'scratch operand']
  %s0 = inlined_call_operand.vmem [shape: bf16[5,2,5,256], index: 0, kind: input, shape index: {}]
  %s1 = inlined_call_operand.vmem [shape: bf16[3,3,256,16], index: 1, kind: input, shape index: {}]
  %s2 = inlined_call_operand.vmem [shape: f32[1,16], index: 2, kind: input, shape index: {}]
  %s3 = inlined_call_operand.vmem [shape: bf16[3,2,3,16], index: 3, kind: output, shape index: {}]
  %s4 = sld [smem:[#allocation0]]
  $region53: #{alexnet_forward.15} parent=0
    _
  %s6 = ssub.s32 1, %s4
  %s7 = scalar_select 0, %s6, %s4
  loop: start=0, step=1, limit=11
  $region2: #{alexnet_forward.15} parent=0 // loop_pre_header
    _
  $region3: #{alexnet_forward.15} parent=0 // loop_header
    %s9 = sphi 0, %s13
    %p10 = scmp.ge.s32.totalorder %s9, 11
    %s16 = sphi 0, %s28
    %s17 = sphi 0, %s24
    %s18 = sphi 0, %s16
    %s19 = sphi 0, %s17
    %s20 = sphi 0, %s18
    %s21 = sphi 0, %s19
    %s33 = sphi 0, %s35
    %s36 = sphi 0, %s33
    %s37 = sphi 0, %s36
    %s53 = sphi 0, %s37
    %s59 = sphi 0, %s61
    %s62 = sphi 0, %s59
    %s63 = sphi 0, %s62
    %s79 = sphi 0, %s63
    %s83 = sphi 0, %s83
    %s85 = sphi 0, %s83
    %s86 = sphi 0, %s85
    %s100 = sphi 0, %s86
    %s106 = sphi 0, %s108
    %s109 = sphi 0, %s106
    %s110 = sphi 0, %s109
    %s126 = sphi 0, %s110
  $region4: #{alexnet_forward.15} parent=0 // loop_header_branch
    %12 = sbr.rel (%p10) target = $region8
  $region5: #{alexnet_forward.15} parent=0 // loop_body
    %s14 = ssub.s32 %s9, 1
    %s15 = ssub.s32 %s9, 2
    %s22 = sadd.s32 1, %s17
    %p23 = scmp.ge.s32.totalorder %s22, 3
    %s24 = scalar_select %p23, 0, %s22
    %s25 = sadd.s32 1, %s16
    %s26 = scalar_select %p23, %s25, %s16
    %p27 = scmp.ge.s32.totalorder %s26, 3
    %s28 = scalar_select %p27, 0, %s26
    %s29 = sadd.s32 %s16, %s17
    %s30 = sadd.s32 %s28, %s24
    %s31 = ssub.s32 %s29, %s30
    %p32 = scmp.eq.s32.totalorder %s31, 0
    %s34 = sadd.s32 %s33, 1
    %s35 = scalar_select %p32, %s33, %s34
    %p38 = pneg %p32
    %p39 = scmp.eq.s32.totalorder %s9, 8
    %p40 = por %p38, %p39
    %p41 = scmp.ne.s32.totalorder %s33, %s36
    %p42 = scmp.eq.s32.totalorder %s9, 0
    %p43 = por %p41, %p42
    %p44 = scmp.ne.s32.totalorder %s33, %s36
    %p45 = scmp.eq.s32.totalorder %s14, 8
    %p46 = por %p44, %p45
    %p47 = scmp.ne.s32.totalorder %s36, %s37
    %p48 = scmp.eq.s32.totalorder %s14, 0
    %p49 = por %p47, %p48
    %p50 = scmp.ne.s32.totalorder %s36, %s37
    %p51 = scmp.eq.s32.totalorder %s15, 8
    %p52 = por %p50, %p51
    %p54 = scmp.ne.s32.totalorder %s37, %s53
    %p55 = scmp.eq.s32.totalorder %s15, 0
    %p56 = por %p54, %p55
    %s57 = ssub.s32 %s17, %s24
    %p58 = scmp.eq.s32.totalorder %s57, 0
    %s60 = sadd.s32 %s59, 1
    %s61 = scalar_select %p58, %s59, %s60
    %p64 = pneg %p58
    %p65 = scmp.eq.s32.totalorder %s9, 8
    %p66 = por %p64, %p65
    %p67 = scmp.ne.s32.totalorder %s59, %s62
    %p68 = scmp.eq.s32.totalorder %s9, 0
    %p69 = por %p67, %p68
    %p70 = scmp.ne.s32.totalorder %s59, %s62
    %p71 = scmp.eq.s32.totalorder %s14, 8
    %p72 = por %p70, %p71
    %p73 = scmp.ne.s32.totalorder %s62, %s63
    %p74 = scmp.eq.s32.totalorder %s14, 0
    %p75 = por %p73, %p74
    %p76 = scmp.ne.s32.totalorder %s62, %s63
    %p77 = scmp.eq.s32.totalorder %s15, 8
    %p78 = por %p76, %p77
    %p80 = scmp.ne.s32.totalorder %s63, %s79
    %p81 = scmp.eq.s32.totalorder %s15, 0
    %p82 = por %p80, %p81
    %s84 = sadd.s32 %s83, 1
    %p87 = scmp.eq.s32.totalorder %s9, 8
    %p88 = scmp.ne.s32.totalorder %s83, %s85
    %p89 = scmp.eq.s32.totalorder %s9, 0
    %p90 = por %p88, %p89
    %p91 = scmp.ne.s32.totalorder %s83, %s85
    %p92 = scmp.eq.s32.totalorder %s14, 8
    %p93 = por %p91, %p92
    %p94 = scmp.ne.s32.totalorder %s85, %s86
    %p95 = scmp.eq.s32.totalorder %s14, 0
    %p96 = por %p94, %p95
    %p97 = scmp.ne.s32.totalorder %s85, %s86
    %p98 = scmp.eq.s32.totalorder %s15, 8
    %p99 = por %p97, %p98
    %p101 = scmp.ne.s32.totalorder %s86, %s100
    %p102 = scmp.eq.s32.totalorder %s15, 0
    %p103 = por %p101, %p102
    %s104 = ssub.s32 %s16, %s28
    %p105 = scmp.eq.s32.totalorder %s104, 0
    %s107 = sadd.s32 %s106, 1
    %s108 = scalar_select %p105, %s106, %s107
    %p111 = pneg %p105
    %p112 = scmp.eq.s32.totalorder %s9, 8
    %p113 = por %p111, %p112
    %p114 = scmp.ne.s32.totalorder %s106, %s109
    %p115 = scmp.eq.s32.totalorder %s9, 0
    %p116 = por %p114, %p115
    %p117 = scmp.ne.s32.totalorder %s106, %s109
    %p118 = scmp.eq.s32.totalorder %s14, 8
    %p119 = por %p117, %p118
    %p120 = scmp.ne.s32.totalorder %s109, %s110
    %p121 = scmp.eq.s32.totalorder %s14, 0
    %p122 = por %p120, %p121
    %p123 = scmp.ne.s32.totalorder %s109, %s110
    %p124 = scmp.eq.s32.totalorder %s15, 8
    %p125 = por %p123, %p124
    %p127 = scmp.ne.s32.totalorder %s110, %s126
    %p128 = scmp.eq.s32.totalorder %s15, 0
    %p129 = por %p127, %p128
    %p130 = scmp.le.s32.totalorder 1, %s9
    %p131 = scmp.lt.s32.totalorder %s9, 10
    %p132 = pnand %p130, %p131
    %p133 = pneg %p132
    // Predicated region
    $region9: #{alexnet_forward.15} parent=5 // pred_check
      _
    $region10: #{alexnet_forward.15} parent=5 // pred_check_branch
      %135 = sbr.rel (%p132) target = $region12
    $region11: #{alexnet_forward.15} parent=5 // pred_region
      %s136 = ssub.s32 %s9, 1
      // Predicated region
      $region13: #{alexnet_forward.15} parent=11 // pred_check
        %p137 = pneg %p96
      $region14: #{alexnet_forward.15} parent=11 // pred_check_branch
        %139 = sbr.rel (%p137) target = $region16
      $region15: #{alexnet_forward.15} parent=11 // pred_region
        _
      $region16: #{alexnet_forward.15} parent=11 // pred_fallthru
        _
    $region12: #{alexnet_forward.15} parent=5 // pred_fallthru
      _
    %p140 = scmp.lt.s32.totalorder %s9, 9
    // Predicated region
    $region17: #{alexnet_forward.15} parent=5 // pred_check
      %p141 = pneg %p140
    $region18: #{alexnet_forward.15} parent=5 // pred_check_branch
      %143 = sbr.rel (%p141) target = $region20
    $region19: #{alexnet_forward.15} parent=5 // pred_region
      // Predicated region
      $region21: #{alexnet_forward.15} parent=19 // pred_check
        %p144 = pneg %p43
      $region22: #{alexnet_forward.15} parent=19 // pred_check_branch
        %146 = sbr.rel (%p144) target = $region24
      $region23: #{alexnet_forward.15} parent=19 // pred_region
        %s147 = sadd.s32 %s16, %s17
        %p148 = scmp.lt.s32.totalorder %s147, 4
        %s149 = scalar_select %p148, %s147, 4
        %s150 = smul.addr %s149, 4
        %s151 = smul.addr %s150, 4
        %s152 = scalar_lea.vmem %s0, %s151
        %s153 = sadd.s32 %s16, %s17
      $region24: #{alexnet_forward.15} parent=19 // pred_fallthru
        _
      // Predicated region
      $region25: #{alexnet_forward.15} parent=19 // pred_check
        %p154 = pneg %p69
      $region26: #{alexnet_forward.15} parent=19 // pred_check_branch
        %156 = sbr.rel (%p154) target = $region28
      $region27: #{alexnet_forward.15} parent=19 // pred_region
        %p157 = scmp.lt.s32.totalorder %s17, 2
        %s158 = scalar_select %p157, %s17, 2
        %s159 = smul.addr %s158, 96
        %s160 = smul.addr %s159, 4
        %s161 = scalar_lea.vmem %s1, %s160
      $region28: #{alexnet_forward.15} parent=19 // pred_fallthru
        _
    $region20: #{alexnet_forward.15} parent=5 // pred_fallthru
      _
    %p162 = scmp.le.s32.totalorder 1, %s9
    %p163 = scmp.lt.s32.totalorder %s9, 10
    %p164 = pnand %p162, %p163
    %p165 = pneg %p164
    // Predicated region
    $region29: #{alexnet_forward.15} parent=5 // pred_check
      _
    $region30: #{alexnet_forward.15} parent=5 // pred_check_branch
      %167 = sbr.rel (%p164) target = $region32
    $region31: #{alexnet_forward.15} parent=5 // pred_region
      %s168 = ssub.s32 %s9, 1
      %s169 = sadd.s32 %s18, %s19
      %p170 = scmp.lt.s32.totalorder %s169, 4
      %s171 = scalar_select %p170, %s169, 4
      %s172 = smul.addr %s171, 4
      %s173 = smul.addr %s172, 4
      %s174 = scalar_lea.vmem %s0, %s173
      %p175 = pneg %p49
      %p176 = pneg %p46
      %p177 = scmp.lt.s32.totalorder %s19, 2
      %s178 = scalar_select %p177, %s19, 2
      %s179 = smul.addr %s178, 96
      %s180 = smul.addr %s179, 4
      %s181 = scalar_lea.vmem %s1, %s180
      %p182 = pneg %p75
      %p183 = pneg %p72
      %p184 = pneg %p96
      %p185 = pneg %p93
      %p186 = pneg %p122
      %p187 = pneg %p119
      %p188 = scmp.lt.s32.totalorder %s18, 2
      %s189 = scalar_select %p188, %s18, 2
      %s190 = smul.addr %s189, 2
      %s191 = smul.addr %s190, 2
      %s192 = scalar_lea.vmem %s3, %s191
      %s193 = sadd.s32 %s18, %s19
      %p194 = scmp.lt.s32.totalorder %s193, 4
      %s195 = scalar_select %p194, %s193, 4
      %s196 = smul.addr %s195, 4
      %s197 = smul.addr %s196, 4
      %s198 = scalar_lea.vmem %s0, %s197
      %s199 = sadd.s32 %s18, %s19
      %p200 = scmp.lt.s32.totalorder %s19, 2
      %s201 = scalar_select %p200, %s19, 2
      %s202 = smul.addr %s201, 96
      %s203 = smul.addr %s202, 4
      %s204 = scalar_lea.vmem %s1, %s203
      %p205 = scmp.lt.s32.totalorder %s18, 2
      %s206 = scalar_select %p205, %s18, 2
      %s207 = smul.addr %s206, 2
      %s208 = smul.addr %s207, 2
      %s209 = scalar_lea.vmem %s3, %s208
      %p211 = scmp.eq.s32.totalorder %s19, 0
      // Predicated region
      $region33: #{alexnet_forward.15} parent=31 // pred_check
        %p212 = pneg %p211
      $region34: #{alexnet_forward.15} parent=31 // pred_check_branch
        %214 = sbr.rel (%p212) target = $region36
      $region35: #{alexnet_forward.15} parent=31 // pred_region
        %vm215 = vcmask 124928
        %216 = vst.msk [vmem:[#allocation2] sm:$0x7] %vm215, 0.0
        %217 = vst.msk [vmem:[#allocation2 + $0x4] sm:$0x7] %vm215, 0.0
      $region36: #{alexnet_forward.15} parent=31 // pred_fallthru
        _
      %v218 = vld [vmem:[%s198] sm:$0x77]
      %v219 = vld [vmem:[%s204] sm:$0xf]
      %v220 = vld [vmem:[%s204 + $0x4] sm:$0xf]
      %v221 = vld [vmem:[%s204 + $0x8] sm:$0xf]
      %v222 = vld [vmem:[%s204 + $0xc] sm:$0xf]
      %v223 = vld [vmem:[%s204 + $0x10] sm:$0xf]
      %v224 = vld [vmem:[%s204 + $0x14] sm:$0xf]
      %v225 = vld [vmem:[%s204 + $0x18] sm:$0xf]
      %v226 = vld [vmem:[%s204 + $0x1c] sm:$0xf]
      %v227 = vld [vmem:[%s204 + $0x20] sm:$0xf]
      %v228 = vld [vmem:[%s204 + $0x24] sm:$0xf]
      %v229 = vld [vmem:[%s204 + $0x28] sm:$0xf]
      %v230 = vld [vmem:[%s204 + $0x2c] sm:$0xf]
      %v231 = vld [vmem:[%s204 + $0x30] sm:$0xf]
      %v232 = vld [vmem:[%s204 + $0x34] sm:$0xf]
      %v233 = vld [vmem:[%s204 + $0x38] sm:$0xf]
      %v234 = vld [vmem:[%s204 + $0x3c] sm:$0xf]
      %v235 = vld [vmem:[%s204 + $0x40] sm:$0xf]
      %v236 = vld [vmem:[%s204 + $0x44] sm:$0xf]
      %v237 = vld [vmem:[%s204 + $0x48] sm:$0xf]
      %v238 = vld [vmem:[%s204 + $0x4c] sm:$0xf]
      %v239 = vld [vmem:[%s204 + $0x50] sm:$0xf]
      %v240 = vld [vmem:[%s204 + $0x54] sm:$0xf]
      %v241 = vld [vmem:[%s204 + $0x58] sm:$0xf]
      %v242 = vld [vmem:[%s204 + $0x5c] sm:$0xf]
      %v243 = vld [vmem:[%s204 + $0x60] sm:$0xf]
      %v244 = vld [vmem:[%s204 + $0x64] sm:$0xf]
      %v245 = vld [vmem:[%s204 + $0x68] sm:$0xf]
      %v246 = vld [vmem:[%s204 + $0x6c] sm:$0xf]
      %v247 = vld [vmem:[%s204 + $0x70] sm:$0xf]
      %v248 = vld [vmem:[%s204 + $0x74] sm:$0xf]
      %v249 = vld [vmem:[%s204 + $0x78] sm:$0xf]
      %v250 = vld [vmem:[%s204 + $0x7c] sm:$0xf]
      %s251 = scalar_lea.vmem %s204, 128
      %v252 = vld [vmem:[%s251] sm:$0xf]
      %v253 = vld [vmem:[%s251 + $0x4] sm:$0xf]
      %v254 = vld [vmem:[%s251 + $0x8] sm:$0xf]
      %v255 = vld [vmem:[%s251 + $0xc] sm:$0xf]
      %v256 = vld [vmem:[%s251 + $0x10] sm:$0xf]
      %v257 = vld [vmem:[%s251 + $0x14] sm:$0xf]
      %v258 = vld [vmem:[%s251 + $0x18] sm:$0xf]
      %v259 = vld [vmem:[%s251 + $0x1c] sm:$0xf]
      %v260 = vld [vmem:[%s251 + $0x20] sm:$0xf]
      %v261 = vld [vmem:[%s251 + $0x24] sm:$0xf]
      %v262 = vld [vmem:[%s251 + $0x28] sm:$0xf]
      %v263 = vld [vmem:[%s251 + $0x2c] sm:$0xf]
      %v264 = vld [vmem:[%s251 + $0x30] sm:$0xf]
      %v265 = vld [vmem:[%s251 + $0x34] sm:$0xf]
      %v266 = vld [vmem:[%s251 + $0x38] sm:$0xf]
      %v267 = vld [vmem:[%s251 + $0x3c] sm:$0xf]
      %v268 = vld [vmem:[%s251 + $0x40] sm:$0xf]
      %v269 = vld [vmem:[%s251 + $0x44] sm:$0xf]
      %v270 = vld [vmem:[%s251 + $0x48] sm:$0xf]
      %v271 = vld [vmem:[%s251 + $0x4c] sm:$0xf]
      %v272 = vld [vmem:[%s251 + $0x50] sm:$0xf]
      %v273 = vld [vmem:[%s251 + $0x54] sm:$0xf]
      %v274 = vld [vmem:[%s251 + $0x58] sm:$0xf]
      %v275 = vld [vmem:[%s251 + $0x5c] sm:$0xf]
      %v276 = vld [vmem:[%s251 + $0x60] sm:$0xf]
      %v277 = vld [vmem:[%s251 + $0x64] sm:$0xf]
      %v278 = vld [vmem:[%s251 + $0x68] sm:$0xf]
      %v279 = vld [vmem:[%s251 + $0x6c] sm:$0xf]
      %v280 = vld [vmem:[%s251 + $0x70] sm:$0xf]
      %v281 = vld [vmem:[%s251 + $0x74] sm:$0xf]
      %v282 = vld [vmem:[%s251 + $0x78] sm:$0xf]
      %v283 = vld [vmem:[%s251 + $0x7c] sm:$0xf]
      %v285 = vunpack.c.l.b16 %v218
      %v286 = vunpack.c.h.b16 %v218
      %v287 = vpack.c.b16 %v285, %v285
      %v288 = vpack.c.b16 %v286, %v286
      %v290 = vshrl.u32 %v287, 16
      %v292 = vshll.u32 %v287, 16
      %v294 = vrot.slane %v292, 1
      %v295 = vor.u32 %v290, %v294
      %v297 = vshrl.u32 %v288, 16
      %v299 = vshll.u32 %v288, 16
      %v301 = vrot.slane %v299, 1
      %v302 = vor.u32 %v297, %v301
      %v337 = vunpack.c.l.b16 %v252
      %v338 = vunpack.c.l.b16 %v253
      %v339 = vunpack.c.l.b16 %v254
      %v340 = vunpack.c.l.b16 %v255
      %v341 = vunpack.c.l.b16 %v256
      %v342 = vunpack.c.l.b16 %v257
      %v343 = vunpack.c.l.b16 %v258
      %v344 = vunpack.c.l.b16 %v259
      %v345 = vunpack.c.l.b16 %v260
      %v346 = vunpack.c.l.b16 %v261
      %v347 = vunpack.c.l.b16 %v262
      %v348 = vunpack.c.l.b16 %v263
      %v349 = vunpack.c.l.b16 %v264
      %v350 = vunpack.c.l.b16 %v265
      %v351 = vunpack.c.l.b16 %v266
      %v352 = vunpack.c.l.b16 %v267
      %v353 = vunpack.c.l.b16 %v268
      %v354 = vunpack.c.l.b16 %v269
      %v355 = vunpack.c.l.b16 %v270
      %v356 = vunpack.c.l.b16 %v271
      %v357 = vunpack.c.l.b16 %v272
      %v358 = vunpack.c.l.b16 %v273
      %v359 = vunpack.c.l.b16 %v274
      %v360 = vunpack.c.l.b16 %v275
      %v361 = vunpack.c.l.b16 %v276
      %v362 = vunpack.c.l.b16 %v277
      %v363 = vunpack.c.l.b16 %v278
      %v364 = vunpack.c.l.b16 %v279
      %v365 = vunpack.c.l.b16 %v280
      %v366 = vunpack.c.l.b16 %v281
      %v367 = vunpack.c.l.b16 %v282
      %v368 = vunpack.c.l.b16 %v283
      %v369 = vpack.c.b16 %v338, %v337
      %v370 = vpack.c.b16 %v340, %v339
      %v371 = vpack.c.b16 %v342, %v341
      %v372 = vpack.c.b16 %v344, %v343
      %v373 = vpack.c.b16 %v346, %v345
      %v374 = vpack.c.b16 %v348, %v347
      %v375 = vpack.c.b16 %v350, %v349
      %v376 = vpack.c.b16 %v352, %v351
      %v377 = vpack.c.b16 %v354, %v353
      %v378 = vpack.c.b16 %v356, %v355
      %v379 = vpack.c.b16 %v358, %v357
      %v380 = vpack.c.b16 %v360, %v359
      %v381 = vpack.c.b16 %v362, %v361
      %v382 = vpack.c.b16 %v364, %v363
      %v383 = vpack.c.b16 %v366, %v365
      %v384 = vpack.c.b16 %v368, %v367
      %401 = vmatprep.subr.bf16.mxu0 0
      %402 = vmatpush1.bf16.msra.mxu0 %v369
      %403 = vmatprep.subr.bf16.mxu0 0
      %404 = vmatpush1.bf16.msra.mxu0 %v370
      %405 = vmatprep.subr.bf16.mxu0 0
      %406 = vmatpush1.bf16.msra.mxu0 %v371
      %407 = vmatprep.subr.bf16.mxu0 0
      %408 = vmatpush1.bf16.msra.mxu0 %v372
      %409 = vmatprep.subr.bf16.mxu0 0
      %410 = vmatpush1.bf16.msra.mxu0 %v373
      %411 = vmatprep.subr.bf16.mxu0 0
      %412 = vmatpush1.bf16.msra.mxu0 %v374
      %413 = vmatprep.subr.bf16.mxu0 0
      %414 = vmatpush1.bf16.msra.mxu0 %v375
      %415 = vmatprep.subr.bf16.mxu0 0
      %416 = vmatpush1.bf16.msra.mxu0 %v376
      %417 = vmatprep.subr.bf16.mxu0 0
      %418 = vmatpush1.bf16.msra.mxu0 %v377
      %419 = vmatprep.subr.bf16.mxu0 0
      %420 = vmatpush1.bf16.msra.mxu0 %v378
      %421 = vmatprep.subr.bf16.mxu0 0
      %422 = vmatpush1.bf16.msra.mxu0 %v379
      %423 = vmatprep.subr.bf16.mxu0 0
      %424 = vmatpush1.bf16.msra.mxu0 %v380
      %425 = vmatprep.subr.bf16.mxu0 0
      %426 = vmatpush1.bf16.msra.mxu0 %v381
      %427 = vmatprep.subr.bf16.mxu0 0
      %428 = vmatpush1.bf16.msra.mxu0 %v382
      %429 = vmatprep.subr.bf16.mxu0 0
      %430 = vmatpush1.bf16.msra.mxu0 %v383
      %431 = vmatprep.subr.bf16.mxu0 0
      %432 = vmatpush1.bf16.msra.mxu0 %v384
      %433 = vmatprep.mubr.bf16.mxu0 %v302
      %434 = vmatmul.mubr.bf16.gmra.mrb[0].mxu0 %v295
      %v435 = vpop.f32.mrb[0].mxu0
      %v436 = vadd.f32 0.0, %v435
      %v437 = vpop.f32.mrb[0].mxu0
      %v438 = vpop.f32.mrb[0].mxu0
      %v439 = vpop.f32.mrb[0].mxu0
      %440 = vdwg.mxu0
      %v475 = vunpack.c.l.b16 %v219
      %v476 = vunpack.c.l.b16 %v220
      %v477 = vunpack.c.l.b16 %v221
      %v478 = vunpack.c.l.b16 %v222
      %v479 = vunpack.c.l.b16 %v223
      %v480 = vunpack.c.l.b16 %v224
      %v481 = vunpack.c.l.b16 %v225
      %v482 = vunpack.c.l.b16 %v226
      %v483 = vunpack.c.l.b16 %v227
      %v484 = vunpack.c.l.b16 %v228
      %v485 = vunpack.c.l.b16 %v229
      %v486 = vunpack.c.l.b16 %v230
      %v487 = vunpack.c.l.b16 %v231
      %v488 = vunpack.c.l.b16 %v232
      %v489 = vunpack.c.l.b16 %v233
      %v490 = vunpack.c.l.b16 %v234
      %v491 = vunpack.c.l.b16 %v235
      %v492 = vunpack.c.l.b16 %v236
      %v493 = vunpack.c.l.b16 %v237
      %v494 = vunpack.c.l.b16 %v238
      %v495 = vunpack.c.l.b16 %v239
      %v496 = vunpack.c.l.b16 %v240
      %v497 = vunpack.c.l.b16 %v241
      %v498 = vunpack.c.l.b16 %v242
      %v499 = vunpack.c.l.b16 %v243
      %v500 = vunpack.c.l.b16 %v244
      %v501 = vunpack.c.l.b16 %v245
      %v502 = vunpack.c.l.b16 %v246
      %v503 = vunpack.c.l.b16 %v247
      %v504 = vunpack.c.l.b16 %v248
      %v505 = vunpack.c.l.b16 %v249
      %v506 = vunpack.c.l.b16 %v250
      %v507 = vpack.c.b16 %v476, %v475
      %v508 = vpack.c.b16 %v478, %v477
      %v509 = vpack.c.b16 %v480, %v479
      %v510 = vpack.c.b16 %v482, %v481
      %v511 = vpack.c.b16 %v484, %v483
      %v512 = vpack.c.b16 %v486, %v485
      %v513 = vpack.c.b16 %v488, %v487
      %v514 = vpack.c.b16 %v490, %v489
      %v515 = vpack.c.b16 %v492, %v491
      %v516 = vpack.c.b16 %v494, %v493
      %v517 = vpack.c.b16 %v496, %v495
      %v518 = vpack.c.b16 %v498, %v497
      %v519 = vpack.c.b16 %v500, %v499
      %v520 = vpack.c.b16 %v502, %v501
      %v521 = vpack.c.b16 %v504, %v503
      %v522 = vpack.c.b16 %v506, %v505
      %539 = vmatprep.subr.bf16.mxu0 0
      %540 = vmatpush1.bf16.msra.mxu0 %v507
      %541 = vmatprep.subr.bf16.mxu0 0
      %542 = vmatpush1.bf16.msra.mxu0 %v508
      %543 = vmatprep.subr.bf16.mxu0 0
      %544 = vmatpush1.bf16.msra.mxu0 %v509
      %545 = vmatprep.subr.bf16.mxu0 0
      %546 = vmatpush1.bf16.msra.mxu0 %v510
      %547 = vmatprep.subr.bf16.mxu0 0
      %548 = vmatpush1.bf16.msra.mxu0 %v511
      %549 = vmatprep.subr.bf16.mxu0 0
      %550 = vmatpush1.bf16.msra.mxu0 %v512
      %551 = vmatprep.subr.bf16.mxu0 0
      %552 = vmatpush1.bf16.msra.mxu0 %v513
      %553 = vmatprep.subr.bf16.mxu0 0
      %554 = vmatpush1.bf16.msra.mxu0 %v514
      %555 = vmatprep.subr.bf16.mxu0 0
      %556 = vmatpush1.bf16.msra.mxu0 %v515
      %557 = vmatprep.subr.bf16.mxu0 0
      %558 = vmatpush1.bf16.msra.mxu0 %v516
      %559 = vmatprep.subr.bf16.mxu0 0
      %560 = vmatpush1.bf16.msra.mxu0 %v517
      %561 = vmatprep.subr.bf16.mxu0 0
      %562 = vmatpush1.bf16.msra.mxu0 %v518
      %563 = vmatprep.subr.bf16.mxu0 0
      %564 = vmatpush1.bf16.msra.mxu0 %v519
      %565 = vmatprep.subr.bf16.mxu0 0
      %566 = vmatpush1.bf16.msra.mxu0 %v520
      %567 = vmatprep.subr.bf16.mxu0 0
      %568 = vmatpush1.bf16.msra.mxu0 %v521
      %569 = vmatprep.subr.bf16.mxu0 0
      %570 = vmatpush1.bf16.msra.mxu0 %v522
      %571 = vmatprep.mubr.bf16.mxu0 %v288
      %572 = vmatmul.mubr.bf16.gmra.mrb[0].mxu0 %v287
      %v573 = vpop.f32.mrb[0].mxu0
      %v574 = vadd.f32 %v436, %v573
      %v575 = vpop.f32.mrb[0].mxu0
      %v576 = vpop.f32.mrb[0].mxu0
      %v577 = vpop.f32.mrb[0].mxu0
      %578 = vdwg.mxu0
      %s579 = scalar_lea.vmem %s204, 256
      %v580 = vld [vmem:[%s579] sm:$0xf]
      %v581 = vld [vmem:[%s579 + $0x4] sm:$0xf]
      %v582 = vld [vmem:[%s579 + $0x8] sm:$0xf]
      %v583 = vld [vmem:[%s579 + $0xc] sm:$0xf]
      %v584 = vld [vmem:[%s579 + $0x10] sm:$0xf]
      %v585 = vld [vmem:[%s579 + $0x14] sm:$0xf]
      %v586 = vld [vmem:[%s579 + $0x18] sm:$0xf]
      %v587 = vld [vmem:[%s579 + $0x1c] sm:$0xf]
      %v588 = vld [vmem:[%s579 + $0x20] sm:$0xf]
      %v589 = vld [vmem:[%s579 + $0x24] sm:$0xf]
      %v590 = vld [vmem:[%s579 + $0x28] sm:$0xf]
      %v591 = vld [vmem:[%s579 + $0x2c] sm:$0xf]
      %v592 = vld [vmem:[%s579 + $0x30] sm:$0xf]
      %v593 = vld [vmem:[%s579 + $0x34] sm:$0xf]
      %v594 = vld [vmem:[%s579 + $0x38] sm:$0xf]
      %v595 = vld [vmem:[%s579 + $0x3c] sm:$0xf]
      %v596 = vld [vmem:[%s579 + $0x40] sm:$0xf]
      %v597 = vld [vmem:[%s579 + $0x44] sm:$0xf]
      %v598 = vld [vmem:[%s579 + $0x48] sm:$0xf]
      %v599 = vld [vmem:[%s579 + $0x4c] sm:$0xf]
      %v600 = vld [vmem:[%s579 + $0x50] sm:$0xf]
      %v601 = vld [vmem:[%s579 + $0x54] sm:$0xf]
      %v602 = vld [vmem:[%s579 + $0x58] sm:$0xf]
      %v603 = vld [vmem:[%s579 + $0x5c] sm:$0xf]
      %v604 = vld [vmem:[%s579 + $0x60] sm:$0xf]
      %v605 = vld [vmem:[%s579 + $0x64] sm:$0xf]
      %v606 = vld [vmem:[%s579 + $0x68] sm:$0xf]
      %v607 = vld [vmem:[%s579 + $0x6c] sm:$0xf]
      %v608 = vld [vmem:[%s579 + $0x70] sm:$0xf]
      %v609 = vld [vmem:[%s579 + $0x74] sm:$0xf]
      %v610 = vld [vmem:[%s579 + $0x78] sm:$0xf]
      %v611 = vld [vmem:[%s579 + $0x7c] sm:$0xf]
      %v612 = vrot.slane %v287, 1
      %v613 = vrot.slane %v288, 1
      %v648 = vunpack.c.l.b16 %v580
      %v649 = vunpack.c.l.b16 %v581
      %v650 = vunpack.c.l.b16 %v582
      %v651 = vunpack.c.l.b16 %v583
      %v652 = vunpack.c.l.b16 %v584
      %v653 = vunpack.c.l.b16 %v585
      %v654 = vunpack.c.l.b16 %v586
      %v655 = vunpack.c.l.b16 %v587
      %v656 = vunpack.c.l.b16 %v588
      %v657 = vunpack.c.l.b16 %v589
      %v658 = vunpack.c.l.b16 %v590
      %v659 = vunpack.c.l.b16 %v591
      %v660 = vunpack.c.l.b16 %v592
      %v661 = vunpack.c.l.b16 %v593
      %v662 = vunpack.c.l.b16 %v594
      %v663 = vunpack.c.l.b16 %v595
      %v664 = vunpack.c.l.b16 %v596
      %v665 = vunpack.c.l.b16 %v597
      %v666 = vunpack.c.l.b16 %v598
      %v667 = vunpack.c.l.b16 %v599
      %v668 = vunpack.c.l.b16 %v600
      %v669 = vunpack.c.l.b16 %v601
      %v670 = vunpack.c.l.b16 %v602
      %v671 = vunpack.c.l.b16 %v603
      %v672 = vunpack.c.l.b16 %v604
      %v673 = vunpack.c.l.b16 %v605
      %v674 = vunpack.c.l.b16 %v606
      %v675 = vunpack.c.l.b16 %v607
      %v676 = vunpack.c.l.b16 %v608
      %v677 = vunpack.c.l.b16 %v609
      %v678 = vunpack.c.l.b16 %v610
      %v679 = vunpack.c.l.b16 %v611
      %v680 = vpack.c.b16 %v649, %v648
      %v681 = vpack.c.b16 %v651, %v650
      %v682 = vpack.c.b16 %v653, %v652
      %v683 = vpack.c.b16 %v655, %v654
      %v684 = vpack.c.b16 %v657, %v656
      %v685 = vpack.c.b16 %v659, %v658
      %v686 = vpack.c.b16 %v661, %v660
      %v687 = vpack.c.b16 %v663, %v662
      %v688 = vpack.c.b16 %v665, %v664
      %v689 = vpack.c.b16 %v667, %v666
      %v690 = vpack.c.b16 %v669, %v668
      %v691 = vpack.c.b16 %v671, %v670
      %v692 = vpack.c.b16 %v673, %v672
      %v693 = vpack.c.b16 %v675, %v674
      %v694 = vpack.c.b16 %v677, %v676
      %v695 = vpack.c.b16 %v679, %v678
      %712 = vmatprep.subr.bf16.mxu0 0
      %713 = vmatpush1.bf16.msra.mxu0 %v680
      %714 = vmatprep.subr.bf16.mxu0 0
      %715 = vmatpush1.bf16.msra.mxu0 %v681
      %716 = vmatprep.subr.bf16.mxu0 0
      %717 = vmatpush1.bf16.msra.mxu0 %v682
      %718 = vmatprep.subr.bf16.mxu0 0
      %719 = vmatpush1.bf16.msra.mxu0 %v683
      %720 = vmatprep.subr.bf16.mxu0 0
      %721 = vmatpush1.bf16.msra.mxu0 %v684
      %722 = vmatprep.subr.bf16.mxu0 0
      %723 = vmatpush1.bf16.msra.mxu0 %v685
      %724 = vmatprep.subr.bf16.mxu0 0
      %725 = vmatpush1.bf16.msra.mxu0 %v686
      %726 = vmatprep.subr.bf16.mxu0 0
      %727 = vmatpush1.bf16.msra.mxu0 %v687
      %728 = vmatprep.subr.bf16.mxu0 0
      %729 = vmatpush1.bf16.msra.mxu0 %v688
      %730 = vmatprep.subr.bf16.mxu0 0
      %731 = vmatpush1.bf16.msra.mxu0 %v689
      %732 = vmatprep.subr.bf16.mxu0 0
      %733 = vmatpush1.bf16.msra.mxu0 %v690
      %734 = vmatprep.subr.bf16.mxu0 0
      %735 = vmatpush1.bf16.msra.mxu0 %v691
      %736 = vmatprep.subr.bf16.mxu0 0
      %737 = vmatpush1.bf16.msra.mxu0 %v692
      %738 = vmatprep.subr.bf16.mxu0 0
      %739 = vmatpush1.bf16.msra.mxu0 %v693
      %740 = vmatprep.subr.bf16.mxu0 0
      %741 = vmatpush1.bf16.msra.mxu0 %v694
      %742 = vmatprep.subr.bf16.mxu0 0
      %743 = vmatpush1.bf16.msra.mxu0 %v695
      %744 = vmatprep.mubr.bf16.mxu0 %v613
      %745 = vmatmul.mubr.bf16.gmra.mrb[0].mxu0 %v612
      %v746 = vpop.f32.mrb[0].mxu0
      %v747 = vadd.f32 0.0, %v746
      %v748 = vpop.f32.mrb[0].mxu0
      %v749 = vpop.f32.mrb[0].mxu0
      %v750 = vpop.f32.mrb[0].mxu0
      %751 = vdwg.mxu0
      %v752 = vadd.f32 %v574, %v747
      %v753 = vld [vmem:[#allocation2] sm:$0x7]
      %v754 = vadd.f32 %v753, %v752
      %vm755 = vcmask 124928
      %756 = vst.msk [vmem:[#allocation2] sm:$0x7] %vm755, %v754
      %s757 = scalar_lea.vmem %s198, 8
      %v758 = vld [vmem:[%s757] sm:$0x77]
      %v759 = vld [vmem:[%s204] sm:$0xf]
      %v760 = vld [vmem:[%s204 + $0x4] sm:$0xf]
      %v761 = vld [vmem:[%s204 + $0x8] sm:$0xf]
      %v762 = vld [vmem:[%s204 + $0xc] sm:$0xf]
      %v763 = vld [vmem:[%s204 + $0x10] sm:$0xf]
      %v764 = vld [vmem:[%s204 + $0x14] sm:$0xf]
      %v765 = vld [vmem:[%s204 + $0x18] sm:$0xf]
      %v766 = vld [vmem:[%s204 + $0x1c] sm:$0xf]
      %v767 = vld [vmem:[%s204 + $0x20] sm:$0xf]
      %v768 = vld [vmem:[%s204 + $0x24] sm:$0xf]
      %v769 = vld [vmem:[%s204 + $0x28] sm:$0xf]
      %v770 = vld [vmem:[%s204 + $0x2c] sm:$0xf]
      %v771 = vld [vmem:[%s204 + $0x30] sm:$0xf]
      %v772 = vld [vmem:[%s204 + $0x34] sm:$0xf]
      %v773 = vld [vmem:[%s204 + $0x38] sm:$0xf]
      %v774 = vld [vmem:[%s204 + $0x3c] sm:$0xf]
      %v775 = vld [vmem:[%s204 + $0x40] sm:$0xf]
      %v776 = vld [vmem:[%s204 + $0x44] sm:$0xf]
      %v777 = vld [vmem:[%s204 + $0x48] sm:$0xf]
      %v778 = vld [vmem:[%s204 + $0x4c] sm:$0xf]
      %v779 = vld [vmem:[%s204 + $0x50] sm:$0xf]
      %v780 = vld [vmem:[%s204 + $0x54] sm:$0xf]
      %v781 = vld [vmem:[%s204 + $0x58] sm:$0xf]
      %v782 = vld [vmem:[%s204 + $0x5c] sm:$0xf]
      %v783 = vld [vmem:[%s204 + $0x60] sm:$0xf]
      %v784 = vld [vmem:[%s204 + $0x64] sm:$0xf]
      %v785 = vld [vmem:[%s204 + $0x68] sm:$0xf]
      %v786 = vld [vmem:[%s204 + $0x6c] sm:$0xf]
      %v787 = vld [vmem:[%s204 + $0x70] sm:$0xf]
      %v788 = vld [vmem:[%s204 + $0x74] sm:$0xf]
      %v789 = vld [vmem:[%s204 + $0x78] sm:$0xf]
      %v790 = vld [vmem:[%s204 + $0x7c] sm:$0xf]
      %v791 = vld [vmem:[%s251] sm:$0xf]
      %v792 = vld [vmem:[%s251 + $0x4] sm:$0xf]
      %v793 = vld [vmem:[%s251 + $0x8] sm:$0xf]
      %v794 = vld [vmem:[%s251 + $0xc] sm:$0xf]
      %v795 = vld [vmem:[%s251 + $0x10] sm:$0xf]
      %v796 = vld [vmem:[%s251 + $0x14] sm:$0xf]
      %v797 = vld [vmem:[%s251 + $0x18] sm:$0xf]
      %v798 = vld [vmem:[%s251 + $0x1c] sm:$0xf]
      %v799 = vld [vmem:[%s251 + $0x20] sm:$0xf]
      %v800 = vld [vmem:[%s251 + $0x24] sm:$0xf]
      %v801 = vld [vmem:[%s251 + $0x28] sm:$0xf]
      %v802 = vld [vmem:[%s251 + $0x2c] sm:$0xf]
      %v803 = vld [vmem:[%s251 + $0x30] sm:$0xf]
      %v804 = vld [vmem:[%s251 + $0x34] sm:$0xf]
      %v805 = vld [vmem:[%s251 + $0x38] sm:$0xf]
      %v806 = vld [vmem:[%s251 + $0x3c] sm:$0xf]
      %v807 = vld [vmem:[%s251 + $0x40] sm:$0xf]
      %v808 = vld [vmem:[%s251 + $0x44] sm:$0xf]
      %v809 = vld [vmem:[%s251 + $0x48] sm:$0xf]
      %v810 = vld [vmem:[%s251 + $0x4c] sm:$0xf]
      %v811 = vld [vmem:[%s251 + $0x50] sm:$0xf]
      %v812 = vld [vmem:[%s251 + $0x54] sm:$0xf]
      %v813 = vld [vmem:[%s251 + $0x58] sm:$0xf]
      %v814 = vld [vmem:[%s251 + $0x5c] sm:$0xf]
      %v815 = vld [vmem:[%s251 + $0x60] sm:$0xf]
      %v816 = vld [vmem:[%s251 + $0x64] sm:$0xf]
      %v817 = vld [vmem:[%s251 + $0x68] sm:$0xf]
      %v818 = vld [vmem:[%s251 + $0x6c] sm:$0xf]
      %v819 = vld [vmem:[%s251 + $0x70] sm:$0xf]
      %v820 = vld [vmem:[%s251 + $0x74] sm:$0xf]
      %v821 = vld [vmem:[%s251 + $0x78] sm:$0xf]
      %v822 = vld [vmem:[%s251 + $0x7c] sm:$0xf]
      %v824 = vunpack.c.l.b16 %v758
      %v825 = vunpack.c.h.b16 %v758
      %v826 = vpack.c.b16 %v824, %v824
      %v827 = vpack.c.b16 %v825, %v825
      %v829 = vshrl.u32 %v826, 16
      %v831 = vshll.u32 %v826, 16
      %v833 = vrot.slane %v831, 1
      %v834 = vor.u32 %v829, %v833
      %v836 = vshrl.u32 %v827, 16
      %v838 = vshll.u32 %v827, 16
      %v840 = vrot.slane %v838, 1
      %v841 = vor.u32 %v836, %v840
      %v876 = vunpack.c.l.b16 %v791
      %v877 = vunpack.c.l.b16 %v792
      %v878 = vunpack.c.l.b16 %v793
      %v879 = vunpack.c.l.b16 %v794
      %v880 = vunpack.c.l.b16 %v795
      %v881 = vunpack.c.l.b16 %v796
      %v882 = vunpack.c.l.b16 %v797
      %v883 = vunpack.c.l.b16 %v798
      %v884 = vunpack.c.l.b16 %v799
      %v885 = vunpack.c.l.b16 %v800
      %v886 = vunpack.c.l.b16 %v801
      %v887 = vunpack.c.l.b16 %v802
      %v888 = vunpack.c.l.b16 %v803
      %v889 = vunpack.c.l.b16 %v804
      %v890 = vunpack.c.l.b16 %v805
      %v891 = vunpack.c.l.b16 %v806
      %v892 = vunpack.c.l.b16 %v807
      %v893 = vunpack.c.l.b16 %v808
      %v894 = vunpack.c.l.b16 %v809
      %v895 = vunpack.c.l.b16 %v810
      %v896 = vunpack.c.l.b16 %v811
      %v897 = vunpack.c.l.b16 %v812
      %v898 = vunpack.c.l.b16 %v813
      %v899 = vunpack.c.l.b16 %v814
      %v900 = vunpack.c.l.b16 %v815
      %v901 = vunpack.c.l.b16 %v816
      %v902 = vunpack.c.l.b16 %v817
      %v903 = vunpack.c.l.b16 %v818
      %v904 = vunpack.c.l.b16 %v819
      %v905 = vunpack.c.l.b16 %v820
      %v906 = vunpack.c.l.b16 %v821
      %v907 = vunpack.c.l.b16 %v822
      %v908 = vpack.c.b16 %v877, %v876
      %v909 = vpack.c.b16 %v879, %v878
      %v910 = vpack.c.b16 %v881, %v880
      %v911 = vpack.c.b16 %v883, %v882
      %v912 = vpack.c.b16 %v885, %v884
      %v913 = vpack.c.b16 %v887, %v886
      %v914 = vpack.c.b16 %v889, %v888
      %v915 = vpack.c.b16 %v891, %v890
      %v916 = vpack.c.b16 %v893, %v892
      %v917 = vpack.c.b16 %v895, %v894
      %v918 = vpack.c.b16 %v897, %v896
      %v919 = vpack.c.b16 %v899, %v898
      %v920 = vpack.c.b16 %v901, %v900
      %v921 = vpack.c.b16 %v903, %v902
      %v922 = vpack.c.b16 %v905, %v904
      %v923 = vpack.c.b16 %v907, %v906
      %940 = vmatprep.subr.bf16.mxu0 0
      %941 = vmatpush1.bf16.msra.mxu0 %v908
      %942 = vmatprep.subr.bf16.mxu0 0
      %943 = vmatpush1.bf16.msra.mxu0 %v909
      %944 = vmatprep.subr.bf16.mxu0 0
      %945 = vmatpush1.bf16.msra.mxu0 %v910
      %946 = vmatprep.subr.bf16.mxu0 0
      %947 = vmatpush1.bf16.msra.mxu0 %v911
      %948 = vmatprep.subr.bf16.mxu0 0
      %949 = vmatpush1.bf16.msra.mxu0 %v912
      %950 = vmatprep.subr.bf16.mxu0 0
      %951 = vmatpush1.bf16.msra.mxu0 %v913
      %952 = vmatprep.subr.bf16.mxu0 0
      %953 = vmatpush1.bf16.msra.mxu0 %v914
      %954 = vmatprep.subr.bf16.mxu0 0
      %955 = vmatpush1.bf16.msra.mxu0 %v915
      %956 = vmatprep.subr.bf16.mxu0 0
      %957 = vmatpush1.bf16.msra.mxu0 %v916
      %958 = vmatprep.subr.bf16.mxu0 0
      %959 = vmatpush1.bf16.msra.mxu0 %v917
      %960 = vmatprep.subr.bf16.mxu0 0
      %961 = vmatpush1.bf16.msra.mxu0 %v918
      %962 = vmatprep.subr.bf16.mxu0 0
      %963 = vmatpush1.bf16.msra.mxu0 %v919
      %964 = vmatprep.subr.bf16.mxu0 0
      %965 = vmatpush1.bf16.msra.mxu0 %v920
      %966 = vmatprep.subr.bf16.mxu0 0
      %967 = vmatpush1.bf16.msra.mxu0 %v921
      %968 = vmatprep.subr.bf16.mxu0 0
      %969 = vmatpush1.bf16.msra.mxu0 %v922
      %970 = vmatprep.subr.bf16.mxu0 0
      %971 = vmatpush1.bf16.msra.mxu0 %v923
      %972 = vmatprep.mubr.bf16.mxu0 %v841
      %973 = vmatmul.mubr.bf16.gmra.mrb[0].mxu0 %v834
      %v974 = vpop.f32.mrb[0].mxu0
      %v975 = vadd.f32 0.0, %v974
      %v976 = vpop.f32.mrb[0].mxu0
      %v977 = vpop.f32.mrb[0].mxu0
      %v978 = vpop.f32.mrb[0].mxu0
      %979 = vdwg.mxu0
      %v1014 = vunpack.c.l.b16 %v759
      %v1015 = vunpack.c.l.b16 %v760
      %v1016 = vunpack.c.l.b16 %v761
      %v1017 = vunpack.c.l.b16 %v762
      %v1018 = vunpack.c.l.b16 %v763
      %v1019 = vunpack.c.l.b16 %v764
      %v1020 = vunpack.c.l.b16 %v765
      %v1021 = vunpack.c.l.b16 %v766
      %v1022 = vunpack.c.l.b16 %v767
      %v1023 = vunpack.c.l.b16 %v768
      %v1024 = vunpack.c.l.b16 %v769
      %v1025 = vunpack.c.l.b16 %v770
      %v1026 = vunpack.c.l.b16 %v771
      %v1027 = vunpack.c.l.b16 %v772
      %v1028 = vunpack.c.l.b16 %v773
      %v1029 = vunpack.c.l.b16 %v774
      %v1030 = vunpack.c.l.b16 %v775
      %v1031 = vunpack.c.l.b16 %v776
      %v1032 = vunpack.c.l.b16 %v777
      %v1033 = vunpack.c.l.b16 %v778
      %v1034 = vunpack.c.l.b16 %v779
      %v1035 = vunpack.c.l.b16 %v780
      %v1036 = vunpack.c.l.b16 %v781
      %v1037 = vunpack.c.l.b16 %v782
      %v1038 = vunpack.c.l.b16 %v783
      %v1039 = vunpack.c.l.b16 %v784
      %v1040 = vunpack.c.l.b16 %v785
      %v1041 = vunpack.c.l.b16 %v786
      %v1042 = vunpack.c.l.b16 %v787
      %v1043 = vunpack.c.l.b16 %v788
      %v1044 = vunpack.c.l.b16 %v789
      %v1045 = vunpack.c.l.b16 %v790
      %v1046 = vpack.c.b16 %v1015, %v1014
      %v1047 = vpack.c.b16 %v1017, %v1016
      %v1048 = vpack.c.b16 %v1019, %v1018
      %v1049 = vpack.c.b16 %v1021, %v1020
      %v1050 = vpack.c.b16 %v1023, %v1022
      %v1051 = vpack.c.b16 %v1025, %v1024
      %v1052 = vpack.c.b16 %v1027, %v1026
      %v1053 = vpack.c.b16 %v1029, %v1028
      %v1054 = vpack.c.b16 %v1031, %v1030
      %v1055 = vpack.c.b16 %v1033, %v1032
      %v1056 = vpack.c.b16 %v1035, %v1034
      %v1057 = vpack.c.b16 %v1037, %v1036
      %v1058 = vpack.c.b16 %v1039, %v1038
      %v1059 = vpack.c.b16 %v1041, %v1040
      %v1060 = vpack.c.b16 %v1043, %v1042
      %v1061 = vpack.c.b16 %v1045, %v1044
      %1078 = vmatprep.subr.bf16.mxu0 0
      %1079 = vmatpush1.bf16.msra.mxu0 %v1046
      %1080 = vmatprep.subr.bf16.mxu0 0
      %1081 = vmatpush1.bf16.msra.mxu0 %v1047
      %1082 = vmatprep.subr.bf16.mxu0 0
      %1083 = vmatpush1.bf16.msra.mxu0 %v1048
      %1084 = vmatprep.subr.bf16.mxu0 0
      %1085 = vmatpush1.bf16.msra.mxu0 %v1049
      %1086 = vmatprep.subr.bf16.mxu0 0
      %1087 = vmatpush1.bf16.msra.mxu0 %v1050
      %1088 = vmatprep.subr.bf16.mxu0 0
      %1089 = vmatpush1.bf16.msra.mxu0 %v1051
      %1090 = vmatprep.subr.bf16.mxu0 0
      %1091 = vmatpush1.bf16.msra.mxu0 %v1052
      %1092 = vmatprep.subr.bf16.mxu0 0
      %1093 = vmatpush1.bf16.msra.mxu0 %v1053
      %1094 = vmatprep.subr.bf16.mxu0 0
      %1095 = vmatpush1.bf16.msra.mxu0 %v1054
      %1096 = vmatprep.subr.bf16.mxu0 0
      %1097 = vmatpush1.bf16.msra.mxu0 %v1055
      %1098 = vmatprep.subr.bf16.mxu0 0
      %1099 = vmatpush1.bf16.msra.mxu0 %v1056
      %1100 = vmatprep.subr.bf16.mxu0 0
      %1101 = vmatpush1.bf16.msra.mxu0 %v1057
      %1102 = vmatprep.subr.bf16.mxu0 0
      %1103 = vmatpush1.bf16.msra.mxu0 %v1058
      %1104 = vmatprep.subr.bf16.mxu0 0
      %1105 = vmatpush1.bf16.msra.mxu0 %v1059
      %1106 = vmatprep.subr.bf16.mxu0 0
      %1107 = vmatpush1.bf16.msra.mxu0 %v1060
      %1108 = vmatprep.subr.bf16.mxu0 0
      %1109 = vmatpush1.bf16.msra.mxu0 %v1061
      %1110 = vmatprep.mubr.bf16.mxu0 %v827
      %1111 = vmatmul.mubr.bf16.gmra.mrb[0].mxu0 %v826
      %v1112 = vpop.f32.mrb[0].mxu0
      %v1113 = vadd.f32 %v975, %v1112
      %v1114 = vpop.f32.mrb[0].mxu0
      %v1115 = vpop.f32.mrb[0].mxu0
      %v1116 = vpop.f32.mrb[0].mxu0
      %1117 = vdwg.mxu0
      %v1118 = vld [vmem:[%s579] sm:$0xf]
      %v1119 = vld [vmem:[%s579 + $0x4] sm:$0xf]
      %v1120 = vld [vmem:[%s579 + $0x8] sm:$0xf]
      %v1121 = vld [vmem:[%s579 + $0xc] sm:$0xf]
      %v1122 = vld [vmem:[%s579 + $0x10] sm:$0xf]
      %v1123 = vld [vmem:[%s579 + $0x14] sm:$0xf]
      %v1124 = vld [vmem:[%s579 + $0x18] sm:$0xf]
      %v1125 = vld [vmem:[%s579 + $0x1c] sm:$0xf]
      %v1126 = vld [vmem:[%s579 + $0x20] sm:$0xf]
      %v1127 = vld [vmem:[%s579 + $0x24] sm:$0xf]
      %v1128 = vld [vmem:[%s579 + $0x28] sm:$0xf]
      %v1129 = vld [vmem:[%s579 + $0x2c] sm:$0xf]
      %v1130 = vld [vmem:[%s579 + $0x30] sm:$0xf]
      %v1131 = vld [vmem:[%s579 + $0x34] sm:$0xf]
      %v1132 = vld [vmem:[%s579 + $0x38] sm:$0xf]
      %v1133 = vld [vmem:[%s579 + $0x3c] sm:$0xf]
      %v1134 = vld [vmem:[%s579 + $0x40] sm:$0xf]
      %v1135 = vld [vmem:[%s579 + $0x44] sm:$0xf]
      %v1136 = vld [vmem:[%s579 + $0x48] sm:$0xf]
      %v1137 = vld [vmem:[%s579 + $0x4c] sm:$0xf]
      %v1138 = vld [vmem:[%s579 + $0x50] sm:$0xf]
      %v1139 = vld [vmem:[%s579 + $0x54] sm:$0xf]
      %v1140 = vld [vmem:[%s579 + $0x58] sm:$0xf]
      %v1141 = vld [vmem:[%s579 + $0x5c] sm:$0xf]
      %v1142 = vld [vmem:[%s579 + $0x60] sm:$0xf]
      %v1143 = vld [vmem:[%s579 + $0x64] sm:$0xf]
      %v1144 = vld [vmem:[%s579 + $0x68] sm:$0xf]
      %v1145 = vld [vmem:[%s579 + $0x6c] sm:$0xf]
      %v1146 = vld [vmem:[%s579 + $0x70] sm:$0xf]
      %v1147 = vld [vmem:[%s579 + $0x74] sm:$0xf]
      %v1148 = vld [vmem:[%s579 + $0x78] sm:$0xf]
      %v1149 = vld [vmem:[%s579 + $0x7c] sm:$0xf]
      %v1150 = vrot.slane %v826, 1
      %v1151 = vrot.slane %v827, 1
      %v1186 = vunpack.c.l.b16 %v1118
      %v1187 = vunpack.c.l.b16 %v1119
      %v1188 = vunpack.c.l.b16 %v1120
      %v1189 = vunpack.c.l.b16 %v1121
      %v1190 = vunpack.c.l.b16 %v1122
      %v1191 = vunpack.c.l.b16 %v1123
      %v1192 = vunpack.c.l.b16 %v1124
      %v1193 = vunpack.c.l.b16 %v1125
      %v1194 = vunpack.c.l.b16 %v1126
      %v1195 = vunpack.c.l.b16 %v1127
      %v1196 = vunpack.c.l.b16 %v1128
      %v1197 = vunpack.c.l.b16 %v1129
      %v1198 = vunpack.c.l.b16 %v1130
      %v1199 = vunpack.c.l.b16 %v1131
      %v1200 = vunpack.c.l.b16 %v1132
      %v1201 = vunpack.c.l.b16 %v1133
      %v1202 = vunpack.c.l.b16 %v1134
      %v1203 = vunpack.c.l.b16 %v1135
      %v1204 = vunpack.c.l.b16 %v1136
      %v1205 = vunpack.c.l.b16 %v1137
      %v1206 = vunpack.c.l.b16 %v1138
      %v1207 = vunpack.c.l.b16 %v1139
      %v1208 = vunpack.c.l.b16 %v1140
      %v1209 = vunpack.c.l.b16 %v1141
      %v1210 = vunpack.c.l.b16 %v1142
      %v1211 = vunpack.c.l.b16 %v1143
      %v1212 = vunpack.c.l.b16 %v1144
      %v1213 = vunpack.c.l.b16 %v1145
      %v1214 = vunpack.c.l.b16 %v1146
      %v1215 = vunpack.c.l.b16 %v1147
      %v1216 = vunpack.c.l.b16 %v1148
      %v1217 = vunpack.c.l.b16 %v1149
      %v1218 = vpack.c.b16 %v1187, %v1186
      %v1219 = vpack.c.b16 %v1189, %v1188
      %v1220 = vpack.c.b16 %v1191, %v1190
      %v1221 = vpack.c.b16 %v1193, %v1192
      %v1222 = vpack.c.b16 %v1195, %v1194
      %v1223 = vpack.c.b16 %v1197, %v1196
      %v1224 = vpack.c.b16 %v1199, %v1198
      %v1225 = vpack.c.b16 %v1201, %v1200
      %v1226 = vpack.c.b16 %v1203, %v1202
      %v1227 = vpack.c.b16 %v1205, %v1204
      %v1228 = vpack.c.b16 %v1207, %v1206
      %v1229 = vpack.c.b16 %v1209, %v1208
      %v1230 = vpack.c.b16 %v1211, %v1210
      %v1231 = vpack.c.b16 %v1213, %v1212
      %v1232 = vpack.c.b16 %v1215, %v1214
      %v1233 = vpack.c.b16 %v1217, %v1216
      %1250 = vmatprep.subr.bf16.mxu0 0
      %1251 = vmatpush1.bf16.msra.mxu0 %v1218
      %1252 = vmatprep.subr.bf16.mxu0 0
      %1253 = vmatpush1.bf16.msra.mxu0 %v1219
      %1254 = vmatprep.subr.bf16.mxu0 0
      %1255 = vmatpush1.bf16.msra.mxu0 %v1220
      %1256 = vmatprep.subr.bf16.mxu0 0
      %1257 = vmatpush1.bf16.msra.mxu0 %v1221
      %1258 = vmatprep.subr.bf16.mxu0 0
      %1259 = vmatpush1.bf16.msra.mxu0 %v1222
      %1260 = vmatprep.subr.bf16.mxu0 0
      %1261 = vmatpush1.bf16.msra.mxu0 %v1223
      %1262 = vmatprep.subr.bf16.mxu0 0
      %1263 = vmatpush1.bf16.msra.mxu0 %v1224
      %1264 = vmatprep.subr.bf16.mxu0 0
      %1265 = vmatpush1.bf16.msra.mxu0 %v1225
      %1266 = vmatprep.subr.bf16.mxu0 0
      %1267 = vmatpush1.bf16.msra.mxu0 %v1226
      %1268 = vmatprep.subr.bf16.mxu0 0
      %1269 = vmatpush1.bf16.msra.mxu0 %v1227
      %1270 = vmatprep.subr.bf16.mxu0 0
      %1271 = vmatpush1.bf16.msra.mxu0 %v1228
      %1272 = vmatprep.subr.bf16.mxu0 0
      %1273 = vmatpush1.bf16.msra.mxu0 %v1229
      %1274 = vmatprep.subr.bf16.mxu0 0
      %1275 = vmatpush1.bf16.msra.mxu0 %v1230
      %1276 = vmatprep.subr.bf16.mxu0 0
      %1277 = vmatpush1.bf16.msra.mxu0 %v1231
      %1278 = vmatprep.subr.bf16.mxu0 0
      %1279 = vmatpush1.bf16.msra.mxu0 %v1232
      %1280 = vmatprep.subr.bf16.mxu0 0
      %1281 = vmatpush1.bf16.msra.mxu0 %v1233
      %1282 = vmatprep.mubr.bf16.mxu0 %v1151
      %1283 = vmatmul.mubr.bf16.gmra.mrb[0].mxu0 %v1150
      %v1284 = vpop.f32.mrb[0].mxu0
      %v1285 = vadd.f32 0.0, %v1284
      %v1286 = vpop.f32.mrb[0].mxu0
      %v1287 = vpop.f32.mrb[0].mxu0
      %v1288 = vpop.f32.mrb[0].mxu0
      %1289 = vdwg.mxu0
      %v1290 = vadd.f32 %v1113, %v1285
      %s1291 = scalar_lea.vmem [#allocation2], 4
      %v1292 = vld [vmem:[%s1291] sm:$0x7]
      %v1293 = vadd.f32 %v1292, %v1290
      %1294 = vst.msk [vmem:[%s1291] sm:$0x7] %vm755, %v1293
      %p1295 = scmp.eq.s32.totalorder %s19, 2
      // Predicated region
      $region37: #{alexnet_forward.15} parent=31 // pred_check
        %p1296 = pneg %p1295
      $region38: #{alexnet_forward.15} parent=31 // pred_check_branch
        %1298 = sbr.rel (%p1296) target = $region40
      $region39: #{alexnet_forward.15} parent=31 // pred_region
        %v1299 = vld [vmem:[#allocation2] sm:$0x7]
        %v1300 = vld [vmem:[#allocation2 + $0x4] sm:$0x7]
        %v1301 = vld [vmem:[%s2] sm:$0x1]
        %v1303 = vlaneseq
        %v1304 = vshrl.u32 %v1303, 7
        %v1305 = vsub.s32 0, %v1304
        %v1306 = vrot.slane %v1301, %v1305
        %v1308 = vadd.f32 %v1299, %v1306
        %v1309 = vadd.f32 %v1300, %v1306
        %v1310 = vmax.f32 %v1308, 0.0
        %v1311 = vmax.f32 %v1309, 0.0
        %v1312 = vpack.c.bf16 %v1310, %v1310
        %v1313 = vpack.c.bf16 %v1311, %v1311
        %vm1314 = vcmask 123904
        %vm1315 = vsmask.f32 1280
        %vm1316 = vmand %vm1314, %vm1315
        %v1317 = vld [vmem:[%s209] sm:$0x3]
        %v1318 = vsel %vm1316, %v1312, %v1317
        %1319 = vst [vmem:[%s209] sm:$0x3] %v1318
        %v1320 = vld [vmem:[%s209 + $0x2] sm:$0x3]
        %v1321 = vsel %vm1316, %v1313, %v1320
        %1322 = vst [vmem:[%s209 + $0x2] sm:$0x3] %v1321
      $region40: #{alexnet_forward.15} parent=31 // pred_fallthru
        _
      %p1323 = scmp.lt.s32.totalorder %s18, 2
      %s1324 = scalar_select %p1323, %s18, 2
      %s1325 = smul.addr %s1324, 2
      %s1326 = smul.addr %s1325, 2
      %s1327 = scalar_lea.vmem %s3, %s1326
      // Predicated region
      $region41: #{alexnet_forward.15} parent=31 // pred_check
        %p1328 = pneg %p119
      $region42: #{alexnet_forward.15} parent=31 // pred_check_branch
        %1330 = sbr.rel (%p1328) target = $region44
      $region43: #{alexnet_forward.15} parent=31 // pred_region
        _
      $region44: #{alexnet_forward.15} parent=31 // pred_fallthru
        _
    $region32: #{alexnet_forward.15} parent=5 // pred_fallthru
      _
    %p1331 = scmp.le.s32.totalorder 2, %s9
    // Predicated region
    $region45: #{alexnet_forward.15} parent=5 // pred_check
      %p1332 = pneg %p1331
    $region46: #{alexnet_forward.15} parent=5 // pred_check_branch
      %1334 = sbr.rel (%p1332) target = $region48
    $region47: #{alexnet_forward.15} parent=5 // pred_region
      %s1335 = ssub.s32 %s9, 2
      // Predicated region
      $region49: #{alexnet_forward.15} parent=47 // pred_check
        %p1336 = pneg %p125
      $region50: #{alexnet_forward.15} parent=47 // pred_check_branch
        %1338 = sbr.rel (%p1336) target = $region52
      $region51: #{alexnet_forward.15} parent=47 // pred_region
        %p1339 = scmp.lt.s32.totalorder %s20, 2
        %s1340 = scalar_select %p1339, %s20, 2
        %s1341 = smul.addr %s1340, 2
        %s1342 = smul.addr %s1341, 2
        %s1343 = scalar_lea.vmem %s3, %s1342
      $region52: #{alexnet_forward.15} parent=47 // pred_fallthru
        _
    $region48: #{alexnet_forward.15} parent=5 // pred_fallthru
      _
  $region6: #{alexnet_forward.15} parent=0 // loop_footer
    %s13 = sadd.s32 1, %s9
  $region7: #{alexnet_forward.15} parent=0 // loop_footer_branch
    %8 = sbr.rel target = $region3
  $region8: #{alexnet_forward.15} parent=0 // loop_exit
    _

// kernel: alexnet_forward.13
$region0: #{alexnet_forward.13}
  #allocation0 [shape = 'u32[]', space=smem, size = 0x4, offset = 0x4, fixed_abs, tag = 'smem constant byte address 0x4 - core index']
  #allocation1 [shape = 'u32[144,128]{1,0:T(1,128)}', space=vmem, size = 0x12000, scoped, tag = 'internal scratch']
  #allocation2 [shape = 'f32[2,3,384]{2,1,0:T(4,128)}', space=vmem, size = 0x3000, scoped, tag = 'scratch operand']
  %s0 = inlined_call_operand.vmem [shape: bf16[5,2,5,192], index: 0, kind: input, shape index: {}]
  %s1 = inlined_call_operand.vmem [shape: bf16[3,3,192,384], index: 1, kind: input, shape index: {}]
  %s2 = inlined_call_operand.vmem [shape: f32[1,384], index: 2, kind: input, shape index: {}]
  %s3 = inlined_call_operand.vmem [shape: bf16[3,2,3,384], index: 3, kind: output, shape index: {}]
  %s4 = sld [smem:[#allocation0]]
  $region53: #{alexnet_forward.13} parent=0
    _
  %s6 = ssub.s32 1, %s4
  %s7 = scalar_select 0, %s6, %s4
  loop: start=0, step=1, limit=11
  $region2: #{alexnet_forward.13} parent=0 // loop_pre_header
    _
  $region3: #{alexnet_forward.13} parent=0 // loop_header
    %s9 = sphi 0, %s13
    %p10 = scmp.ge.s32.totalorder %s9, 11
    %s16 = sphi 0, %s28
    %s17 = sphi 0, %s24
    %s18 = sphi 0, %s16
    %s19 = sphi 0, %s17
    %s20 = sphi 0, %s18
    %s21 = sphi 0, %s19
    %s33 = sphi 0, %s35
    %s36 = sphi 0, %s33
    %s37 = sphi 0, %s36
    %s53 = sphi 0, %s37
    %s59 = sphi 0, %s61
    %s62 = sphi 0, %s59
    %s63 = sphi 0, %s62
    %s79 = sphi 0, %s63
    %s83 = sphi 0, %s83
    %s85 = sphi 0, %s83
    %s86 = sphi 0, %s85
    %s100 = sphi 0, %s86
    %s106 = sphi 0, %s108
    %s109 = sphi 0, %s106
    %s110 = sphi 0, %s109
    %s126 = sphi 0, %s110
  $region4: #{alexnet_forward.13} parent=0 // loop_header_branch
    %12 = sbr.rel (%p10) target = $region8
  $region5: #{alexnet_forward.13} parent=0 // loop_body
    %s14 = ssub.s32 %s9, 1
    %s15 = ssub.s32 %s9, 2
    %s22 = sadd.s32 1, %s17
    %p23 = scmp.ge.s32.totalorder %s22, 3
    %s24 = scalar_select %p23, 0, %s22
    %s25 = sadd.s32 1, %s16
    %s26 = scalar_select %p23, %s25, %s16
    %p27 = scmp.ge.s32.totalorder %s26, 3
    %s28 = scalar_select %p27, 0, %s26
    %s29 = sadd.s32 %s16, %s17
    %s30 = sadd.s32 %s28, %s24
    %s31 = ssub.s32 %s29, %s30
    %p32 = scmp.eq.s32.totalorder %s31, 0
    %s34 = sadd.s32 %s33, 1
    %s35 = scalar_select %p32, %s33, %s34
    %p38 = pneg %p32
    %p39 = scmp.eq.s32.totalorder %s9, 8
    %p40 = por %p38, %p39
    %p41 = scmp.ne.s32.totalorder %s33, %s36
    %p42 = scmp.eq.s32.totalorder %s9, 0
    %p43 = por %p41, %p42
    %p44 = scmp.ne.s32.totalorder %s33, %s36
    %p45 = scmp.eq.s32.totalorder %s14, 8
    %p46 = por %p44, %p45
    %p47 = scmp.ne.s32.totalorder %s36, %s37
    %p48 = scmp.eq.s32.totalorder %s14, 0
    %p49 = por %p47, %p48
    %p50 = scmp.ne.s32.totalorder %s36, %s37
    %p51 = scmp.eq.s32.totalorder %s15, 8
    %p52 = por %p50, %p51
    %p54 = scmp.ne.s32.totalorder %s37, %s53
    %p55 = scmp.eq.s32.totalorder %s15, 0
    %p56 = por %p54, %p55
    %s57 = ssub.s32 %s17, %s24
    %p58 = scmp.eq.s32.totalorder %s57, 0
    %s60 = sadd.s32 %s59, 1
    %s61 = scalar_select %p58, %s59, %s60
    %p64 = pneg %p58
    %p65 = scmp.eq.s32.totalorder %s9, 8
    %p66 = por %p64, %p65
    %p67 = scmp.ne.s32.totalorder %s59, %s62
    %p68 = scmp.eq.s32.totalorder %s9, 0
    %p69 = por %p67, %p68
    %p70 = scmp.ne.s32.totalorder %s59, %s62
    %p71 = scmp.eq.s32.totalorder %s14, 8
    %p72 = por %p70, %p71
    %p73 = scmp.ne.s32.totalorder %s62, %s63
    %p74 = scmp.eq.s32.totalorder %s14, 0
    %p75 = por %p73, %p74
    %p76 = scmp.ne.s32.totalorder %s62, %s63
    %p77 = scmp.eq.s32.totalorder %s15, 8
    %p78 = por %p76, %p77
    %p80 = scmp.ne.s32.totalorder %s63, %s79
    %p81 = scmp.eq.s32.totalorder %s15, 0
    %p82 = por %p80, %p81
    %s84 = sadd.s32 %s83, 1
    %p87 = scmp.eq.s32.totalorder %s9, 8
    %p88 = scmp.ne.s32.totalorder %s83, %s85
    %p89 = scmp.eq.s32.totalorder %s9, 0
    %p90 = por %p88, %p89
    %p91 = scmp.ne.s32.totalorder %s83, %s85
    %p92 = scmp.eq.s32.totalorder %s14, 8
    %p93 = por %p91, %p92
    %p94 = scmp.ne.s32.totalorder %s85, %s86
    %p95 = scmp.eq.s32.totalorder %s14, 0
    %p96 = por %p94, %p95
    %p97 = scmp.ne.s32.totalorder %s85, %s86
    %p98 = scmp.eq.s32.totalorder %s15, 8
    %p99 = por %p97, %p98
    %p101 = scmp.ne.s32.totalorder %s86, %s100
    %p102 = scmp.eq.s32.totalorder %s15, 0
    %p103 = por %p101, %p102
    %s104 = ssub.s32 %s16, %s28
    %p105 = scmp.eq.s32.totalorder %s104, 0
    %s107 = sadd.s32 %s106, 1
    %s108 = scalar_select %p105, %s106, %s107
    %p111 = pneg %p105
    %p112 = scmp.eq.s32.totalorder %s9, 8
    %p113 = por %p111, %p112
    %p114 = scmp.ne.s32.totalorder %s106, %s109
    %p115 = scmp.eq.s32.totalorder %s9, 0
    %p116 = por %p114, %p115
    %p117 = scmp.ne.s32.totalorder %s106, %s109
    %p118 = scmp.eq.s32.totalorder %s14, 8
    %p119 = por %p117, %p118
    %p120 = scmp.ne.s32.totalorder %s109, %s110
    %p121 = scmp.eq.s32.totalorder %s14, 0
    %p122 = por %p120, %p121
    %p123 = scmp.ne.s32.totalorder %s109, %s110
    %p124 = scmp.eq.s32.totalorder %s15, 8
    %p125 = por %p123, %p124
    %p127 = scmp.ne.s32.totalorder %s110, %s126
    %p128 = scmp.eq.s32.totalorder %s15, 0
    %p129 = por %p127, %p128
    %p130 = scmp.le.s32.totalorder 1, %s9
    %p131 = scmp.lt.s32.totalorder %s9, 10
    %p132 = pnand %p130, %p131
    %p133 = pneg %p132
    // Predicated region
    $region9: #{alexnet_forward.13} parent=5 // pred_check
      _
    $region10: #{alexnet_forward.13} parent=5 // pred_check_branch
      %135 = sbr.rel (%p132) target = $region12
    $region11: #{alexnet_forward.13} parent=5 // pred_region
      %s136 = ssub.s32 %s9, 1
      // Predicated region
      $region13: #{alexnet_forward.13} parent=11 // pred_check
        %p137 = pneg %p96
      $region14: #{alexnet_forward.13} parent=11 // pred_check_branch
        %139 = sbr.rel (%p137) target = $region16
      $region15: #{alexnet_forward.13} parent=11 // pred_region
        _
      $region16: #{alexnet_forward.13} parent=11 // pred_fallthru
        _
    $region12: #{alexnet_forward.13} parent=5 // pred_fallthru
      _
    %p140 = scmp.lt.s32.totalorder %s9, 9
    // Predicated region
    $region17: #{alexnet_forward.13} parent=5 // pred_check
      %p141 = pneg %p140
    $region18: #{alexnet_forward.13} parent=5 // pred_check_branch
      %143 = sbr.rel (%p141) target = $region20
    $region19: #{alexnet_forward.13} parent=5 // pred_region
      // Predicated region
      $region21: #{alexnet_forward.13} parent=19 // pred_check
        %p144 = pneg %p43
      $region22: #{alexnet_forward.13} parent=19 // pred_check_branch
        %146 = sbr.rel (%p144) target = $region24
      $region23: #{alexnet_forward.13} parent=19 // pred_region
        %s147 = sadd.s32 %s16, %s17
        %p148 = scmp.lt.s32.totalorder %s147, 4
        %s149 = scalar_select %p148, %s147, 4
        %s150 = smul.addr %s149, 4
        %s151 = smul.addr %s150, 4
        %s152 = scalar_lea.vmem %s0, %s151
        %s153 = sadd.s32 %s16, %s17
      $region24: #{alexnet_forward.13} parent=19 // pred_fallthru
        _
      // Predicated region
      $region25: #{alexnet_forward.13} parent=19 // pred_check
        %p154 = pneg %p69
      $region26: #{alexnet_forward.13} parent=19 // pred_check_branch
        %156 = sbr.rel (%p154) target = $region28
      $region27: #{alexnet_forward.13} parent=19 // pred_region
        %p157 = scmp.lt.s32.totalorder %s17, 2
        %s158 = scalar_select %p157, %s17, 2
        %s159 = smul.addr %s158, 216
        %s160 = smul.addr %s159, 4
        %s161 = scalar_lea.vmem %s1, %s160
      $region28: #{alexnet_forward.13} parent=19 // pred_fallthru
        _
    $region20: #{alexnet_forward.13} parent=5 // pred_fallthru
      _
    %p162 = scmp.le.s32.totalorder 1, %s9
    %p163 = scmp.lt.s32.totalorder %s9, 10
    %p164 = pnand %p162, %p163
    %p165 = pneg %p164
    // Predicated region
    $region29: #{alexnet_forward.13} parent=5 // pred_check
      _
    $region30: #{alexnet_forward.13} parent=5 // pred_check_branch
      %167 = sbr.rel (%p164) target = $region32
    $region31: #{alexnet_forward.13} parent=5 // pred_region
      %s168 = ssub.s32 %s9, 1
      %s169 = sadd.s32 %s18, %s19
      %p170 = scmp.lt.s32.totalorder %s169, 4
      %s171 = scalar_select %p170, %s169, 4
      %s172 = smul.addr %s171, 4
      %s173 = smul.addr %s172, 4
      %s174 = scalar_lea.vmem %s0, %s173
      %p175 = pneg %p49
      %p176 = pneg %p46
      %p177 = scmp.lt.s32.totalorder %s19, 2
      %s178 = scalar_select %p177, %s19, 2
      %s179 = smul.addr %s178, 216
      %s180 = smul.addr %s179, 4
      %s181 = scalar_lea.vmem %s1, %s180
      %p182 = pneg %p75
      %p183 = pneg %p72
      %p184 = pneg %p96
      %p185 = pneg %p93
      %p186 = pneg %p122
      %p187 = pneg %p119
      %p188 = scmp.lt.s32.totalorder %s18, 2
      %s189 = scalar_select %p188, %s18, 2
      %s190 = smul.addr %s189, 6
      %s191 = smul.addr %s190, 2
      %s192 = scalar_lea.vmem %s3, %s191
      %s193 = sadd.s32 %s18, %s19
      %p194 = scmp.lt.s32.totalorder %s193, 4
      %s195 = scalar_select %p194, %s193, 4
      %s196 = smul.addr %s195, 4
      %s197 = smul.addr %s196, 4
      %s198 = scalar_lea.vmem %s0, %s197
      %s199 = sadd.s32 %s18, %s19
      %p200 = scmp.lt.s32.totalorder %s19, 2
      %s201 = scalar_select %p200, %s19, 2
      %s202 = smul.addr %s201, 216
      %s203 = smul.addr %s202, 4
      %s204 = scalar_lea.vmem %s1, %s203
      %p205 = scmp.lt.s32.totalorder %s18, 2
      %s206 = scalar_select %p205, %s18, 2
      %s207 = smul.addr %s206, 6
      %s208 = smul.addr %s207, 2
      %s209 = scalar_lea.vmem %s3, %s208
      %p211 = scmp.eq.s32.totalorder %s19, 0
      // Predicated region
      $region33: #{alexnet_forward.13} parent=31 // pred_check
        %p212 = pneg %p211
      $region34: #{alexnet_forward.13} parent=31 // pred_check_branch
        %214 = sbr.rel (%p212) target = $region36
      $region35: #{alexnet_forward.13} parent=31 // pred_region
        %215 = vst [vmem:[#allocation2] sm:$0x77] 0.0
        %216 = vst [vmem:[#allocation2 + $0x8] sm:$0x7] 0.0
        %217 = vst [vmem:[#allocation2 + $0xc] sm:$0x77] 0.0
        %218 = vst [vmem:[#allocation2 + $0x14] sm:$0x7] 0.0
      $region36: #{alexnet_forward.13} parent=31 // pred_fallthru
        _
      %v219 = vld [vmem:[%s198] sm:$0x77]
      %v220 = vld [vmem:[%s204] sm:$0xff]
      %v221 = vld [vmem:[%s204 + $0x8] sm:$0xf]
      %v222 = vld [vmem:[%s204 + $0xc] sm:$0xff]
      %v223 = vld [vmem:[%s204 + $0x14] sm:$0xf]
      %v224 = vld [vmem:[%s204 + $0x18] sm:$0xff]
      %v225 = vld [vmem:[%s204 + $0x20] sm:$0xf]
      %v226 = vld [vmem:[%s204 + $0x24] sm:$0xff]
      %v227 = vld [vmem:[%s204 + $0x2c] sm:$0xf]
      %v228 = vld [vmem:[%s204 + $0x30] sm:$0xff]
      %v229 = vld [vmem:[%s204 + $0x38] sm:$0xf]
      %v230 = vld [vmem:[%s204 + $0x3c] sm:$0xff]
      %v231 = vld [vmem:[%s204 + $0x44] sm:$0xf]
      %v232 = vld [vmem:[%s204 + $0x48] sm:$0xff]
      %v233 = vld [vmem:[%s204 + $0x50] sm:$0xf]
      %v234 = vld [vmem:[%s204 + $0x54] sm:$0xff]
      %v235 = vld [vmem:[%s204 + $0x5c] sm:$0xf]
      %v236 = vld [vmem:[%s204 + $0x60] sm:$0xff]
      %v237 = vld [vmem:[%s204 + $0x68] sm:$0xf]
      %v238 = vld [vmem:[%s204 + $0x6c] sm:$0xff]
      %v239 = vld [vmem:[%s204 + $0x74] sm:$0xf]
      %v240 = vld [vmem:[%s204 + $0x78] sm:$0xff]
      %v241 = vld [vmem:[%s204 + $0x80] sm:$0xf]
      %v242 = vld [vmem:[%s204 + $0x84] sm:$0xff]
      %v243 = vld [vmem:[%s204 + $0x8c] sm:$0xf]
      %v244 = vld [vmem:[%s204 + $0x90] sm:$0xff]
      %v245 = vld [vmem:[%s204 + $0x98] sm:$0xf]
      %v246 = vld [vmem:[%s204 + $0x9c] sm:$0xff]
      %v247 = vld [vmem:[%s204 + $0xa4] sm:$0xf]
      %v248 = vld [vmem:[%s204 + $0xa8] sm:$0xff]
      %v249 = vld [vmem:[%s204 + $0xb0] sm:$0xf]
      %v250 = vld [vmem:[%s204 + $0xb4] sm:$0xff]
      %v251 = vld [vmem:[%s204 + $0xbc] sm:$0xf]
      %v252 = vld [vmem:[%s204 + $0xc0] sm:$0xff]
      %v253 = vld [vmem:[%s204 + $0xc8] sm:$0xf]
      %v254 = vld [vmem:[%s204 + $0xcc] sm:$0xff]
      %v255 = vld [vmem:[%s204 + $0xd4] sm:$0xf]
      %v256 = vld [vmem:[%s204 + $0xd8] sm:$0xff]
      %v257 = vld [vmem:[%s204 + $0xe0] sm:$0xf]
      %v258 = vld [vmem:[%s204 + $0xe4] sm:$0xff]
      %v259 = vld [vmem:[%s204 + $0xec] sm:$0xf]
      %v260 = vld [vmem:[%s204 + $0xf0] sm:$0xff]
      %v261 = vld [vmem:[%s204 + $0xf8] sm:$0xf]
      %v262 = vld [vmem:[%s204 + $0xfc] sm:$0xff]
      %v263 = vld [vmem:[%s204 + $0x104] sm:$0xf]
      %v264 = vld [vmem:[%s204 + $0x108] sm:$0xff]
      %v265 = vld [vmem:[%s204 + $0x110] sm:$0xf]
      %v266 = vld [vmem:[%s204 + $0x114] sm:$0xff]
      %v267 = vld [vmem:[%s204 + $0x11c] sm:$0xf]
      %s268 = scalar_lea.vmem %s204, 288
      %v269 = vld [vmem:[%s268] sm:$0xff]
      %v270 = vld [vmem:[%s268 + $0x8] sm:$0xf]
      %v271 = vld [vmem:[%s268 + $0xc] sm:$0xff]
      %v272 = vld [vmem:[%s268 + $0x14] sm:$0xf]
      %v273 = vld [vmem:[%s268 + $0x18] sm:$0xff]
      %v274 = vld [vmem:[%s268 + $0x20] sm:$0xf]
      %v275 = vld [vmem:[%s268 + $0x24] sm:$0xff]
      %v276 = vld [vmem:[%s268 + $0x2c] sm:$0xf]
      %v277 = vld [vmem:[%s268 + $0x30] sm:$0xff]
      %v278 = vld [vmem:[%s268 + $0x38] sm:$0xf]
      %v279 = vld [vmem:[%s268 + $0x3c] sm:$0xff]
      %v280 = vld [vmem:[%s268 + $0x44] sm:$0xf]
      %v281 = vld [vmem:[%s268 + $0x48] sm:$0xff]
      %v282 = vld [vmem:[%s268 + $0x50] sm:$0xf]
      %v283 = vld [vmem:[%s268 + $0x54] sm:$0xff]
      %v284 = vld [vmem:[%s268 + $0x5c] sm:$0xf]
      %v285 = vld [vmem:[%s268 + $0x60] sm:$0xff]
      %v286 = vld [vmem:[%s268 + $0x68] sm:$0xf]
      %v287 = vld [vmem:[%s268 + $0x6c] sm:$0xff]
      %v288 = vld [vmem:[%s268 + $0x74] sm:$0xf]
      %v289 = vld [vmem:[%s268 + $0x78] sm:$0xff]
      %v290 = vld [vmem:[%s268 + $0x80] sm:$0xf]
      %v291 = vld [vmem:[%s268 + $0x84] sm:$0xff]
      %v292 = vld [vmem:[%s268 + $0x8c] sm:$0xf]
      %v293 = vld [vmem:[%s268 + $0x90] sm:$0xff]
      %v294 = vld [vmem:[%s268 + $0x98] sm:$0xf]
      %v295 = vld [vmem:[%s268 + $0x9c] sm:$0xff]
      %v296 = vld [vmem:[%s268 + $0xa4] sm:$0xf]
      %v297 = vld [vmem:[%s268 + $0xa8] sm:$0xff]
      %v298 = vld [vmem:[%s268 + $0xb0] sm:$0xf]
      %v299 = vld [vmem:[%s268 + $0xb4] sm:$0xff]
      %v300 = vld [vmem:[%s268 + $0xbc] sm:$0xf]
      %v301 = vld [vmem:[%s268 + $0xc0] sm:$0xff]
      %v302 = vld [vmem:[%s268 + $0xc8] sm:$0xf]
      %v303 = vld [vmem:[%s268 + $0xcc] sm:$0xff]
      %v304 = vld [vmem:[%s268 + $0xd4] sm:$0xf]
      %v305 = vld [vmem:[%s268 + $0xd8] sm:$0xff]
      %v306 = vld [vmem:[%s268 + $0xe0] sm:$0xf]
      %v307 = vld [vmem:[%s268 + $0xe4] sm:$0xff]
      %v308 = vld [vmem:[%s268 + $0xec] sm:$0xf]
      %v309 = vld [vmem:[%s268 + $0xf0] sm:$0xff]
      %v310 = vld [vmem:[%s268 + $0xf8] sm:$0xf]
      %v311 = vld [vmem:[%s268 + $0xfc] sm:$0xff]
      %v312 = vld [vmem:[%s268 + $0x104] sm:$0xf]
      %v313 = vld [vmem:[%s268 + $0x108] sm:$0xff]
      %v314 = vld [vmem:[%s268 + $0x110] sm:$0xf]
      %v315 = vld [vmem:[%s268 + $0x114] sm:$0xff]
      %v316 = vld [vmem:[%s268 + $0x11c] sm:$0xf]
      %v318 = vunpack.c.l.b16 %v219
      %v319 = vunpack.c.h.b16 %v219
      %v320 = vpack.c.b16 %v318, %v318
      %v321 = vpack.c.b16 %v319, %v319
      %v323 = vshrl.u32 %v320, 16
      %v325 = vshll.u32 %v320, 16
      %v327 = vrot.slane %v325, 1
      %v328 = vor.u32 %v323, %v327
      %v330 = vshrl.u32 %v321, 16
      %v332 = vshll.u32 %v321, 16
      %v334 = vrot.slane %v332, 1
      %v335 = vor.u32 %v330, %v334
      %v385 = vunpack.c.l.b16 %v269
      %v386 = vunpack.c.h.b16 %v269
      %v387 = vunpack.c.l.b16 %v270
      %v388 = vunpack.c.l.b16 %v271
      %v389 = vunpack.c.h.b16 %v271
      %v390 = vunpack.c.l.b16 %v272
      %v391 = vunpack.c.l.b16 %v273
      %v392 = vunpack.c.h.b16 %v273
      %v393 = vunpack.c.l.b16 %v274
      %v394 = vunpack.c.l.b16 %v275
      %v395 = vunpack.c.h.b16 %v275
      %v396 = vunpack.c.l.b16 %v276
      %v397 = vunpack.c.l.b16 %v277
      %v398 = vunpack.c.h.b16 %v277
      %v399 = vunpack.c.l.b16 %v278
      %v400 = vunpack.c.l.b16 %v279
      %v401 = vunpack.c.h.b16 %v279
      %v402 = vunpack.c.l.b16 %v280
      %v403 = vunpack.c.l.b16 %v281
      %v404 = vunpack.c.h.b16 %v281
      %v405 = vunpack.c.l.b16 %v282
      %v406 = vunpack.c.l.b16 %v283
      %v407 = vunpack.c.h.b16 %v283
      %v408 = vunpack.c.l.b16 %v284
      %v409 = vunpack.c.l.b16 %v285
      %v410 = vunpack.c.h.b16 %v285
      %v411 = vunpack.c.l.b16 %v286
      %v412 = vunpack.c.l.b16 %v287
      %v413 = vunpack.c.h.b16 %v287
      %v414 = vunpack.c.l.b16 %v288
      %v415 = vunpack.c.l.b16 %v289
      %v416 = vunpack.c.h.b16 %v289
      %v417 = vunpack.c.l.b16 %v290
      %v418 = vunpack.c.l.b16 %v291
      %v419 = vunpack.c.h.b16 %v291
      %v420 = vunpack.c.l.b16 %v292
      %v421 = vunpack.c.l.b16 %v293
      %v422 = vunpack.c.h.b16 %v293
      %v423 = vunpack.c.l.b16 %v294
      %v424 = vunpack.c.l.b16 %v295
      %v425 = vunpack.c.h.b16 %v295
      %v426 = vunpack.c.l.b16 %v296
      %v427 = vunpack.c.l.b16 %v297
      %v428 = vunpack.c.h.b16 %v297
      %v429 = vunpack.c.l.b16 %v298
      %v430 = vunpack.c.l.b16 %v299
      %v431 = vunpack.c.h.b16 %v299
      %v432 = vunpack.c.l.b16 %v300
      %v433 = vunpack.c.l.b16 %v301
      %v434 = vunpack.c.h.b16 %v301
      %v435 = vunpack.c.l.b16 %v302
      %v436 = vunpack.c.l.b16 %v303
      %v437 = vunpack.c.h.b16 %v303
      %v438 = vunpack.c.l.b16 %v304
      %v439 = vunpack.c.l.b16 %v305
      %v440 = vunpack.c.h.b16 %v305
      %v441 = vunpack.c.l.b16 %v306
      %v442 = vunpack.c.l.b16 %v307
      %v443 = vunpack.c.h.b16 %v307
      %v444 = vunpack.c.l.b16 %v308
      %v445 = vunpack.c.l.b16 %v309
      %v446 = vunpack.c.h.b16 %v309
      %v447 = vunpack.c.l.b16 %v310
      %v448 = vunpack.c.l.b16 %v311
      %v449 = vunpack.c.h.b16 %v311
      %v450 = vunpack.c.l.b16 %v312
      %v451 = vunpack.c.l.b16 %v313
      %v452 = vunpack.c.h.b16 %v313
      %v453 = vunpack.c.l.b16 %v314
      %v454 = vunpack.c.l.b16 %v315
      %v455 = vunpack.c.h.b16 %v315
      %v456 = vunpack.c.l.b16 %v316
      %v457 = vpack.c.b16 %v388, %v385
      %v458 = vpack.c.b16 %v389, %v386
      %v459 = vpack.c.b16 %v390, %v387
      %v460 = vpack.c.b16 %v394, %v391
      %v461 = vpack.c.b16 %v395, %v392
      %v462 = vpack.c.b16 %v396, %v393
      %v463 = vpack.c.b16 %v400, %v397
      %v464 = vpack.c.b16 %v401, %v398
      %v465 = vpack.c.b16 %v402, %v399
      %v466 = vpack.c.b16 %v406, %v403
      %v467 = vpack.c.b16 %v407, %v404
      %v468 = vpack.c.b16 %v408, %v405
      %v469 = vpack.c.b16 %v412, %v409
      %v470 = vpack.c.b16 %v413, %v410
      %v471 = vpack.c.b16 %v414, %v411
      %v472 = vpack.c.b16 %v418, %v415
      %v473 = vpack.c.b16 %v419, %v416
      %v474 = vpack.c.b16 %v420, %v417
      %v475 = vpack.c.b16 %v424, %v421
      %v476 = vpack.c.b16 %v425, %v422
      %v477 = vpack.c.b16 %v426, %v423
      %v478 = vpack.c.b16 %v430, %v427
      %v479 = vpack.c.b16 %v431, %v428
      %v480 = vpack.c.b16 %v432, %v429
      %v481 = vpack.c.b16 %v436, %v433
      %v482 = vpack.c.b16 %v437, %v434
      %v483 = vpack.c.b16 %v438, %v435
      %v484 = vpack.c.b16 %v442, %v439
      %v485 = vpack.c.b16 %v443, %v440
      %v486 = vpack.c.b16 %v444, %v441
      %v487 = vpack.c.b16 %v448, %v445
      %v488 = vpack.c.b16 %v449, %v446
      %v489 = vpack.c.b16 %v450, %v447
      %v490 = vpack.c.b16 %v454, %v451
      %v491 = vpack.c.b16 %v455, %v452
      %v492 = vpack.c.b16 %v456, %v453
      %vm529 = vcmask 523264
      %v531 = vsel %vm529, %v335, 0
      %533 = vmatprep.subr.bf16.mxu0 %v458
      %534 = vmatpush1.bf16.msra.mxu0 %v457
      %535 = vmatprep.subr.bf16.mxu0 %v461
      %536 = vmatpush1.bf16.msra.mxu0 %v460
      %537 = vmatprep.subr.bf16.mxu0 %v464
      %538 = vmatpush1.bf16.msra.mxu0 %v463
      %539 = vmatprep.subr.bf16.mxu0 %v467
      %540 = vmatpush1.bf16.msra.mxu0 %v466
      %541 = vmatprep.subr.bf16.mxu0 %v470
      %542 = vmatpush1.bf16.msra.mxu0 %v469
      %543 = vmatprep.subr.bf16.mxu0 %v473
      %544 = vmatpush1.bf16.msra.mxu0 %v472
      %545 = vmatprep.subr.bf16.mxu0 %v476
      %546 = vmatpush1.bf16.msra.mxu0 %v475
      %547 = vmatprep.subr.bf16.mxu0 %v479
      %548 = vmatpush1.bf16.msra.mxu0 %v478
      %549 = vmatprep.subr.bf16.mxu0 %v482
      %550 = vmatpush1.bf16.msra.mxu0 %v481
      %551 = vmatprep.subr.bf16.mxu0 %v485
      %552 = vmatpush1.bf16.msra.mxu0 %v484
      %553 = vmatprep.subr.bf16.mxu0 %v488
      %554 = vmatpush1.bf16.msra.mxu0 %v487
      %555 = vmatprep.subr.bf16.mxu0 %v491
      %556 = vmatpush1.bf16.msra.mxu0 %v490
      %557 = vmatprep.subr.bf16.mxu0 0
      %558 = vmatpush1.bf16.msra.mxu0 0
      %559 = vmatprep.subr.bf16.mxu0 0
      %560 = vmatpush1.bf16.msra.mxu0 0
      %561 = vmatprep.subr.bf16.mxu0 0
      %562 = vmatpush1.bf16.msra.mxu0 0
      %563 = vmatprep.subr.bf16.mxu0 0
      %564 = vmatpush1.bf16.msra.mxu0 0
      %565 = vmatprep.mubr.bf16.mxu0 %v531
      %566 = vmatmul.mubr.bf16.gmra.mrb[0].mxu0 %v328
      %v567 = vpop.f32.mrb[0].mxu0
      %v568 = vadd.f32 0.0, %v567
      %v569 = vpop.f32.mrb[0].mxu0
      %v570 = vadd.f32 0.0, %v569
      %v571 = vpop.f32.mrb[0].mxu0
      %v572 = vpop.f32.mrb[0].mxu0
      %573 = vdwg.mxu0
      %574 = vmatprep.subr.bf16.mxu0 0
      %575 = vmatpush1.bf16.msra.mxu0 %v459
      %576 = vmatprep.subr.bf16.mxu0 0
      %577 = vmatpush1.bf16.msra.mxu0 %v462
      %578 = vmatprep.subr.bf16.mxu0 0
      %579 = vmatpush1.bf16.msra.mxu0 %v465
      %580 = vmatprep.subr.bf16.mxu0 0
      %581 = vmatpush1.bf16.msra.mxu0 %v468
      %582 = vmatprep.subr.bf16.mxu0 0
      %583 = vmatpush1.bf16.msra.mxu0 %v471
      %584 = vmatprep.subr.bf16.mxu0 0
      %585 = vmatpush1.bf16.msra.mxu0 %v474
      %586 = vmatprep.subr.bf16.mxu0 0
      %587 = vmatpush1.bf16.msra.mxu0 %v477
      %588 = vmatprep.subr.bf16.mxu0 0
      %589 = vmatpush1.bf16.msra.mxu0 %v480
      %590 = vmatprep.subr.bf16.mxu0 0
      %591 = vmatpush1.bf16.msra.mxu0 %v483
      %592 = vmatprep.subr.bf16.mxu0 0
      %593 = vmatpush1.bf16.msra.mxu0 %v486
      %594 = vmatprep.subr.bf16.mxu0 0
      %595 = vmatpush1.bf16.msra.mxu0 %v489
      %596 = vmatprep.subr.bf16.mxu0 0
      %597 = vmatpush1.bf16.msra.mxu0 %v492
      %598 = vmatprep.subr.bf16.mxu0 0
      %599 = vmatpush1.bf16.msra.mxu0 0
      %600 = vmatprep.subr.bf16.mxu0 0
      %601 = vmatpush1.bf16.msra.mxu0 0
      %602 = vmatprep.subr.bf16.mxu0 0
      %603 = vmatpush1.bf16.msra.mxu0 0
      %604 = vmatprep.subr.bf16.mxu0 0
      %605 = vmatpush1.bf16.msra.mxu0 0
      %606 = vmatprep.mubr.bf16.mxu0 %v531
      %607 = vmatmul.mubr.bf16.gmra.mrb[0].mxu0 %v328
      %v608 = vpop.f32.mrb[0].mxu0
      %v609 = vadd.f32 0.0, %v608
      %v610 = vpop.f32.mrb[0].mxu0
      %v611 = vpop.f32.mrb[0].mxu0
      %v612 = vpop.f32.mrb[0].mxu0
      %613 = vdwg.mxu0
      %v663 = vunpack.c.l.b16 %v220
      %v664 = vunpack.c.h.b16 %v220
      %v665 = vunpack.c.l.b16 %v221
      %v666 = vunpack.c.l.b16 %v222
      %v667 = vunpack.c.h.b16 %v222
      %v668 = vunpack.c.l.b16 %v223
      %v669 = vunpack.c.l.b16 %v224
      %v670 = vunpack.c.h.b16 %v224
      %v671 = vunpack.c.l.b16 %v225
      %v672 = vunpack.c.l.b16 %v226
      %v673 = vunpack.c.h.b16 %v226
      %v674 = vunpack.c.l.b16 %v227
      %v675 = vunpack.c.l.b16 %v228
      %v676 = vunpack.c.h.b16 %v228
      %v677 = vunpack.c.l.b16 %v229
      %v678 = vunpack.c.l.b16 %v230
      %v679 = vunpack.c.h.b16 %v230
      %v680 = vunpack.c.l.b16 %v231
      %v681 = vunpack.c.l.b16 %v232
      %v682 = vunpack.c.h.b16 %v232
      %v683 = vunpack.c.l.b16 %v233
      %v684 = vunpack.c.l.b16 %v234
      %v685 = vunpack.c.h.b16 %v234
      %v686 = vunpack.c.l.b16 %v235
      %v687 = vunpack.c.l.b16 %v236
      %v688 = vunpack.c.h.b16 %v236
      %v689 = vunpack.c.l.b16 %v237
      %v690 = vunpack.c.l.b16 %v238
      %v691 = vunpack.c.h.b16 %v238
      %v692 = vunpack.c.l.b16 %v239
      %v693 = vunpack.c.l.b16 %v240
      %v694 = vunpack.c.h.b16 %v240
      %v695 = vunpack.c.l.b16 %v241
      %v696 = vunpack.c.l.b16 %v242
      %v697 = vunpack.c.h.b16 %v242
      %v698 = vunpack.c.l.b16 %v243
      %v699 = vunpack.c.l.b16 %v244
      %v700 = vunpack.c.h.b16 %v244
      %v701 = vunpack.c.l.b16 %v245
      %v702 = vunpack.c.l.b16 %v246
      %v703 = vunpack.c.h.b16 %v246
      %v704 = vunpack.c.l.b16 %v247
      %v705 = vunpack.c.l.b16 %v248
      %v706 = vunpack.c.h.b16 %v248
      %v707 = vunpack.c.l.b16 %v249
      %v708 = vunpack.c.l.b16 %v250
      %v709 = vunpack.c.h.b16 %v250
      %v710 = vunpack.c.l.b16 %v251
      %v711 = vunpack.c.l.b16 %v252
      %v712 = vunpack.c.h.b16 %v252
      %v713 = vunpack.c.l.b16 %v253
      %v714 = vunpack.c.l.b16 %v254
      %v715 = vunpack.c.h.b16 %v254
      %v716 = vunpack.c.l.b16 %v255
      %v717 = vunpack.c.l.b16 %v256
      %v718 = vunpack.c.h.b16 %v256
      %v719 = vunpack.c.l.b16 %v257
      %v720 = vunpack.c.l.b16 %v258
      %v721 = vunpack.c.h.b16 %v258
      %v722 = vunpack.c.l.b16 %v259
      %v723 = vunpack.c.l.b16 %v260
      %v724 = vunpack.c.h.b16 %v260
      %v725 = vunpack.c.l.b16 %v261
      %v726 = vunpack.c.l.b16 %v262
      %v727 = vunpack.c.h.b16 %v262
      %v728 = vunpack.c.l.b16 %v263
      %v729 = vunpack.c.l.b16 %v264
      %v730 = vunpack.c.h.b16 %v264
      %v731 = vunpack.c.l.b16 %v265
      %v732 = vunpack.c.l.b16 %v266
      %v733 = vunpack.c.h.b16 %v266
      %v734 = vunpack.c.l.b16 %v267
      %v735 = vpack.c.b16 %v666, %v663
      %v736 = vpack.c.b16 %v667, %v664
      %v737 = vpack.c.b16 %v668, %v665
      %v738 = vpack.c.b16 %v672, %v669
      %v739 = vpack.c.b16 %v673, %v670
      %v740 = vpack.c.b16 %v674, %v671
      %v741 = vpack.c.b16 %v678, %v675
      %v742 = vpack.c.b16 %v679, %v676
      %v743 = vpack.c.b16 %v680, %v677
      %v744 = vpack.c.b16 %v684, %v681
      %v745 = vpack.c.b16 %v685, %v682
      %v746 = vpack.c.b16 %v686, %v683
      %v747 = vpack.c.b16 %v690, %v687
      %v748 = vpack.c.b16 %v691, %v688
      %v749 = vpack.c.b16 %v692, %v689
      %v750 = vpack.c.b16 %v696, %v693
      %v751 = vpack.c.b16 %v697, %v694
      %v752 = vpack.c.b16 %v698, %v695
      %v753 = vpack.c.b16 %v702, %v699
      %v754 = vpack.c.b16 %v703, %v700
      %v755 = vpack.c.b16 %v704, %v701
      %v756 = vpack.c.b16 %v708, %v705
      %v757 = vpack.c.b16 %v709, %v706
      %v758 = vpack.c.b16 %v710, %v707
      %v759 = vpack.c.b16 %v714, %v711
      %v760 = vpack.c.b16 %v715, %v712
      %v761 = vpack.c.b16 %v716, %v713
      %v762 = vpack.c.b16 %v720, %v717
      %v763 = vpack.c.b16 %v721, %v718
      %v764 = vpack.c.b16 %v722, %v719
      %v765 = vpack.c.b16 %v726, %v723
      %v766 = vpack.c.b16 %v727, %v724
      %v767 = vpack.c.b16 %v728, %v725
      %v768 = vpack.c.b16 %v732, %v729
      %v769 = vpack.c.b16 %v733, %v730
      %v770 = vpack.c.b16 %v734, %v731
      %v807 = vsel %vm529, %v321, 0
      %809 = vmatprep.subr.bf16.mxu0 %v736
      %810 = vmatpush1.bf16.msra.mxu0 %v735
      %811 = vmatprep.subr.bf16.mxu0 %v739
      %812 = vmatpush1.bf16.msra.mxu0 %v738
      %813 = vmatprep.subr.bf16.mxu0 %v742
      %814 = vmatpush1.bf16.msra.mxu0 %v741
      %815 = vmatprep.subr.bf16.mxu0 %v745
      %816 = vmatpush1.bf16.msra.mxu0 %v744
      %817 = vmatprep.subr.bf16.mxu0 %v748
      %818 = vmatpush1.bf16.msra.mxu0 %v747
      %819 = vmatprep.subr.bf16.mxu0 %v751
      %820 = vmatpush1.bf16.msra.mxu0 %v750
      %821 = vmatprep.subr.bf16.mxu0 %v754
      %822 = vmatpush1.bf16.msra.mxu0 %v753
      %823 = vmatprep.subr.bf16.mxu0 %v757
      %824 = vmatpush1.bf16.msra.mxu0 %v756
      %825 = vmatprep.subr.bf16.mxu0 %v760
      %826 = vmatpush1.bf16.msra.mxu0 %v759
      %827 = vmatprep.subr.bf16.mxu0 %v763
      %828 = vmatpush1.bf16.msra.mxu0 %v762
      %829 = vmatprep.subr.bf16.mxu0 %v766
      %830 = vmatpush1.bf16.msra.mxu0 %v765
      %831 = vmatprep.subr.bf16.mxu0 %v769
      %832 = vmatpush1.bf16.msra.mxu0 %v768
      %833 = vmatprep.subr.bf16.mxu0 0
      %834 = vmatpush1.bf16.msra.mxu0 0
      %835 = vmatprep.subr.bf16.mxu0 0
      %836 = vmatpush1.bf16.msra.mxu0 0
      %837 = vmatprep.subr.bf16.mxu0 0
      %838 = vmatpush1.bf16.msra.mxu0 0
      %839 = vmatprep.subr.bf16.mxu0 0
      %840 = vmatpush1.bf16.msra.mxu0 0
      %841 = vmatprep.mubr.bf16.mxu0 %v807
      %842 = vmatmul.mubr.bf16.gmra.mrb[0].mxu0 %v320
      %v843 = vpop.f32.mrb[0].mxu0
      %v844 = vadd.f32 %v568, %v843
      %v845 = vpop.f32.mrb[0].mxu0
      %v846 = vadd.f32 %v570, %v845
      %v847 = vpop.f32.mrb[0].mxu0
      %v848 = vpop.f32.mrb[0].mxu0
      %849 = vdwg.mxu0
      %850 = vmatprep.subr.bf16.mxu0 0
      %851 = vmatpush1.bf16.msra.mxu0 %v737
      %852 = vmatprep.subr.bf16.mxu0 0
      %853 = vmatpush1.bf16.msra.mxu0 %v740
      %854 = vmatprep.subr.bf16.mxu0 0
      %855 = vmatpush1.bf16.msra.mxu0 %v743
      %856 = vmatprep.subr.bf16.mxu0 0
      %857 = vmatpush1.bf16.msra.mxu0 %v746
      %858 = vmatprep.subr.bf16.mxu0 0
      %859 = vmatpush1.bf16.msra.mxu0 %v749
      %860 = vmatprep.subr.bf16.mxu0 0
      %861 = vmatpush1.bf16.msra.mxu0 %v752
      %862 = vmatprep.subr.bf16.mxu0 0
      %863 = vmatpush1.bf16.msra.mxu0 %v755
      %864 = vmatprep.subr.bf16.mxu0 0
      %865 = vmatpush1.bf16.msra.mxu0 %v758
      %866 = vmatprep.subr.bf16.mxu0 0
      %867 = vmatpush1.bf16.msra.mxu0 %v761
      %868 = vmatprep.subr.bf16.mxu0 0
      %869 = vmatpush1.bf16.msra.mxu0 %v764
      %870 = vmatprep.subr.bf16.mxu0 0
      %871 = vmatpush1.bf16.msra.mxu0 %v767
      %872 = vmatprep.subr.bf16.mxu0 0
      %873 = vmatpush1.bf16.msra.mxu0 %v770
      %874 = vmatprep.subr.bf16.mxu0 0
      %875 = vmatpush1.bf16.msra.mxu0 0
      %876 = vmatprep.subr.bf16.mxu0 0
      %877 = vmatpush1.bf16.msra.mxu0 0
      %878 = vmatprep.subr.bf16.mxu0 0
      %879 = vmatpush1.bf16.msra.mxu0 0
      %880 = vmatprep.subr.bf16.mxu0 0
      %881 = vmatpush1.bf16.msra.mxu0 0
      %882 = vmatprep.mubr.bf16.mxu0 %v807
      %883 = vmatmul.mubr.bf16.gmra.mrb[0].mxu0 %v320
      %v884 = vpop.f32.mrb[0].mxu0
      %v885 = vadd.f32 %v609, %v884
      %v886 = vpop.f32.mrb[0].mxu0
      %v887 = vpop.f32.mrb[0].mxu0
      %v888 = vpop.f32.mrb[0].mxu0
      %889 = vdwg.mxu0
      %s890 = scalar_lea.vmem %s204, 576
      %v891 = vld [vmem:[%s890] sm:$0xff]
      %v892 = vld [vmem:[%s890 + $0x8] sm:$0xf]
      %v893 = vld [vmem:[%s890 + $0xc] sm:$0xff]
      %v894 = vld [vmem:[%s890 + $0x14] sm:$0xf]
      %v895 = vld [vmem:[%s890 + $0x18] sm:$0xff]
      %v896 = vld [vmem:[%s890 + $0x20] sm:$0xf]
      %v897 = vld [vmem:[%s890 + $0x24] sm:$0xff]
      %v898 = vld [vmem:[%s890 + $0x2c] sm:$0xf]
      %v899 = vld [vmem:[%s890 + $0x30] sm:$0xff]
      %v900 = vld [vmem:[%s890 + $0x38] sm:$0xf]
      %v901 = vld [vmem:[%s890 + $0x3c] sm:$0xff]
      %v902 = vld [vmem:[%s890 + $0x44] sm:$0xf]
      %v903 = vld [vmem:[%s890 + $0x48] sm:$0xff]
      %v904 = vld [vmem:[%s890 + $0x50] sm:$0xf]
      %v905 = vld [vmem:[%s890 + $0x54] sm:$0xff]
      %v906 = vld [vmem:[%s890 + $0x5c] sm:$0xf]
      %v907 = vld [vmem:[%s890 + $0x60] sm:$0xff]
      %v908 = vld [vmem:[%s890 + $0x68] sm:$0xf]
      %v909 = vld [vmem:[%s890 + $0x6c] sm:$0xff]
      %v910 = vld [vmem:[%s890 + $0x74] sm:$0xf]
      %v911 = vld [vmem:[%s890 + $0x78] sm:$0xff]
      %v912 = vld [vmem:[%s890 + $0x80] sm:$0xf]
      %v913 = vld [vmem:[%s890 + $0x84] sm:$0xff]
      %v914 = vld [vmem:[%s890 + $0x8c] sm:$0xf]
      %v915 = vld [vmem:[%s890 + $0x90] sm:$0xff]
      %v916 = vld [vmem:[%s890 + $0x98] sm:$0xf]
      %v917 = vld [vmem:[%s890 + $0x9c] sm:$0xff]
      %v918 = vld [vmem:[%s890 + $0xa4] sm:$0xf]
      %v919 = vld [vmem:[%s890 + $0xa8] sm:$0xff]
      %v920 = vld [vmem:[%s890 + $0xb0] sm:$0xf]
      %v921 = vld [vmem:[%s890 + $0xb4] sm:$0xff]
      %v922 = vld [vmem:[%s890 + $0xbc] sm:$0xf]
      %v923 = vld [vmem:[%s890 + $0xc0] sm:$0xff]
      %v924 = vld [vmem:[%s890 + $0xc8] sm:$0xf]
      %v925 = vld [vmem:[%s890 + $0xcc] sm:$0xff]
      %v926 = vld [vmem:[%s890 + $0xd4] sm:$0xf]
      %v927 = vld [vmem:[%s890 + $0xd8] sm:$0xff]
      %v928 = vld [vmem:[%s890 + $0xe0] sm:$0xf]
      %v929 = vld [vmem:[%s890 + $0xe4] sm:$0xff]
      %v930 = vld [vmem:[%s890 + $0xec] sm:$0xf]
      %v931 = vld [vmem:[%s890 + $0xf0] sm:$0xff]
      %v932 = vld [vmem:[%s890 + $0xf8] sm:$0xf]
      %v933 = vld [vmem:[%s890 + $0xfc] sm:$0xff]
      %v934 = vld [vmem:[%s890 + $0x104] sm:$0xf]
      %v935 = vld [vmem:[%s890 + $0x108] sm:$0xff]
      %v936 = vld [vmem:[%s890 + $0x110] sm:$0xf]
      %v937 = vld [vmem:[%s890 + $0x114] sm:$0xff]
      %v938 = vld [vmem:[%s890 + $0x11c] sm:$0xf]
      %v939 = vrot.slane %v320, 1
      %v940 = vrot.slane %v321, 1
      %v990 = vunpack.c.l.b16 %v891
      %v991 = vunpack.c.h.b16 %v891
      %v992 = vunpack.c.l.b16 %v892
      %v993 = vunpack.c.l.b16 %v893
      %v994 = vunpack.c.h.b16 %v893
      %v995 = vunpack.c.l.b16 %v894
      %v996 = vunpack.c.l.b16 %v895
      %v997 = vunpack.c.h.b16 %v895
      %v998 = vunpack.c.l.b16 %v896
      %v999 = vunpack.c.l.b16 %v897
      %v1000 = vunpack.c.h.b16 %v897
      %v1001 = vunpack.c.l.b16 %v898
      %v1002 = vunpack.c.l.b16 %v899
      %v1003 = vunpack.c.h.b16 %v899
      %v1004 = vunpack.c.l.b16 %v900
      %v1005 = vunpack.c.l.b16 %v901
      %v1006 = vunpack.c.h.b16 %v901
      %v1007 = vunpack.c.l.b16 %v902
      %v1008 = vunpack.c.l.b16 %v903
      %v1009 = vunpack.c.h.b16 %v903
      %v1010 = vunpack.c.l.b16 %v904
      %v1011 = vunpack.c.l.b16 %v905
      %v1012 = vunpack.c.h.b16 %v905
      %v1013 = vunpack.c.l.b16 %v906
      %v1014 = vunpack.c.l.b16 %v907
      %v1015 = vunpack.c.h.b16 %v907
      %v1016 = vunpack.c.l.b16 %v908
      %v1017 = vunpack.c.l.b16 %v909
      %v1018 = vunpack.c.h.b16 %v909
      %v1019 = vunpack.c.l.b16 %v910
      %v1020 = vunpack.c.l.b16 %v911
      %v1021 = vunpack.c.h.b16 %v911
      %v1022 = vunpack.c.l.b16 %v912
      %v1023 = vunpack.c.l.b16 %v913
      %v1024 = vunpack.c.h.b16 %v913
      %v1025 = vunpack.c.l.b16 %v914
      %v1026 = vunpack.c.l.b16 %v915
      %v1027 = vunpack.c.h.b16 %v915
      %v1028 = vunpack.c.l.b16 %v916
      %v1029 = vunpack.c.l.b16 %v917
      %v1030 = vunpack.c.h.b16 %v917
      %v1031 = vunpack.c.l.b16 %v918
      %v1032 = vunpack.c.l.b16 %v919
      %v1033 = vunpack.c.h.b16 %v919
      %v1034 = vunpack.c.l.b16 %v920
      %v1035 = vunpack.c.l.b16 %v921
      %v1036 = vunpack.c.h.b16 %v921
      %v1037 = vunpack.c.l.b16 %v922
      %v1038 = vunpack.c.l.b16 %v923
      %v1039 = vunpack.c.h.b16 %v923
      %v1040 = vunpack.c.l.b16 %v924
      %v1041 = vunpack.c.l.b16 %v925
      %v1042 = vunpack.c.h.b16 %v925
      %v1043 = vunpack.c.l.b16 %v926
      %v1044 = vunpack.c.l.b16 %v927
      %v1045 = vunpack.c.h.b16 %v927
      %v1046 = vunpack.c.l.b16 %v928
      %v1047 = vunpack.c.l.b16 %v929
      %v1048 = vunpack.c.h.b16 %v929
      %v1049 = vunpack.c.l.b16 %v930
      %v1050 = vunpack.c.l.b16 %v931
      %v1051 = vunpack.c.h.b16 %v931
      %v1052 = vunpack.c.l.b16 %v932
      %v1053 = vunpack.c.l.b16 %v933
      %v1054 = vunpack.c.h.b16 %v933
      %v1055 = vunpack.c.l.b16 %v934
      %v1056 = vunpack.c.l.b16 %v935
      %v1057 = vunpack.c.h.b16 %v935
      %v1058 = vunpack.c.l.b16 %v936
      %v1059 = vunpack.c.l.b16 %v937
      %v1060 = vunpack.c.h.b16 %v937
      %v1061 = vunpack.c.l.b16 %v938
      %v1062 = vpack.c.b16 %v993, %v990
      %v1063 = vpack.c.b16 %v994, %v991
      %v1064 = vpack.c.b16 %v995, %v992
      %v1065 = vpack.c.b16 %v999, %v996
      %v1066 = vpack.c.b16 %v1000, %v997
      %v1067 = vpack.c.b16 %v1001, %v998
      %v1068 = vpack.c.b16 %v1005, %v1002
      %v1069 = vpack.c.b16 %v1006, %v1003
      %v1070 = vpack.c.b16 %v1007, %v1004
      %v1071 = vpack.c.b16 %v1011, %v1008
      %v1072 = vpack.c.b16 %v1012, %v1009
      %v1073 = vpack.c.b16 %v1013, %v1010
      %v1074 = vpack.c.b16 %v1017, %v1014
      %v1075 = vpack.c.b16 %v1018, %v1015
      %v1076 = vpack.c.b16 %v1019, %v1016
      %v1077 = vpack.c.b16 %v1023, %v1020
      %v1078 = vpack.c.b16 %v1024, %v1021
      %v1079 = vpack.c.b16 %v1025, %v1022
      %v1080 = vpack.c.b16 %v1029, %v1026
      %v1081 = vpack.c.b16 %v1030, %v1027
      %v1082 = vpack.c.b16 %v1031, %v1028
      %v1083 = vpack.c.b16 %v1035, %v1032
      %v1084 = vpack.c.b16 %v1036, %v1033
      %v1085 = vpack.c.b16 %v1037, %v1034
      %v1086 = vpack.c.b16 %v1041, %v1038
      %v1087 = vpack.c.b16 %v1042, %v1039
      %v1088 = vpack.c.b16 %v1043, %v1040
      %v1089 = vpack.c.b16 %v1047, %v1044
      %v1090 = vpack.c.b16 %v1048, %v1045
      %v1091 = vpack.c.b16 %v1049, %v1046
      %v1092 = vpack.c.b16 %v1053, %v1050
      %v1093 = vpack.c.b16 %v1054, %v1051
      %v1094 = vpack.c.b16 %v1055, %v1052
      %v1095 = vpack.c.b16 %v1059, %v1056
      %v1096 = vpack.c.b16 %v1060, %v1057
      %v1097 = vpack.c.b16 %v1061, %v1058
      %v1135 = vsel %vm529, %v940, 0
      %1137 = vmatprep.subr.bf16.mxu0 %v1063
      %1138 = vmatpush1.bf16.msra.mxu0 %v1062
      %1139 = vmatprep.subr.bf16.mxu0 %v1066
      %1140 = vmatpush1.bf16.msra.mxu0 %v1065
      %1141 = vmatprep.subr.bf16.mxu0 %v1069
      %1142 = vmatpush1.bf16.msra.mxu0 %v1068
      %1143 = vmatprep.subr.bf16.mxu0 %v1072
      %1144 = vmatpush1.bf16.msra.mxu0 %v1071
      %1145 = vmatprep.subr.bf16.mxu0 %v1075
      %1146 = vmatpush1.bf16.msra.mxu0 %v1074
      %1147 = vmatprep.subr.bf16.mxu0 %v1078
      %1148 = vmatpush1.bf16.msra.mxu0 %v1077
      %1149 = vmatprep.subr.bf16.mxu0 %v1081
      %1150 = vmatpush1.bf16.msra.mxu0 %v1080
      %1151 = vmatprep.subr.bf16.mxu0 %v1084
      %1152 = vmatpush1.bf16.msra.mxu0 %v1083
      %1153 = vmatprep.subr.bf16.mxu0 %v1087
      %1154 = vmatpush1.bf16.msra.mxu0 %v1086
      %1155 = vmatprep.subr.bf16.mxu0 %v1090
      %1156 = vmatpush1.bf16.msra.mxu0 %v1089
      %1157 = vmatprep.subr.bf16.mxu0 %v1093
      %1158 = vmatpush1.bf16.msra.mxu0 %v1092
      %1159 = vmatprep.subr.bf16.mxu0 %v1096
      %1160 = vmatpush1.bf16.msra.mxu0 %v1095
      %1161 = vmatprep.subr.bf16.mxu0 0
      %1162 = vmatpush1.bf16.msra.mxu0 0
      %1163 = vmatprep.subr.bf16.mxu0 0
      %1164 = vmatpush1.bf16.msra.mxu0 0
      %1165 = vmatprep.subr.bf16.mxu0 0
      %1166 = vmatpush1.bf16.msra.mxu0 0
      %1167 = vmatprep.subr.bf16.mxu0 0
      %1168 = vmatpush1.bf16.msra.mxu0 0
      %1169 = vmatprep.mubr.bf16.mxu0 %v1135
      %1170 = vmatmul.mubr.bf16.gmra.mrb[0].mxu0 %v939
      %v1171 = vpop.f32.mrb[0].mxu0
      %v1172 = vadd.f32 0.0, %v1171
      %v1173 = vpop.f32.mrb[0].mxu0
      %v1174 = vadd.f32 0.0, %v1173
      %v1175 = vpop.f32.mrb[0].mxu0
      %v1176 = vpop.f32.mrb[0].mxu0
      %1177 = vdwg.mxu0
      %1178 = vmatprep.subr.bf16.mxu0 0
      %1179 = vmatpush1.bf16.msra.mxu0 %v1064
      %1180 = vmatprep.subr.bf16.mxu0 0
      %1181 = vmatpush1.bf16.msra.mxu0 %v1067
      %1182 = vmatprep.subr.bf16.mxu0 0
      %1183 = vmatpush1.bf16.msra.mxu0 %v1070
      %1184 = vmatprep.subr.bf16.mxu0 0
      %1185 = vmatpush1.bf16.msra.mxu0 %v1073
      %1186 = vmatprep.subr.bf16.mxu0 0
      %1187 = vmatpush1.bf16.msra.mxu0 %v1076
      %1188 = vmatprep.subr.bf16.mxu0 0
      %1189 = vmatpush1.bf16.msra.mxu0 %v1079
      %1190 = vmatprep.subr.bf16.mxu0 0
      %1191 = vmatpush1.bf16.msra.mxu0 %v1082
      %1192 = vmatprep.subr.bf16.mxu0 0
      %1193 = vmatpush1.bf16.msra.mxu0 %v1085
      %1194 = vmatprep.subr.bf16.mxu0 0
      %1195 = vmatpush1.bf16.msra.mxu0 %v1088
      %1196 = vmatprep.subr.bf16.mxu0 0
      %1197 = vmatpush1.bf16.msra.mxu0 %v1091
      %1198 = vmatprep.subr.bf16.mxu0 0
      %1199 = vmatpush1.bf16.msra.mxu0 %v1094
      %1200 = vmatprep.subr.bf16.mxu0 0
      %1201 = vmatpush1.bf16.msra.mxu0 %v1097
      %1202 = vmatprep.subr.bf16.mxu0 0
      %1203 = vmatpush1.bf16.msra.mxu0 0
      %1204 = vmatprep.subr.bf16.mxu0 0
      %1205 = vmatpush1.bf16.msra.mxu0 0
      %1206 = vmatprep.subr.bf16.mxu0 0
      %1207 = vmatpush1.bf16.msra.mxu0 0
      %1208 = vmatprep.subr.bf16.mxu0 0
      %1209 = vmatpush1.bf16.msra.mxu0 0
      %1210 = vmatprep.mubr.bf16.mxu0 %v1135
      %1211 = vmatmul.mubr.bf16.gmra.mrb[0].mxu0 %v939
      %v1212 = vpop.f32.mrb[0].mxu0
      %v1213 = vadd.f32 0.0, %v1212
      %v1214 = vpop.f32.mrb[0].mxu0
      %v1215 = vpop.f32.mrb[0].mxu0
      %v1216 = vpop.f32.mrb[0].mxu0
      %1217 = vdwg.mxu0
      %v1218 = vadd.f32 %v844, %v1172
      %v1219 = vadd.f32 %v846, %v1174
      %v1220 = vadd.f32 %v885, %v1213
      %v1221 = vld [vmem:[#allocation2] sm:$0x77]
      %v1222 = vld [vmem:[#allocation2 + $0x8] sm:$0x7]
      %v1225 = vcombine.low %v1218, %v1219
      %v1227 = vadd.f32 %v1221, %v1225
      %v1228 = vadd.f32 %v1222, %v1220
      %1229 = vst [vmem:[#allocation2] sm:$0x77] %v1227
      %1230 = vst [vmem:[#allocation2 + $0x8] sm:$0x7] %v1228
      %s1231 = scalar_lea.vmem %s198, 8
      %v1232 = vld [vmem:[%s1231] sm:$0x77]
      %v1233 = vld [vmem:[%s204] sm:$0xff]
      %v1234 = vld [vmem:[%s204 + $0x8] sm:$0xf]
      %v1235 = vld [vmem:[%s204 + $0xc] sm:$0xff]
      %v1236 = vld [vmem:[%s204 + $0x14] sm:$0xf]
      %v1237 = vld [vmem:[%s204 + $0x18] sm:$0xff]
      %v1238 = vld [vmem:[%s204 + $0x20] sm:$0xf]
      %v1239 = vld [vmem:[%s204 + $0x24] sm:$0xff]
      %v1240 = vld [vmem:[%s204 + $0x2c] sm:$0xf]
      %v1241 = vld [vmem:[%s204 + $0x30] sm:$0xff]
      %v1242 = vld [vmem:[%s204 + $0x38] sm:$0xf]
      %v1243 = vld [vmem:[%s204 + $0x3c] sm:$0xff]
      %v1244 = vld [vmem:[%s204 + $0x44] sm:$0xf]
      %v1245 = vld [vmem:[%s204 + $0x48] sm:$0xff]
      %v1246 = vld [vmem:[%s204 + $0x50] sm:$0xf]
      %v1247 = vld [vmem:[%s204 + $0x54] sm:$0xff]
      %v1248 = vld [vmem:[%s204 + $0x5c] sm:$0xf]
      %v1249 = vld [vmem:[%s204 + $0x60] sm:$0xff]
      %v1250 = vld [vmem:[%s204 + $0x68] sm:$0xf]
      %v1251 = vld [vmem:[%s204 + $0x6c] sm:$0xff]
      %v1252 = vld [vmem:[%s204 + $0x74] sm:$0xf]
      %v1253 = vld [vmem:[%s204 + $0x78] sm:$0xff]
      %v1254 = vld [vmem:[%s204 + $0x80] sm:$0xf]
      %v1255 = vld [vmem:[%s204 + $0x84] sm:$0xff]
      %v1256 = vld [vmem:[%s204 + $0x8c] sm:$0xf]
      %v1257 = vld [vmem:[%s204 + $0x90] sm:$0xff]
      %v1258 = vld [vmem:[%s204 + $0x98] sm:$0xf]
      %v1259 = vld [vmem:[%s204 + $0x9c] sm:$0xff]
      %v1260 = vld [vmem:[%s204 + $0xa4] sm:$0xf]
      %v1261 = vld [vmem:[%s204 + $0xa8] sm:$0xff]
      %v1262 = vld [vmem:[%s204 + $0xb0] sm:$0xf]
      %v1263 = vld [vmem:[%s204 + $0xb4] sm:$0xff]
      %v1264 = vld [vmem:[%s204 + $0xbc] sm:$0xf]
      %v1265 = vld [vmem:[%s204 + $0xc0] sm:$0xff]
      %v1266 = vld [vmem:[%s204 + $0xc8] sm:$0xf]
      %v1267 = vld [vmem:[%s204 + $0xcc] sm:$0xff]
      %v1268 = vld [vmem:[%s204 + $0xd4] sm:$0xf]
      %v1269 = vld [vmem:[%s204 + $0xd8] sm:$0xff]
      %v1270 = vld [vmem:[%s204 + $0xe0] sm:$0xf]
      %v1271 = vld [vmem:[%s204 + $0xe4] sm:$0xff]
      %v1272 = vld [vmem:[%s204 + $0xec] sm:$0xf]
      %v1273 = vld [vmem:[%s204 + $0xf0] sm:$0xff]
      %v1274 = vld [vmem:[%s204 + $0xf8] sm:$0xf]
      %v1275 = vld [vmem:[%s204 + $0xfc] sm:$0xff]
      %v1276 = vld [vmem:[%s204 + $0x104] sm:$0xf]
      %v1277 = vld [vmem:[%s204 + $0x108] sm:$0xff]
      %v1278 = vld [vmem:[%s204 + $0x110] sm:$0xf]
      %v1279 = vld [vmem:[%s204 + $0x114] sm:$0xff]
      %v1280 = vld [vmem:[%s204 + $0x11c] sm:$0xf]
      %v1281 = vld [vmem:[%s268] sm:$0xff]
      %v1282 = vld [vmem:[%s268 + $0x8] sm:$0xf]
      %v1283 = vld [vmem:[%s268 + $0xc] sm:$0xff]
      %v1284 = vld [vmem:[%s268 + $0x14] sm:$0xf]
      %v1285 = vld [vmem:[%s268 + $0x18] sm:$0xff]
      %v1286 = vld [vmem:[%s268 + $0x20] sm:$0xf]
      %v1287 = vld [vmem:[%s268 + $0x24] sm:$0xff]
      %v1288 = vld [vmem:[%s268 + $0x2c] sm:$0xf]
      %v1289 = vld [vmem:[%s268 + $0x30] sm:$0xff]
      %v1290 = vld [vmem:[%s268 + $0x38] sm:$0xf]
      %v1291 = vld [vmem:[%s268 + $0x3c] sm:$0xff]
      %v1292 = vld [vmem:[%s268 + $0x44] sm:$0xf]
      %v1293 = vld [vmem:[%s268 + $0x48] sm:$0xff]
      %v1294 = vld [vmem:[%s268 + $0x50] sm:$0xf]
      %v1295 = vld [vmem:[%s268 + $0x54] sm:$0xff]
      %v1296 = vld [vmem:[%s268 + $0x5c] sm:$0xf]
      %v1297 = vld [vmem:[%s268 + $0x60] sm:$0xff]
      %v1298 = vld [vmem:[%s268 + $0x68] sm:$0xf]
      %v1299 = vld [vmem:[%s268 + $0x6c] sm:$0xff]
      %v1300 = vld [vmem:[%s268 + $0x74] sm:$0xf]
      %v1301 = vld [vmem:[%s268 + $0x78] sm:$0xff]
      %v1302 = vld [vmem:[%s268 + $0x80] sm:$0xf]
      %v1303 = vld [vmem:[%s268 + $0x84] sm:$0xff]
      %v1304 = vld [vmem:[%s268 + $0x8c] sm:$0xf]
      %v1305 = vld [vmem:[%s268 + $0x90] sm:$0xff]
      %v1306 = vld [vmem:[%s268 + $0x98] sm:$0xf]
      %v1307 = vld [vmem:[%s268 + $0x9c] sm:$0xff]
      %v1308 = vld [vmem:[%s268 + $0xa4] sm:$0xf]
      %v1309 = vld [vmem:[%s268 + $0xa8] sm:$0xff]
      %v1310 = vld [vmem:[%s268 + $0xb0] sm:$0xf]
      %v1311 = vld [vmem:[%s268 + $0xb4] sm:$0xff]
      %v1312 = vld [vmem:[%s268 + $0xbc] sm:$0xf]
      %v1313 = vld [vmem:[%s268 + $0xc0] sm:$0xff]
      %v1314 = vld [vmem:[%s268 + $0xc8] sm:$0xf]
      %v1315 = vld [vmem:[%s268 + $0xcc] sm:$0xff]
      %v1316 = vld [vmem:[%s268 + $0xd4] sm:$0xf]
      %v1317 = vld [vmem:[%s268 + $0xd8] sm:$0xff]
      %v1318 = vld [vmem:[%s268 + $0xe0] sm:$0xf]
      %v1319 = vld [vmem:[%s268 + $0xe4] sm:$0xff]
      %v1320 = vld [vmem:[%s268 + $0xec] sm:$0xf]
      %v1321 = vld [vmem:[%s268 + $0xf0] sm:$0xff]
      %v1322 = vld [vmem:[%s268 + $0xf8] sm:$0xf]
      %v1323 = vld [vmem:[%s268 + $0xfc] sm:$0xff]
      %v1324 = vld [vmem:[%s268 + $0x104] sm:$0xf]
      %v1325 = vld [vmem:[%s268 + $0x108] sm:$0xff]
      %v1326 = vld [vmem:[%s268 + $0x110] sm:$0xf]
      %v1327 = vld [vmem:[%s268 + $0x114] sm:$0xff]
      %v1328 = vld [vmem:[%s268 + $0x11c] sm:$0xf]
      %v1330 = vunpack.c.l.b16 %v1232
      %v1331 = vunpack.c.h.b16 %v1232
      %v1332 = vpack.c.b16 %v1330, %v1330
      %v1333 = vpack.c.b16 %v1331, %v1331
      %v1335 = vshrl.u32 %v1332, 16
      %v1337 = vshll.u32 %v1332, 16
      %v1339 = vrot.slane %v1337, 1
      %v1340 = vor.u32 %v1335, %v1339
      %v1342 = vshrl.u32 %v1333, 16
      %v1344 = vshll.u32 %v1333, 16
      %v1346 = vrot.slane %v1344, 1
      %v1347 = vor.u32 %v1342, %v1346
      %v1397 = vunpack.c.l.b16 %v1281
      %v1398 = vunpack.c.h.b16 %v1281
      %v1399 = vunpack.c.l.b16 %v1282
      %v1400 = vunpack.c.l.b16 %v1283
      %v1401 = vunpack.c.h.b16 %v1283
      %v1402 = vunpack.c.l.b16 %v1284
      %v1403 = vunpack.c.l.b16 %v1285
      %v1404 = vunpack.c.h.b16 %v1285
      %v1405 = vunpack.c.l.b16 %v1286
      %v1406 = vunpack.c.l.b16 %v1287
      %v1407 = vunpack.c.h.b16 %v1287
      %v1408 = vunpack.c.l.b16 %v1288
      %v1409 = vunpack.c.l.b16 %v1289
      %v1410 = vunpack.c.h.b16 %v1289
      %v1411 = vunpack.c.l.b16 %v1290
      %v1412 = vunpack.c.l.b16 %v1291
      %v1413 = vunpack.c.h.b16 %v1291
      %v1414 = vunpack.c.l.b16 %v1292
      %v1415 = vunpack.c.l.b16 %v1293
      %v1416 = vunpack.c.h.b16 %v1293
      %v1417 = vunpack.c.l.b16 %v1294
      %v1418 = vunpack.c.l.b16 %v1295
      %v1419 = vunpack.c.h.b16 %v1295
      %v1420 = vunpack.c.l.b16 %v1296
      %v1421 = vunpack.c.l.b16 %v1297
      %v1422 = vunpack.c.h.b16 %v1297
      %v1423 = vunpack.c.l.b16 %v1298
      %v1424 = vunpack.c.l.b16 %v1299
      %v1425 = vunpack.c.h.b16 %v1299
      %v1426 = vunpack.c.l.b16 %v1300
      %v1427 = vunpack.c.l.b16 %v1301
      %v1428 = vunpack.c.h.b16 %v1301
      %v1429 = vunpack.c.l.b16 %v1302
      %v1430 = vunpack.c.l.b16 %v1303
      %v1431 = vunpack.c.h.b16 %v1303
      %v1432 = vunpack.c.l.b16 %v1304
      %v1433 = vunpack.c.l.b16 %v1305
      %v1434 = vunpack.c.h.b16 %v1305
      %v1435 = vunpack.c.l.b16 %v1306
      %v1436 = vunpack.c.l.b16 %v1307
      %v1437 = vunpack.c.h.b16 %v1307
      %v1438 = vunpack.c.l.b16 %v1308
      %v1439 = vunpack.c.l.b16 %v1309
      %v1440 = vunpack.c.h.b16 %v1309
      %v1441 = vunpack.c.l.b16 %v1310
      %v1442 = vunpack.c.l.b16 %v1311
      %v1443 = vunpack.c.h.b16 %v1311
      %v1444 = vunpack.c.l.b16 %v1312
      %v1445 = vunpack.c.l.b16 %v1313
      %v1446 = vunpack.c.h.b16 %v1313
      %v1447 = vunpack.c.l.b16 %v1314
      %v1448 = vunpack.c.l.b16 %v1315
      %v1449 = vunpack.c.h.b16 %v1315
      %v1450 = vunpack.c.l.b16 %v1316
      %v1451 = vunpack.c.l.b16 %v1317
      %v1452 = vunpack.c.h.b16 %v1317
      %v1453 = vunpack.c.l.b16 %v1318
      %v1454 = vunpack.c.l.b16 %v1319
      %v1455 = vunpack.c.h.b16 %v1319
      %v1456 = vunpack.c.l.b16 %v1320
      %v1457 = vunpack.c.l.b16 %v1321
      %v1458 = vunpack.c.h.b16 %v1321
      %v1459 = vunpack.c.l.b16 %v1322
      %v1460 = vunpack.c.l.b16 %v1323
      %v1461 = vunpack.c.h.b16 %v1323
      %v1462 = vunpack.c.l.b16 %v1324
      %v1463 = vunpack.c.l.b16 %v1325
      %v1464 = vunpack.c.h.b16 %v1325
      %v1465 = vunpack.c.l.b16 %v1326
      %v1466 = vunpack.c.l.b16 %v1327
      %v1467 = vunpack.c.h.b16 %v1327
      %v1468 = vunpack.c.l.b16 %v1328
      %v1469 = vpack.c.b16 %v1400, %v1397
      %v1470 = vpack.c.b16 %v1401, %v1398
      %v1471 = vpack.c.b16 %v1402, %v1399
      %v1472 = vpack.c.b16 %v1406, %v1403
      %v1473 = vpack.c.b16 %v1407, %v1404
      %v1474 = vpack.c.b16 %v1408, %v1405
      %v1475 = vpack.c.b16 %v1412, %v1409
      %v1476 = vpack.c.b16 %v1413, %v1410
      %v1477 = vpack.c.b16 %v1414, %v1411
      %v1478 = vpack.c.b16 %v1418, %v1415
      %v1479 = vpack.c.b16 %v1419, %v1416
      %v1480 = vpack.c.b16 %v1420, %v1417
      %v1481 = vpack.c.b16 %v1424, %v1421
      %v1482 = vpack.c.b16 %v1425, %v1422
      %v1483 = vpack.c.b16 %v1426, %v1423
      %v1484 = vpack.c.b16 %v1430, %v1427
      %v1485 = vpack.c.b16 %v1431, %v1428
      %v1486 = vpack.c.b16 %v1432, %v1429
      %v1487 = vpack.c.b16 %v1436, %v1433
      %v1488 = vpack.c.b16 %v1437, %v1434
      %v1489 = vpack.c.b16 %v1438, %v1435
      %v1490 = vpack.c.b16 %v1442, %v1439
      %v1491 = vpack.c.b16 %v1443, %v1440
      %v1492 = vpack.c.b16 %v1444, %v1441
      %v1493 = vpack.c.b16 %v1448, %v1445
      %v1494 = vpack.c.b16 %v1449, %v1446
      %v1495 = vpack.c.b16 %v1450, %v1447
      %v1496 = vpack.c.b16 %v1454, %v1451
      %v1497 = vpack.c.b16 %v1455, %v1452
      %v1498 = vpack.c.b16 %v1456, %v1453
      %v1499 = vpack.c.b16 %v1460, %v1457
      %v1500 = vpack.c.b16 %v1461, %v1458
      %v1501 = vpack.c.b16 %v1462, %v1459
      %v1502 = vpack.c.b16 %v1466, %v1463
      %v1503 = vpack.c.b16 %v1467, %v1464
      %v1504 = vpack.c.b16 %v1468, %v1465
      %v1542 = vsel %vm529, %v1347, 0
      %1544 = vmatprep.subr.bf16.mxu0 %v1470
      %1545 = vmatpush1.bf16.msra.mxu0 %v1469
      %1546 = vmatprep.subr.bf16.mxu0 %v1473
      %1547 = vmatpush1.bf16.msra.mxu0 %v1472
      %1548 = vmatprep.subr.bf16.mxu0 %v1476
      %1549 = vmatpush1.bf16.msra.mxu0 %v1475
      %1550 = vmatprep.subr.bf16.mxu0 %v1479
      %1551 = vmatpush1.bf16.msra.mxu0 %v1478
      %1552 = vmatprep.subr.bf16.mxu0 %v1482
      %1553 = vmatpush1.bf16.msra.mxu0 %v1481
      %1554 = vmatprep.subr.bf16.mxu0 %v1485
      %1555 = vmatpush1.bf16.msra.mxu0 %v1484
      %1556 = vmatprep.subr.bf16.mxu0 %v1488
      %1557 = vmatpush1.bf16.msra.mxu0 %v1487
      %1558 = vmatprep.subr.bf16.mxu0 %v1491
      %1559 = vmatpush1.bf16.msra.mxu0 %v1490
      %1560 = vmatprep.subr.bf16.mxu0 %v1494
      %1561 = vmatpush1.bf16.msra.mxu0 %v1493
      %1562 = vmatprep.subr.bf16.mxu0 %v1497
      %1563 = vmatpush1.bf16.msra.mxu0 %v1496
      %1564 = vmatprep.subr.bf16.mxu0 %v1500
      %1565 = vmatpush1.bf16.msra.mxu0 %v1499
      %1566 = vmatprep.subr.bf16.mxu0 %v1503
      %1567 = vmatpush1.bf16.msra.mxu0 %v1502
      %1568 = vmatprep.subr.bf16.mxu0 0
      %1569 = vmatpush1.bf16.msra.mxu0 0
      %1570 = vmatprep.subr.bf16.mxu0 0
      %1571 = vmatpush1.bf16.msra.mxu0 0
      %1572 = vmatprep.subr.bf16.mxu0 0
      %1573 = vmatpush1.bf16.msra.mxu0 0
      %1574 = vmatprep.subr.bf16.mxu0 0
      %1575 = vmatpush1.bf16.msra.mxu0 0
      %1576 = vmatprep.mubr.bf16.mxu0 %v1542
      %1577 = vmatmul.mubr.bf16.gmra.mrb[0].mxu0 %v1340
      %v1578 = vpop.f32.mrb[0].mxu0
      %v1579 = vadd.f32 0.0, %v1578
      %v1580 = vpop.f32.mrb[0].mxu0
      %v1581 = vadd.f32 0.0, %v1580
      %v1582 = vpop.f32.mrb[0].mxu0
      %v1583 = vpop.f32.mrb[0].mxu0
      %1584 = vdwg.mxu0
      %1585 = vmatprep.subr.bf16.mxu0 0
      %1586 = vmatpush1.bf16.msra.mxu0 %v1471
      %1587 = vmatprep.subr.bf16.mxu0 0
      %1588 = vmatpush1.bf16.msra.mxu0 %v1474
      %1589 = vmatprep.subr.bf16.mxu0 0
      %1590 = vmatpush1.bf16.msra.mxu0 %v1477
      %1591 = vmatprep.subr.bf16.mxu0 0
      %1592 = vmatpush1.bf16.msra.mxu0 %v1480
      %1593 = vmatprep.subr.bf16.mxu0 0
      %1594 = vmatpush1.bf16.msra.mxu0 %v1483
      %1595 = vmatprep.subr.bf16.mxu0 0
      %1596 = vmatpush1.bf16.msra.mxu0 %v1486
      %1597 = vmatprep.subr.bf16.mxu0 0
      %1598 = vmatpush1.bf16.msra.mxu0 %v1489
      %1599 = vmatprep.subr.bf16.mxu0 0
      %1600 = vmatpush1.bf16.msra.mxu0 %v1492
      %1601 = vmatprep.subr.bf16.mxu0 0
      %1602 = vmatpush1.bf16.msra.mxu0 %v1495
      %1603 = vmatprep.subr.bf16.mxu0 0
      %1604 = vmatpush1.bf16.msra.mxu0 %v1498
      %1605 = vmatprep.subr.bf16.mxu0 0
      %1606 = vmatpush1.bf16.msra.mxu0 %v1501
      %1607 = vmatprep.subr.bf16.mxu0 0
      %1608 = vmatpush1.bf16.msra.mxu0 %v1504
      %1609 = vmatprep.subr.bf16.mxu0 0
      %1610 = vmatpush1.bf16.msra.mxu0 0
      %1611 = vmatprep.subr.bf16.mxu0 0
      %1612 = vmatpush1.bf16.msra.mxu0 0
      %1613 = vmatprep.subr.bf16.mxu0 0
      %1614 = vmatpush1.bf16.msra.mxu0 0
      %1615 = vmatprep.subr.bf16.mxu0 0
      %1616 = vmatpush1.bf16.msra.mxu0 0
      %1617 = vmatprep.mubr.bf16.mxu0 %v1542
      %1618 = vmatmul.mubr.bf16.gmra.mrb[0].mxu0 %v1340
      %v1619 = vpop.f32.mrb[0].mxu0
      %v1620 = vadd.f32 0.0, %v1619
      %v1621 = vpop.f32.mrb[0].mxu0
      %v1622 = vpop.f32.mrb[0].mxu0
      %v1623 = vpop.f32.mrb[0].mxu0
      %1624 = vdwg.mxu0
      %v1674 = vunpack.c.l.b16 %v1233
      %v1675 = vunpack.c.h.b16 %v1233
      %v1676 = vunpack.c.l.b16 %v1234
      %v1677 = vunpack.c.l.b16 %v1235
      %v1678 = vunpack.c.h.b16 %v1235
      %v1679 = vunpack.c.l.b16 %v1236
      %v1680 = vunpack.c.l.b16 %v1237
      %v1681 = vunpack.c.h.b16 %v1237
      %v1682 = vunpack.c.l.b16 %v1238
      %v1683 = vunpack.c.l.b16 %v1239
      %v1684 = vunpack.c.h.b16 %v1239
      %v1685 = vunpack.c.l.b16 %v1240
      %v1686 = vunpack.c.l.b16 %v1241
      %v1687 = vunpack.c.h.b16 %v1241
      %v1688 = vunpack.c.l.b16 %v1242
      %v1689 = vunpack.c.l.b16 %v1243
      %v1690 = vunpack.c.h.b16 %v1243
      %v1691 = vunpack.c.l.b16 %v1244
      %v1692 = vunpack.c.l.b16 %v1245
      %v1693 = vunpack.c.h.b16 %v1245
      %v1694 = vunpack.c.l.b16 %v1246
      %v1695 = vunpack.c.l.b16 %v1247
      %v1696 = vunpack.c.h.b16 %v1247
      %v1697 = vunpack.c.l.b16 %v1248
      %v1698 = vunpack.c.l.b16 %v1249
      %v1699 = vunpack.c.h.b16 %v1249
      %v1700 = vunpack.c.l.b16 %v1250
      %v1701 = vunpack.c.l.b16 %v1251
      %v1702 = vunpack.c.h.b16 %v1251
      %v1703 = vunpack.c.l.b16 %v1252
      %v1704 = vunpack.c.l.b16 %v1253
      %v1705 = vunpack.c.h.b16 %v1253
      %v1706 = vunpack.c.l.b16 %v1254
      %v1707 = vunpack.c.l.b16 %v1255
      %v1708 = vunpack.c.h.b16 %v1255
      %v1709 = vunpack.c.l.b16 %v1256
      %v1710 = vunpack.c.l.b16 %v1257
      %v1711 = vunpack.c.h.b16 %v1257
      %v1712 = vunpack.c.l.b16 %v1258
      %v1713 = vunpack.c.l.b16 %v1259
      %v1714 = vunpack.c.h.b16 %v1259
      %v1715 = vunpack.c.l.b16 %v1260
      %v1716 = vunpack.c.l.b16 %v1261
      %v1717 = vunpack.c.h.b16 %v1261
      %v1718 = vunpack.c.l.b16 %v1262
      %v1719 = vunpack.c.l.b16 %v1263
      %v1720 = vunpack.c.h.b16 %v1263
      %v1721 = vunpack.c.l.b16 %v1264
      %v1722 = vunpack.c.l.b16 %v1265
      %v1723 = vunpack.c.h.b16 %v1265
      %v1724 = vunpack.c.l.b16 %v1266
      %v1725 = vunpack.c.l.b16 %v1267
      %v1726 = vunpack.c.h.b16 %v1267
      %v1727 = vunpack.c.l.b16 %v1268
      %v1728 = vunpack.c.l.b16 %v1269
      %v1729 = vunpack.c.h.b16 %v1269
      %v1730 = vunpack.c.l.b16 %v1270
      %v1731 = vunpack.c.l.b16 %v1271
      %v1732 = vunpack.c.h.b16 %v1271
      %v1733 = vunpack.c.l.b16 %v1272
      %v1734 = vunpack.c.l.b16 %v1273
      %v1735 = vunpack.c.h.b16 %v1273
      %v1736 = vunpack.c.l.b16 %v1274
      %v1737 = vunpack.c.l.b16 %v1275
      %v1738 = vunpack.c.h.b16 %v1275
      %v1739 = vunpack.c.l.b16 %v1276
      %v1740 = vunpack.c.l.b16 %v1277
      %v1741 = vunpack.c.h.b16 %v1277
      %v1742 = vunpack.c.l.b16 %v1278
      %v1743 = vunpack.c.l.b16 %v1279
      %v1744 = vunpack.c.h.b16 %v1279
      %v1745 = vunpack.c.l.b16 %v1280
      %v1746 = vpack.c.b16 %v1677, %v1674
      %v1747 = vpack.c.b16 %v1678, %v1675
      %v1748 = vpack.c.b16 %v1679, %v1676
      %v1749 = vpack.c.b16 %v1683, %v1680
      %v1750 = vpack.c.b16 %v1684, %v1681
      %v1751 = vpack.c.b16 %v1685, %v1682
      %v1752 = vpack.c.b16 %v1689, %v1686
      %v1753 = vpack.c.b16 %v1690, %v1687
      %v1754 = vpack.c.b16 %v1691, %v1688
      %v1755 = vpack.c.b16 %v1695, %v1692
      %v1756 = vpack.c.b16 %v1696, %v1693
      %v1757 = vpack.c.b16 %v1697, %v1694
      %v1758 = vpack.c.b16 %v1701, %v1698
      %v1759 = vpack.c.b16 %v1702, %v1699
      %v1760 = vpack.c.b16 %v1703, %v1700
      %v1761 = vpack.c.b16 %v1707, %v1704
      %v1762 = vpack.c.b16 %v1708, %v1705
      %v1763 = vpack.c.b16 %v1709, %v1706
      %v1764 = vpack.c.b16 %v1713, %v1710
      %v1765 = vpack.c.b16 %v1714, %v1711
      %v1766 = vpack.c.b16 %v1715, %v1712
      %v1767 = vpack.c.b16 %v1719, %v1716
      %v1768 = vpack.c.b16 %v1720, %v1717
      %v1769 = vpack.c.b16 %v1721, %v1718
      %v1770 = vpack.c.b16 %v1725, %v1722
      %v1771 = vpack.c.b16 %v1726, %v1723
      %v1772 = vpack.c.b16 %v1727, %v1724
      %v1773 = vpack.c.b16 %v1731, %v1728
      %v1774 = vpack.c.b16 %v1732, %v1729
      %v1775 = vpack.c.b16 %v1733, %v1730
      %v1776 = vpack.c.b16 %v1737, %v1734
      %v1777 = vpack.c.b16 %v1738, %v1735
      %v1778 = vpack.c.b16 %v1739, %v1736
      %v1779 = vpack.c.b16 %v1743, %v1740
      %v1780 = vpack.c.b16 %v1744, %v1741
      %v1781 = vpack.c.b16 %v1745, %v1742
      %v1818 = vsel %vm529, %v1333, 0
      %1820 = vmatprep.subr.bf16.mxu0 %v1747
      %1821 = vmatpush1.bf16.msra.mxu0 %v1746
      %1822 = vmatprep.subr.bf16.mxu0 %v1750
      %1823 = vmatpush1.bf16.msra.mxu0 %v1749
      %1824 = vmatprep.subr.bf16.mxu0 %v1753
      %1825 = vmatpush1.bf16.msra.mxu0 %v1752
      %1826 = vmatprep.subr.bf16.mxu0 %v1756
      %1827 = vmatpush1.bf16.msra.mxu0 %v1755
      %1828 = vmatprep.subr.bf16.mxu0 %v1759
      %1829 = vmatpush1.bf16.msra.mxu0 %v1758
      %1830 = vmatprep.subr.bf16.mxu0 %v1762
      %1831 = vmatpush1.bf16.msra.mxu0 %v1761
      %1832 = vmatprep.subr.bf16.mxu0 %v1765
      %1833 = vmatpush1.bf16.msra.mxu0 %v1764
      %1834 = vmatprep.subr.bf16.mxu0 %v1768
      %1835 = vmatpush1.bf16.msra.mxu0 %v1767
      %1836 = vmatprep.subr.bf16.mxu0 %v1771
      %1837 = vmatpush1.bf16.msra.mxu0 %v1770
      %1838 = vmatprep.subr.bf16.mxu0 %v1774
      %1839 = vmatpush1.bf16.msra.mxu0 %v1773
      %1840 = vmatprep.subr.bf16.mxu0 %v1777
      %1841 = vmatpush1.bf16.msra.mxu0 %v1776
      %1842 = vmatprep.subr.bf16.mxu0 %v1780
      %1843 = vmatpush1.bf16.msra.mxu0 %v1779
      %1844 = vmatprep.subr.bf16.mxu0 0
      %1845 = vmatpush1.bf16.msra.mxu0 0
      %1846 = vmatprep.subr.bf16.mxu0 0
      %1847 = vmatpush1.bf16.msra.mxu0 0
      %1848 = vmatprep.subr.bf16.mxu0 0
      %1849 = vmatpush1.bf16.msra.mxu0 0
      %1850 = vmatprep.subr.bf16.mxu0 0
      %1851 = vmatpush1.bf16.msra.mxu0 0
      %1852 = vmatprep.mubr.bf16.mxu0 %v1818
      %1853 = vmatmul.mubr.bf16.gmra.mrb[0].mxu0 %v1332
      %v1854 = vpop.f32.mrb[0].mxu0
      %v1855 = vadd.f32 %v1579, %v1854
      %v1856 = vpop.f32.mrb[0].mxu0
      %v1857 = vadd.f32 %v1581, %v1856
      %v1858 = vpop.f32.mrb[0].mxu0
      %v1859 = vpop.f32.mrb[0].mxu0
      %1860 = vdwg.mxu0
      %1861 = vmatprep.subr.bf16.mxu0 0
      %1862 = vmatpush1.bf16.msra.mxu0 %v1748
      %1863 = vmatprep.subr.bf16.mxu0 0
      %1864 = vmatpush1.bf16.msra.mxu0 %v1751
      %1865 = vmatprep.subr.bf16.mxu0 0
      %1866 = vmatpush1.bf16.msra.mxu0 %v1754
      %1867 = vmatprep.subr.bf16.mxu0 0
      %1868 = vmatpush1.bf16.msra.mxu0 %v1757
      %1869 = vmatprep.subr.bf16.mxu0 0
      %1870 = vmatpush1.bf16.msra.mxu0 %v1760
      %1871 = vmatprep.subr.bf16.mxu0 0
      %1872 = vmatpush1.bf16.msra.mxu0 %v1763
      %1873 = vmatprep.subr.bf16.mxu0 0
      %1874 = vmatpush1.bf16.msra.mxu0 %v1766
      %1875 = vmatprep.subr.bf16.mxu0 0
      %1876 = vmatpush1.bf16.msra.mxu0 %v1769
      %1877 = vmatprep.subr.bf16.mxu0 0
      %1878 = vmatpush1.bf16.msra.mxu0 %v1772
      %1879 = vmatprep.subr.bf16.mxu0 0
      %1880 = vmatpush1.bf16.msra.mxu0 %v1775
      %1881 = vmatprep.subr.bf16.mxu0 0
      %1882 = vmatpush1.bf16.msra.mxu0 %v1778
      %1883 = vmatprep.subr.bf16.mxu0 0
      %1884 = vmatpush1.bf16.msra.mxu0 %v1781
      %1885 = vmatprep.subr.bf16.mxu0 0
      %1886 = vmatpush1.bf16.msra.mxu0 0
      %1887 = vmatprep.subr.bf16.mxu0 0
      %1888 = vmatpush1.bf16.msra.mxu0 0
      %1889 = vmatprep.subr.bf16.mxu0 0
      %1890 = vmatpush1.bf16.msra.mxu0 0
      %1891 = vmatprep.subr.bf16.mxu0 0
      %1892 = vmatpush1.bf16.msra.mxu0 0
      %1893 = vmatprep.mubr.bf16.mxu0 %v1818
      %1894 = vmatmul.mubr.bf16.gmra.mrb[0].mxu0 %v1332
      %v1895 = vpop.f32.mrb[0].mxu0
      %v1896 = vadd.f32 %v1620, %v1895
      %v1897 = vpop.f32.mrb[0].mxu0
      %v1898 = vpop.f32.mrb[0].mxu0
      %v1899 = vpop.f32.mrb[0].mxu0
      %1900 = vdwg.mxu0
      %v1901 = vld [vmem:[%s890] sm:$0xff]
      %v1902 = vld [vmem:[%s890 + $0x8] sm:$0xf]
      %v1903 = vld [vmem:[%s890 + $0xc] sm:$0xff]
      %v1904 = vld [vmem:[%s890 + $0x14] sm:$0xf]
      %v1905 = vld [vmem:[%s890 + $0x18] sm:$0xff]
      %v1906 = vld [vmem:[%s890 + $0x20] sm:$0xf]
      %v1907 = vld [vmem:[%s890 + $0x24] sm:$0xff]
      %v1908 = vld [vmem:[%s890 + $0x2c] sm:$0xf]
      %v1909 = vld [vmem:[%s890 + $0x30] sm:$0xff]
      %v1910 = vld [vmem:[%s890 + $0x38] sm:$0xf]
      %v1911 = vld [vmem:[%s890 + $0x3c] sm:$0xff]
      %v1912 = vld [vmem:[%s890 + $0x44] sm:$0xf]
      %v1913 = vld [vmem:[%s890 + $0x48] sm:$0xff]
      %v1914 = vld [vmem:[%s890 + $0x50] sm:$0xf]
      %v1915 = vld [vmem:[%s890 + $0x54] sm:$0xff]
      %v1916 = vld [vmem:[%s890 + $0x5c] sm:$0xf]
      %v1917 = vld [vmem:[%s890 + $0x60] sm:$0xff]
      %v1918 = vld [vmem:[%s890 + $0x68] sm:$0xf]
      %v1919 = vld [vmem:[%s890 + $0x6c] sm:$0xff]
      %v1920 = vld [vmem:[%s890 + $0x74] sm:$0xf]
      %v1921 = vld [vmem:[%s890 + $0x78] sm:$0xff]
      %v1922 = vld [vmem:[%s890 + $0x80] sm:$0xf]
      %v1923 = vld [vmem:[%s890 + $0x84] sm:$0xff]
      %v1924 = vld [vmem:[%s890 + $0x8c] sm:$0xf]
      %v1925 = vld [vmem:[%s890 + $0x90] sm:$0xff]
      %v1926 = vld [vmem:[%s890 + $0x98] sm:$0xf]
      %v1927 = vld [vmem:[%s890 + $0x9c] sm:$0xff]
      %v1928 = vld [vmem:[%s890 + $0xa4] sm:$0xf]
      %v1929 = vld [vmem:[%s890 + $0xa8] sm:$0xff]
      %v1930 = vld [vmem:[%s890 + $0xb0] sm:$0xf]
      %v1931 = vld [vmem:[%s890 + $0xb4] sm:$0xff]
      %v1932 = vld [vmem:[%s890 + $0xbc] sm:$0xf]
      %v1933 = vld [vmem:[%s890 + $0xc0] sm:$0xff]
      %v1934 = vld [vmem:[%s890 + $0xc8] sm:$0xf]
      %v1935 = vld [vmem:[%s890 + $0xcc] sm:$0xff]
      %v1936 = vld [vmem:[%s890 + $0xd4] sm:$0xf]
      %v1937 = vld [vmem:[%s890 + $0xd8] sm:$0xff]
      %v1938 = vld [vmem:[%s890 + $0xe0] sm:$0xf]
      %v1939 = vld [vmem:[%s890 + $0xe4] sm:$0xff]
      %v1940 = vld [vmem:[%s890 + $0xec] sm:$0xf]
      %v1941 = vld [vmem:[%s890 + $0xf0] sm:$0xff]
      %v1942 = vld [vmem:[%s890 + $0xf8] sm:$0xf]
      %v1943 = vld [vmem:[%s890 + $0xfc] sm:$0xff]
      %v1944 = vld [vmem:[%s890 + $0x104] sm:$0xf]
      %v1945 = vld [vmem:[%s890 + $0x108] sm:$0xff]
      %v1946 = vld [vmem:[%s890 + $0x110] sm:$0xf]
      %v1947 = vld [vmem:[%s890 + $0x114] sm:$0xff]
      %v1948 = vld [vmem:[%s890 + $0x11c] sm:$0xf]
      %v1949 = vrot.slane %v1332, 1
      %v1950 = vrot.slane %v1333, 1
      %v2000 = vunpack.c.l.b16 %v1901
      %v2001 = vunpack.c.h.b16 %v1901
      %v2002 = vunpack.c.l.b16 %v1902
      %v2003 = vunpack.c.l.b16 %v1903
      %v2004 = vunpack.c.h.b16 %v1903
      %v2005 = vunpack.c.l.b16 %v1904
      %v2006 = vunpack.c.l.b16 %v1905
      %v2007 = vunpack.c.h.b16 %v1905
      %v2008 = vunpack.c.l.b16 %v1906
      %v2009 = vunpack.c.l.b16 %v1907
      %v2010 = vunpack.c.h.b16 %v1907
      %v2011 = vunpack.c.l.b16 %v1908
      %v2012 = vunpack.c.l.b16 %v1909
      %v2013 = vunpack.c.h.b16 %v1909
      %v2014 = vunpack.c.l.b16 %v1910
      %v2015 = vunpack.c.l.b16 %v1911
      %v2016 = vunpack.c.h.b16 %v1911
      %v2017 = vunpack.c.l.b16 %v1912
      %v2018 = vunpack.c.l.b16 %v1913
      %v2019 = vunpack.c.h.b16 %v1913
      %v2020 = vunpack.c.l.b16 %v1914
      %v2021 = vunpack.c.l.b16 %v1915
      %v2022 = vunpack.c.h.b16 %v1915
      %v2023 = vunpack.c.l.b16 %v1916
      %v2024 = vunpack.c.l.b16 %v1917
      %v2025 = vunpack.c.h.b16 %v1917
      %v2026 = vunpack.c.l.b16 %v1918
      %v2027 = vunpack.c.l.b16 %v1919
      %v2028 = vunpack.c.h.b16 %v1919
      %v2029 = vunpack.c.l.b16 %v1920
      %v2030 = vunpack.c.l.b16 %v1921
      %v2031 = vunpack.c.h.b16 %v1921
      %v2032 = vunpack.c.l.b16 %v1922
      %v2033 = vunpack.c.l.b16 %v1923
      %v2034 = vunpack.c.h.b16 %v1923
      %v2035 = vunpack.c.l.b16 %v1924
      %v2036 = vunpack.c.l.b16 %v1925
      %v2037 = vunpack.c.h.b16 %v1925
      %v2038 = vunpack.c.l.b16 %v1926
      %v2039 = vunpack.c.l.b16 %v1927
      %v2040 = vunpack.c.h.b16 %v1927
      %v2041 = vunpack.c.l.b16 %v1928
      %v2042 = vunpack.c.l.b16 %v1929
      %v2043 = vunpack.c.h.b16 %v1929
      %v2044 = vunpack.c.l.b16 %v1930
      %v2045 = vunpack.c.l.b16 %v1931
      %v2046 = vunpack.c.h.b16 %v1931
      %v2047 = vunpack.c.l.b16 %v1932
      %v2048 = vunpack.c.l.b16 %v1933
      %v2049 = vunpack.c.h.b16 %v1933
      %v2050 = vunpack.c.l.b16 %v1934
      %v2051 = vunpack.c.l.b16 %v1935
      %v2052 = vunpack.c.h.b16 %v1935
      %v2053 = vunpack.c.l.b16 %v1936
      %v2054 = vunpack.c.l.b16 %v1937
      %v2055 = vunpack.c.h.b16 %v1937
      %v2056 = vunpack.c.l.b16 %v1938
      %v2057 = vunpack.c.l.b16 %v1939
      %v2058 = vunpack.c.h.b16 %v1939
      %v2059 = vunpack.c.l.b16 %v1940
      %v2060 = vunpack.c.l.b16 %v1941
      %v2061 = vunpack.c.h.b16 %v1941
      %v2062 = vunpack.c.l.b16 %v1942
      %v2063 = vunpack.c.l.b16 %v1943
      %v2064 = vunpack.c.h.b16 %v1943
      %v2065 = vunpack.c.l.b16 %v1944
      %v2066 = vunpack.c.l.b16 %v1945
      %v2067 = vunpack.c.h.b16 %v1945
      %v2068 = vunpack.c.l.b16 %v1946
      %v2069 = vunpack.c.l.b16 %v1947
      %v2070 = vunpack.c.h.b16 %v1947
      %v2071 = vunpack.c.l.b16 %v1948
      %v2072 = vpack.c.b16 %v2003, %v2000
      %v2073 = vpack.c.b16 %v2004, %v2001
      %v2074 = vpack.c.b16 %v2005, %v2002
      %v2075 = vpack.c.b16 %v2009, %v2006
      %v2076 = vpack.c.b16 %v2010, %v2007
      %v2077 = vpack.c.b16 %v2011, %v2008
      %v2078 = vpack.c.b16 %v2015, %v2012
      %v2079 = vpack.c.b16 %v2016, %v2013
      %v2080 = vpack.c.b16 %v2017, %v2014
      %v2081 = vpack.c.b16 %v2021, %v2018
      %v2082 = vpack.c.b16 %v2022, %v2019
      %v2083 = vpack.c.b16 %v2023, %v2020
      %v2084 = vpack.c.b16 %v2027, %v2024
      %v2085 = vpack.c.b16 %v2028, %v2025
      %v2086 = vpack.c.b16 %v2029, %v2026
      %v2087 = vpack.c.b16 %v2033, %v2030
      %v2088 = vpack.c.b16 %v2034, %v2031
      %v2089 = vpack.c.b16 %v2035, %v2032
      %v2090 = vpack.c.b16 %v2039, %v2036
      %v2091 = vpack.c.b16 %v2040, %v2037
      %v2092 = vpack.c.b16 %v2041, %v2038
      %v2093 = vpack.c.b16 %v2045, %v2042
      %v2094 = vpack.c.b16 %v2046, %v2043
      %v2095 = vpack.c.b16 %v2047, %v2044
      %v2096 = vpack.c.b16 %v2051, %v2048
      %v2097 = vpack.c.b16 %v2052, %v2049
      %v2098 = vpack.c.b16 %v2053, %v2050
      %v2099 = vpack.c.b16 %v2057, %v2054
      %v2100 = vpack.c.b16 %v2058, %v2055
      %v2101 = vpack.c.b16 %v2059, %v2056
      %v2102 = vpack.c.b16 %v2063, %v2060
      %v2103 = vpack.c.b16 %v2064, %v2061
      %v2104 = vpack.c.b16 %v2065, %v2062
      %v2105 = vpack.c.b16 %v2069, %v2066
      %v2106 = vpack.c.b16 %v2070, %v2067
      %v2107 = vpack.c.b16 %v2071, %v2068
      %v2145 = vsel %vm529, %v1950, 0
      %2147 = vmatprep.subr.bf16.mxu0 %v2073
      %2148 = vmatpush1.bf16.msra.mxu0 %v2072
      %2149 = vmatprep.subr.bf16.mxu0 %v2076
      %2150 = vmatpush1.bf16.msra.mxu0 %v2075
      %2151 = vmatprep.subr.bf16.mxu0 %v2079
      %2152 = vmatpush1.bf16.msra.mxu0 %v2078
      %2153 = vmatprep.subr.bf16.mxu0 %v2082
      %2154 = vmatpush1.bf16.msra.mxu0 %v2081
      %2155 = vmatprep.subr.bf16.mxu0 %v2085
      %2156 = vmatpush1.bf16.msra.mxu0 %v2084
      %2157 = vmatprep.subr.bf16.mxu0 %v2088
      %2158 = vmatpush1.bf16.msra.mxu0 %v2087
      %2159 = vmatprep.subr.bf16.mxu0 %v2091
      %2160 = vmatpush1.bf16.msra.mxu0 %v2090
      %2161 = vmatprep.subr.bf16.mxu0 %v2094
      %2162 = vmatpush1.bf16.msra.mxu0 %v2093
      %2163 = vmatprep.subr.bf16.mxu0 %v2097
      %2164 = vmatpush1.bf16.msra.mxu0 %v2096
      %2165 = vmatprep.subr.bf16.mxu0 %v2100
      %2166 = vmatpush1.bf16.msra.mxu0 %v2099
      %2167 = vmatprep.subr.bf16.mxu0 %v2103
      %2168 = vmatpush1.bf16.msra.mxu0 %v2102
      %2169 = vmatprep.subr.bf16.mxu0 %v2106
      %2170 = vmatpush1.bf16.msra.mxu0 %v2105
      %2171 = vmatprep.subr.bf16.mxu0 0
      %2172 = vmatpush1.bf16.msra.mxu0 0
      %2173 = vmatprep.subr.bf16.mxu0 0
      %2174 = vmatpush1.bf16.msra.mxu0 0
      %2175 = vmatprep.subr.bf16.mxu0 0
      %2176 = vmatpush1.bf16.msra.mxu0 0
      %2177 = vmatprep.subr.bf16.mxu0 0
      %2178 = vmatpush1.bf16.msra.mxu0 0
      %2179 = vmatprep.mubr.bf16.mxu0 %v2145
      %2180 = vmatmul.mubr.bf16.gmra.mrb[0].mxu0 %v1949
      %v2181 = vpop.f32.mrb[0].mxu0
      %v2182 = vadd.f32 0.0, %v2181
      %v2183 = vpop.f32.mrb[0].mxu0
      %v2184 = vadd.f32 0.0, %v2183
      %v2185 = vpop.f32.mrb[0].mxu0
      %v2186 = vpop.f32.mrb[0].mxu0
      %2187 = vdwg.mxu0
      %2188 = vmatprep.subr.bf16.mxu0 0
      %2189 = vmatpush1.bf16.msra.mxu0 %v2074
      %2190 = vmatprep.subr.bf16.mxu0 0
      %2191 = vmatpush1.bf16.msra.mxu0 %v2077
      %2192 = vmatprep.subr.bf16.mxu0 0
      %2193 = vmatpush1.bf16.msra.mxu0 %v2080
      %2194 = vmatprep.subr.bf16.mxu0 0
      %2195 = vmatpush1.bf16.msra.mxu0 %v2083
      %2196 = vmatprep.subr.bf16.mxu0 0
      %2197 = vmatpush1.bf16.msra.mxu0 %v2086
      %2198 = vmatprep.subr.bf16.mxu0 0
      %2199 = vmatpush1.bf16.msra.mxu0 %v2089
      %2200 = vmatprep.subr.bf16.mxu0 0
      %2201 = vmatpush1.bf16.msra.mxu0 %v2092
      %2202 = vmatprep.subr.bf16.mxu0 0
      %2203 = vmatpush1.bf16.msra.mxu0 %v2095
      %2204 = vmatprep.subr.bf16.mxu0 0
      %2205 = vmatpush1.bf16.msra.mxu0 %v2098
      %2206 = vmatprep.subr.bf16.mxu0 0
      %2207 = vmatpush1.bf16.msra.mxu0 %v2101
      %2208 = vmatprep.subr.bf16.mxu0 0
      %2209 = vmatpush1.bf16.msra.mxu0 %v2104
      %2210 = vmatprep.subr.bf16.mxu0 0
      %2211 = vmatpush1.bf16.msra.mxu0 %v2107
      %2212 = vmatprep.subr.bf16.mxu0 0
      %2213 = vmatpush1.bf16.msra.mxu0 0
      %2214 = vmatprep.subr.bf16.mxu0 0
      %2215 = vmatpush1.bf16.msra.mxu0 0
      %2216 = vmatprep.subr.bf16.mxu0 0
      %2217 = vmatpush1.bf16.msra.mxu0 0
      %2218 = vmatprep.subr.bf16.mxu0 0
      %2219 = vmatpush1.bf16.msra.mxu0 0
      %2220 = vmatprep.mubr.bf16.mxu0 %v2145
      %2221 = vmatmul.mubr.bf16.gmra.mrb[0].mxu0 %v1949
      %v2222 = vpop.f32.mrb[0].mxu0
      %v2223 = vadd.f32 0.0, %v2222
      %v2224 = vpop.f32.mrb[0].mxu0
      %v2225 = vpop.f32.mrb[0].mxu0
      %v2226 = vpop.f32.mrb[0].mxu0
      %2227 = vdwg.mxu0
      %v2228 = vadd.f32 %v1855, %v2182
      %v2229 = vadd.f32 %v1857, %v2184
      %v2230 = vadd.f32 %v1896, %v2223
      %s2231 = scalar_lea.vmem [#allocation2], 12
      %v2232 = vld [vmem:[%s2231] sm:$0x77]
      %v2233 = vld [vmem:[%s2231 + $0x8] sm:$0x7]
      %v2236 = vcombine.low %v2228, %v2229
      %v2238 = vadd.f32 %v2232, %v2236
      %v2239 = vadd.f32 %v2233, %v2230
      %2240 = vst [vmem:[%s2231] sm:$0x77] %v2238
      %2241 = vst [vmem:[%s2231 + $0x8] sm:$0x7] %v2239
      %p2242 = scmp.eq.s32.totalorder %s19, 2
      // Predicated region
      $region37: #{alexnet_forward.13} parent=31 // pred_check
        %p2243 = pneg %p2242
      $region38: #{alexnet_forward.13} parent=31 // pred_check_branch
        %2245 = sbr.rel (%p2243) target = $region40
      $region39: #{alexnet_forward.13} parent=31 // pred_region
        %v2246 = vld [vmem:[#allocation2] sm:$0x77]
        %v2247 = vld [vmem:[#allocation2 + $0x8] sm:$0x7]
        %v2248 = vld [vmem:[#allocation2 + $0xc] sm:$0x77]
        %v2249 = vld [vmem:[#allocation2 + $0x14] sm:$0x7]
        %v2250 = vld [vmem:[%s2] sm:$0x7]
        %v2252 = vlaneseq
        %v2253 = vshrl.u32 %v2252, 7
        %v2254 = vsub.s32 0, %v2253
        %v2255 = vrot.slane %v2250, %v2254
        %v2256 = vlaneseq
        %v2257 = vshrl.u32 %v2256, 7
        %v2258 = vsub.s32 1, %v2257
        %v2259 = vrot.slane %v2250, %v2258
        %v2260 = vlaneseq
        %v2261 = vshrl.u32 %v2260, 7
        %v2262 = vsub.s32 2, %v2261
        %v2263 = vrot.slane %v2250, %v2262
        %v2265 = vcombine.low %v2255, %v2259
        %v2267 = vadd.f32 %v2246, %v2265
        %v2268 = vadd.f32 %v2247, %v2263
        %v2269 = vadd.f32 %v2248, %v2265
        %v2270 = vadd.f32 %v2249, %v2263
        %v2271 = vmax.f32 %v2267, 0.0
        %v2272 = vmax.f32 %v2268, 0.0
        %v2273 = vmax.f32 %v2269, 0.0
        %v2274 = vmax.f32 %v2270, 0.0
        %v2277 = vcombine.high %v2271, %v2271
        %v2278 = vcombine.high %v2273, %v2273
        %v2281 = vpack.c.bf16 %v2271, %v2271
        %v2282 = vpack.c.bf16 %v2277, %v2277
        %v2283 = vpack.c.bf16 %v2272, %v2272
        %v2284 = vpack.c.bf16 %v2273, %v2273
        %v2285 = vpack.c.bf16 %v2278, %v2278
        %v2286 = vpack.c.bf16 %v2274, %v2274
        %v2293 = vcombine.low %v2281, %v2282
        %v2295 = vunpack.c.l.s4 1983009808
        %v2296 = vunpack.c.0.s8 %v2295
        %v2297 = vlaneseq
        %v2298 = vshrl.u32 %v2297, 7
        %v2299 = vsub.s32 %v2296, %v2298
        %v2300 = vrot.slane %v2293, %v2299
        %v2302 = vunpack.c.l.s4 1983009808
        %v2303 = vunpack.c.0.s8 %v2302
        %v2304 = vlaneseq
        %v2305 = vshrl.u32 %v2304, 7
        %v2306 = vsub.s32 %v2303, %v2305
        %v2307 = vrot.slane %v2283, %v2306
        %v2308 = vcombine.low %v2300, %v2307
        %v2309 = vcombine.low %v2284, %v2285
        %v2311 = vunpack.c.l.s4 1983009808
        %v2312 = vunpack.c.0.s8 %v2311
        %v2313 = vlaneseq
        %v2314 = vshrl.u32 %v2313, 7
        %v2315 = vsub.s32 %v2312, %v2314
        %v2316 = vrot.slane %v2309, %v2315
        %v2318 = vunpack.c.l.s4 1983009808
        %v2319 = vunpack.c.0.s8 %v2318
        %v2320 = vlaneseq
        %v2321 = vshrl.u32 %v2320, 7
        %v2322 = vsub.s32 %v2319, %v2321
        %v2323 = vrot.slane %v2286, %v2322
        %v2324 = vcombine.low %v2316, %v2323
        %vm2327 = vcmask 1041408
        %vm2328 = vsmask.f32 1280
        %vm2329 = vmand %vm2327, %vm2328
        %vm2330 = vcmask 1043458
        %vm2331 = vsmask.f32 3328
        %vm2332 = vmand %vm2330, %vm2331
        %vm2333 = vmor %vm2332, %vm2329
        %vm2334 = vcmask 1045508
        %vm2335 = vsmask.f32 5376
        %vm2336 = vmand %vm2334, %vm2335
        %vm2337 = vmor %vm2336, %vm2333
        %v2338 = vld [vmem:[%s209] sm:$0x3f]
        %v2339 = vsel %vm2337, %v2308, %v2338
        %2340 = vst [vmem:[%s209] sm:$0x3f] %v2339
        %v2341 = vld [vmem:[%s209 + $0x6] sm:$0x3f]
        %v2342 = vsel %vm2337, %v2324, %v2341
        %2343 = vst [vmem:[%s209 + $0x6] sm:$0x3f] %v2342
      $region40: #{alexnet_forward.13} parent=31 // pred_fallthru
        _
      %p2344 = scmp.lt.s32.totalorder %s18, 2
      %s2345 = scalar_select %p2344, %s18, 2
      %s2346 = smul.addr %s2345, 6
      %s2347 = smul.addr %s2346, 2
      %s2348 = scalar_lea.vmem %s3, %s2347
      // Predicated region
      $region41: #{alexnet_forward.13} parent=31 // pred_check
        %p2349 = pneg %p119
      $region42: #{alexnet_forward.13} parent=31 // pred_check_branch
        %2351 = sbr.rel (%p2349) target = $region44
      $region43: #{alexnet_forward.13} parent=31 // pred_region
        _
      $region44: #{alexnet_forward.13} parent=31 // pred_fallthru
        _
    $region32: #{alexnet_forward.13} parent=5 // pred_fallthru
      _
    %p2352 = scmp.le.s32.totalorder 2, %s9
    // Predicated region
    $region45: #{alexnet_forward.13} parent=5 // pred_check
      %p2353 = pneg %p2352
    $region46: #{alexnet_forward.13} parent=5 // pred_check_branch
      %2355 = sbr.rel (%p2353) target = $region48
    $region47: #{alexnet_forward.13} parent=5 // pred_region
      %s2356 = ssub.s32 %s9, 2
      // Predicated region
      $region49: #{alexnet_forward.13} parent=47 // pred_check
        %p2357 = pneg %p125
      $region50: #{alexnet_forward.13} parent=47 // pred_check_branch
        %2359 = sbr.rel (%p2357) target = $region52
      $region51: #{alexnet_forward.13} parent=47 // pred_region
        %p2360 = scmp.lt.s32.totalorder %s20, 2
        %s2361 = scalar_select %p2360, %s20, 2
        %s2362 = smul.addr %s2361, 6
        %s2363 = smul.addr %s2362, 2
        %s2364 = scalar_lea.vmem %s3, %s2363
      $region52: #{alexnet_forward.13} parent=47 // pred_fallthru
        _
    $region48: #{alexnet_forward.13} parent=5 // pred_fallthru
      _
  $region6: #{alexnet_forward.13} parent=0 // loop_footer
    %s13 = sadd.s32 1, %s9
  $region7: #{alexnet_forward.13} parent=0 // loop_footer_branch
    %8 = sbr.rel target = $region3
  $region8: #{alexnet_forward.13} parent=0 // loop_exit
    _

// kernel: alexnet_forward.14
$region0: #{alexnet_forward.14}
  #allocation0 [shape = 'u32[]', space=smem, size = 0x4, offset = 0x4, fixed_abs, tag = 'smem constant byte address 0x4 - core index']
  #allocation1 [shape = 'u32[144,128]{1,0:T(1,128)}', space=vmem, size = 0x12000, scoped, tag = 'internal scratch']
  #allocation2 [shape = 'f32[2,3,256]{2,1,0:T(4,128)}', space=vmem, size = 0x2000, scoped, tag = 'scratch operand']
  %s0 = inlined_call_operand.vmem [shape: bf16[5,2,5,384], index: 0, kind: input, shape index: {}]
  %s1 = inlined_call_operand.vmem [shape: bf16[3,3,384,256], index: 1, kind: input, shape index: {}]
  %s2 = inlined_call_operand.vmem [shape: f32[1,256], index: 2, kind: input, shape index: {}]
  %s3 = inlined_call_operand.vmem [shape: bf16[3,2,3,256], index: 3, kind: output, shape index: {}]
  %s4 = sld [smem:[#allocation0]]
  $region53: #{alexnet_forward.14} parent=0
    _
  %s6 = ssub.s32 1, %s4
  %s7 = scalar_select 0, %s6, %s4
  loop: start=0, step=1, limit=11
  $region2: #{alexnet_forward.14} parent=0 // loop_pre_header
    _
  $region3: #{alexnet_forward.14} parent=0 // loop_header
    %s9 = sphi 0, %s13
    %p10 = scmp.ge.s32.totalorder %s9, 11
    %s16 = sphi 0, %s28
    %s17 = sphi 0, %s24
    %s18 = sphi 0, %s16
    %s19 = sphi 0, %s17
    %s20 = sphi 0, %s18
    %s21 = sphi 0, %s19
    %s33 = sphi 0, %s35
    %s36 = sphi 0, %s33
    %s37 = sphi 0, %s36
    %s53 = sphi 0, %s37
    %s59 = sphi 0, %s61
    %s62 = sphi 0, %s59
    %s63 = sphi 0, %s62
    %s79 = sphi 0, %s63
    %s83 = sphi 0, %s83
    %s85 = sphi 0, %s83
    %s86 = sphi 0, %s85
    %s100 = sphi 0, %s86
    %s106 = sphi 0, %s108
    %s109 = sphi 0, %s106
    %s110 = sphi 0, %s109
    %s126 = sphi 0, %s110
  $region4: #{alexnet_forward.14} parent=0 // loop_header_branch
    %12 = sbr.rel (%p10) target = $region8
  $region5: #{alexnet_forward.14} parent=0 // loop_body
    %s14 = ssub.s32 %s9, 1
    %s15 = ssub.s32 %s9, 2
    %s22 = sadd.s32 1, %s17
    %p23 = scmp.ge.s32.totalorder %s22, 3
    %s24 = scalar_select %p23, 0, %s22
    %s25 = sadd.s32 1, %s16
    %s26 = scalar_select %p23, %s25, %s16
    %p27 = scmp.ge.s32.totalorder %s26, 3
    %s28 = scalar_select %p27, 0, %s26
    %s29 = sadd.s32 %s16, %s17
    %s30 = sadd.s32 %s28, %s24
    %s31 = ssub.s32 %s29, %s30
    %p32 = scmp.eq.s32.totalorder %s31, 0
    %s34 = sadd.s32 %s33, 1
    %s35 = scalar_select %p32, %s33, %s34
    %p38 = pneg %p32
    %p39 = scmp.eq.s32.totalorder %s9, 8
    %p40 = por %p38, %p39
    %p41 = scmp.ne.s32.totalorder %s33, %s36
    %p42 = scmp.eq.s32.totalorder %s9, 0
    %p43 = por %p41, %p42
    %p44 = scmp.ne.s32.totalorder %s33, %s36
    %p45 = scmp.eq.s32.totalorder %s14, 8
    %p46 = por %p44, %p45
    %p47 = scmp.ne.s32.totalorder %s36, %s37
    %p48 = scmp.eq.s32.totalorder %s14, 0
    %p49 = por %p47, %p48
    %p50 = scmp.ne.s32.totalorder %s36, %s37
    %p51 = scmp.eq.s32.totalorder %s15, 8
    %p52 = por %p50, %p51
    %p54 = scmp.ne.s32.totalorder %s37, %s53
    %p55 = scmp.eq.s32.totalorder %s15, 0
    %p56 = por %p54, %p55
    %s57 = ssub.s32 %s17, %s24
    %p58 = scmp.eq.s32.totalorder %s57, 0
    %s60 = sadd.s32 %s59, 1
    %s61 = scalar_select %p58, %s59, %s60
    %p64 = pneg %p58
    %p65 = scmp.eq.s32.totalorder %s9, 8
    %p66 = por %p64, %p65
    %p67 = scmp.ne.s32.totalorder %s59, %s62
    %p68 = scmp.eq.s32.totalorder %s9, 0
    %p69 = por %p67, %p68
    %p70 = scmp.ne.s32.totalorder %s59, %s62
    %p71 = scmp.eq.s32.totalorder %s14, 8
    %p72 = por %p70, %p71
    %p73 = scmp.ne.s32.totalorder %s62, %s63
    %p74 = scmp.eq.s32.totalorder %s14, 0
    %p75 = por %p73, %p74
    %p76 = scmp.ne.s32.totalorder %s62, %s63
    %p77 = scmp.eq.s32.totalorder %s15, 8
    %p78 = por %p76, %p77
    %p80 = scmp.ne.s32.totalorder %s63, %s79
    %p81 = scmp.eq.s32.totalorder %s15, 0
    %p82 = por %p80, %p81
    %s84 = sadd.s32 %s83, 1
    %p87 = scmp.eq.s32.totalorder %s9, 8
    %p88 = scmp.ne.s32.totalorder %s83, %s85
    %p89 = scmp.eq.s32.totalorder %s9, 0
    %p90 = por %p88, %p89
    %p91 = scmp.ne.s32.totalorder %s83, %s85
    %p92 = scmp.eq.s32.totalorder %s14, 8
    %p93 = por %p91, %p92
    %p94 = scmp.ne.s32.totalorder %s85, %s86
    %p95 = scmp.eq.s32.totalorder %s14, 0
    %p96 = por %p94, %p95
    %p97 = scmp.ne.s32.totalorder %s85, %s86
    %p98 = scmp.eq.s32.totalorder %s15, 8
    %p99 = por %p97, %p98
    %p101 = scmp.ne.s32.totalorder %s86, %s100
    %p102 = scmp.eq.s32.totalorder %s15, 0
    %p103 = por %p101, %p102
    %s104 = ssub.s32 %s16, %s28
    %p105 = scmp.eq.s32.totalorder %s104, 0
    %s107 = sadd.s32 %s106, 1
    %s108 = scalar_select %p105, %s106, %s107
    %p111 = pneg %p105
    %p112 = scmp.eq.s32.totalorder %s9, 8
    %p113 = por %p111, %p112
    %p114 = scmp.ne.s32.totalorder %s106, %s109
    %p115 = scmp.eq.s32.totalorder %s9, 0
    %p116 = por %p114, %p115
    %p117 = scmp.ne.s32.totalorder %s106, %s109
    %p118 = scmp.eq.s32.totalorder %s14, 8
    %p119 = por %p117, %p118
    %p120 = scmp.ne.s32.totalorder %s109, %s110
    %p121 = scmp.eq.s32.totalorder %s14, 0
    %p122 = por %p120, %p121
    %p123 = scmp.ne.s32.totalorder %s109, %s110
    %p124 = scmp.eq.s32.totalorder %s15, 8
    %p125 = por %p123, %p124
    %p127 = scmp.ne.s32.totalorder %s110, %s126
    %p128 = scmp.eq.s32.totalorder %s15, 0
    %p129 = por %p127, %p128
    %p130 = scmp.le.s32.totalorder 1, %s9
    %p131 = scmp.lt.s32.totalorder %s9, 10
    %p132 = pnand %p130, %p131
    %p133 = pneg %p132
    // Predicated region
    $region9: #{alexnet_forward.14} parent=5 // pred_check
      _
    $region10: #{alexnet_forward.14} parent=5 // pred_check_branch
      %135 = sbr.rel (%p132) target = $region12
    $region11: #{alexnet_forward.14} parent=5 // pred_region
      %s136 = ssub.s32 %s9, 1
      // Predicated region
      $region13: #{alexnet_forward.14} parent=11 // pred_check
        %p137 = pneg %p96
      $region14: #{alexnet_forward.14} parent=11 // pred_check_branch
        %139 = sbr.rel (%p137) target = $region16
      $region15: #{alexnet_forward.14} parent=11 // pred_region
        _
      $region16: #{alexnet_forward.14} parent=11 // pred_fallthru
        _
    $region12: #{alexnet_forward.14} parent=5 // pred_fallthru
      _
    %p140 = scmp.lt.s32.totalorder %s9, 9
    // Predicated region
    $region17: #{alexnet_forward.14} parent=5 // pred_check
      %p141 = pneg %p140
    $region18: #{alexnet_forward.14} parent=5 // pred_check_branch
      %143 = sbr.rel (%p141) target = $region20
    $region19: #{alexnet_forward.14} parent=5 // pred_region
      // Predicated region
      $region21: #{alexnet_forward.14} parent=19 // pred_check
        %p144 = pneg %p43
      $region22: #{alexnet_forward.14} parent=19 // pred_check_branch
        %146 = sbr.rel (%p144) target = $region24
      $region23: #{alexnet_forward.14} parent=19 // pred_region
        %s147 = sadd.s32 %s16, %s17
        %p148 = scmp.lt.s32.totalorder %s147, 4
        %s149 = scalar_select %p148, %s147, 4
        %s150 = smul.addr %s149, 6
        %s151 = smul.addr %s150, 4
        %s152 = scalar_lea.vmem %s0, %s151
        %s153 = sadd.s32 %s16, %s17
      $region24: #{alexnet_forward.14} parent=19 // pred_fallthru
        _
      // Predicated region
      $region25: #{alexnet_forward.14} parent=19 // pred_check
        %p154 = pneg %p69
      $region26: #{alexnet_forward.14} parent=19 // pred_check_branch
        %156 = sbr.rel (%p154) target = $region28
      $region27: #{alexnet_forward.14} parent=19 // pred_region
        %p157 = scmp.lt.s32.totalorder %s17, 2
        %s158 = scalar_select %p157, %s17, 2
        %s159 = smul.addr %s158, 288
        %s160 = smul.addr %s159, 4
        %s161 = scalar_lea.vmem %s1, %s160
      $region28: #{alexnet_forward.14} parent=19 // pred_fallthru
        _
    $region20: #{alexnet_forward.14} parent=5 // pred_fallthru
      _
    %p162 = scmp.le.s32.totalorder 1, %s9
    %p163 = scmp.lt.s32.totalorder %s9, 10
    %p164 = pnand %p162, %p163
    %p165 = pneg %p164
    // Predicated region
    $region29: #{alexnet_forward.14} parent=5 // pred_check
      _
    $region30: #{alexnet_forward.14} parent=5 // pred_check_branch
      %167 = sbr.rel (%p164) target = $region32
    $region31: #{alexnet_forward.14} parent=5 // pred_region
      %s168 = ssub.s32 %s9, 1
      %s169 = sadd.s32 %s18, %s19
      %p170 = scmp.lt.s32.totalorder %s169, 4
      %s171 = scalar_select %p170, %s169, 4
      %s172 = smul.addr %s171, 6
      %s173 = smul.addr %s172, 4
      %s174 = scalar_lea.vmem %s0, %s173
      %p175 = pneg %p49
      %p176 = pneg %p46
      %p177 = scmp.lt.s32.totalorder %s19, 2
      %s178 = scalar_select %p177, %s19, 2
      %s179 = smul.addr %s178, 288
      %s180 = smul.addr %s179, 4
      %s181 = scalar_lea.vmem %s1, %s180
      %p182 = pneg %p75
      %p183 = pneg %p72
      %p184 = pneg %p96
      %p185 = pneg %p93
      %p186 = pneg %p122
      %p187 = pneg %p119
      %p188 = scmp.lt.s32.totalorder %s18, 2
      %s189 = scalar_select %p188, %s18, 2
      %s190 = smul.addr %s189, 4
      %s191 = smul.addr %s190, 2
      %s192 = scalar_lea.vmem %s3, %s191
      %s193 = sadd.s32 %s18, %s19
      %p194 = scmp.lt.s32.totalorder %s193, 4
      %s195 = scalar_select %p194, %s193, 4
      %s196 = smul.addr %s195, 6
      %s197 = smul.addr %s196, 4
      %s198 = scalar_lea.vmem %s0, %s197
      %s199 = sadd.s32 %s18, %s19
      %p200 = scmp.lt.s32.totalorder %s19, 2
      %s201 = scalar_select %p200, %s19, 2
      %s202 = smul.addr %s201, 288
      %s203 = smul.addr %s202, 4
      %s204 = scalar_lea.vmem %s1, %s203
      %p205 = scmp.lt.s32.totalorder %s18, 2
      %s206 = scalar_select %p205, %s18, 2
      %s207 = smul.addr %s206, 4
      %s208 = smul.addr %s207, 2
      %s209 = scalar_lea.vmem %s3, %s208
      %p211 = scmp.eq.s32.totalorder %s19, 0
      // Predicated region
      $region33: #{alexnet_forward.14} parent=31 // pred_check
        %p212 = pneg %p211
      $region34: #{alexnet_forward.14} parent=31 // pred_check_branch
        %214 = sbr.rel (%p212) target = $region36
      $region35: #{alexnet_forward.14} parent=31 // pred_region
        %215 = vst [vmem:[#allocation2] sm:$0x77] 0.0
        %216 = vst [vmem:[#allocation2 + $0x8] sm:$0x77] 0.0
      $region36: #{alexnet_forward.14} parent=31 // pred_fallthru
        _
      %v217 = vld [vmem:[%s198] sm:$0x77]
      %v218 = vld [vmem:[%s198 + $0x8] sm:$0x7]
      %v219 = vld [vmem:[%s204] sm:$0xff]
      %v220 = vld [vmem:[%s204 + $0x8] sm:$0xff]
      %v221 = vld [vmem:[%s204 + $0x10] sm:$0xff]
      %v222 = vld [vmem:[%s204 + $0x18] sm:$0xff]
      %v223 = vld [vmem:[%s204 + $0x20] sm:$0xff]
      %v224 = vld [vmem:[%s204 + $0x28] sm:$0xff]
      %v225 = vld [vmem:[%s204 + $0x30] sm:$0xff]
      %v226 = vld [vmem:[%s204 + $0x38] sm:$0xff]
      %v227 = vld [vmem:[%s204 + $0x40] sm:$0xff]
      %v228 = vld [vmem:[%s204 + $0x48] sm:$0xff]
      %v229 = vld [vmem:[%s204 + $0x50] sm:$0xff]
      %v230 = vld [vmem:[%s204 + $0x58] sm:$0xff]
      %v231 = vld [vmem:[%s204 + $0x60] sm:$0xff]
      %v232 = vld [vmem:[%s204 + $0x68] sm:$0xff]
      %v233 = vld [vmem:[%s204 + $0x70] sm:$0xff]
      %v234 = vld [vmem:[%s204 + $0x78] sm:$0xff]
      %v235 = vld [vmem:[%s204 + $0x80] sm:$0xff]
      %v236 = vld [vmem:[%s204 + $0x88] sm:$0xff]
      %v237 = vld [vmem:[%s204 + $0x90] sm:$0xff]
      %v238 = vld [vmem:[%s204 + $0x98] sm:$0xff]
      %v239 = vld [vmem:[%s204 + $0xa0] sm:$0xff]
      %v240 = vld [vmem:[%s204 + $0xa8] sm:$0xff]
      %v241 = vld [vmem:[%s204 + $0xb0] sm:$0xff]
      %v242 = vld [vmem:[%s204 + $0xb8] sm:$0xff]
      %v243 = vld [vmem:[%s204 + $0xc0] sm:$0xff]
      %v244 = vld [vmem:[%s204 + $0xc8] sm:$0xff]
      %v245 = vld [vmem:[%s204 + $0xd0] sm:$0xff]
      %v246 = vld [vmem:[%s204 + $0xd8] sm:$0xff]
      %v247 = vld [vmem:[%s204 + $0xe0] sm:$0xff]
      %v248 = vld [vmem:[%s204 + $0xe8] sm:$0xff]
      %v249 = vld [vmem:[%s204 + $0xf0] sm:$0xff]
      %v250 = vld [vmem:[%s204 + $0xf8] sm:$0xff]
      %v251 = vld [vmem:[%s204 + $0x100] sm:$0xff]
      %v252 = vld [vmem:[%s204 + $0x108] sm:$0xff]
      %v253 = vld [vmem:[%s204 + $0x110] sm:$0xff]
      %v254 = vld [vmem:[%s204 + $0x118] sm:$0xff]
      %v255 = vld [vmem:[%s204 + $0x120] sm:$0xff]
      %v256 = vld [vmem:[%s204 + $0x128] sm:$0xff]
      %v257 = vld [vmem:[%s204 + $0x130] sm:$0xff]
      %v258 = vld [vmem:[%s204 + $0x138] sm:$0xff]
      %v259 = vld [vmem:[%s204 + $0x140] sm:$0xff]
      %v260 = vld [vmem:[%s204 + $0x148] sm:$0xff]
      %v261 = vld [vmem:[%s204 + $0x150] sm:$0xff]
      %v262 = vld [vmem:[%s204 + $0x158] sm:$0xff]
      %v263 = vld [vmem:[%s204 + $0x160] sm:$0xff]
      %v264 = vld [vmem:[%s204 + $0x168] sm:$0xff]
      %v265 = vld [vmem:[%s204 + $0x170] sm:$0xff]
      %v266 = vld [vmem:[%s204 + $0x178] sm:$0xff]
      %s267 = scalar_lea.vmem %s204, 384
      %v268 = vld [vmem:[%s267] sm:$0xff]
      %v269 = vld [vmem:[%s267 + $0x8] sm:$0xff]
      %v270 = vld [vmem:[%s267 + $0x10] sm:$0xff]
      %v271 = vld [vmem:[%s267 + $0x18] sm:$0xff]
      %v272 = vld [vmem:[%s267 + $0x20] sm:$0xff]
      %v273 = vld [vmem:[%s267 + $0x28] sm:$0xff]
      %v274 = vld [vmem:[%s267 + $0x30] sm:$0xff]
      %v275 = vld [vmem:[%s267 + $0x38] sm:$0xff]
      %v276 = vld [vmem:[%s267 + $0x40] sm:$0xff]
      %v277 = vld [vmem:[%s267 + $0x48] sm:$0xff]
      %v278 = vld [vmem:[%s267 + $0x50] sm:$0xff]
      %v279 = vld [vmem:[%s267 + $0x58] sm:$0xff]
      %v280 = vld [vmem:[%s267 + $0x60] sm:$0xff]
      %v281 = vld [vmem:[%s267 + $0x68] sm:$0xff]
      %v282 = vld [vmem:[%s267 + $0x70] sm:$0xff]
      %v283 = vld [vmem:[%s267 + $0x78] sm:$0xff]
      %v284 = vld [vmem:[%s267 + $0x80] sm:$0xff]
      %v285 = vld [vmem:[%s267 + $0x88] sm:$0xff]
      %v286 = vld [vmem:[%s267 + $0x90] sm:$0xff]
      %v287 = vld [vmem:[%s267 + $0x98] sm:$0xff]
      %v288 = vld [vmem:[%s267 + $0xa0] sm:$0xff]
      %v289 = vld [vmem:[%s267 + $0xa8] sm:$0xff]
      %v290 = vld [vmem:[%s267 + $0xb0] sm:$0xff]
      %v291 = vld [vmem:[%s267 + $0xb8] sm:$0xff]
      %v292 = vld [vmem:[%s267 + $0xc0] sm:$0xff]
      %v293 = vld [vmem:[%s267 + $0xc8] sm:$0xff]
      %v294 = vld [vmem:[%s267 + $0xd0] sm:$0xff]
      %v295 = vld [vmem:[%s267 + $0xd8] sm:$0xff]
      %v296 = vld [vmem:[%s267 + $0xe0] sm:$0xff]
      %v297 = vld [vmem:[%s267 + $0xe8] sm:$0xff]
      %v298 = vld [vmem:[%s267 + $0xf0] sm:$0xff]
      %v299 = vld [vmem:[%s267 + $0xf8] sm:$0xff]
      %v300 = vld [vmem:[%s267 + $0x100] sm:$0xff]
      %v301 = vld [vmem:[%s267 + $0x108] sm:$0xff]
      %v302 = vld [vmem:[%s267 + $0x110] sm:$0xff]
      %v303 = vld [vmem:[%s267 + $0x118] sm:$0xff]
      %v304 = vld [vmem:[%s267 + $0x120] sm:$0xff]
      %v305 = vld [vmem:[%s267 + $0x128] sm:$0xff]
      %v306 = vld [vmem:[%s267 + $0x130] sm:$0xff]
      %v307 = vld [vmem:[%s267 + $0x138] sm:$0xff]
      %v308 = vld [vmem:[%s267 + $0x140] sm:$0xff]
      %v309 = vld [vmem:[%s267 + $0x148] sm:$0xff]
      %v310 = vld [vmem:[%s267 + $0x150] sm:$0xff]
      %v311 = vld [vmem:[%s267 + $0x158] sm:$0xff]
      %v312 = vld [vmem:[%s267 + $0x160] sm:$0xff]
      %v313 = vld [vmem:[%s267 + $0x168] sm:$0xff]
      %v314 = vld [vmem:[%s267 + $0x170] sm:$0xff]
      %v315 = vld [vmem:[%s267 + $0x178] sm:$0xff]
      %v318 = vunpack.c.l.b16 %v217
      %v319 = vunpack.c.h.b16 %v217
      %v320 = vunpack.c.l.b16 %v218
      %v321 = vpack.c.b16 %v318, %v318
      %v322 = vpack.c.b16 %v319, %v319
      %v323 = vpack.c.b16 %v320, %v320
      %v325 = vshrl.u32 %v321, 16
      %v327 = vshll.u32 %v321, 16
      %v329 = vrot.slane %v327, 1
      %v330 = vor.u32 %v325, %v329
      %v332 = vshrl.u32 %v322, 16
      %v334 = vshll.u32 %v322, 16
      %v336 = vrot.slane %v334, 1
      %v337 = vor.u32 %v332, %v336
      %v339 = vshrl.u32 %v323, 16
      %v341 = vshll.u32 %v323, 16
      %v343 = vrot.slane %v341, 1
      %v344 = vor.u32 %v339, %v343
      %v396 = vunpack.c.l.b16 %v268
      %v397 = vunpack.c.h.b16 %v268
      %v398 = vunpack.c.l.b16 %v269
      %v399 = vunpack.c.h.b16 %v269
      %v400 = vunpack.c.l.b16 %v270
      %v401 = vunpack.c.h.b16 %v270
      %v402 = vunpack.c.l.b16 %v271
      %v403 = vunpack.c.h.b16 %v271
      %v404 = vunpack.c.l.b16 %v272
      %v405 = vunpack.c.h.b16 %v272
      %v406 = vunpack.c.l.b16 %v273
      %v407 = vunpack.c.h.b16 %v273
      %v408 = vunpack.c.l.b16 %v274
      %v409 = vunpack.c.h.b16 %v274
      %v410 = vunpack.c.l.b16 %v275
      %v411 = vunpack.c.h.b16 %v275
      %v412 = vunpack.c.l.b16 %v276
      %v413 = vunpack.c.h.b16 %v276
      %v414 = vunpack.c.l.b16 %v277
      %v415 = vunpack.c.h.b16 %v277
      %v416 = vunpack.c.l.b16 %v278
      %v417 = vunpack.c.h.b16 %v278
      %v418 = vunpack.c.l.b16 %v279
      %v419 = vunpack.c.h.b16 %v279
      %v420 = vunpack.c.l.b16 %v280
      %v421 = vunpack.c.h.b16 %v280
      %v422 = vunpack.c.l.b16 %v281
      %v423 = vunpack.c.h.b16 %v281
      %v424 = vunpack.c.l.b16 %v282
      %v425 = vunpack.c.h.b16 %v282
      %v426 = vunpack.c.l.b16 %v283
      %v427 = vunpack.c.h.b16 %v283
      %v428 = vunpack.c.l.b16 %v284
      %v429 = vunpack.c.h.b16 %v284
      %v430 = vunpack.c.l.b16 %v285
      %v431 = vunpack.c.h.b16 %v285
      %v432 = vunpack.c.l.b16 %v286
      %v433 = vunpack.c.h.b16 %v286
      %v434 = vunpack.c.l.b16 %v287
      %v435 = vunpack.c.h.b16 %v287
      %v436 = vunpack.c.l.b16 %v288
      %v437 = vunpack.c.h.b16 %v288
      %v438 = vunpack.c.l.b16 %v289
      %v439 = vunpack.c.h.b16 %v289
      %v440 = vunpack.c.l.b16 %v290
      %v441 = vunpack.c.h.b16 %v290
      %v442 = vunpack.c.l.b16 %v291
      %v443 = vunpack.c.h.b16 %v291
      %v444 = vunpack.c.l.b16 %v292
      %v445 = vunpack.c.h.b16 %v292
      %v446 = vunpack.c.l.b16 %v293
      %v447 = vunpack.c.h.b16 %v293
      %v448 = vunpack.c.l.b16 %v294
      %v449 = vunpack.c.h.b16 %v294
      %v450 = vunpack.c.l.b16 %v295
      %v451 = vunpack.c.h.b16 %v295
      %v452 = vunpack.c.l.b16 %v296
      %v453 = vunpack.c.h.b16 %v296
      %v454 = vunpack.c.l.b16 %v297
      %v455 = vunpack.c.h.b16 %v297
      %v456 = vunpack.c.l.b16 %v298
      %v457 = vunpack.c.h.b16 %v298
      %v458 = vunpack.c.l.b16 %v299
      %v459 = vunpack.c.h.b16 %v299
      %v460 = vunpack.c.l.b16 %v300
      %v461 = vunpack.c.h.b16 %v300
      %v462 = vunpack.c.l.b16 %v301
      %v463 = vunpack.c.h.b16 %v301
      %v464 = vunpack.c.l.b16 %v302
      %v465 = vunpack.c.h.b16 %v302
      %v466 = vunpack.c.l.b16 %v303
      %v467 = vunpack.c.h.b16 %v303
      %v468 = vunpack.c.l.b16 %v304
      %v469 = vunpack.c.h.b16 %v304
      %v470 = vunpack.c.l.b16 %v305
      %v471 = vunpack.c.h.b16 %v305
      %v472 = vunpack.c.l.b16 %v306
      %v473 = vunpack.c.h.b16 %v306
      %v474 = vunpack.c.l.b16 %v307
      %v475 = vunpack.c.h.b16 %v307
      %v476 = vunpack.c.l.b16 %v308
      %v477 = vunpack.c.h.b16 %v308
      %v478 = vunpack.c.l.b16 %v309
      %v479 = vunpack.c.h.b16 %v309
      %v480 = vunpack.c.l.b16 %v310
      %v481 = vunpack.c.h.b16 %v310
      %v482 = vunpack.c.l.b16 %v311
      %v483 = vunpack.c.h.b16 %v311
      %v484 = vunpack.c.l.b16 %v312
      %v485 = vunpack.c.h.b16 %v312
      %v486 = vunpack.c.l.b16 %v313
      %v487 = vunpack.c.h.b16 %v313
      %v488 = vunpack.c.l.b16 %v314
      %v489 = vunpack.c.h.b16 %v314
      %v490 = vunpack.c.l.b16 %v315
      %v491 = vunpack.c.h.b16 %v315
      %v492 = vpack.c.b16 %v398, %v396
      %v493 = vpack.c.b16 %v399, %v397
      %v494 = vpack.c.b16 %v402, %v400
      %v495 = vpack.c.b16 %v403, %v401
      %v496 = vpack.c.b16 %v406, %v404
      %v497 = vpack.c.b16 %v407, %v405
      %v498 = vpack.c.b16 %v410, %v408
      %v499 = vpack.c.b16 %v411, %v409
      %v500 = vpack.c.b16 %v414, %v412
      %v501 = vpack.c.b16 %v415, %v413
      %v502 = vpack.c.b16 %v418, %v416
      %v503 = vpack.c.b16 %v419, %v417
      %v504 = vpack.c.b16 %v422, %v420
      %v505 = vpack.c.b16 %v423, %v421
      %v506 = vpack.c.b16 %v426, %v424
      %v507 = vpack.c.b16 %v427, %v425
      %v508 = vpack.c.b16 %v430, %v428
      %v509 = vpack.c.b16 %v431, %v429
      %v510 = vpack.c.b16 %v434, %v432
      %v511 = vpack.c.b16 %v435, %v433
      %v512 = vpack.c.b16 %v438, %v436
      %v513 = vpack.c.b16 %v439, %v437
      %v514 = vpack.c.b16 %v442, %v440
      %v515 = vpack.c.b16 %v443, %v441
      %v516 = vpack.c.b16 %v446, %v444
      %v517 = vpack.c.b16 %v447, %v445
      %v518 = vpack.c.b16 %v450, %v448
      %v519 = vpack.c.b16 %v451, %v449
      %v520 = vpack.c.b16 %v454, %v452
      %v521 = vpack.c.b16 %v455, %v453
      %v522 = vpack.c.b16 %v458, %v456
      %v523 = vpack.c.b16 %v459, %v457
      %v524 = vpack.c.b16 %v462, %v460
      %v525 = vpack.c.b16 %v463, %v461
      %v526 = vpack.c.b16 %v466, %v464
      %v527 = vpack.c.b16 %v467, %v465
      %v528 = vpack.c.b16 %v470, %v468
      %v529 = vpack.c.b16 %v471, %v469
      %v530 = vpack.c.b16 %v474, %v472
      %v531 = vpack.c.b16 %v475, %v473
      %v532 = vpack.c.b16 %v478, %v476
      %v533 = vpack.c.b16 %v479, %v477
      %v534 = vpack.c.b16 %v482, %v480
      %v535 = vpack.c.b16 %v483, %v481
      %v536 = vpack.c.b16 %v486, %v484
      %v537 = vpack.c.b16 %v487, %v485
      %v538 = vpack.c.b16 %v490, %v488
      %v539 = vpack.c.b16 %v491, %v489
      %588 = vmatprep.subr.bf16.mxu0 %v493
      %589 = vmatpush1.bf16.msra.mxu0 %v492
      %590 = vmatprep.subr.bf16.mxu0 %v495
      %591 = vmatpush1.bf16.msra.mxu0 %v494
      %592 = vmatprep.subr.bf16.mxu0 %v497
      %593 = vmatpush1.bf16.msra.mxu0 %v496
      %594 = vmatprep.subr.bf16.mxu0 %v499
      %595 = vmatpush1.bf16.msra.mxu0 %v498
      %596 = vmatprep.subr.bf16.mxu0 %v501
      %597 = vmatpush1.bf16.msra.mxu0 %v500
      %598 = vmatprep.subr.bf16.mxu0 %v503
      %599 = vmatpush1.bf16.msra.mxu0 %v502
      %600 = vmatprep.subr.bf16.mxu0 %v505
      %601 = vmatpush1.bf16.msra.mxu0 %v504
      %602 = vmatprep.subr.bf16.mxu0 %v507
      %603 = vmatpush1.bf16.msra.mxu0 %v506
      %604 = vmatprep.subr.bf16.mxu0 %v509
      %605 = vmatpush1.bf16.msra.mxu0 %v508
      %606 = vmatprep.subr.bf16.mxu0 %v511
      %607 = vmatpush1.bf16.msra.mxu0 %v510
      %608 = vmatprep.subr.bf16.mxu0 %v513
      %609 = vmatpush1.bf16.msra.mxu0 %v512
      %610 = vmatprep.subr.bf16.mxu0 %v515
      %611 = vmatpush1.bf16.msra.mxu0 %v514
      %612 = vmatprep.subr.bf16.mxu0 %v517
      %613 = vmatpush1.bf16.msra.mxu0 %v516
      %614 = vmatprep.subr.bf16.mxu0 %v519
      %615 = vmatpush1.bf16.msra.mxu0 %v518
      %616 = vmatprep.subr.bf16.mxu0 %v521
      %617 = vmatpush1.bf16.msra.mxu0 %v520
      %618 = vmatprep.subr.bf16.mxu0 %v523
      %619 = vmatpush1.bf16.msra.mxu0 %v522
      %620 = vmatprep.mubr.bf16.mxu0 %v337
      %621 = vmatmul.mubr.bf16.gmra.mrb[0].mxu0 %v330
      %v622 = vpop.f32.mrb[0].mxu0
      %v623 = vadd.f32 0.0, %v622
      %v624 = vpop.f32.mrb[0].mxu0
      %v625 = vadd.f32 0.0, %v624
      %v626 = vpop.f32.mrb[0].mxu0
      %v627 = vpop.f32.mrb[0].mxu0
      %628 = vdwg.mxu0
      %629 = vmatprep.subr.bf16.mxu0 %v525
      %630 = vmatpush1.bf16.msra.mxu0 %v524
      %631 = vmatprep.subr.bf16.mxu0 %v527
      %632 = vmatpush1.bf16.msra.mxu0 %v526
      %633 = vmatprep.subr.bf16.mxu0 %v529
      %634 = vmatpush1.bf16.msra.mxu0 %v528
      %635 = vmatprep.subr.bf16.mxu0 %v531
      %636 = vmatpush1.bf16.msra.mxu0 %v530
      %637 = vmatprep.subr.bf16.mxu0 %v533
      %638 = vmatpush1.bf16.msra.mxu0 %v532
      %639 = vmatprep.subr.bf16.mxu0 %v535
      %640 = vmatpush1.bf16.msra.mxu0 %v534
      %641 = vmatprep.subr.bf16.mxu0 %v537
      %642 = vmatpush1.bf16.msra.mxu0 %v536
      %643 = vmatprep.subr.bf16.mxu0 %v539
      %644 = vmatpush1.bf16.msra.mxu0 %v538
      %645 = vmatprep.subr.bf16.mxu0 0
      %646 = vmatpush1.bf16.msra.mxu0 0
      %647 = vmatprep.subr.bf16.mxu0 0
      %648 = vmatpush1.bf16.msra.mxu0 0
      %649 = vmatprep.subr.bf16.mxu0 0
      %650 = vmatpush1.bf16.msra.mxu0 0
      %651 = vmatprep.subr.bf16.mxu0 0
      %652 = vmatpush1.bf16.msra.mxu0 0
      %653 = vmatprep.subr.bf16.mxu0 0
      %654 = vmatpush1.bf16.msra.mxu0 0
      %655 = vmatprep.subr.bf16.mxu0 0
      %656 = vmatpush1.bf16.msra.mxu0 0
      %657 = vmatprep.subr.bf16.mxu0 0
      %658 = vmatpush1.bf16.msra.mxu0 0
      %659 = vmatprep.subr.bf16.mxu0 0
      %660 = vmatpush1.bf16.msra.mxu0 0
      %661 = vmatprep.mubr.bf16.mxu0 0
      %662 = vmatmul.mubr.bf16.gmra.mrb[0].mxu0 %v344
      %v663 = vpop.f32.mrb[0].mxu0
      %v664 = vadd.f32 %v623, %v663
      %v665 = vpop.f32.mrb[0].mxu0
      %v666 = vadd.f32 %v625, %v665
      %v667 = vpop.f32.mrb[0].mxu0
      %v668 = vpop.f32.mrb[0].mxu0
      %669 = vdwg.mxu0
      %v721 = vunpack.c.l.b16 %v219
      %v722 = vunpack.c.h.b16 %v219
      %v723 = vunpack.c.l.b16 %v220
      %v724 = vunpack.c.h.b16 %v220
      %v725 = vunpack.c.l.b16 %v221
      %v726 = vunpack.c.h.b16 %v221
      %v727 = vunpack.c.l.b16 %v222
      %v728 = vunpack.c.h.b16 %v222
      %v729 = vunpack.c.l.b16 %v223
      %v730 = vunpack.c.h.b16 %v223
      %v731 = vunpack.c.l.b16 %v224
      %v732 = vunpack.c.h.b16 %v224
      %v733 = vunpack.c.l.b16 %v225
      %v734 = vunpack.c.h.b16 %v225
      %v735 = vunpack.c.l.b16 %v226
      %v736 = vunpack.c.h.b16 %v226
      %v737 = vunpack.c.l.b16 %v227
      %v738 = vunpack.c.h.b16 %v227
      %v739 = vunpack.c.l.b16 %v228
      %v740 = vunpack.c.h.b16 %v228
      %v741 = vunpack.c.l.b16 %v229
      %v742 = vunpack.c.h.b16 %v229
      %v743 = vunpack.c.l.b16 %v230
      %v744 = vunpack.c.h.b16 %v230
      %v745 = vunpack.c.l.b16 %v231
      %v746 = vunpack.c.h.b16 %v231
      %v747 = vunpack.c.l.b16 %v232
      %v748 = vunpack.c.h.b16 %v232
      %v749 = vunpack.c.l.b16 %v233
      %v750 = vunpack.c.h.b16 %v233
      %v751 = vunpack.c.l.b16 %v234
      %v752 = vunpack.c.h.b16 %v234
      %v753 = vunpack.c.l.b16 %v235
      %v754 = vunpack.c.h.b16 %v235
      %v755 = vunpack.c.l.b16 %v236
      %v756 = vunpack.c.h.b16 %v236
      %v757 = vunpack.c.l.b16 %v237
      %v758 = vunpack.c.h.b16 %v237
      %v759 = vunpack.c.l.b16 %v238
      %v760 = vunpack.c.h.b16 %v238
      %v761 = vunpack.c.l.b16 %v239
      %v762 = vunpack.c.h.b16 %v239
      %v763 = vunpack.c.l.b16 %v240
      %v764 = vunpack.c.h.b16 %v240
      %v765 = vunpack.c.l.b16 %v241
      %v766 = vunpack.c.h.b16 %v241
      %v767 = vunpack.c.l.b16 %v242
      %v768 = vunpack.c.h.b16 %v242
      %v769 = vunpack.c.l.b16 %v243
      %v770 = vunpack.c.h.b16 %v243
      %v771 = vunpack.c.l.b16 %v244
      %v772 = vunpack.c.h.b16 %v244
      %v773 = vunpack.c.l.b16 %v245
      %v774 = vunpack.c.h.b16 %v245
      %v775 = vunpack.c.l.b16 %v246
      %v776 = vunpack.c.h.b16 %v246
      %v777 = vunpack.c.l.b16 %v247
      %v778 = vunpack.c.h.b16 %v247
      %v779 = vunpack.c.l.b16 %v248
      %v780 = vunpack.c.h.b16 %v248
      %v781 = vunpack.c.l.b16 %v249
      %v782 = vunpack.c.h.b16 %v249
      %v783 = vunpack.c.l.b16 %v250
      %v784 = vunpack.c.h.b16 %v250
      %v785 = vunpack.c.l.b16 %v251
      %v786 = vunpack.c.h.b16 %v251
      %v787 = vunpack.c.l.b16 %v252
      %v788 = vunpack.c.h.b16 %v252
      %v789 = vunpack.c.l.b16 %v253
      %v790 = vunpack.c.h.b16 %v253
      %v791 = vunpack.c.l.b16 %v254
      %v792 = vunpack.c.h.b16 %v254
      %v793 = vunpack.c.l.b16 %v255
      %v794 = vunpack.c.h.b16 %v255
      %v795 = vunpack.c.l.b16 %v256
      %v796 = vunpack.c.h.b16 %v256
      %v797 = vunpack.c.l.b16 %v257
      %v798 = vunpack.c.h.b16 %v257
      %v799 = vunpack.c.l.b16 %v258
      %v800 = vunpack.c.h.b16 %v258
      %v801 = vunpack.c.l.b16 %v259
      %v802 = vunpack.c.h.b16 %v259
      %v803 = vunpack.c.l.b16 %v260
      %v804 = vunpack.c.h.b16 %v260
      %v805 = vunpack.c.l.b16 %v261
      %v806 = vunpack.c.h.b16 %v261
      %v807 = vunpack.c.l.b16 %v262
      %v808 = vunpack.c.h.b16 %v262
      %v809 = vunpack.c.l.b16 %v263
      %v810 = vunpack.c.h.b16 %v263
      %v811 = vunpack.c.l.b16 %v264
      %v812 = vunpack.c.h.b16 %v264
      %v813 = vunpack.c.l.b16 %v265
      %v814 = vunpack.c.h.b16 %v265
      %v815 = vunpack.c.l.b16 %v266
      %v816 = vunpack.c.h.b16 %v266
      %v817 = vpack.c.b16 %v723, %v721
      %v818 = vpack.c.b16 %v724, %v722
      %v819 = vpack.c.b16 %v727, %v725
      %v820 = vpack.c.b16 %v728, %v726
      %v821 = vpack.c.b16 %v731, %v729
      %v822 = vpack.c.b16 %v732, %v730
      %v823 = vpack.c.b16 %v735, %v733
      %v824 = vpack.c.b16 %v736, %v734
      %v825 = vpack.c.b16 %v739, %v737
      %v826 = vpack.c.b16 %v740, %v738
      %v827 = vpack.c.b16 %v743, %v741
      %v828 = vpack.c.b16 %v744, %v742
      %v829 = vpack.c.b16 %v747, %v745
      %v830 = vpack.c.b16 %v748, %v746
      %v831 = vpack.c.b16 %v751, %v749
      %v832 = vpack.c.b16 %v752, %v750
      %v833 = vpack.c.b16 %v755, %v753
      %v834 = vpack.c.b16 %v756, %v754
      %v835 = vpack.c.b16 %v759, %v757
      %v836 = vpack.c.b16 %v760, %v758
      %v837 = vpack.c.b16 %v763, %v761
      %v838 = vpack.c.b16 %v764, %v762
      %v839 = vpack.c.b16 %v767, %v765
      %v840 = vpack.c.b16 %v768, %v766
      %v841 = vpack.c.b16 %v771, %v769
      %v842 = vpack.c.b16 %v772, %v770
      %v843 = vpack.c.b16 %v775, %v773
      %v844 = vpack.c.b16 %v776, %v774
      %v845 = vpack.c.b16 %v779, %v777
      %v846 = vpack.c.b16 %v780, %v778
      %v847 = vpack.c.b16 %v783, %v781
      %v848 = vpack.c.b16 %v784, %v782
      %v849 = vpack.c.b16 %v787, %v785
      %v850 = vpack.c.b16 %v788, %v786
      %v851 = vpack.c.b16 %v791, %v789
      %v852 = vpack.c.b16 %v792, %v790
      %v853 = vpack.c.b16 %v795, %v793
      %v854 = vpack.c.b16 %v796, %v794
      %v855 = vpack.c.b16 %v799, %v797
      %v856 = vpack.c.b16 %v800, %v798
      %v857 = vpack.c.b16 %v803, %v801
      %v858 = vpack.c.b16 %v804, %v802
      %v859 = vpack.c.b16 %v807, %v805
      %v860 = vpack.c.b16 %v808, %v806
      %v861 = vpack.c.b16 %v811, %v809
      %v862 = vpack.c.b16 %v812, %v810
      %v863 = vpack.c.b16 %v815, %v813
      %v864 = vpack.c.b16 %v816, %v814
      %913 = vmatprep.subr.bf16.mxu0 %v818
      %914 = vmatpush1.bf16.msra.mxu0 %v817
      %915 = vmatprep.subr.bf16.mxu0 %v820
      %916 = vmatpush1.bf16.msra.mxu0 %v819
      %917 = vmatprep.subr.bf16.mxu0 %v822
      %918 = vmatpush1.bf16.msra.mxu0 %v821
      %919 = vmatprep.subr.bf16.mxu0 %v824
      %920 = vmatpush1.bf16.msra.mxu0 %v823
      %921 = vmatprep.subr.bf16.mxu0 %v826
      %922 = vmatpush1.bf16.msra.mxu0 %v825
      %923 = vmatprep.subr.bf16.mxu0 %v828
      %924 = vmatpush1.bf16.msra.mxu0 %v827
      %925 = vmatprep.subr.bf16.mxu0 %v830
      %926 = vmatpush1.bf16.msra.mxu0 %v829
      %927 = vmatprep.subr.bf16.mxu0 %v832
      %928 = vmatpush1.bf16.msra.mxu0 %v831
      %929 = vmatprep.subr.bf16.mxu0 %v834
      %930 = vmatpush1.bf16.msra.mxu0 %v833
      %931 = vmatprep.subr.bf16.mxu0 %v836
      %932 = vmatpush1.bf16.msra.mxu0 %v835
      %933 = vmatprep.subr.bf16.mxu0 %v838
      %934 = vmatpush1.bf16.msra.mxu0 %v837
      %935 = vmatprep.subr.bf16.mxu0 %v840
      %936 = vmatpush1.bf16.msra.mxu0 %v839
      %937 = vmatprep.subr.bf16.mxu0 %v842
      %938 = vmatpush1.bf16.msra.mxu0 %v841
      %939 = vmatprep.subr.bf16.mxu0 %v844
      %940 = vmatpush1.bf16.msra.mxu0 %v843
      %941 = vmatprep.subr.bf16.mxu0 %v846
      %942 = vmatpush1.bf16.msra.mxu0 %v845
      %943 = vmatprep.subr.bf16.mxu0 %v848
      %944 = vmatpush1.bf16.msra.mxu0 %v847
      %945 = vmatprep.mubr.bf16.mxu0 %v322
      %946 = vmatmul.mubr.bf16.gmra.mrb[0].mxu0 %v321
      %v947 = vpop.f32.mrb[0].mxu0
      %v948 = vadd.f32 %v664, %v947
      %v949 = vpop.f32.mrb[0].mxu0
      %v950 = vadd.f32 %v666, %v949
      %v951 = vpop.f32.mrb[0].mxu0
      %v952 = vpop.f32.mrb[0].mxu0
      %953 = vdwg.mxu0
      %954 = vmatprep.subr.bf16.mxu0 %v850
      %955 = vmatpush1.bf16.msra.mxu0 %v849
      %956 = vmatprep.subr.bf16.mxu0 %v852
      %957 = vmatpush1.bf16.msra.mxu0 %v851
      %958 = vmatprep.subr.bf16.mxu0 %v854
      %959 = vmatpush1.bf16.msra.mxu0 %v853
      %960 = vmatprep.subr.bf16.mxu0 %v856
      %961 = vmatpush1.bf16.msra.mxu0 %v855
      %962 = vmatprep.subr.bf16.mxu0 %v858
      %963 = vmatpush1.bf16.msra.mxu0 %v857
      %964 = vmatprep.subr.bf16.mxu0 %v860
      %965 = vmatpush1.bf16.msra.mxu0 %v859
      %966 = vmatprep.subr.bf16.mxu0 %v862
      %967 = vmatpush1.bf16.msra.mxu0 %v861
      %968 = vmatprep.subr.bf16.mxu0 %v864
      %969 = vmatpush1.bf16.msra.mxu0 %v863
      %970 = vmatprep.subr.bf16.mxu0 0
      %971 = vmatpush1.bf16.msra.mxu0 0
      %972 = vmatprep.subr.bf16.mxu0 0
      %973 = vmatpush1.bf16.msra.mxu0 0
      %974 = vmatprep.subr.bf16.mxu0 0
      %975 = vmatpush1.bf16.msra.mxu0 0
      %976 = vmatprep.subr.bf16.mxu0 0
      %977 = vmatpush1.bf16.msra.mxu0 0
      %978 = vmatprep.subr.bf16.mxu0 0
      %979 = vmatpush1.bf16.msra.mxu0 0
      %980 = vmatprep.subr.bf16.mxu0 0
      %981 = vmatpush1.bf16.msra.mxu0 0
      %982 = vmatprep.subr.bf16.mxu0 0
      %983 = vmatpush1.bf16.msra.mxu0 0
      %984 = vmatprep.subr.bf16.mxu0 0
      %985 = vmatpush1.bf16.msra.mxu0 0
      %986 = vmatprep.mubr.bf16.mxu0 0
      %987 = vmatmul.mubr.bf16.gmra.mrb[0].mxu0 %v323
      %v988 = vpop.f32.mrb[0].mxu0
      %v989 = vadd.f32 %v948, %v988
      %v990 = vpop.f32.mrb[0].mxu0
      %v991 = vadd.f32 %v950, %v990
      %v992 = vpop.f32.mrb[0].mxu0
      %v993 = vpop.f32.mrb[0].mxu0
      %994 = vdwg.mxu0
      %s995 = scalar_lea.vmem %s204, 768
      %v996 = vld [vmem:[%s995] sm:$0xff]
      %v997 = vld [vmem:[%s995 + $0x8] sm:$0xff]
      %v998 = vld [vmem:[%s995 + $0x10] sm:$0xff]
      %v999 = vld [vmem:[%s995 + $0x18] sm:$0xff]
      %v1000 = vld [vmem:[%s995 + $0x20] sm:$0xff]
      %v1001 = vld [vmem:[%s995 + $0x28] sm:$0xff]
      %v1002 = vld [vmem:[%s995 + $0x30] sm:$0xff]
      %v1003 = vld [vmem:[%s995 + $0x38] sm:$0xff]
      %v1004 = vld [vmem:[%s995 + $0x40] sm:$0xff]
      %v1005 = vld [vmem:[%s995 + $0x48] sm:$0xff]
      %v1006 = vld [vmem:[%s995 + $0x50] sm:$0xff]
      %v1007 = vld [vmem:[%s995 + $0x58] sm:$0xff]
      %v1008 = vld [vmem:[%s995 + $0x60] sm:$0xff]
      %v1009 = vld [vmem:[%s995 + $0x68] sm:$0xff]
      %v1010 = vld [vmem:[%s995 + $0x70] sm:$0xff]
      %v1011 = vld [vmem:[%s995 + $0x78] sm:$0xff]
      %v1012 = vld [vmem:[%s995 + $0x80] sm:$0xff]
      %v1013 = vld [vmem:[%s995 + $0x88] sm:$0xff]
      %v1014 = vld [vmem:[%s995 + $0x90] sm:$0xff]
      %v1015 = vld [vmem:[%s995 + $0x98] sm:$0xff]
      %v1016 = vld [vmem:[%s995 + $0xa0] sm:$0xff]
      %v1017 = vld [vmem:[%s995 + $0xa8] sm:$0xff]
      %v1018 = vld [vmem:[%s995 + $0xb0] sm:$0xff]
      %v1019 = vld [vmem:[%s995 + $0xb8] sm:$0xff]
      %v1020 = vld [vmem:[%s995 + $0xc0] sm:$0xff]
      %v1021 = vld [vmem:[%s995 + $0xc8] sm:$0xff]
      %v1022 = vld [vmem:[%s995 + $0xd0] sm:$0xff]
      %v1023 = vld [vmem:[%s995 + $0xd8] sm:$0xff]
      %v1024 = vld [vmem:[%s995 + $0xe0] sm:$0xff]
      %v1025 = vld [vmem:[%s995 + $0xe8] sm:$0xff]
      %v1026 = vld [vmem:[%s995 + $0xf0] sm:$0xff]
      %v1027 = vld [vmem:[%s995 + $0xf8] sm:$0xff]
      %v1028 = vld [vmem:[%s995 + $0x100] sm:$0xff]
      %v1029 = vld [vmem:[%s995 + $0x108] sm:$0xff]
      %v1030 = vld [vmem:[%s995 + $0x110] sm:$0xff]
      %v1031 = vld [vmem:[%s995 + $0x118] sm:$0xff]
      %v1032 = vld [vmem:[%s995 + $0x120] sm:$0xff]
      %v1033 = vld [vmem:[%s995 + $0x128] sm:$0xff]
      %v1034 = vld [vmem:[%s995 + $0x130] sm:$0xff]
      %v1035 = vld [vmem:[%s995 + $0x138] sm:$0xff]
      %v1036 = vld [vmem:[%s995 + $0x140] sm:$0xff]
      %v1037 = vld [vmem:[%s995 + $0x148] sm:$0xff]
      %v1038 = vld [vmem:[%s995 + $0x150] sm:$0xff]
      %v1039 = vld [vmem:[%s995 + $0x158] sm:$0xff]
      %v1040 = vld [vmem:[%s995 + $0x160] sm:$0xff]
      %v1041 = vld [vmem:[%s995 + $0x168] sm:$0xff]
      %v1042 = vld [vmem:[%s995 + $0x170] sm:$0xff]
      %v1043 = vld [vmem:[%s995 + $0x178] sm:$0xff]
      %v1044 = vrot.slane %v321, 1
      %v1045 = vrot.slane %v322, 1
      %v1046 = vrot.slane %v323, 1
      %v1098 = vunpack.c.l.b16 %v996
      %v1099 = vunpack.c.h.b16 %v996
      %v1100 = vunpack.c.l.b16 %v997
      %v1101 = vunpack.c.h.b16 %v997
      %v1102 = vunpack.c.l.b16 %v998
      %v1103 = vunpack.c.h.b16 %v998
      %v1104 = vunpack.c.l.b16 %v999
      %v1105 = vunpack.c.h.b16 %v999
      %v1106 = vunpack.c.l.b16 %v1000
      %v1107 = vunpack.c.h.b16 %v1000
      %v1108 = vunpack.c.l.b16 %v1001
      %v1109 = vunpack.c.h.b16 %v1001
      %v1110 = vunpack.c.l.b16 %v1002
      %v1111 = vunpack.c.h.b16 %v1002
      %v1112 = vunpack.c.l.b16 %v1003
      %v1113 = vunpack.c.h.b16 %v1003
      %v1114 = vunpack.c.l.b16 %v1004
      %v1115 = vunpack.c.h.b16 %v1004
      %v1116 = vunpack.c.l.b16 %v1005
      %v1117 = vunpack.c.h.b16 %v1005
      %v1118 = vunpack.c.l.b16 %v1006
      %v1119 = vunpack.c.h.b16 %v1006
      %v1120 = vunpack.c.l.b16 %v1007
      %v1121 = vunpack.c.h.b16 %v1007
      %v1122 = vunpack.c.l.b16 %v1008
      %v1123 = vunpack.c.h.b16 %v1008
      %v1124 = vunpack.c.l.b16 %v1009
      %v1125 = vunpack.c.h.b16 %v1009
      %v1126 = vunpack.c.l.b16 %v1010
      %v1127 = vunpack.c.h.b16 %v1010
      %v1128 = vunpack.c.l.b16 %v1011
      %v1129 = vunpack.c.h.b16 %v1011
      %v1130 = vunpack.c.l.b16 %v1012
      %v1131 = vunpack.c.h.b16 %v1012
      %v1132 = vunpack.c.l.b16 %v1013
      %v1133 = vunpack.c.h.b16 %v1013
      %v1134 = vunpack.c.l.b16 %v1014
      %v1135 = vunpack.c.h.b16 %v1014
      %v1136 = vunpack.c.l.b16 %v1015
      %v1137 = vunpack.c.h.b16 %v1015
      %v1138 = vunpack.c.l.b16 %v1016
      %v1139 = vunpack.c.h.b16 %v1016
      %v1140 = vunpack.c.l.b16 %v1017
      %v1141 = vunpack.c.h.b16 %v1017
      %v1142 = vunpack.c.l.b16 %v1018
      %v1143 = vunpack.c.h.b16 %v1018
      %v1144 = vunpack.c.l.b16 %v1019
      %v1145 = vunpack.c.h.b16 %v1019
      %v1146 = vunpack.c.l.b16 %v1020
      %v1147 = vunpack.c.h.b16 %v1020
      %v1148 = vunpack.c.l.b16 %v1021
      %v1149 = vunpack.c.h.b16 %v1021
      %v1150 = vunpack.c.l.b16 %v1022
      %v1151 = vunpack.c.h.b16 %v1022
      %v1152 = vunpack.c.l.b16 %v1023
      %v1153 = vunpack.c.h.b16 %v1023
      %v1154 = vunpack.c.l.b16 %v1024
      %v1155 = vunpack.c.h.b16 %v1024
      %v1156 = vunpack.c.l.b16 %v1025
      %v1157 = vunpack.c.h.b16 %v1025
      %v1158 = vunpack.c.l.b16 %v1026
      %v1159 = vunpack.c.h.b16 %v1026
      %v1160 = vunpack.c.l.b16 %v1027
      %v1161 = vunpack.c.h.b16 %v1027
      %v1162 = vunpack.c.l.b16 %v1028
      %v1163 = vunpack.c.h.b16 %v1028
      %v1164 = vunpack.c.l.b16 %v1029
      %v1165 = vunpack.c.h.b16 %v1029
      %v1166 = vunpack.c.l.b16 %v1030
      %v1167 = vunpack.c.h.b16 %v1030
      %v1168 = vunpack.c.l.b16 %v1031
      %v1169 = vunpack.c.h.b16 %v1031
      %v1170 = vunpack.c.l.b16 %v1032
      %v1171 = vunpack.c.h.b16 %v1032
      %v1172 = vunpack.c.l.b16 %v1033
      %v1173 = vunpack.c.h.b16 %v1033
      %v1174 = vunpack.c.l.b16 %v1034
      %v1175 = vunpack.c.h.b16 %v1034
      %v1176 = vunpack.c.l.b16 %v1035
      %v1177 = vunpack.c.h.b16 %v1035
      %v1178 = vunpack.c.l.b16 %v1036
      %v1179 = vunpack.c.h.b16 %v1036
      %v1180 = vunpack.c.l.b16 %v1037
      %v1181 = vunpack.c.h.b16 %v1037
      %v1182 = vunpack.c.l.b16 %v1038
      %v1183 = vunpack.c.h.b16 %v1038
      %v1184 = vunpack.c.l.b16 %v1039
      %v1185 = vunpack.c.h.b16 %v1039
      %v1186 = vunpack.c.l.b16 %v1040
      %v1187 = vunpack.c.h.b16 %v1040
      %v1188 = vunpack.c.l.b16 %v1041
      %v1189 = vunpack.c.h.b16 %v1041
      %v1190 = vunpack.c.l.b16 %v1042
      %v1191 = vunpack.c.h.b16 %v1042
      %v1192 = vunpack.c.l.b16 %v1043
      %v1193 = vunpack.c.h.b16 %v1043
      %v1194 = vpack.c.b16 %v1100, %v1098
      %v1195 = vpack.c.b16 %v1101, %v1099
      %v1196 = vpack.c.b16 %v1104, %v1102
      %v1197 = vpack.c.b16 %v1105, %v1103
      %v1198 = vpack.c.b16 %v1108, %v1106
      %v1199 = vpack.c.b16 %v1109, %v1107
      %v1200 = vpack.c.b16 %v1112, %v1110
      %v1201 = vpack.c.b16 %v1113, %v1111
      %v1202 = vpack.c.b16 %v1116, %v1114
      %v1203 = vpack.c.b16 %v1117, %v1115
      %v1204 = vpack.c.b16 %v1120, %v1118
      %v1205 = vpack.c.b16 %v1121, %v1119
      %v1206 = vpack.c.b16 %v1124, %v1122
      %v1207 = vpack.c.b16 %v1125, %v1123
      %v1208 = vpack.c.b16 %v1128, %v1126
      %v1209 = vpack.c.b16 %v1129, %v1127
      %v1210 = vpack.c.b16 %v1132, %v1130
      %v1211 = vpack.c.b16 %v1133, %v1131
      %v1212 = vpack.c.b16 %v1136, %v1134
      %v1213 = vpack.c.b16 %v1137, %v1135
      %v1214 = vpack.c.b16 %v1140, %v1138
      %v1215 = vpack.c.b16 %v1141, %v1139
      %v1216 = vpack.c.b16 %v1144, %v1142
      %v1217 = vpack.c.b16 %v1145, %v1143
      %v1218 = vpack.c.b16 %v1148, %v1146
      %v1219 = vpack.c.b16 %v1149, %v1147
      %v1220 = vpack.c.b16 %v1152, %v1150
      %v1221 = vpack.c.b16 %v1153, %v1151
      %v1222 = vpack.c.b16 %v1156, %v1154
      %v1223 = vpack.c.b16 %v1157, %v1155
      %v1224 = vpack.c.b16 %v1160, %v1158
      %v1225 = vpack.c.b16 %v1161, %v1159
      %v1226 = vpack.c.b16 %v1164, %v1162
      %v1227 = vpack.c.b16 %v1165, %v1163
      %v1228 = vpack.c.b16 %v1168, %v1166
      %v1229 = vpack.c.b16 %v1169, %v1167
      %v1230 = vpack.c.b16 %v1172, %v1170
      %v1231 = vpack.c.b16 %v1173, %v1171
      %v1232 = vpack.c.b16 %v1176, %v1174
      %v1233 = vpack.c.b16 %v1177, %v1175
      %v1234 = vpack.c.b16 %v1180, %v1178
      %v1235 = vpack.c.b16 %v1181, %v1179
      %v1236 = vpack.c.b16 %v1184, %v1182
      %v1237 = vpack.c.b16 %v1185, %v1183
      %v1238 = vpack.c.b16 %v1188, %v1186
      %v1239 = vpack.c.b16 %v1189, %v1187
      %v1240 = vpack.c.b16 %v1192, %v1190
      %v1241 = vpack.c.b16 %v1193, %v1191
      %1290 = vmatprep.subr.bf16.mxu0 %v1195
      %1291 = vmatpush1.bf16.msra.mxu0 %v1194
      %1292 = vmatprep.subr.bf16.mxu0 %v1197
      %1293 = vmatpush1.bf16.msra.mxu0 %v1196
      %1294 = vmatprep.subr.bf16.mxu0 %v1199
      %1295 = vmatpush1.bf16.msra.mxu0 %v1198
      %1296 = vmatprep.subr.bf16.mxu0 %v1201
      %1297 = vmatpush1.bf16.msra.mxu0 %v1200
      %1298 = vmatprep.subr.bf16.mxu0 %v1203
      %1299 = vmatpush1.bf16.msra.mxu0 %v1202
      %1300 = vmatprep.subr.bf16.mxu0 %v1205
      %1301 = vmatpush1.bf16.msra.mxu0 %v1204
      %1302 = vmatprep.subr.bf16.mxu0 %v1207
      %1303 = vmatpush1.bf16.msra.mxu0 %v1206
      %1304 = vmatprep.subr.bf16.mxu0 %v1209
      %1305 = vmatpush1.bf16.msra.mxu0 %v1208
      %1306 = vmatprep.subr.bf16.mxu0 %v1211
      %1307 = vmatpush1.bf16.msra.mxu0 %v1210
      %1308 = vmatprep.subr.bf16.mxu0 %v1213
      %1309 = vmatpush1.bf16.msra.mxu0 %v1212
      %1310 = vmatprep.subr.bf16.mxu0 %v1215
      %1311 = vmatpush1.bf16.msra.mxu0 %v1214
      %1312 = vmatprep.subr.bf16.mxu0 %v1217
      %1313 = vmatpush1.bf16.msra.mxu0 %v1216
      %1314 = vmatprep.subr.bf16.mxu0 %v1219
      %1315 = vmatpush1.bf16.msra.mxu0 %v1218
      %1316 = vmatprep.subr.bf16.mxu0 %v1221
      %1317 = vmatpush1.bf16.msra.mxu0 %v1220
      %1318 = vmatprep.subr.bf16.mxu0 %v1223
      %1319 = vmatpush1.bf16.msra.mxu0 %v1222
      %1320 = vmatprep.subr.bf16.mxu0 %v1225
      %1321 = vmatpush1.bf16.msra.mxu0 %v1224
      %1322 = vmatprep.mubr.bf16.mxu0 %v1045
      %1323 = vmatmul.mubr.bf16.gmra.mrb[0].mxu0 %v1044
      %v1324 = vpop.f32.mrb[0].mxu0
      %v1325 = vadd.f32 0.0, %v1324
      %v1326 = vpop.f32.mrb[0].mxu0
      %v1327 = vadd.f32 0.0, %v1326
      %v1328 = vpop.f32.mrb[0].mxu0
      %v1329 = vpop.f32.mrb[0].mxu0
      %1330 = vdwg.mxu0
      %1331 = vmatprep.subr.bf16.mxu0 %v1227
      %1332 = vmatpush1.bf16.msra.mxu0 %v1226
      %1333 = vmatprep.subr.bf16.mxu0 %v1229
      %1334 = vmatpush1.bf16.msra.mxu0 %v1228
      %1335 = vmatprep.subr.bf16.mxu0 %v1231
      %1336 = vmatpush1.bf16.msra.mxu0 %v1230
      %1337 = vmatprep.subr.bf16.mxu0 %v1233
      %1338 = vmatpush1.bf16.msra.mxu0 %v1232
      %1339 = vmatprep.subr.bf16.mxu0 %v1235
      %1340 = vmatpush1.bf16.msra.mxu0 %v1234
      %1341 = vmatprep.subr.bf16.mxu0 %v1237
      %1342 = vmatpush1.bf16.msra.mxu0 %v1236
      %1343 = vmatprep.subr.bf16.mxu0 %v1239
      %1344 = vmatpush1.bf16.msra.mxu0 %v1238
      %1345 = vmatprep.subr.bf16.mxu0 %v1241
      %1346 = vmatpush1.bf16.msra.mxu0 %v1240
      %1347 = vmatprep.subr.bf16.mxu0 0
      %1348 = vmatpush1.bf16.msra.mxu0 0
      %1349 = vmatprep.subr.bf16.mxu0 0
      %1350 = vmatpush1.bf16.msra.mxu0 0
      %1351 = vmatprep.subr.bf16.mxu0 0
      %1352 = vmatpush1.bf16.msra.mxu0 0
      %1353 = vmatprep.subr.bf16.mxu0 0
      %1354 = vmatpush1.bf16.msra.mxu0 0
      %1355 = vmatprep.subr.bf16.mxu0 0
      %1356 = vmatpush1.bf16.msra.mxu0 0
      %1357 = vmatprep.subr.bf16.mxu0 0
      %1358 = vmatpush1.bf16.msra.mxu0 0
      %1359 = vmatprep.subr.bf16.mxu0 0
      %1360 = vmatpush1.bf16.msra.mxu0 0
      %1361 = vmatprep.subr.bf16.mxu0 0
      %1362 = vmatpush1.bf16.msra.mxu0 0
      %1363 = vmatprep.mubr.bf16.mxu0 0
      %1364 = vmatmul.mubr.bf16.gmra.mrb[0].mxu0 %v1046
      %v1365 = vpop.f32.mrb[0].mxu0
      %v1366 = vadd.f32 %v1325, %v1365
      %v1367 = vpop.f32.mrb[0].mxu0
      %v1368 = vadd.f32 %v1327, %v1367
      %v1369 = vpop.f32.mrb[0].mxu0
      %v1370 = vpop.f32.mrb[0].mxu0
      %1371 = vdwg.mxu0
      %v1372 = vadd.f32 %v989, %v1366
      %v1373 = vadd.f32 %v991, %v1368
      %v1374 = vld [vmem:[#allocation2] sm:$0x77]
      %v1377 = vcombine.low %v1372, %v1373
      %v1379 = vadd.f32 %v1374, %v1377
      %1380 = vst [vmem:[#allocation2] sm:$0x77] %v1379
      %s1381 = scalar_lea.vmem %s198, 12
      %v1382 = vld [vmem:[%s1381] sm:$0x77]
      %v1383 = vld [vmem:[%s1381 + $0x8] sm:$0x7]
      %v1384 = vld [vmem:[%s204] sm:$0xff]
      %v1385 = vld [vmem:[%s204 + $0x8] sm:$0xff]
      %v1386 = vld [vmem:[%s204 + $0x10] sm:$0xff]
      %v1387 = vld [vmem:[%s204 + $0x18] sm:$0xff]
      %v1388 = vld [vmem:[%s204 + $0x20] sm:$0xff]
      %v1389 = vld [vmem:[%s204 + $0x28] sm:$0xff]
      %v1390 = vld [vmem:[%s204 + $0x30] sm:$0xff]
      %v1391 = vld [vmem:[%s204 + $0x38] sm:$0xff]
      %v1392 = vld [vmem:[%s204 + $0x40] sm:$0xff]
      %v1393 = vld [vmem:[%s204 + $0x48] sm:$0xff]
      %v1394 = vld [vmem:[%s204 + $0x50] sm:$0xff]
      %v1395 = vld [vmem:[%s204 + $0x58] sm:$0xff]
      %v1396 = vld [vmem:[%s204 + $0x60] sm:$0xff]
      %v1397 = vld [vmem:[%s204 + $0x68] sm:$0xff]
      %v1398 = vld [vmem:[%s204 + $0x70] sm:$0xff]
      %v1399 = vld [vmem:[%s204 + $0x78] sm:$0xff]
      %v1400 = vld [vmem:[%s204 + $0x80] sm:$0xff]
      %v1401 = vld [vmem:[%s204 + $0x88] sm:$0xff]
      %v1402 = vld [vmem:[%s204 + $0x90] sm:$0xff]
      %v1403 = vld [vmem:[%s204 + $0x98] sm:$0xff]
      %v1404 = vld [vmem:[%s204 + $0xa0] sm:$0xff]
      %v1405 = vld [vmem:[%s204 + $0xa8] sm:$0xff]
      %v1406 = vld [vmem:[%s204 + $0xb0] sm:$0xff]
      %v1407 = vld [vmem:[%s204 + $0xb8] sm:$0xff]
      %v1408 = vld [vmem:[%s204 + $0xc0] sm:$0xff]
      %v1409 = vld [vmem:[%s204 + $0xc8] sm:$0xff]
      %v1410 = vld [vmem:[%s204 + $0xd0] sm:$0xff]
      %v1411 = vld [vmem:[%s204 + $0xd8] sm:$0xff]
      %v1412 = vld [vmem:[%s204 + $0xe0] sm:$0xff]
      %v1413 = vld [vmem:[%s204 + $0xe8] sm:$0xff]
      %v1414 = vld [vmem:[%s204 + $0xf0] sm:$0xff]
      %v1415 = vld [vmem:[%s204 + $0xf8] sm:$0xff]
      %v1416 = vld [vmem:[%s204 + $0x100] sm:$0xff]
      %v1417 = vld [vmem:[%s204 + $0x108] sm:$0xff]
      %v1418 = vld [vmem:[%s204 + $0x110] sm:$0xff]
      %v1419 = vld [vmem:[%s204 + $0x118] sm:$0xff]
      %v1420 = vld [vmem:[%s204 + $0x120] sm:$0xff]
      %v1421 = vld [vmem:[%s204 + $0x128] sm:$0xff]
      %v1422 = vld [vmem:[%s204 + $0x130] sm:$0xff]
      %v1423 = vld [vmem:[%s204 + $0x138] sm:$0xff]
      %v1424 = vld [vmem:[%s204 + $0x140] sm:$0xff]
      %v1425 = vld [vmem:[%s204 + $0x148] sm:$0xff]
      %v1426 = vld [vmem:[%s204 + $0x150] sm:$0xff]
      %v1427 = vld [vmem:[%s204 + $0x158] sm:$0xff]
      %v1428 = vld [vmem:[%s204 + $0x160] sm:$0xff]
      %v1429 = vld [vmem:[%s204 + $0x168] sm:$0xff]
      %v1430 = vld [vmem:[%s204 + $0x170] sm:$0xff]
      %v1431 = vld [vmem:[%s204 + $0x178] sm:$0xff]
      %v1432 = vld [vmem:[%s267] sm:$0xff]
      %v1433 = vld [vmem:[%s267 + $0x8] sm:$0xff]
      %v1434 = vld [vmem:[%s267 + $0x10] sm:$0xff]
      %v1435 = vld [vmem:[%s267 + $0x18] sm:$0xff]
      %v1436 = vld [vmem:[%s267 + $0x20] sm:$0xff]
      %v1437 = vld [vmem:[%s267 + $0x28] sm:$0xff]
      %v1438 = vld [vmem:[%s267 + $0x30] sm:$0xff]
      %v1439 = vld [vmem:[%s267 + $0x38] sm:$0xff]
      %v1440 = vld [vmem:[%s267 + $0x40] sm:$0xff]
      %v1441 = vld [vmem:[%s267 + $0x48] sm:$0xff]
      %v1442 = vld [vmem:[%s267 + $0x50] sm:$0xff]
      %v1443 = vld [vmem:[%s267 + $0x58] sm:$0xff]
      %v1444 = vld [vmem:[%s267 + $0x60] sm:$0xff]
      %v1445 = vld [vmem:[%s267 + $0x68] sm:$0xff]
      %v1446 = vld [vmem:[%s267 + $0x70] sm:$0xff]
      %v1447 = vld [vmem:[%s267 + $0x78] sm:$0xff]
      %v1448 = vld [vmem:[%s267 + $0x80] sm:$0xff]
      %v1449 = vld [vmem:[%s267 + $0x88] sm:$0xff]
      %v1450 = vld [vmem:[%s267 + $0x90] sm:$0xff]
      %v1451 = vld [vmem:[%s267 + $0x98] sm:$0xff]
      %v1452 = vld [vmem:[%s267 + $0xa0] sm:$0xff]
      %v1453 = vld [vmem:[%s267 + $0xa8] sm:$0xff]
      %v1454 = vld [vmem:[%s267 + $0xb0] sm:$0xff]
      %v1455 = vld [vmem:[%s267 + $0xb8] sm:$0xff]
      %v1456 = vld [vmem:[%s267 + $0xc0] sm:$0xff]
      %v1457 = vld [vmem:[%s267 + $0xc8] sm:$0xff]
      %v1458 = vld [vmem:[%s267 + $0xd0] sm:$0xff]
      %v1459 = vld [vmem:[%s267 + $0xd8] sm:$0xff]
      %v1460 = vld [vmem:[%s267 + $0xe0] sm:$0xff]
      %v1461 = vld [vmem:[%s267 + $0xe8] sm:$0xff]
      %v1462 = vld [vmem:[%s267 + $0xf0] sm:$0xff]
      %v1463 = vld [vmem:[%s267 + $0xf8] sm:$0xff]
      %v1464 = vld [vmem:[%s267 + $0x100] sm:$0xff]
      %v1465 = vld [vmem:[%s267 + $0x108] sm:$0xff]
      %v1466 = vld [vmem:[%s267 + $0x110] sm:$0xff]
      %v1467 = vld [vmem:[%s267 + $0x118] sm:$0xff]
      %v1468 = vld [vmem:[%s267 + $0x120] sm:$0xff]
      %v1469 = vld [vmem:[%s267 + $0x128] sm:$0xff]
      %v1470 = vld [vmem:[%s267 + $0x130] sm:$0xff]
      %v1471 = vld [vmem:[%s267 + $0x138] sm:$0xff]
      %v1472 = vld [vmem:[%s267 + $0x140] sm:$0xff]
      %v1473 = vld [vmem:[%s267 + $0x148] sm:$0xff]
      %v1474 = vld [vmem:[%s267 + $0x150] sm:$0xff]
      %v1475 = vld [vmem:[%s267 + $0x158] sm:$0xff]
      %v1476 = vld [vmem:[%s267 + $0x160] sm:$0xff]
      %v1477 = vld [vmem:[%s267 + $0x168] sm:$0xff]
      %v1478 = vld [vmem:[%s267 + $0x170] sm:$0xff]
      %v1479 = vld [vmem:[%s267 + $0x178] sm:$0xff]
      %v1482 = vunpack.c.l.b16 %v1382
      %v1483 = vunpack.c.h.b16 %v1382
      %v1484 = vunpack.c.l.b16 %v1383
      %v1485 = vpack.c.b16 %v1482, %v1482
      %v1486 = vpack.c.b16 %v1483, %v1483
      %v1487 = vpack.c.b16 %v1484, %v1484
      %v1489 = vshrl.u32 %v1485, 16
      %v1491 = vshll.u32 %v1485, 16
      %v1493 = vrot.slane %v1491, 1
      %v1494 = vor.u32 %v1489, %v1493
      %v1496 = vshrl.u32 %v1486, 16
      %v1498 = vshll.u32 %v1486, 16
      %v1500 = vrot.slane %v1498, 1
      %v1501 = vor.u32 %v1496, %v1500
      %v1503 = vshrl.u32 %v1487, 16
      %v1505 = vshll.u32 %v1487, 16
      %v1507 = vrot.slane %v1505, 1
      %v1508 = vor.u32 %v1503, %v1507
      %v1560 = vunpack.c.l.b16 %v1432
      %v1561 = vunpack.c.h.b16 %v1432
      %v1562 = vunpack.c.l.b16 %v1433
      %v1563 = vunpack.c.h.b16 %v1433
      %v1564 = vunpack.c.l.b16 %v1434
      %v1565 = vunpack.c.h.b16 %v1434
      %v1566 = vunpack.c.l.b16 %v1435
      %v1567 = vunpack.c.h.b16 %v1435
      %v1568 = vunpack.c.l.b16 %v1436
      %v1569 = vunpack.c.h.b16 %v1436
      %v1570 = vunpack.c.l.b16 %v1437
      %v1571 = vunpack.c.h.b16 %v1437
      %v1572 = vunpack.c.l.b16 %v1438
      %v1573 = vunpack.c.h.b16 %v1438
      %v1574 = vunpack.c.l.b16 %v1439
      %v1575 = vunpack.c.h.b16 %v1439
      %v1576 = vunpack.c.l.b16 %v1440
      %v1577 = vunpack.c.h.b16 %v1440
      %v1578 = vunpack.c.l.b16 %v1441
      %v1579 = vunpack.c.h.b16 %v1441
      %v1580 = vunpack.c.l.b16 %v1442
      %v1581 = vunpack.c.h.b16 %v1442
      %v1582 = vunpack.c.l.b16 %v1443
      %v1583 = vunpack.c.h.b16 %v1443
      %v1584 = vunpack.c.l.b16 %v1444
      %v1585 = vunpack.c.h.b16 %v1444
      %v1586 = vunpack.c.l.b16 %v1445
      %v1587 = vunpack.c.h.b16 %v1445
      %v1588 = vunpack.c.l.b16 %v1446
      %v1589 = vunpack.c.h.b16 %v1446
      %v1590 = vunpack.c.l.b16 %v1447
      %v1591 = vunpack.c.h.b16 %v1447
      %v1592 = vunpack.c.l.b16 %v1448
      %v1593 = vunpack.c.h.b16 %v1448
      %v1594 = vunpack.c.l.b16 %v1449
      %v1595 = vunpack.c.h.b16 %v1449
      %v1596 = vunpack.c.l.b16 %v1450
      %v1597 = vunpack.c.h.b16 %v1450
      %v1598 = vunpack.c.l.b16 %v1451
      %v1599 = vunpack.c.h.b16 %v1451
      %v1600 = vunpack.c.l.b16 %v1452
      %v1601 = vunpack.c.h.b16 %v1452
      %v1602 = vunpack.c.l.b16 %v1453
      %v1603 = vunpack.c.h.b16 %v1453
      %v1604 = vunpack.c.l.b16 %v1454
      %v1605 = vunpack.c.h.b16 %v1454
      %v1606 = vunpack.c.l.b16 %v1455
      %v1607 = vunpack.c.h.b16 %v1455
      %v1608 = vunpack.c.l.b16 %v1456
      %v1609 = vunpack.c.h.b16 %v1456
      %v1610 = vunpack.c.l.b16 %v1457
      %v1611 = vunpack.c.h.b16 %v1457
      %v1612 = vunpack.c.l.b16 %v1458
      %v1613 = vunpack.c.h.b16 %v1458
      %v1614 = vunpack.c.l.b16 %v1459
      %v1615 = vunpack.c.h.b16 %v1459
      %v1616 = vunpack.c.l.b16 %v1460
      %v1617 = vunpack.c.h.b16 %v1460
      %v1618 = vunpack.c.l.b16 %v1461
      %v1619 = vunpack.c.h.b16 %v1461
      %v1620 = vunpack.c.l.b16 %v1462
      %v1621 = vunpack.c.h.b16 %v1462
      %v1622 = vunpack.c.l.b16 %v1463
      %v1623 = vunpack.c.h.b16 %v1463
      %v1624 = vunpack.c.l.b16 %v1464
      %v1625 = vunpack.c.h.b16 %v1464
      %v1626 = vunpack.c.l.b16 %v1465
      %v1627 = vunpack.c.h.b16 %v1465
      %v1628 = vunpack.c.l.b16 %v1466
      %v1629 = vunpack.c.h.b16 %v1466
      %v1630 = vunpack.c.l.b16 %v1467
      %v1631 = vunpack.c.h.b16 %v1467
      %v1632 = vunpack.c.l.b16 %v1468
      %v1633 = vunpack.c.h.b16 %v1468
      %v1634 = vunpack.c.l.b16 %v1469
      %v1635 = vunpack.c.h.b16 %v1469
      %v1636 = vunpack.c.l.b16 %v1470
      %v1637 = vunpack.c.h.b16 %v1470
      %v1638 = vunpack.c.l.b16 %v1471
      %v1639 = vunpack.c.h.b16 %v1471
      %v1640 = vunpack.c.l.b16 %v1472
      %v1641 = vunpack.c.h.b16 %v1472
      %v1642 = vunpack.c.l.b16 %v1473
      %v1643 = vunpack.c.h.b16 %v1473
      %v1644 = vunpack.c.l.b16 %v1474
      %v1645 = vunpack.c.h.b16 %v1474
      %v1646 = vunpack.c.l.b16 %v1475
      %v1647 = vunpack.c.h.b16 %v1475
      %v1648 = vunpack.c.l.b16 %v1476
      %v1649 = vunpack.c.h.b16 %v1476
      %v1650 = vunpack.c.l.b16 %v1477
      %v1651 = vunpack.c.h.b16 %v1477
      %v1652 = vunpack.c.l.b16 %v1478
      %v1653 = vunpack.c.h.b16 %v1478
      %v1654 = vunpack.c.l.b16 %v1479
      %v1655 = vunpack.c.h.b16 %v1479
      %v1656 = vpack.c.b16 %v1562, %v1560
      %v1657 = vpack.c.b16 %v1563, %v1561
      %v1658 = vpack.c.b16 %v1566, %v1564
      %v1659 = vpack.c.b16 %v1567, %v1565
      %v1660 = vpack.c.b16 %v1570, %v1568
      %v1661 = vpack.c.b16 %v1571, %v1569
      %v1662 = vpack.c.b16 %v1574, %v1572
      %v1663 = vpack.c.b16 %v1575, %v1573
      %v1664 = vpack.c.b16 %v1578, %v1576
      %v1665 = vpack.c.b16 %v1579, %v1577
      %v1666 = vpack.c.b16 %v1582, %v1580
      %v1667 = vpack.c.b16 %v1583, %v1581
      %v1668 = vpack.c.b16 %v1586, %v1584
      %v1669 = vpack.c.b16 %v1587, %v1585
      %v1670 = vpack.c.b16 %v1590, %v1588
      %v1671 = vpack.c.b16 %v1591, %v1589
      %v1672 = vpack.c.b16 %v1594, %v1592
      %v1673 = vpack.c.b16 %v1595, %v1593
      %v1674 = vpack.c.b16 %v1598, %v1596
      %v1675 = vpack.c.b16 %v1599, %v1597
      %v1676 = vpack.c.b16 %v1602, %v1600
      %v1677 = vpack.c.b16 %v1603, %v1601
      %v1678 = vpack.c.b16 %v1606, %v1604
      %v1679 = vpack.c.b16 %v1607, %v1605
      %v1680 = vpack.c.b16 %v1610, %v1608
      %v1681 = vpack.c.b16 %v1611, %v1609
      %v1682 = vpack.c.b16 %v1614, %v1612
      %v1683 = vpack.c.b16 %v1615, %v1613
      %v1684 = vpack.c.b16 %v1618, %v1616
      %v1685 = vpack.c.b16 %v1619, %v1617
      %v1686 = vpack.c.b16 %v1622, %v1620
      %v1687 = vpack.c.b16 %v1623, %v1621
      %v1688 = vpack.c.b16 %v1626, %v1624
      %v1689 = vpack.c.b16 %v1627, %v1625
      %v1690 = vpack.c.b16 %v1630, %v1628
      %v1691 = vpack.c.b16 %v1631, %v1629
      %v1692 = vpack.c.b16 %v1634, %v1632
      %v1693 = vpack.c.b16 %v1635, %v1633
      %v1694 = vpack.c.b16 %v1638, %v1636
      %v1695 = vpack.c.b16 %v1639, %v1637
      %v1696 = vpack.c.b16 %v1642, %v1640
      %v1697 = vpack.c.b16 %v1643, %v1641
      %v1698 = vpack.c.b16 %v1646, %v1644
      %v1699 = vpack.c.b16 %v1647, %v1645
      %v1700 = vpack.c.b16 %v1650, %v1648
      %v1701 = vpack.c.b16 %v1651, %v1649
      %v1702 = vpack.c.b16 %v1654, %v1652
      %v1703 = vpack.c.b16 %v1655, %v1653
      %1752 = vmatprep.subr.bf16.mxu0 %v1657
      %1753 = vmatpush1.bf16.msra.mxu0 %v1656
      %1754 = vmatprep.subr.bf16.mxu0 %v1659
      %1755 = vmatpush1.bf16.msra.mxu0 %v1658
      %1756 = vmatprep.subr.bf16.mxu0 %v1661
      %1757 = vmatpush1.bf16.msra.mxu0 %v1660
      %1758 = vmatprep.subr.bf16.mxu0 %v1663
      %1759 = vmatpush1.bf16.msra.mxu0 %v1662
      %1760 = vmatprep.subr.bf16.mxu0 %v1665
      %1761 = vmatpush1.bf16.msra.mxu0 %v1664
      %1762 = vmatprep.subr.bf16.mxu0 %v1667
      %1763 = vmatpush1.bf16.msra.mxu0 %v1666
      %1764 = vmatprep.subr.bf16.mxu0 %v1669
      %1765 = vmatpush1.bf16.msra.mxu0 %v1668
      %1766 = vmatprep.subr.bf16.mxu0 %v1671
      %1767 = vmatpush1.bf16.msra.mxu0 %v1670
      %1768 = vmatprep.subr.bf16.mxu0 %v1673
      %1769 = vmatpush1.bf16.msra.mxu0 %v1672
      %1770 = vmatprep.subr.bf16.mxu0 %v1675
      %1771 = vmatpush1.bf16.msra.mxu0 %v1674
      %1772 = vmatprep.subr.bf16.mxu0 %v1677
      %1773 = vmatpush1.bf16.msra.mxu0 %v1676
      %1774 = vmatprep.subr.bf16.mxu0 %v1679
      %1775 = vmatpush1.bf16.msra.mxu0 %v1678
      %1776 = vmatprep.subr.bf16.mxu0 %v1681
      %1777 = vmatpush1.bf16.msra.mxu0 %v1680
      %1778 = vmatprep.subr.bf16.mxu0 %v1683
      %1779 = vmatpush1.bf16.msra.mxu0 %v1682
      %1780 = vmatprep.subr.bf16.mxu0 %v1685
      %1781 = vmatpush1.bf16.msra.mxu0 %v1684
      %1782 = vmatprep.subr.bf16.mxu0 %v1687
      %1783 = vmatpush1.bf16.msra.mxu0 %v1686
      %1784 = vmatprep.mubr.bf16.mxu0 %v1501
      %1785 = vmatmul.mubr.bf16.gmra.mrb[0].mxu0 %v1494
      %v1786 = vpop.f32.mrb[0].mxu0
      %v1787 = vadd.f32 0.0, %v1786
      %v1788 = vpop.f32.mrb[0].mxu0
      %v1789 = vadd.f32 0.0, %v1788
      %v1790 = vpop.f32.mrb[0].mxu0
      %v1791 = vpop.f32.mrb[0].mxu0
      %1792 = vdwg.mxu0
      %1793 = vmatprep.subr.bf16.mxu0 %v1689
      %1794 = vmatpush1.bf16.msra.mxu0 %v1688
      %1795 = vmatprep.subr.bf16.mxu0 %v1691
      %1796 = vmatpush1.bf16.msra.mxu0 %v1690
      %1797 = vmatprep.subr.bf16.mxu0 %v1693
      %1798 = vmatpush1.bf16.msra.mxu0 %v1692
      %1799 = vmatprep.subr.bf16.mxu0 %v1695
      %1800 = vmatpush1.bf16.msra.mxu0 %v1694
      %1801 = vmatprep.subr.bf16.mxu0 %v1697
      %1802 = vmatpush1.bf16.msra.mxu0 %v1696
      %1803 = vmatprep.subr.bf16.mxu0 %v1699
      %1804 = vmatpush1.bf16.msra.mxu0 %v1698
      %1805 = vmatprep.subr.bf16.mxu0 %v1701
      %1806 = vmatpush1.bf16.msra.mxu0 %v1700
      %1807 = vmatprep.subr.bf16.mxu0 %v1703
      %1808 = vmatpush1.bf16.msra.mxu0 %v1702
      %1809 = vmatprep.subr.bf16.mxu0 0
      %1810 = vmatpush1.bf16.msra.mxu0 0
      %1811 = vmatprep.subr.bf16.mxu0 0
      %1812 = vmatpush1.bf16.msra.mxu0 0
      %1813 = vmatprep.subr.bf16.mxu0 0
      %1814 = vmatpush1.bf16.msra.mxu0 0
      %1815 = vmatprep.subr.bf16.mxu0 0
      %1816 = vmatpush1.bf16.msra.mxu0 0
      %1817 = vmatprep.subr.bf16.mxu0 0
      %1818 = vmatpush1.bf16.msra.mxu0 0
      %1819 = vmatprep.subr.bf16.mxu0 0
      %1820 = vmatpush1.bf16.msra.mxu0 0
      %1821 = vmatprep.subr.bf16.mxu0 0
      %1822 = vmatpush1.bf16.msra.mxu0 0
      %1823 = vmatprep.subr.bf16.mxu0 0
      %1824 = vmatpush1.bf16.msra.mxu0 0
      %1825 = vmatprep.mubr.bf16.mxu0 0
      %1826 = vmatmul.mubr.bf16.gmra.mrb[0].mxu0 %v1508
      %v1827 = vpop.f32.mrb[0].mxu0
      %v1828 = vadd.f32 %v1787, %v1827
      %v1829 = vpop.f32.mrb[0].mxu0
      %v1830 = vadd.f32 %v1789, %v1829
      %v1831 = vpop.f32.mrb[0].mxu0
      %v1832 = vpop.f32.mrb[0].mxu0
      %1833 = vdwg.mxu0
      %v1885 = vunpack.c.l.b16 %v1384
      %v1886 = vunpack.c.h.b16 %v1384
      %v1887 = vunpack.c.l.b16 %v1385
      %v1888 = vunpack.c.h.b16 %v1385
      %v1889 = vunpack.c.l.b16 %v1386
      %v1890 = vunpack.c.h.b16 %v1386
      %v1891 = vunpack.c.l.b16 %v1387
      %v1892 = vunpack.c.h.b16 %v1387
      %v1893 = vunpack.c.l.b16 %v1388
      %v1894 = vunpack.c.h.b16 %v1388
      %v1895 = vunpack.c.l.b16 %v1389
      %v1896 = vunpack.c.h.b16 %v1389
      %v1897 = vunpack.c.l.b16 %v1390
      %v1898 = vunpack.c.h.b16 %v1390
      %v1899 = vunpack.c.l.b16 %v1391
      %v1900 = vunpack.c.h.b16 %v1391
      %v1901 = vunpack.c.l.b16 %v1392
      %v1902 = vunpack.c.h.b16 %v1392
      %v1903 = vunpack.c.l.b16 %v1393
      %v1904 = vunpack.c.h.b16 %v1393
      %v1905 = vunpack.c.l.b16 %v1394
      %v1906 = vunpack.c.h.b16 %v1394
      %v1907 = vunpack.c.l.b16 %v1395
      %v1908 = vunpack.c.h.b16 %v1395
      %v1909 = vunpack.c.l.b16 %v1396
      %v1910 = vunpack.c.h.b16 %v1396
      %v1911 = vunpack.c.l.b16 %v1397
      %v1912 = vunpack.c.h.b16 %v1397
      %v1913 = vunpack.c.l.b16 %v1398
      %v1914 = vunpack.c.h.b16 %v1398
      %v1915 = vunpack.c.l.b16 %v1399
      %v1916 = vunpack.c.h.b16 %v1399
      %v1917 = vunpack.c.l.b16 %v1400
      %v1918 = vunpack.c.h.b16 %v1400
      %v1919 = vunpack.c.l.b16 %v1401
      %v1920 = vunpack.c.h.b16 %v1401
      %v1921 = vunpack.c.l.b16 %v1402
      %v1922 = vunpack.c.h.b16 %v1402
      %v1923 = vunpack.c.l.b16 %v1403
      %v1924 = vunpack.c.h.b16 %v1403
      %v1925 = vunpack.c.l.b16 %v1404
      %v1926 = vunpack.c.h.b16 %v1404
      %v1927 = vunpack.c.l.b16 %v1405
      %v1928 = vunpack.c.h.b16 %v1405
      %v1929 = vunpack.c.l.b16 %v1406
      %v1930 = vunpack.c.h.b16 %v1406
      %v1931 = vunpack.c.l.b16 %v1407
      %v1932 = vunpack.c.h.b16 %v1407
      %v1933 = vunpack.c.l.b16 %v1408
      %v1934 = vunpack.c.h.b16 %v1408
      %v1935 = vunpack.c.l.b16 %v1409
      %v1936 = vunpack.c.h.b16 %v1409
      %v1937 = vunpack.c.l.b16 %v1410
      %v1938 = vunpack.c.h.b16 %v1410
      %v1939 = vunpack.c.l.b16 %v1411
      %v1940 = vunpack.c.h.b16 %v1411
      %v1941 = vunpack.c.l.b16 %v1412
      %v1942 = vunpack.c.h.b16 %v1412
      %v1943 = vunpack.c.l.b16 %v1413
      %v1944 = vunpack.c.h.b16 %v1413
      %v1945 = vunpack.c.l.b16 %v1414
      %v1946 = vunpack.c.h.b16 %v1414
      %v1947 = vunpack.c.l.b16 %v1415
      %v1948 = vunpack.c.h.b16 %v1415
      %v1949 = vunpack.c.l.b16 %v1416
      %v1950 = vunpack.c.h.b16 %v1416
      %v1951 = vunpack.c.l.b16 %v1417
      %v1952 = vunpack.c.h.b16 %v1417
      %v1953 = vunpack.c.l.b16 %v1418
      %v1954 = vunpack.c.h.b16 %v1418
      %v1955 = vunpack.c.l.b16 %v1419
      %v1956 = vunpack.c.h.b16 %v1419
      %v1957 = vunpack.c.l.b16 %v1420
      %v1958 = vunpack.c.h.b16 %v1420
      %v1959 = vunpack.c.l.b16 %v1421
      %v1960 = vunpack.c.h.b16 %v1421
      %v1961 = vunpack.c.l.b16 %v1422
      %v1962 = vunpack.c.h.b16 %v1422
      %v1963 = vunpack.c.l.b16 %v1423
      %v1964 = vunpack.c.h.b16 %v1423
      %v1965 = vunpack.c.l.b16 %v1424
      %v1966 = vunpack.c.h.b16 %v1424
      %v1967 = vunpack.c.l.b16 %v1425
      %v1968 = vunpack.c.h.b16 %v1425
      %v1969 = vunpack.c.l.b16 %v1426
      %v1970 = vunpack.c.h.b16 %v1426
      %v1971 = vunpack.c.l.b16 %v1427
      %v1972 = vunpack.c.h.b16 %v1427
      %v1973 = vunpack.c.l.b16 %v1428
      %v1974 = vunpack.c.h.b16 %v1428
      %v1975 = vunpack.c.l.b16 %v1429
      %v1976 = vunpack.c.h.b16 %v1429
      %v1977 = vunpack.c.l.b16 %v1430
      %v1978 = vunpack.c.h.b16 %v1430
      %v1979 = vunpack.c.l.b16 %v1431
      %v1980 = vunpack.c.h.b16 %v1431
      %v1981 = vpack.c.b16 %v1887, %v1885
      %v1982 = vpack.c.b16 %v1888, %v1886
      %v1983 = vpack.c.b16 %v1891, %v1889
      %v1984 = vpack.c.b16 %v1892, %v1890
      %v1985 = vpack.c.b16 %v1895, %v1893
      %v1986 = vpack.c.b16 %v1896, %v1894
      %v1987 = vpack.c.b16 %v1899, %v1897
      %v1988 = vpack.c.b16 %v1900, %v1898
      %v1989 = vpack.c.b16 %v1903, %v1901
      %v1990 = vpack.c.b16 %v1904, %v1902
      %v1991 = vpack.c.b16 %v1907, %v1905
      %v1992 = vpack.c.b16 %v1908, %v1906
      %v1993 = vpack.c.b16 %v1911, %v1909
      %v1994 = vpack.c.b16 %v1912, %v1910
      %v1995 = vpack.c.b16 %v1915, %v1913
      %v1996 = vpack.c.b16 %v1916, %v1914
      %v1997 = vpack.c.b16 %v1919, %v1917
      %v1998 = vpack.c.b16 %v1920, %v1918
      %v1999 = vpack.c.b16 %v1923, %v1921
      %v2000 = vpack.c.b16 %v1924, %v1922
      %v2001 = vpack.c.b16 %v1927, %v1925
      %v2002 = vpack.c.b16 %v1928, %v1926
      %v2003 = vpack.c.b16 %v1931, %v1929
      %v2004 = vpack.c.b16 %v1932, %v1930
      %v2005 = vpack.c.b16 %v1935, %v1933
      %v2006 = vpack.c.b16 %v1936, %v1934
      %v2007 = vpack.c.b16 %v1939, %v1937
      %v2008 = vpack.c.b16 %v1940, %v1938
      %v2009 = vpack.c.b16 %v1943, %v1941
      %v2010 = vpack.c.b16 %v1944, %v1942
      %v2011 = vpack.c.b16 %v1947, %v1945
      %v2012 = vpack.c.b16 %v1948, %v1946
      %v2013 = vpack.c.b16 %v1951, %v1949
      %v2014 = vpack.c.b16 %v1952, %v1950
      %v2015 = vpack.c.b16 %v1955, %v1953
      %v2016 = vpack.c.b16 %v1956, %v1954
      %v2017 = vpack.c.b16 %v1959, %v1957
      %v2018 = vpack.c.b16 %v1960, %v1958
      %v2019 = vpack.c.b16 %v1963, %v1961
      %v2020 = vpack.c.b16 %v1964, %v1962
      %v2021 = vpack.c.b16 %v1967, %v1965
      %v2022 = vpack.c.b16 %v1968, %v1966
      %v2023 = vpack.c.b16 %v1971, %v1969
      %v2024 = vpack.c.b16 %v1972, %v1970
      %v2025 = vpack.c.b16 %v1975, %v1973
      %v2026 = vpack.c.b16 %v1976, %v1974
      %v2027 = vpack.c.b16 %v1979, %v1977
      %v2028 = vpack.c.b16 %v1980, %v1978
      %2077 = vmatprep.subr.bf16.mxu0 %v1982
      %2078 = vmatpush1.bf16.msra.mxu0 %v1981
      %2079 = vmatprep.subr.bf16.mxu0 %v1984
      %2080 = vmatpush1.bf16.msra.mxu0 %v1983
      %2081 = vmatprep.subr.bf16.mxu0 %v1986
      %2082 = vmatpush1.bf16.msra.mxu0 %v1985
      %2083 = vmatprep.subr.bf16.mxu0 %v1988
      %2084 = vmatpush1.bf16.msra.mxu0 %v1987
      %2085 = vmatprep.subr.bf16.mxu0 %v1990
      %2086 = vmatpush1.bf16.msra.mxu0 %v1989
      %2087 = vmatprep.subr.bf16.mxu0 %v1992
      %2088 = vmatpush1.bf16.msra.mxu0 %v1991
      %2089 = vmatprep.subr.bf16.mxu0 %v1994
      %2090 = vmatpush1.bf16.msra.mxu0 %v1993
      %2091 = vmatprep.subr.bf16.mxu0 %v1996
      %2092 = vmatpush1.bf16.msra.mxu0 %v1995
      %2093 = vmatprep.subr.bf16.mxu0 %v1998
      %2094 = vmatpush1.bf16.msra.mxu0 %v1997
      %2095 = vmatprep.subr.bf16.mxu0 %v2000
      %2096 = vmatpush1.bf16.msra.mxu0 %v1999
      %2097 = vmatprep.subr.bf16.mxu0 %v2002
      %2098 = vmatpush1.bf16.msra.mxu0 %v2001
      %2099 = vmatprep.subr.bf16.mxu0 %v2004
      %2100 = vmatpush1.bf16.msra.mxu0 %v2003
      %2101 = vmatprep.subr.bf16.mxu0 %v2006
      %2102 = vmatpush1.bf16.msra.mxu0 %v2005
      %2103 = vmatprep.subr.bf16.mxu0 %v2008
      %2104 = vmatpush1.bf16.msra.mxu0 %v2007
      %2105 = vmatprep.subr.bf16.mxu0 %v2010
      %2106 = vmatpush1.bf16.msra.mxu0 %v2009
      %2107 = vmatprep.subr.bf16.mxu0 %v2012
      %2108 = vmatpush1.bf16.msra.mxu0 %v2011
      %2109 = vmatprep.mubr.bf16.mxu0 %v1486
      %2110 = vmatmul.mubr.bf16.gmra.mrb[0].mxu0 %v1485
      %v2111 = vpop.f32.mrb[0].mxu0
      %v2112 = vadd.f32 %v1828, %v2111
      %v2113 = vpop.f32.mrb[0].mxu0
      %v2114 = vadd.f32 %v1830, %v2113
      %v2115 = vpop.f32.mrb[0].mxu0
      %v2116 = vpop.f32.mrb[0].mxu0
      %2117 = vdwg.mxu0
      %2118 = vmatprep.subr.bf16.mxu0 %v2014
      %2119 = vmatpush1.bf16.msra.mxu0 %v2013
      %2120 = vmatprep.subr.bf16.mxu0 %v2016
      %2121 = vmatpush1.bf16.msra.mxu0 %v2015
      %2122 = vmatprep.subr.bf16.mxu0 %v2018
      %2123 = vmatpush1.bf16.msra.mxu0 %v2017
      %2124 = vmatprep.subr.bf16.mxu0 %v2020
      %2125 = vmatpush1.bf16.msra.mxu0 %v2019
      %2126 = vmatprep.subr.bf16.mxu0 %v2022
      %2127 = vmatpush1.bf16.msra.mxu0 %v2021
      %2128 = vmatprep.subr.bf16.mxu0 %v2024
      %2129 = vmatpush1.bf16.msra.mxu0 %v2023
      %2130 = vmatprep.subr.bf16.mxu0 %v2026
      %2131 = vmatpush1.bf16.msra.mxu0 %v2025
      %2132 = vmatprep.subr.bf16.mxu0 %v2028
      %2133 = vmatpush1.bf16.msra.mxu0 %v2027
      %2134 = vmatprep.subr.bf16.mxu0 0
      %2135 = vmatpush1.bf16.msra.mxu0 0
      %2136 = vmatprep.subr.bf16.mxu0 0
      %2137 = vmatpush1.bf16.msra.mxu0 0
      %2138 = vmatprep.subr.bf16.mxu0 0
      %2139 = vmatpush1.bf16.msra.mxu0 0
      %2140 = vmatprep.subr.bf16.mxu0 0
      %2141 = vmatpush1.bf16.msra.mxu0 0
      %2142 = vmatprep.subr.bf16.mxu0 0
      %2143 = vmatpush1.bf16.msra.mxu0 0
      %2144 = vmatprep.subr.bf16.mxu0 0
      %2145 = vmatpush1.bf16.msra.mxu0 0
      %2146 = vmatprep.subr.bf16.mxu0 0
      %2147 = vmatpush1.bf16.msra.mxu0 0
      %2148 = vmatprep.subr.bf16.mxu0 0
      %2149 = vmatpush1.bf16.msra.mxu0 0
      %2150 = vmatprep.mubr.bf16.mxu0 0
      %2151 = vmatmul.mubr.bf16.gmra.mrb[0].mxu0 %v1487
      %v2152 = vpop.f32.mrb[0].mxu0
      %v2153 = vadd.f32 %v2112, %v2152
      %v2154 = vpop.f32.mrb[0].mxu0
      %v2155 = vadd.f32 %v2114, %v2154
      %v2156 = vpop.f32.mrb[0].mxu0
      %v2157 = vpop.f32.mrb[0].mxu0
      %2158 = vdwg.mxu0
      %v2159 = vld [vmem:[%s995] sm:$0xff]
      %v2160 = vld [vmem:[%s995 + $0x8] sm:$0xff]
      %v2161 = vld [vmem:[%s995 + $0x10] sm:$0xff]
      %v2162 = vld [vmem:[%s995 + $0x18] sm:$0xff]
      %v2163 = vld [vmem:[%s995 + $0x20] sm:$0xff]
      %v2164 = vld [vmem:[%s995 + $0x28] sm:$0xff]
      %v2165 = vld [vmem:[%s995 + $0x30] sm:$0xff]
      %v2166 = vld [vmem:[%s995 + $0x38] sm:$0xff]
      %v2167 = vld [vmem:[%s995 + $0x40] sm:$0xff]
      %v2168 = vld [vmem:[%s995 + $0x48] sm:$0xff]
      %v2169 = vld [vmem:[%s995 + $0x50] sm:$0xff]
      %v2170 = vld [vmem:[%s995 + $0x58] sm:$0xff]
      %v2171 = vld [vmem:[%s995 + $0x60] sm:$0xff]
      %v2172 = vld [vmem:[%s995 + $0x68] sm:$0xff]
      %v2173 = vld [vmem:[%s995 + $0x70] sm:$0xff]
      %v2174 = vld [vmem:[%s995 + $0x78] sm:$0xff]
      %v2175 = vld [vmem:[%s995 + $0x80] sm:$0xff]
      %v2176 = vld [vmem:[%s995 + $0x88] sm:$0xff]
      %v2177 = vld [vmem:[%s995 + $0x90] sm:$0xff]
      %v2178 = vld [vmem:[%s995 + $0x98] sm:$0xff]
      %v2179 = vld [vmem:[%s995 + $0xa0] sm:$0xff]
      %v2180 = vld [vmem:[%s995 + $0xa8] sm:$0xff]
      %v2181 = vld [vmem:[%s995 + $0xb0] sm:$0xff]
      %v2182 = vld [vmem:[%s995 + $0xb8] sm:$0xff]
      %v2183 = vld [vmem:[%s995 + $0xc0] sm:$0xff]
      %v2184 = vld [vmem:[%s995 + $0xc8] sm:$0xff]
      %v2185 = vld [vmem:[%s995 + $0xd0] sm:$0xff]
      %v2186 = vld [vmem:[%s995 + $0xd8] sm:$0xff]
      %v2187 = vld [vmem:[%s995 + $0xe0] sm:$0xff]
      %v2188 = vld [vmem:[%s995 + $0xe8] sm:$0xff]
      %v2189 = vld [vmem:[%s995 + $0xf0] sm:$0xff]
      %v2190 = vld [vmem:[%s995 + $0xf8] sm:$0xff]
      %v2191 = vld [vmem:[%s995 + $0x100] sm:$0xff]
      %v2192 = vld [vmem:[%s995 + $0x108] sm:$0xff]
      %v2193 = vld [vmem:[%s995 + $0x110] sm:$0xff]
      %v2194 = vld [vmem:[%s995 + $0x118] sm:$0xff]
      %v2195 = vld [vmem:[%s995 + $0x120] sm:$0xff]
      %v2196 = vld [vmem:[%s995 + $0x128] sm:$0xff]
      %v2197 = vld [vmem:[%s995 + $0x130] sm:$0xff]
      %v2198 = vld [vmem:[%s995 + $0x138] sm:$0xff]
      %v2199 = vld [vmem:[%s995 + $0x140] sm:$0xff]
      %v2200 = vld [vmem:[%s995 + $0x148] sm:$0xff]
      %v2201 = vld [vmem:[%s995 + $0x150] sm:$0xff]
      %v2202 = vld [vmem:[%s995 + $0x158] sm:$0xff]
      %v2203 = vld [vmem:[%s995 + $0x160] sm:$0xff]
      %v2204 = vld [vmem:[%s995 + $0x168] sm:$0xff]
      %v2205 = vld [vmem:[%s995 + $0x170] sm:$0xff]
      %v2206 = vld [vmem:[%s995 + $0x178] sm:$0xff]
      %v2207 = vrot.slane %v1485, 1
      %v2208 = vrot.slane %v1486, 1
      %v2209 = vrot.slane %v1487, 1
      %v2261 = vunpack.c.l.b16 %v2159
      %v2262 = vunpack.c.h.b16 %v2159
      %v2263 = vunpack.c.l.b16 %v2160
      %v2264 = vunpack.c.h.b16 %v2160
      %v2265 = vunpack.c.l.b16 %v2161
      %v2266 = vunpack.c.h.b16 %v2161
      %v2267 = vunpack.c.l.b16 %v2162
      %v2268 = vunpack.c.h.b16 %v2162
      %v2269 = vunpack.c.l.b16 %v2163
      %v2270 = vunpack.c.h.b16 %v2163
      %v2271 = vunpack.c.l.b16 %v2164
      %v2272 = vunpack.c.h.b16 %v2164
      %v2273 = vunpack.c.l.b16 %v2165
      %v2274 = vunpack.c.h.b16 %v2165
      %v2275 = vunpack.c.l.b16 %v2166
      %v2276 = vunpack.c.h.b16 %v2166
      %v2277 = vunpack.c.l.b16 %v2167
      %v2278 = vunpack.c.h.b16 %v2167
      %v2279 = vunpack.c.l.b16 %v2168
      %v2280 = vunpack.c.h.b16 %v2168
      %v2281 = vunpack.c.l.b16 %v2169
      %v2282 = vunpack.c.h.b16 %v2169
      %v2283 = vunpack.c.l.b16 %v2170
      %v2284 = vunpack.c.h.b16 %v2170
      %v2285 = vunpack.c.l.b16 %v2171
      %v2286 = vunpack.c.h.b16 %v2171
      %v2287 = vunpack.c.l.b16 %v2172
      %v2288 = vunpack.c.h.b16 %v2172
      %v2289 = vunpack.c.l.b16 %v2173
      %v2290 = vunpack.c.h.b16 %v2173
      %v2291 = vunpack.c.l.b16 %v2174
      %v2292 = vunpack.c.h.b16 %v2174
      %v2293 = vunpack.c.l.b16 %v2175
      %v2294 = vunpack.c.h.b16 %v2175
      %v2295 = vunpack.c.l.b16 %v2176
      %v2296 = vunpack.c.h.b16 %v2176
      %v2297 = vunpack.c.l.b16 %v2177
      %v2298 = vunpack.c.h.b16 %v2177
      %v2299 = vunpack.c.l.b16 %v2178
      %v2300 = vunpack.c.h.b16 %v2178
      %v2301 = vunpack.c.l.b16 %v2179
      %v2302 = vunpack.c.h.b16 %v2179
      %v2303 = vunpack.c.l.b16 %v2180
      %v2304 = vunpack.c.h.b16 %v2180
      %v2305 = vunpack.c.l.b16 %v2181
      %v2306 = vunpack.c.h.b16 %v2181
      %v2307 = vunpack.c.l.b16 %v2182
      %v2308 = vunpack.c.h.b16 %v2182
      %v2309 = vunpack.c.l.b16 %v2183
      %v2310 = vunpack.c.h.b16 %v2183
      %v2311 = vunpack.c.l.b16 %v2184
      %v2312 = vunpack.c.h.b16 %v2184
      %v2313 = vunpack.c.l.b16 %v2185
      %v2314 = vunpack.c.h.b16 %v2185
      %v2315 = vunpack.c.l.b16 %v2186
      %v2316 = vunpack.c.h.b16 %v2186
      %v2317 = vunpack.c.l.b16 %v2187
      %v2318 = vunpack.c.h.b16 %v2187
      %v2319 = vunpack.c.l.b16 %v2188
      %v2320 = vunpack.c.h.b16 %v2188
      %v2321 = vunpack.c.l.b16 %v2189
      %v2322 = vunpack.c.h.b16 %v2189
      %v2323 = vunpack.c.l.b16 %v2190
      %v2324 = vunpack.c.h.b16 %v2190
      %v2325 = vunpack.c.l.b16 %v2191
      %v2326 = vunpack.c.h.b16 %v2191
      %v2327 = vunpack.c.l.b16 %v2192
      %v2328 = vunpack.c.h.b16 %v2192
      %v2329 = vunpack.c.l.b16 %v2193
      %v2330 = vunpack.c.h.b16 %v2193
      %v2331 = vunpack.c.l.b16 %v2194
      %v2332 = vunpack.c.h.b16 %v2194
      %v2333 = vunpack.c.l.b16 %v2195
      %v2334 = vunpack.c.h.b16 %v2195
      %v2335 = vunpack.c.l.b16 %v2196
      %v2336 = vunpack.c.h.b16 %v2196
      %v2337 = vunpack.c.l.b16 %v2197
      %v2338 = vunpack.c.h.b16 %v2197
      %v2339 = vunpack.c.l.b16 %v2198
      %v2340 = vunpack.c.h.b16 %v2198
      %v2341 = vunpack.c.l.b16 %v2199
      %v2342 = vunpack.c.h.b16 %v2199
      %v2343 = vunpack.c.l.b16 %v2200
      %v2344 = vunpack.c.h.b16 %v2200
      %v2345 = vunpack.c.l.b16 %v2201
      %v2346 = vunpack.c.h.b16 %v2201
      %v2347 = vunpack.c.l.b16 %v2202
      %v2348 = vunpack.c.h.b16 %v2202
      %v2349 = vunpack.c.l.b16 %v2203
      %v2350 = vunpack.c.h.b16 %v2203
      %v2351 = vunpack.c.l.b16 %v2204
      %v2352 = vunpack.c.h.b16 %v2204
      %v2353 = vunpack.c.l.b16 %v2205
      %v2354 = vunpack.c.h.b16 %v2205
      %v2355 = vunpack.c.l.b16 %v2206
      %v2356 = vunpack.c.h.b16 %v2206
      %v2357 = vpack.c.b16 %v2263, %v2261
      %v2358 = vpack.c.b16 %v2264, %v2262
      %v2359 = vpack.c.b16 %v2267, %v2265
      %v2360 = vpack.c.b16 %v2268, %v2266
      %v2361 = vpack.c.b16 %v2271, %v2269
      %v2362 = vpack.c.b16 %v2272, %v2270
      %v2363 = vpack.c.b16 %v2275, %v2273
      %v2364 = vpack.c.b16 %v2276, %v2274
      %v2365 = vpack.c.b16 %v2279, %v2277
      %v2366 = vpack.c.b16 %v2280, %v2278
      %v2367 = vpack.c.b16 %v2283, %v2281
      %v2368 = vpack.c.b16 %v2284, %v2282
      %v2369 = vpack.c.b16 %v2287, %v2285
      %v2370 = vpack.c.b16 %v2288, %v2286
      %v2371 = vpack.c.b16 %v2291, %v2289
      %v2372 = vpack.c.b16 %v2292, %v2290
      %v2373 = vpack.c.b16 %v2295, %v2293
      %v2374 = vpack.c.b16 %v2296, %v2294
      %v2375 = vpack.c.b16 %v2299, %v2297
      %v2376 = vpack.c.b16 %v2300, %v2298
      %v2377 = vpack.c.b16 %v2303, %v2301
      %v2378 = vpack.c.b16 %v2304, %v2302
      %v2379 = vpack.c.b16 %v2307, %v2305
      %v2380 = vpack.c.b16 %v2308, %v2306
      %v2381 = vpack.c.b16 %v2311, %v2309
      %v2382 = vpack.c.b16 %v2312, %v2310
      %v2383 = vpack.c.b16 %v2315, %v2313
      %v2384 = vpack.c.b16 %v2316, %v2314
      %v2385 = vpack.c.b16 %v2319, %v2317
      %v2386 = vpack.c.b16 %v2320, %v2318
      %v2387 = vpack.c.b16 %v2323, %v2321
      %v2388 = vpack.c.b16 %v2324, %v2322
      %v2389 = vpack.c.b16 %v2327, %v2325
      %v2390 = vpack.c.b16 %v2328, %v2326
      %v2391 = vpack.c.b16 %v2331, %v2329
      %v2392 = vpack.c.b16 %v2332, %v2330
      %v2393 = vpack.c.b16 %v2335, %v2333
      %v2394 = vpack.c.b16 %v2336, %v2334
      %v2395 = vpack.c.b16 %v2339, %v2337
      %v2396 = vpack.c.b16 %v2340, %v2338
      %v2397 = vpack.c.b16 %v2343, %v2341
      %v2398 = vpack.c.b16 %v2344, %v2342
      %v2399 = vpack.c.b16 %v2347, %v2345
      %v2400 = vpack.c.b16 %v2348, %v2346
      %v2401 = vpack.c.b16 %v2351, %v2349
      %v2402 = vpack.c.b16 %v2352, %v2350
      %v2403 = vpack.c.b16 %v2355, %v2353
      %v2404 = vpack.c.b16 %v2356, %v2354
      %2453 = vmatprep.subr.bf16.mxu0 %v2358
      %2454 = vmatpush1.bf16.msra.mxu0 %v2357
      %2455 = vmatprep.subr.bf16.mxu0 %v2360
      %2456 = vmatpush1.bf16.msra.mxu0 %v2359
      %2457 = vmatprep.subr.bf16.mxu0 %v2362
      %2458 = vmatpush1.bf16.msra.mxu0 %v2361
      %2459 = vmatprep.subr.bf16.mxu0 %v2364
      %2460 = vmatpush1.bf16.msra.mxu0 %v2363
      %2461 = vmatprep.subr.bf16.mxu0 %v2366
      %2462 = vmatpush1.bf16.msra.mxu0 %v2365
      %2463 = vmatprep.subr.bf16.mxu0 %v2368
      %2464 = vmatpush1.bf16.msra.mxu0 %v2367
      %2465 = vmatprep.subr.bf16.mxu0 %v2370
      %2466 = vmatpush1.bf16.msra.mxu0 %v2369
      %2467 = vmatprep.subr.bf16.mxu0 %v2372
      %2468 = vmatpush1.bf16.msra.mxu0 %v2371
      %2469 = vmatprep.subr.bf16.mxu0 %v2374
      %2470 = vmatpush1.bf16.msra.mxu0 %v2373
      %2471 = vmatprep.subr.bf16.mxu0 %v2376
      %2472 = vmatpush1.bf16.msra.mxu0 %v2375
      %2473 = vmatprep.subr.bf16.mxu0 %v2378
      %2474 = vmatpush1.bf16.msra.mxu0 %v2377
      %2475 = vmatprep.subr.bf16.mxu0 %v2380
      %2476 = vmatpush1.bf16.msra.mxu0 %v2379
      %2477 = vmatprep.subr.bf16.mxu0 %v2382
      %2478 = vmatpush1.bf16.msra.mxu0 %v2381
      %2479 = vmatprep.subr.bf16.mxu0 %v2384
      %2480 = vmatpush1.bf16.msra.mxu0 %v2383
      %2481 = vmatprep.subr.bf16.mxu0 %v2386
      %2482 = vmatpush1.bf16.msra.mxu0 %v2385
      %2483 = vmatprep.subr.bf16.mxu0 %v2388
      %2484 = vmatpush1.bf16.msra.mxu0 %v2387
      %2485 = vmatprep.mubr.bf16.mxu0 %v2208
      %2486 = vmatmul.mubr.bf16.gmra.mrb[0].mxu0 %v2207
      %v2487 = vpop.f32.mrb[0].mxu0
      %v2488 = vadd.f32 0.0, %v2487
      %v2489 = vpop.f32.mrb[0].mxu0
      %v2490 = vadd.f32 0.0, %v2489
      %v2491 = vpop.f32.mrb[0].mxu0
      %v2492 = vpop.f32.mrb[0].mxu0
      %2493 = vdwg.mxu0
      %2494 = vmatprep.subr.bf16.mxu0 %v2390
      %2495 = vmatpush1.bf16.msra.mxu0 %v2389
      %2496 = vmatprep.subr.bf16.mxu0 %v2392
      %2497 = vmatpush1.bf16.msra.mxu0 %v2391
      %2498 = vmatprep.subr.bf16.mxu0 %v2394
      %2499 = vmatpush1.bf16.msra.mxu0 %v2393
      %2500 = vmatprep.subr.bf16.mxu0 %v2396
      %2501 = vmatpush1.bf16.msra.mxu0 %v2395
      %2502 = vmatprep.subr.bf16.mxu0 %v2398
      %2503 = vmatpush1.bf16.msra.mxu0 %v2397
      %2504 = vmatprep.subr.bf16.mxu0 %v2400
      %2505 = vmatpush1.bf16.msra.mxu0 %v2399
      %2506 = vmatprep.subr.bf16.mxu0 %v2402
      %2507 = vmatpush1.bf16.msra.mxu0 %v2401
      %2508 = vmatprep.subr.bf16.mxu0 %v2404
      %2509 = vmatpush1.bf16.msra.mxu0 %v2403
      %2510 = vmatprep.subr.bf16.mxu0 0
      %2511 = vmatpush1.bf16.msra.mxu0 0
      %2512 = vmatprep.subr.bf16.mxu0 0
      %2513 = vmatpush1.bf16.msra.mxu0 0
      %2514 = vmatprep.subr.bf16.mxu0 0
      %2515 = vmatpush1.bf16.msra.mxu0 0
      %2516 = vmatprep.subr.bf16.mxu0 0
      %2517 = vmatpush1.bf16.msra.mxu0 0
      %2518 = vmatprep.subr.bf16.mxu0 0
      %2519 = vmatpush1.bf16.msra.mxu0 0
      %2520 = vmatprep.subr.bf16.mxu0 0
      %2521 = vmatpush1.bf16.msra.mxu0 0
      %2522 = vmatprep.subr.bf16.mxu0 0
      %2523 = vmatpush1.bf16.msra.mxu0 0
      %2524 = vmatprep.subr.bf16.mxu0 0
      %2525 = vmatpush1.bf16.msra.mxu0 0
      %2526 = vmatprep.mubr.bf16.mxu0 0
      %2527 = vmatmul.mubr.bf16.gmra.mrb[0].mxu0 %v2209
      %v2528 = vpop.f32.mrb[0].mxu0
      %v2529 = vadd.f32 %v2488, %v2528
      %v2530 = vpop.f32.mrb[0].mxu0
      %v2531 = vadd.f32 %v2490, %v2530
      %v2532 = vpop.f32.mrb[0].mxu0
      %v2533 = vpop.f32.mrb[0].mxu0
      %2534 = vdwg.mxu0
      %v2535 = vadd.f32 %v2153, %v2529
      %v2536 = vadd.f32 %v2155, %v2531
      %s2537 = scalar_lea.vmem [#allocation2], 8
      %v2538 = vld [vmem:[%s2537] sm:$0x77]
      %v2541 = vcombine.low %v2535, %v2536
      %v2543 = vadd.f32 %v2538, %v2541
      %2544 = vst [vmem:[%s2537] sm:$0x77] %v2543
      %p2545 = scmp.eq.s32.totalorder %s19, 2
      // Predicated region
      $region37: #{alexnet_forward.14} parent=31 // pred_check
        %p2546 = pneg %p2545
      $region38: #{alexnet_forward.14} parent=31 // pred_check_branch
        %2548 = sbr.rel (%p2546) target = $region40
      $region39: #{alexnet_forward.14} parent=31 // pred_region
        %v2549 = vld [vmem:[#allocation2] sm:$0x77]
        %v2550 = vld [vmem:[#allocation2 + $0x8] sm:$0x77]
        %v2551 = vld [vmem:[%s2] sm:$0x3]
        %v2553 = vlaneseq
        %v2554 = vshrl.u32 %v2553, 7
        %v2555 = vsub.s32 0, %v2554
        %v2556 = vrot.slane %v2551, %v2555
        %v2557 = vlaneseq
        %v2558 = vshrl.u32 %v2557, 7
        %v2559 = vsub.s32 1, %v2558
        %v2560 = vrot.slane %v2551, %v2559
        %v2561 = vcombine.low %v2556, %v2560
        %v2563 = vadd.f32 %v2549, %v2561
        %v2564 = vadd.f32 %v2550, %v2561
        %v2565 = vmax.f32 %v2563, 0.0
        %v2566 = vmax.f32 %v2564, 0.0
        %v2569 = vcombine.high %v2565, %v2565
        %v2570 = vcombine.high %v2566, %v2566
        %v2573 = vpack.c.bf16 %v2565, %v2565
        %v2574 = vpack.c.bf16 %v2569, %v2569
        %v2575 = vpack.c.bf16 %v2566, %v2566
        %v2576 = vpack.c.bf16 %v2570, %v2570
        %v2581 = vcombine.low %v2573, %v2574
        %v2583 = vunpack.c.l.s4 1983009808
        %v2584 = vunpack.c.0.s8 %v2583
        %v2585 = vlaneseq
        %v2586 = vshrl.u32 %v2585, 7
        %v2587 = vsub.s32 %v2584, %v2586
        %v2588 = vrot.slane %v2581, %v2587
        %v2589 = vcombine.low %v2575, %v2576
        %v2591 = vunpack.c.l.s4 1983009808
        %v2592 = vunpack.c.0.s8 %v2591
        %v2593 = vlaneseq
        %v2594 = vshrl.u32 %v2593, 7
        %v2595 = vsub.s32 %v2592, %v2594
        %v2596 = vrot.slane %v2589, %v2595
        %vm2599 = vcmask 1041408
        %vm2600 = vsmask.f32 1280
        %vm2601 = vmand %vm2599, %vm2600
        %vm2602 = vcmask 1043458
        %vm2603 = vsmask.f32 3328
        %vm2604 = vmand %vm2602, %vm2603
        %vm2605 = vmor %vm2604, %vm2601
        %v2606 = vld [vmem:[%s209] sm:$0xf]
        %v2607 = vsel %vm2605, %v2588, %v2606
        %2608 = vst [vmem:[%s209] sm:$0xf] %v2607
        %v2609 = vld [vmem:[%s209 + $0x4] sm:$0xf]
        %v2610 = vsel %vm2605, %v2596, %v2609
        %2611 = vst [vmem:[%s209 + $0x4] sm:$0xf] %v2610
      $region40: #{alexnet_forward.14} parent=31 // pred_fallthru
        _
      %p2612 = scmp.lt.s32.totalorder %s18, 2
      %s2613 = scalar_select %p2612, %s18, 2
      %s2614 = smul.addr %s2613, 4
      %s2615 = smul.addr %s2614, 2
      %s2616 = scalar_lea.vmem %s3, %s2615
      // Predicated region
      $region41: #{alexnet_forward.14} parent=31 // pred_check
        %p2617 = pneg %p119
      $region42: #{alexnet_forward.14} parent=31 // pred_check_branch
        %2619 = sbr.rel (%p2617) target = $region44
      $region43: #{alexnet_forward.14} parent=31 // pred_region
        _
      $region44: #{alexnet_forward.14} parent=31 // pred_fallthru
        _
    $region32: #{alexnet_forward.14} parent=5 // pred_fallthru
      _
    %p2620 = scmp.le.s32.totalorder 2, %s9
    // Predicated region
    $region45: #{alexnet_forward.14} parent=5 // pred_check
      %p2621 = pneg %p2620
    $region46: #{alexnet_forward.14} parent=5 // pred_check_branch
      %2623 = sbr.rel (%p2621) target = $region48
    $region47: #{alexnet_forward.14} parent=5 // pred_region
      %s2624 = ssub.s32 %s9, 2
      // Predicated region
      $region49: #{alexnet_forward.14} parent=47 // pred_check
        %p2625 = pneg %p125
      $region50: #{alexnet_forward.14} parent=47 // pred_check_branch
        %2627 = sbr.rel (%p2625) target = $region52
      $region51: #{alexnet_forward.14} parent=47 // pred_region
        %p2628 = scmp.lt.s32.totalorder %s20, 2
        %s2629 = scalar_select %p2628, %s20, 2
        %s2630 = smul.addr %s2629, 4
        %s2631 = smul.addr %s2630, 2
        %s2632 = scalar_lea.vmem %s3, %s2631
      $region52: #{alexnet_forward.14} parent=47 // pred_fallthru
        _
    $region48: #{alexnet_forward.14} parent=5 // pred_fallthru
      _
  $region6: #{alexnet_forward.14} parent=0 // loop_footer
    %s13 = sadd.s32 1, %s9
  $region7: #{alexnet_forward.14} parent=0 // loop_footer_branch
    %8 = sbr.rel target = $region3
  $region8: #{alexnet_forward.14} parent=0 // loop_exit
    _

// kernel: alexnet_forward.16
$region0: #{alexnet_forward.16}
  #allocation0 [shape = 'u32[]', space=smem, size = 0x4, offset = 0x4, fixed_abs, tag = 'smem constant byte address 0x4 - core index']
  #allocation1 [shape = 'u32[144,128]{1,0:T(1,128)}', space=vmem, size = 0x12000, scoped, tag = 'internal scratch']
  %s0 = inlined_call_operand.vmem [shape: bf16[3,2,3,16], index: 0, kind: input, shape index: {}, may-alias: {0,1,2}]
  %s1 = inlined_call_operand.vmem [shape: bf16[3,2,3,16], index: 1, kind: input, shape index: {}, may-alias: {0,1,2}]
  %s2 = inlined_call_operand.vmem [shape: bf16[3,2,3,16], index: 2, kind: input, shape index: {}, may-alias: {0,1,2}]
  %s3 = inlined_call_operand.vmem [shape: bf16[1,2,1,16], index: 3, kind: output, shape index: {}]
  %s4 = sld [smem:[#allocation0]]
  $region22: #{alexnet_forward.16} parent=0
    _
  %s6 = ssub.s32 1, %s4
  %s7 = scalar_select 0, %s6, %s4
  // Predicated region
  $region2: #{alexnet_forward.16} parent=0 // pred_check
    _
  $region3: #{alexnet_forward.16} parent=0 // pred_check_branch
    %9 = sbr.rel (0) target = $region5
  $region4: #{alexnet_forward.16} parent=0 // pred_region
    %s10 = smul.u32 0, 2
    %p11 = scmp.lt.s32.totalorder %s10, 2
    %s12 = scalar_select %p11, %s10, 2
    %s13 = smul.addr %s12, 2
    %s14 = smul.addr %s13, 2
    %s15 = scalar_lea.vmem %s0, %s14
    %s16 = smul.u32 0, 2
  $region5: #{alexnet_forward.16} parent=0 // pred_fallthru
    _
  // Predicated region
  $region6: #{alexnet_forward.16} parent=0 // pred_check
    _
  $region7: #{alexnet_forward.16} parent=0 // pred_check_branch
    %18 = sbr.rel (0) target = $region9
  $region8: #{alexnet_forward.16} parent=0 // pred_region
    %s19 = smul.u32 0, 2
    %s20 = sadd.s32 %s19, 1
    %p21 = scmp.lt.s32.totalorder %s20, 2
    %s22 = scalar_select %p21, %s20, 2
    %s23 = smul.addr %s22, 2
    %s24 = smul.addr %s23, 2
    %s25 = scalar_lea.vmem %s1, %s24
    %s26 = smul.u32 0, 2
    %s27 = sadd.s32 %s26, 1
  $region9: #{alexnet_forward.16} parent=0 // pred_fallthru
    _
  // Predicated region
  $region10: #{alexnet_forward.16} parent=0 // pred_check
    _
  $region11: #{alexnet_forward.16} parent=0 // pred_check_branch
    %29 = sbr.rel (0) target = $region13
  $region12: #{alexnet_forward.16} parent=0 // pred_region
    %s30 = smul.u32 0, 2
    %s31 = sadd.s32 %s30, 2
    %p32 = scmp.lt.s32.totalorder %s31, 2
    %s33 = scalar_select %p32, %s31, 2
    %s34 = smul.addr %s33, 2
    %s35 = smul.addr %s34, 2
    %s36 = scalar_lea.vmem %s2, %s35
    %s37 = smul.u32 0, 2
    %s38 = sadd.s32 %s37, 2
  $region13: #{alexnet_forward.16} parent=0 // pred_fallthru
    _
  %s39 = smul.u32 0, 2
  %p40 = scmp.lt.s32.totalorder %s39, 2
  %s41 = scalar_select %p40, %s39, 2
  %s42 = smul.addr %s41, 2
  %s43 = smul.addr %s42, 2
  %s44 = scalar_lea.vmem %s0, %s43
  %s45 = smul.u32 0, 2
  %s46 = sadd.s32 %s45, 1
  %p47 = scmp.lt.s32.totalorder %s46, 2
  %s48 = scalar_select %p47, %s46, 2
  %s49 = smul.addr %s48, 2
  %s50 = smul.addr %s49, 2
  %s51 = scalar_lea.vmem %s1, %s50
  %s52 = smul.u32 0, 2
  %s53 = sadd.s32 %s52, 2
  %p54 = scmp.lt.s32.totalorder %s53, 2
  %s55 = scalar_select %p54, %s53, 2
  %s56 = smul.addr %s55, 2
  %s57 = smul.addr %s56, 2
  %s58 = scalar_lea.vmem %s2, %s57
  %s59 = smul.u32 0, 2
  %p60 = scmp.lt.s32.totalorder %s59, 2
  %s61 = scalar_select %p60, %s59, 2
  %s62 = smul.addr %s61, 2
  %s63 = smul.addr %s62, 2
  %s64 = scalar_lea.vmem %s0, %s63
  %s65 = smul.u32 0, 2
  %s66 = smul.u32 0, 2
  %s67 = sadd.s32 %s66, 1
  %p68 = scmp.lt.s32.totalorder %s67, 2
  %s69 = scalar_select %p68, %s67, 2
  %s70 = smul.addr %s69, 2
  %s71 = smul.addr %s70, 2
  %s72 = scalar_lea.vmem %s1, %s71
  %s73 = smul.u32 0, 2
  %s74 = sadd.s32 %s73, 1
  %s75 = smul.u32 0, 2
  %s76 = sadd.s32 %s75, 2
  %p77 = scmp.lt.s32.totalorder %s76, 2
  %s78 = scalar_select %p77, %s76, 2
  %s79 = smul.addr %s78, 2
  %s80 = smul.addr %s79, 2
  %s81 = scalar_lea.vmem %s2, %s80
  %s82 = smul.u32 0, 2
  %s83 = sadd.s32 %s82, 2
  %v84 = vld [vmem:[%s64] sm:$0x3]
  %v85 = vld [vmem:[%s64 + $0x2] sm:$0x3]
  %v86 = vld [vmem:[%s72] sm:$0x3]
  %v87 = vld [vmem:[%s72 + $0x2] sm:$0x3]
  %v88 = vmax.bf16 %v84, %v86
  %v89 = vmax.bf16 %v85, %v87
  %v90 = vld [vmem:[%s81] sm:$0x3]
  %v91 = vld [vmem:[%s81 + $0x2] sm:$0x3]
  %v92 = vmax.bf16 %v88, %v90
  %v93 = vmax.bf16 %v89, %v91
  %v95 = vshrl.u32 %v92, 16
  %v97 = vrot.slane %v95, 6
  %v98 = vrot.slane %v97, 2
  %v100 = vshrl.u32 %v93, 16
  %v102 = vrot.slane %v100, 6
  %v103 = vrot.slane %v102, 2
  %v106 = vmax.bf16 %v92, %v98
  %v107 = vmax.bf16 %v93, %v103
  %v110 = vrot.slane %v92, 7
  %v111 = vrot.slane %v110, 2
  %v112 = vrot.slane %v93, 7
  %v113 = vrot.slane %v112, 2
  %v116 = vmax.bf16 %v106, %v111
  %v117 = vmax.bf16 %v107, %v113
  %vm118 = vcmask 122880
  %vm119 = vsmask.f32 256
  %vm120 = vmand %vm118, %vm119
  %v121 = vld [vmem:[%s3] sm:$0x1]
  %v122 = vsel %vm120, %v116, %v121
  %123 = vst [vmem:[%s3] sm:$0x1] %v122
  %v124 = vld [vmem:[%s3 + $0x1] sm:$0x1]
  %v125 = vsel %vm120, %v117, %v124
  %126 = vst [vmem:[%s3 + $0x1] sm:$0x1] %v125
  // Predicated region
  $region14: #{alexnet_forward.16} parent=0 // pred_check
    _
  $region15: #{alexnet_forward.16} parent=0 // pred_check_branch
    %128 = sbr.rel (0) target = $region17
  $region16: #{alexnet_forward.16} parent=0 // pred_region
    _
  $region17: #{alexnet_forward.16} parent=0 // pred_fallthru
    _
  // Predicated region
  $region18: #{alexnet_forward.16} parent=0 // pred_check
    _
  $region19: #{alexnet_forward.16} parent=0 // pred_check_branch
    %130 = sbr.rel (0) target = $region21
  $region20: #{alexnet_forward.16} parent=0 // pred_region
    _
  $region21: #{alexnet_forward.16} parent=0 // pred_fallthru
    _

// kernel: alexnet_forward.17
$region0: #{alexnet_forward.17}
  #allocation0 [shape = 'u32[]', space=smem, size = 0x4, offset = 0x4, fixed_abs, tag = 'smem constant byte address 0x4 - core index']
  #allocation1 [shape = 'u32[144,128]{1,0:T(1,128)}', space=vmem, size = 0x12000, scoped, tag = 'internal scratch']
  %s0 = inlined_call_operand.vmem [shape: bf16[1,2,1,16], index: 0, kind: input, shape index: {}]
  %s1 = inlined_call_operand.hbm [shape: f32[2,16], index: 1, kind: output, shape index: {}]
  %s2 = sld [smem:[#allocation0]]
  $region14: #{alexnet_forward.17} parent=0
    _
  %s4 = ssub.s32 1, %s2
  %s5 = scalar_select 0, %s4, %s2
  $region1: #{alexnet_forward.17} parent=0
    #allocation2 [shape = 'u8[1024]{0}', space=vmem, size = 0x400, scoped, tag = 'output window, operand 0, single buffered']
    #allocation3 [shape = 's32[1]{0}', space=sflag, size = 0x4, scoped, tag = 'scoped memory for alexnet_forward.17']
    %6 = vsyncpa [#allocation3], 0
    // Predicated region
    $region2: #{alexnet_forward.17} parent=1 // pred_check
      _
    $region3: #{alexnet_forward.17} parent=1 // pred_check_branch
      %8 = sbr.rel (0) target = $region5
    $region4: #{alexnet_forward.17} parent=1 // pred_region
      _
    $region5: #{alexnet_forward.17} parent=1 // pred_fallthru
      _
    %v9 = vld [vmem:[%s0] sm:$0x1]
    %v10 = vld [vmem:[%s0 + $0x1] sm:$0x1]
    %v11 = vunpack.c.l.bf16 %v9
    %v12 = vunpack.c.l.bf16 %v10
    %v13 = vadd.f32 %v11, 0.0
    %v14 = vadd.f32 %v12, 0.0
    %v15 = vadd.f32 %v13, 0.0
    %v16 = vadd.f32 %v14, 0.0
    %v17 = vmax.f32 %v15, 0.0
    %v18 = vmax.f32 %v16, 0.0
    %v21 = vlaneseq
    %v22 = vshrl.u32 %v21, 7
    %v23 = vsub.s32 0, %v22
    %v24 = vrot.slane %v17, %v23
    %v25 = vlaneseq
    %v26 = vshrl.u32 %v25, 7
    %v27 = vsub.s32 0, %v26
    %v28 = vrot.slane %v18, %v27
    %vm29 = vcmask 1041409
    %v30 = vsel %vm29, %v28, %v24
    %vm32 = vcmask 123904
    %33 = vst.msk [vmem:[#allocation2] sm:$0x3] %vm32, %v30
    // Predicated region
    $region6: #{alexnet_forward.17} parent=1 // pred_check
      _
    $region7: #{alexnet_forward.17} parent=1 // pred_check_branch
      %35 = sbr.rel (0) target = $region9
    $region8: #{alexnet_forward.17} parent=1 // pred_region
      %s37 = ssub.s32 32, 32
      %38 = vsyncadd [#allocation3], %s37
      %s40 = sshll.u32 [#allocation2], 4
      %s41 = int_to_ptr.vmem [resolvable:$true] %s40
      %43 = dma.vmem_to_hbm [thread:$0]  %s41, 32, %s1, [#allocation3]
    $region9: #{alexnet_forward.17} parent=1 // pred_fallthru
      _
    // Predicated region
    $region10: #{alexnet_forward.17} parent=1 // pred_check
      _
    $region11: #{alexnet_forward.17} parent=1 // pred_check_branch
      %45 = sbr.rel (0) target = $region13
    $region12: #{alexnet_forward.17} parent=1 // pred_region
      %46 = dma.done [#allocation3], 32
    $region13: #{alexnet_forward.17} parent=1 // pred_fallthru
      _
    %47 = vsyncpa [#allocation3], 1

</llo_original>
